<compile_context>
chip_gen: v7x
topology: tpu7x:2x2x1
jax: 0.10.0
libtpu: 0.0.40
codegen_flags: <defaults>
</compile_context>

<pallas_src>
import numpy as np
import jax
import jax.numpy as jnp
from jax import lax
from jax.experimental import pallas as pl
from jax.experimental.pallas import tpu as pltpu


def _round_up(n, m):
    return (n + m - 1) // m * m


def _pick_batch_block(n, cap):
    """Largest divisor of n that is <= cap while leaving >= 2 grid steps
    (keeps both v7x TensorCores busy via the 'parallel' batch axis)."""
    if n <= 1:
        return 1
    best = 1
    for d in range(1, min(cap, n // 2) + 1):
        if n % d == 0:
            best = d
    return best


# --------------------------------------------------------------------------
# Kernel 1: fused valid-conv(3x3) + bias + ReLU + 2x2/stride-2 maxpool
# Grid: one step per batch block (parallel).
# --------------------------------------------------------------------------
def make_conv_relu_pool_kernel(Bblk, KH, KW, CIN, COUT, OH, OW_pad, PH, PW, PW_out):
    M = Bblk * OH * OW_pad

    def kernel(x_ref, w_ref, b_ref, o_ref):
        # x_ref: (Bblk, IH, IW_pad, CIN)   w_ref: (KH*KW*CIN, COUT)   b_ref: (1, COUT)
        # o_ref: (Bblk, PH, PW_out, COUT)
        if CIN == 1:
            # 1-channel input (conv1): VPU shifted multiply-accumulate, accumulator
            # kept as a traced value.  Operands rounded to bf16 so numerics match
            # the bf16 MXU path / reference.
            acc4 = jnp.zeros((Bblk, OH, OW_pad, COUT), jnp.float32)
            for kh in range(KH):
                for kw in range(KW):
                    xs = x_ref[:, kh:kh + OH, kw:kw + OW_pad, :]     # (Bblk,OH,OWp,1)
                    xs = xs.astype(jnp.bfloat16).astype(jnp.float32)
                    row = kh * KW + kw
                    wv = w_ref[row:row + 1, :]                       # (1, COUT)
                    wv = wv.astype(jnp.bfloat16).astype(jnp.float32)
                    acc4 = acc4 + xs * wv
        else:
            # Multi-channel (conv2): build the im2col patch matrix in-register and
            # do a single MXU GEMM: (Bblk*OH*OW_pad, KH*KW*CIN) @ (KH*KW*CIN, COUT).
            # OW_pad % 8 == 0 -> the (Bblk,OH,OW_pad,CIN) -> (M,CIN) reshape is a
            # pure tile regroup (no sublane repacking).
            cols = []
            for kh in range(KH):
                for kw in range(KW):
                    xs = x_ref[:, kh:kh + OH, kw:kw + OW_pad, :]     # (Bblk,OH,OWp,CIN)
                    cols.append(xs.reshape(M, CIN))
            patch = jnp.concatenate(cols, axis=1)                    # (M, KH*KW*CIN)
            acc = jnp.dot(patch.astype(jnp.bfloat16),
                          w_ref[...].astype(jnp.bfloat16),
                          preferred_element_type=jnp.float32)        # (M, COUT)
            acc4 = acc.reshape(Bblk, OH, OW_pad, COUT)

        # bias + ReLU (f32)
        acc4 = jnp.maximum(acc4 + b_ref[...], 0.0)

        # 2x2 / stride-2 max pool (floor mode): vectorized pairwise maxes over
        # full-width slabs, finished with ONE dense store to o_ref.
        rows = [jnp.maximum(acc4[:, 2 * ph:2 * ph + 1, :, :],
                            acc4[:, 2 * ph + 1:2 * ph + 2, :, :])
                for ph in range(PH)]
        rows = jnp.concatenate(rows, axis=1)                         # (Bblk,PH,OWp,COUT)
        cols_p = [jnp.maximum(rows[:, :, 2 * pw:2 * pw + 1, :],
                              rows[:, :, 2 * pw + 1:2 * pw + 2, :])
                  for pw in range(PW)]
        if PW_out > PW:
            # zero-pad the output width so the next conv's padded window sees zeros
            cols_p.append(jnp.zeros((Bblk, PH, PW_out - PW, COUT), jnp.float32))
        o_ref[...] = jnp.concatenate(cols_p, axis=2)                 # (Bblk,PH,PW_out,COUT)

    return kernel


def conv_relu_pool(x_nhwc, w_hwio, bias_row, *, in_w_valid, out_w_pad=None):
    """x_nhwc: (B, IH, IW_pad, CIN) with valid data in columns [0, in_w_valid) and
    zeros beyond.  Returns (B, PH, out_w_pad or PW, COUT) with zero-padded width."""
    B, IH, IW_pad, CIN = x_nhwc.shape
    KH, KW, _, COUT = w_hwio.shape
    OH = IH - KH + 1
    OW = in_w_valid - KW + 1
    OW_pad = _round_up(OW, 8)
    assert IW_pad >= OW_pad + KW - 1, "input width not padded enough"
    PH, PW = OH // 2, OW // 2
    PW_out = PW if out_w_pad is None else out_w_pad
    assert PW_out >= PW
    Bblk = _pick_batch_block(B, cap=8)

    w2d = w_hwio.reshape(KH * KW * CIN, COUT)        # row order = (kh, kw, ci)
    kernel = make_conv_relu_pool_kernel(Bblk, KH, KW, CIN, COUT,
                                        OH, OW_pad, PH, PW, PW_out)
    return pl.pallas_call(
        kernel,
        out_shape=jax.ShapeDtypeStruct((B, PH, PW_out, COUT), jnp.float32),
        grid_spec=pltpu.PrefetchScalarGridSpec(
            num_scalar_prefetch=0,
            grid=(B // Bblk,),
            in_specs=[
                pl.BlockSpec((Bblk, IH, IW_pad, CIN), lambda b: (b, 0, 0, 0)),
                pl.BlockSpec((KH * KW * CIN, COUT), lambda b: (0, 0)),
                pl.BlockSpec((1, COUT), lambda b: (0, 0)),
            ],
            out_specs=pl.BlockSpec((Bblk, PH, PW_out, COUT), lambda b: (b, 0, 0, 0)),
        ),
        compiler_params=pltpu.CompilerParams(dimension_semantics=("parallel",)),
    )(x_nhwc, w2d, bias_row)


# --------------------------------------------------------------------------
# Kernel 2: fused Linear(800,128pad) + ReLU + Linear(128pad,10) + softmax(dim=1)
# --------------------------------------------------------------------------
def fc_softmax_kernel(x_ref, w1_ref, b1_ref, w2_ref, b2_ref, o_ref):
    h = jnp.dot(x_ref[...].astype(jnp.bfloat16),
                w1_ref[...].astype(jnp.bfloat16),
                preferred_element_type=jnp.float32)
    h = jnp.maximum(h + b1_ref[...], 0.0)
    z = jnp.dot(h.astype(jnp.bfloat16),
                w2_ref[...].astype(jnp.bfloat16),
                preferred_element_type=jnp.float32) + b2_ref[...]
    z = z - jnp.max(z, axis=1, keepdims=True)
    e = jnp.exp(z)
    o_ref[...] = e / jnp.sum(e, axis=1, keepdims=True)


def fc_softmax(x, w1, b1, w2, b2):
    B, D = x.shape
    Hp = w1.shape[1]
    O = w2.shape[1]
    # 8-row-aligned batch tiles when the batch is big enough (>=2 parallel grid
    # steps feeds both v7x TensorCores); otherwise one full-batch step.
    bb = 8 if (B >= 16 and B % 8 == 0) else B
    return pl.pallas_call(
        fc_softmax_kernel,
        out_shape=jax.ShapeDtypeStruct((B, O), jnp.float32),
        grid_spec=pltpu.PrefetchScalarGridSpec(
            num_scalar_prefetch=0,
            grid=(B // bb,),
            in_specs=[
                pl.BlockSpec((bb, D), lambda i: (i, 0)),
                pl.BlockSpec((D, Hp), lambda i: (0, 0)),
                pl.BlockSpec((1, Hp), lambda i: (0, 0)),
                pl.BlockSpec((Hp, O), lambda i: (0, 0)),
                pl.BlockSpec((1, O), lambda i: (0, 0)),
            ],
            out_specs=pl.BlockSpec((bb, O), lambda i: (i, 0)),
        ),
        compiler_params=pltpu.CompilerParams(dimension_semantics=("parallel",)),
    )(x, w1, b1, w2, b2)


# --------------------------------------------------------------------------
# Parameters (deterministic, kaiming/xavier-style bounds as in the module)
# --------------------------------------------------------------------------
def init_params(key, n_channels=1):
    ks = jax.random.split(key, 8)

    def kaiming_uniform(k, shape, fan_in):
        bound = np.sqrt(6.0 / fan_in)              # gain sqrt(2) for relu
        return jax.random.uniform(k, shape, jnp.float32, -bound, bound)

    def bias_uniform(k, shape, fan_in):
        bound = 1.0 / np.sqrt(fan_in)
        return jax.random.uniform(k, shape, jnp.float32, -bound, bound)

    p = {}
    p["w_conv1"] = kaiming_uniform(ks[0], (3, 3, n_channels, 32), 9 * n_channels)  # HWIO
    p["b_conv1"] = bias_uniform(ks[1], (1, 32), 9 * n_channels)
    p["w_conv2"] = kaiming_uniform(ks[2], (3, 3, 32, 32), 9 * 32)
    p["b_conv2"] = bias_uniform(ks[3], (1, 32), 9 * 32)
    p["w_fc1"] = kaiming_uniform(ks[4], (800, 100), 800)     # rows in torch (c,h,w) order
    p["b_fc1"] = bias_uniform(ks[5], (1, 100), 800)
    xb = np.sqrt(6.0 / (100 + 10))                            # xavier_uniform
    p["w_fc2"] = jax.random.uniform(ks[6], (100, 10), jnp.float32, -xb, xb)
    p["b_fc2"] = bias_uniform(ks[7], (1, 10), 100)
    return p


# --------------------------------------------------------------------------
# Forward (Pallas) and plain-JAX reference (same bf16 matmul rounding)
# --------------------------------------------------------------------------
@jax.jit
def cnn_forward(x_nchw, params):
    x = jnp.transpose(x_nchw, (0, 2, 3, 1))                   # NCHW -> NHWC
    B, IH, IW, CIN = x.shape
    KH, KW, _, _ = params["w_conv1"].shape

    # conv1 geometry (pad widths so in-kernel reshapes stay tile-trivial)
    ow1 = IW - KW + 1
    iw1_pad = _round_up(ow1, 8) + KW - 1
    pw1 = ow1 // 2
    # conv2 consumes conv1's (already width-padded) output directly
    ow2 = pw1 - KW + 1
    iw2_pad = _round_up(ow2, 8) + KW - 1

    x = jnp.pad(x, ((0, 0), (0, 0), (0, iw1_pad - IW), (0, 0)))
    x = conv_relu_pool(x, params["w_conv1"], params["b_conv1"],
                       in_w_valid=IW, out_w_pad=iw2_pad)      # (B, 13, 18, 32)
    x = conv_relu_pool(x, params["w_conv2"], params["b_conv2"],
                       in_w_valid=pw1)                        # (B, 5, 5, 32)

    _, PH, PW, COUT = x.shape
    flat = x.reshape(B, PH * PW * COUT)                       # NHWC-order flatten

    # Honour torch's X.view(-1, 5*5*32) (NCHW order) by permuting the fc1 weight
    # rows once instead of transposing the activations.
    w1 = params["w_fc1"].reshape(COUT, PH, PW, -1)
    w1 = jnp.transpose(w1, (1, 2, 0, 3)).reshape(PH * PW * COUT, -1)
    # Pad hidden dim 100 -> 128: lane-dense intermediate, zero pad is exact.
    Hn = w1.shape[1]
    Hp = _round_up(Hn, 128)
    w1 = jnp.pad(w1, ((0, 0), (0, Hp - Hn)))
    b1 = jnp.pad(params["b_fc1"], ((0, 0), (0, Hp - Hn)))
    w2 = jnp.pad(params["w_fc2"], ((0, Hp - Hn), (0, 0)))
    return fc_softmax(flat, w1, b1, w2, params["b_fc2"])


def cnn_reference(x_nchw, params):
    # Plain-JAX reference with the same bf16-operand / f32-accumulate matmul
    # rounding the kernels use (single-pass bf16 MXU).
    x = jnp.transpose(x_nchw, (0, 2, 3, 1))

    def conv_block(x, w, b):
        y = lax.conv_general_dilated(
            x.astype(jnp.bfloat16), w.astype(jnp.bfloat16),
            window_strides=(1, 1), padding="VALID",
            dimension_numbers=("NHWC", "HWIO", "NHWC"),
            preferred_element_type=jnp.float32)
        y = jnp.maximum(y + b.reshape(1, 1, 1, -1), 0.0)
        return lax.reduce_window(y, -jnp.inf, lax.max,
                                 (1, 2, 2, 1), (1, 2, 2, 1), "VALID")

    x = conv_block(x, params["w_conv1"], params["b_conv1"])
    x = conv_block(x, params["w_conv2"], params["b_conv2"])
    B = x.shape[0]
    flat = jnp.transpose(x, (0, 3, 1, 2)).reshape(B, -1)       # torch NCHW flatten
    h = jnp.maximum(
        jnp.dot(flat.astype(jnp.bfloat16), params["w_fc1"].astype(jnp.bfloat16),
                preferred_element_type=jnp.float32) + params["b_fc1"], 0.0)
    z = jnp.dot(h.astype(jnp.bfloat16), params["w_fc2"].astype(jnp.bfloat16),
                preferred_element_type=jnp.float32) + params["b_fc2"]
    return jax.nn.softmax(z, axis=1)


if __name__ == "__main__":
    B, C_IN, H, W = 2, 1, 28, 28   # module's 5*5*32 flatten implies 28x28, 1-channel input
    key = jax.random.PRNGKey(0)
    k_x, k_p = jax.random.split(key)
    x_nchw = jax.random.normal(k_x, (B, C_IN, H, W), dtype=jnp.float32)
    params = init_params(k_p, n_channels=C_IN)

    out = jax.block_until_ready(cnn_forward(x_nchw, params))
    assert out.shape == (B, 10)

    ref = jax.block_until_ready(cnn_reference(x_nchw, params))
    # bf16 single-pass MXU (per perf review) -> compare against a bf16-rounded
    # reference with a correspondingly (slightly) relaxed tolerance.
    np.testing.assert_allclose(np.asarray(out), np.asarray(ref), rtol=2e-3, atol=2e-5)

    print("KERNEL_OK")
</pallas_src>

<mosaic_0001>
module attributes {stable_mosaic.version = 11 : i64} {
  func.func @kernel(%arg0: i32, %arg1: memref<1x13x18x32xf32, #tpu.memory_space<vmem>>, %arg2: memref<288x32xf32, #tpu.memory_space<vmem>>, %arg3: memref<1x32xf32, #tpu.memory_space<vmem>>, %arg4: memref<1x5x5x32xf32, #tpu.memory_space<vmem>>) attributes {dimension_semantics = [#tpu.dimension_semantics<parallel>], iteration_bounds = array<i64: 2>, scalar_prefetch = 0 : i64, scratch_operands = 0 : i64, tpu.core_type = #tpu.core_type<tc>, window_params = [{transform_indices = @transform_0, window_bounds = array<i64: 1, 13, 18, 32>}, {pipeline_mode = #tpu.pipeline_mode<synchronous>, transform_indices = @transform_1, window_bounds = array<i64: 288, 32>}, {pipeline_mode = #tpu.pipeline_mode<synchronous>, transform_indices = @transform_2, window_bounds = array<i64: 1, 32>}, {transform_indices = @transform_3, window_bounds = array<i64: 1, 5, 5, 32>}]} {
    %c0 = arith.constant 0 : index
    %c0_0 = arith.constant 0 : index
    %c0_1 = arith.constant 0 : index
    %c0_2 = arith.constant 0 : index
    %0 = vector.load %arg1[%c0, %c0_0, %c0_1, %c0_2] : memref<1x13x18x32xf32, #tpu.memory_space<vmem>>, vector<1x11x16x32xf32>
    %1 = vector.shape_cast %0 : vector<1x11x16x32xf32> to vector<176x32xf32>
    %c0_3 = arith.constant 0 : index
    %c0_4 = arith.constant 0 : index
    %c1 = arith.constant 1 : index
    %c0_5 = arith.constant 0 : index
    %2 = vector.load %arg1[%c0_3, %c0_4, %c1, %c0_5] : memref<1x13x18x32xf32, #tpu.memory_space<vmem>>, vector<1x11x16x32xf32>
    %3 = vector.shape_cast %2 : vector<1x11x16x32xf32> to vector<176x32xf32>
    %c0_6 = arith.constant 0 : index
    %c0_7 = arith.constant 0 : index
    %c2 = arith.constant 2 : index
    %c0_8 = arith.constant 0 : index
    %4 = vector.load %arg1[%c0_6, %c0_7, %c2, %c0_8] : memref<1x13x18x32xf32, #tpu.memory_space<vmem>>, vector<1x11x16x32xf32>
    %5 = vector.shape_cast %4 : vector<1x11x16x32xf32> to vector<176x32xf32>
    %c0_9 = arith.constant 0 : index
    %c1_10 = arith.constant 1 : index
    %c0_11 = arith.constant 0 : index
    %c0_12 = arith.constant 0 : index
    %6 = vector.load %arg1[%c0_9, %c1_10, %c0_11, %c0_12] : memref<1x13x18x32xf32, #tpu.memory_space<vmem>>, vector<1x11x16x32xf32>
    %7 = vector.shape_cast %6 : vector<1x11x16x32xf32> to vector<176x32xf32>
    %c0_13 = arith.constant 0 : index
    %c1_14 = arith.constant 1 : index
    %c1_15 = arith.constant 1 : index
    %c0_16 = arith.constant 0 : index
    %8 = vector.load %arg1[%c0_13, %c1_14, %c1_15, %c0_16] : memref<1x13x18x32xf32, #tpu.memory_space<vmem>>, vector<1x11x16x32xf32>
    %9 = vector.shape_cast %8 : vector<1x11x16x32xf32> to vector<176x32xf32>
    %c0_17 = arith.constant 0 : index
    %c1_18 = arith.constant 1 : index
    %c2_19 = arith.constant 2 : index
    %c0_20 = arith.constant 0 : index
    %10 = vector.load %arg1[%c0_17, %c1_18, %c2_19, %c0_20] : memref<1x13x18x32xf32, #tpu.memory_space<vmem>>, vector<1x11x16x32xf32>
    %11 = vector.shape_cast %10 : vector<1x11x16x32xf32> to vector<176x32xf32>
    %c0_21 = arith.constant 0 : index
    %c2_22 = arith.constant 2 : index
    %c0_23 = arith.constant 0 : index
    %c0_24 = arith.constant 0 : index
    %12 = vector.load %arg1[%c0_21, %c2_22, %c0_23, %c0_24] : memref<1x13x18x32xf32, #tpu.memory_space<vmem>>, vector<1x11x16x32xf32>
    %13 = vector.shape_cast %12 : vector<1x11x16x32xf32> to vector<176x32xf32>
    %c0_25 = arith.constant 0 : index
    %c2_26 = arith.constant 2 : index
    %c1_27 = arith.constant 1 : index
    %c0_28 = arith.constant 0 : index
    %14 = vector.load %arg1[%c0_25, %c2_26, %c1_27, %c0_28] : memref<1x13x18x32xf32, #tpu.memory_space<vmem>>, vector<1x11x16x32xf32>
    %15 = vector.shape_cast %14 : vector<1x11x16x32xf32> to vector<176x32xf32>
    %c0_29 = arith.constant 0 : index
    %c2_30 = arith.constant 2 : index
    %c2_31 = arith.constant 2 : index
    %c0_32 = arith.constant 0 : index
    %16 = vector.load %arg1[%c0_29, %c2_30, %c2_31, %c0_32] : memref<1x13x18x32xf32, #tpu.memory_space<vmem>>, vector<1x11x16x32xf32>
    %17 = vector.shape_cast %16 : vector<1x11x16x32xf32> to vector<176x32xf32>
    %18 = tpu.concatenate %1, %3, %5, %7, %9, %11, %13, %15, %17 in 1 : vector<176x32xf32>, vector<176x32xf32>, vector<176x32xf32>, vector<176x32xf32>, vector<176x32xf32>, vector<176x32xf32>, vector<176x32xf32>, vector<176x32xf32>, vector<176x32xf32> -> vector<176x288xf32>
    %19 = arith.truncf %18 : vector<176x288xf32> to vector<176x288xbf16>
    %c0_33 = arith.constant 0 : index
    %c0_34 = arith.constant 0 : index
    %20 = vector.load %arg2[%c0_33, %c0_34] : memref<288x32xf32, #tpu.memory_space<vmem>>, vector<288x32xf32>
    %21 = arith.truncf %20 : vector<288x32xf32> to vector<288x32xbf16>
    %cst = arith.constant dense<0.000000e+00> : vector<176x32xf32>
    %22 = tpu.matmul %19, %21, %cst {dimension_numbers = #tpu.dot_dimension_numbers<[1], [0], [0], [1], [0, 0, 1, 1], [], []>} : vector<176x288xbf16>, vector<288x32xbf16>, vector<176x32xf32> -> vector<176x32xf32>
    %23 = vector.shape_cast %22 : vector<176x32xf32> to vector<1x11x16x32xf32>
    %c0_35 = arith.constant 0 : index
    %c0_36 = arith.constant 0 : index
    %24 = vector.load %arg3[%c0_35, %c0_36] : memref<1x32xf32, #tpu.memory_space<vmem>>, vector<1x32xf32>
    %25 = vector.shape_cast %24 : vector<1x32xf32> to vector<1x1x1x32xf32>
    %26 = vector.broadcast %25 : vector<1x1x1x32xf32> to vector<1x11x16x32xf32>
    %27 = arith.addf %23, %26 : vector<1x11x16x32xf32>
    %cst_37 = arith.constant 0.000000e+00 : f32
    %28 = vector.broadcast %cst_37 : f32 to vector<1x11x16x32xf32>
    %29 = arith.maximumf %27, %28 : vector<1x11x16x32xf32>
    %30 = vector.extract_strided_slice %29 {offsets = [0, 0, 0, 0], sizes = [1, 1, 16, 32], strides = [1, 1, 1, 1]} : vector<1x11x16x32xf32> to vector<1x1x16x32xf32>
    %31 = vector.extract_strided_slice %29 {offsets = [0, 1, 0, 0], sizes = [1, 1, 16, 32], strides = [1, 1, 1, 1]} : vector<1x11x16x32xf32> to vector<1x1x16x32xf32>
    %32 = arith.maximumf %30, %31 : vector<1x1x16x32xf32>
    %33 = vector.extract_strided_slice %29 {offsets = [0, 2, 0, 0], sizes = [1, 1, 16, 32], strides = [1, 1, 1, 1]} : vector<1x11x16x32xf32> to vector<1x1x16x32xf32>
    %34 = vector.extract_strided_slice %29 {offsets = [0, 3, 0, 0], sizes = [1, 1, 16, 32], strides = [1, 1, 1, 1]} : vector<1x11x16x32xf32> to vector<1x1x16x32xf32>
    %35 = arith.maximumf %33, %34 : vector<1x1x16x32xf32>
    %36 = vector.extract_strided_slice %29 {offsets = [0, 4, 0, 0], sizes = [1, 1, 16, 32], strides = [1, 1, 1, 1]} : vector<1x11x16x32xf32> to vector<1x1x16x32xf32>
    %37 = vector.extract_strided_slice %29 {offsets = [0, 5, 0, 0], sizes = [1, 1, 16, 32], strides = [1, 1, 1, 1]} : vector<1x11x16x32xf32> to vector<1x1x16x32xf32>
    %38 = arith.maximumf %36, %37 : vector<1x1x16x32xf32>
    %39 = vector.extract_strided_slice %29 {offsets = [0, 6, 0, 0], sizes = [1, 1, 16, 32], strides = [1, 1, 1, 1]} : vector<1x11x16x32xf32> to vector<1x1x16x32xf32>
    %40 = vector.extract_strided_slice %29 {offsets = [0, 7, 0, 0], sizes = [1, 1, 16, 32], strides = [1, 1, 1, 1]} : vector<1x11x16x32xf32> to vector<1x1x16x32xf32>
    %41 = arith.maximumf %39, %40 : vector<1x1x16x32xf32>
    %42 = vector.extract_strided_slice %29 {offsets = [0, 8, 0, 0], sizes = [1, 1, 16, 32], strides = [1, 1, 1, 1]} : vector<1x11x16x32xf32> to vector<1x1x16x32xf32>
    %43 = vector.extract_strided_slice %29 {offsets = [0, 9, 0, 0], sizes = [1, 1, 16, 32], strides = [1, 1, 1, 1]} : vector<1x11x16x32xf32> to vector<1x1x16x32xf32>
    %44 = arith.maximumf %42, %43 : vector<1x1x16x32xf32>
    %45 = tpu.concatenate %32, %35, %38, %41, %44 in 1 : vector<1x1x16x32xf32>, vector<1x1x16x32xf32>, vector<1x1x16x32xf32>, vector<1x1x16x32xf32>, vector<1x1x16x32xf32> -> vector<1x5x16x32xf32>
    %46 = vector.extract_strided_slice %45 {offsets = [0, 0, 0, 0], sizes = [1, 5, 1, 32], strides = [1, 1, 1, 1]} : vector<1x5x16x32xf32> to vector<1x5x1x32xf32>
    %47 = vector.extract_strided_slice %45 {offsets = [0, 0, 1, 0], sizes = [1, 5, 1, 32], strides = [1, 1, 1, 1]} : vector<1x5x16x32xf32> to vector<1x5x1x32xf32>
    %48 = arith.maximumf %46, %47 : vector<1x5x1x32xf32>
    %49 = vector.extract_strided_slice %45 {offsets = [0, 0, 2, 0], sizes = [1, 5, 1, 32], strides = [1, 1, 1, 1]} : vector<1x5x16x32xf32> to vector<1x5x1x32xf32>
    %50 = vector.extract_strided_slice %45 {offsets = [0, 0, 3, 0], sizes = [1, 5, 1, 32], strides = [1, 1, 1, 1]} : vector<1x5x16x32xf32> to vector<1x5x1x32xf32>
    %51 = arith.maximumf %49, %50 : vector<1x5x1x32xf32>
    %52 = vector.extract_strided_slice %45 {offsets = [0, 0, 4, 0], sizes = [1, 5, 1, 32], strides = [1, 1, 1, 1]} : vector<1x5x16x32xf32> to vector<1x5x1x32xf32>
    %53 = vector.extract_strided_slice %45 {offsets = [0, 0, 5, 0], sizes = [1, 5, 1, 32], strides = [1, 1, 1, 1]} : vector<1x5x16x32xf32> to vector<1x5x1x32xf32>
    %54 = arith.maximumf %52, %53 : vector<1x5x1x32xf32>
    %55 = vector.extract_strided_slice %45 {offsets = [0, 0, 6, 0], sizes = [1, 5, 1, 32], strides = [1, 1, 1, 1]} : vector<1x5x16x32xf32> to vector<1x5x1x32xf32>
    %56 = vector.extract_strided_slice %45 {offsets = [0, 0, 7, 0], sizes = [1, 5, 1, 32], strides = [1, 1, 1, 1]} : vector<1x5x16x32xf32> to vector<1x5x1x32xf32>
    %57 = arith.maximumf %55, %56 : vector<1x5x1x32xf32>
    %58 = vector.extract_strided_slice %45 {offsets = [0, 0, 8, 0], sizes = [1, 5, 1, 32], strides = [1, 1, 1, 1]} : vector<1x5x16x32xf32> to vector<1x5x1x32xf32>
    %59 = vector.extract_strided_slice %45 {offsets = [0, 0, 9, 0], sizes = [1, 5, 1, 32], strides = [1, 1, 1, 1]} : vector<1x5x16x32xf32> to vector<1x5x1x32xf32>
    %60 = arith.maximumf %58, %59 : vector<1x5x1x32xf32>
    %61 = tpu.concatenate %48, %51, %54, %57, %60 in 2 : vector<1x5x1x32xf32>, vector<1x5x1x32xf32>, vector<1x5x1x32xf32>, vector<1x5x1x32xf32>, vector<1x5x1x32xf32> -> vector<1x5x5x32xf32>
    %c0_38 = arith.constant 0 : index
    %c0_39 = arith.constant 0 : index
    %c0_40 = arith.constant 0 : index
    %c0_41 = arith.constant 0 : index
    %62 = vector.load %arg4[%c0_38, %c0_39, %c0_40, %c0_41] : memref<1x5x5x32xf32, #tpu.memory_space<vmem>>, vector<1x5x5x32xf32>
    tpu.vector_store %arg4[%c0_38, %c0_39, %c0_40, %c0_41], %61 {strides = array<i32>} : memref<1x5x5x32xf32, #tpu.memory_space<vmem>>, vector<1x5x5x32xf32>,
    return
  }
  func.func @transform_0(%arg0: i32) -> (i32, i32, i32, i32) {
    %c0_i32 = arith.constant 0 : i32
    %c0_i32_0 = arith.constant 0 : i32
    %c0_i32_1 = arith.constant 0 : i32
    %c0_i32_2 = arith.constant 0 : i32
    return %arg0, %c0_i32, %c0_i32_0, %c0_i32_1 : i32, i32, i32, i32
  }
  func.func @transform_1(%arg0: i32) -> (i32, i32) {
    %c0_i32 = arith.constant 0 : i32
    %c0_i32_0 = arith.constant 0 : i32
    %c0_i32_1 = arith.constant 0 : i32
    return %c0_i32, %c0_i32_0 : i32, i32
  }
  func.func @transform_2(%arg0: i32) -> (i32, i32) {
    %c0_i32 = arith.constant 0 : i32
    %c0_i32_0 = arith.constant 0 : i32
    %c0_i32_1 = arith.constant 0 : i32
    return %c0_i32, %c0_i32_0 : i32, i32
  }
  func.func @transform_3(%arg0: i32) -> (i32, i32, i32, i32) {
    %c0_i32 = arith.constant 0 : i32
    %c0_i32_0 = arith.constant 0 : i32
    %c0_i32_1 = arith.constant 0 : i32
    %c0_i32_2 = arith.constant 0 : i32
    return %arg0, %c0_i32, %c0_i32_0, %c0_i32_1 : i32, i32, i32, i32
  }
}

module attributes {stable_mosaic.version = 11 : i64} {
  func.func @kernel(%arg0: i32, %arg1: memref<1x28x34x1xf32, #tpu.memory_space<vmem>>, %arg2: memref<9x32xf32, #tpu.memory_space<vmem>>, %arg3: memref<1x32xf32, #tpu.memory_space<vmem>>, %arg4: memref<1x13x18x32xf32, #tpu.memory_space<vmem>>) attributes {dimension_semantics = [#tpu.dimension_semantics<parallel>], iteration_bounds = array<i64: 2>, scalar_prefetch = 0 : i64, scratch_operands = 0 : i64, tpu.core_type = #tpu.core_type<tc>, window_params = [{transform_indices = @transform_0, window_bounds = array<i64: 1, 28, 34, 1>}, {pipeline_mode = #tpu.pipeline_mode<synchronous>, transform_indices = @transform_1, window_bounds = array<i64: 9, 32>}, {pipeline_mode = #tpu.pipeline_mode<synchronous>, transform_indices = @transform_2, window_bounds = array<i64: 1, 32>}, {transform_indices = @transform_3, window_bounds = array<i64: 1, 13, 18, 32>}]} {
    %cst = arith.constant 0.000000e+00 : f32
    %0 = vector.broadcast %cst : f32 to vector<1x26x32x32xf32>
    %c0 = arith.constant 0 : index
    %c0_0 = arith.constant 0 : index
    %c0_1 = arith.constant 0 : index
    %c0_2 = arith.constant 0 : index
    %1 = vector.load %arg1[%c0, %c0_0, %c0_1, %c0_2] : memref<1x28x34x1xf32, #tpu.memory_space<vmem>>, vector<1x26x32x1xf32>
    %2 = arith.truncf %1 : vector<1x26x32x1xf32> to vector<1x26x32x1xbf16>
    %3 = arith.extf %2 : vector<1x26x32x1xbf16> to vector<1x26x32x1xf32>
    %c0_3 = arith.constant 0 : index
    %c0_4 = arith.constant 0 : index
    %4 = vector.load %arg2[%c0_3, %c0_4] : memref<9x32xf32, #tpu.memory_space<vmem>>, vector<1x32xf32>
    %5 = arith.truncf %4 : vector<1x32xf32> to vector<1x32xbf16>
    %6 = arith.extf %5 : vector<1x32xbf16> to vector<1x32xf32>
    %7 = vector.shape_cast %6 : vector<1x32xf32> to vector<1x1x1x32xf32>
    %8 = vector.broadcast %3 : vector<1x26x32x1xf32> to vector<1x26x32x32xf32>
    %9 = vector.broadcast %7 : vector<1x1x1x32xf32> to vector<1x26x32x32xf32>
    %10 = arith.mulf %8, %9 : vector<1x26x32x32xf32>
    %11 = arith.addf %0, %10 : vector<1x26x32x32xf32>
    %c0_5 = arith.constant 0 : index
    %c0_6 = arith.constant 0 : index
    %c1 = arith.constant 1 : index
    %c0_7 = arith.constant 0 : index
    %12 = vector.load %arg1[%c0_5, %c0_6, %c1, %c0_7] : memref<1x28x34x1xf32, #tpu.memory_space<vmem>>, vector<1x26x32x1xf32>
    %13 = arith.truncf %12 : vector<1x26x32x1xf32> to vector<1x26x32x1xbf16>
    %14 = arith.extf %13 : vector<1x26x32x1xbf16> to vector<1x26x32x1xf32>
    %c1_8 = arith.constant 1 : index
    %c0_9 = arith.constant 0 : index
    %15 = vector.load %arg2[%c1_8, %c0_9] : memref<9x32xf32, #tpu.memory_space<vmem>>, vector<1x32xf32>
    %16 = arith.truncf %15 : vector<1x32xf32> to vector<1x32xbf16>
    %17 = arith.extf %16 : vector<1x32xbf16> to vector<1x32xf32>
    %18 = vector.shape_cast %17 : vector<1x32xf32> to vector<1x1x1x32xf32>
    %19 = vector.broadcast %14 : vector<1x26x32x1xf32> to vector<1x26x32x32xf32>
    %20 = vector.broadcast %18 : vector<1x1x1x32xf32> to vector<1x26x32x32xf32>
    %21 = arith.mulf %19, %20 : vector<1x26x32x32xf32>
    %22 = arith.addf %11, %21 : vector<1x26x32x32xf32>
    %c0_10 = arith.constant 0 : index
    %c0_11 = arith.constant 0 : index
    %c2 = arith.constant 2 : index
    %c0_12 = arith.constant 0 : index
    %23 = vector.load %arg1[%c0_10, %c0_11, %c2, %c0_12] : memref<1x28x34x1xf32, #tpu.memory_space<vmem>>, vector<1x26x32x1xf32>
    %24 = arith.truncf %23 : vector<1x26x32x1xf32> to vector<1x26x32x1xbf16>
    %25 = arith.extf %24 : vector<1x26x32x1xbf16> to vector<1x26x32x1xf32>
    %c2_13 = arith.constant 2 : index
    %c0_14 = arith.constant 0 : index
    %26 = vector.load %arg2[%c2_13, %c0_14] : memref<9x32xf32, #tpu.memory_space<vmem>>, vector<1x32xf32>
    %27 = arith.truncf %26 : vector<1x32xf32> to vector<1x32xbf16>
    %28 = arith.extf %27 : vector<1x32xbf16> to vector<1x32xf32>
    %29 = vector.shape_cast %28 : vector<1x32xf32> to vector<1x1x1x32xf32>
    %30 = vector.broadcast %25 : vector<1x26x32x1xf32> to vector<1x26x32x32xf32>
    %31 = vector.broadcast %29 : vector<1x1x1x32xf32> to vector<1x26x32x32xf32>
    %32 = arith.mulf %30, %31 : vector<1x26x32x32xf32>
    %33 = arith.addf %22, %32 : vector<1x26x32x32xf32>
    %c0_15 = arith.constant 0 : index
    %c1_16 = arith.constant 1 : index
    %c0_17 = arith.constant 0 : index
    %c0_18 = arith.constant 0 : index
    %34 = vector.load %arg1[%c0_15, %c1_16, %c0_17, %c0_18] : memref<1x28x34x1xf32, #tpu.memory_space<vmem>>, vector<1x26x32x1xf32>
    %35 = arith.truncf %34 : vector<1x26x32x1xf32> to vector<1x26x32x1xbf16>
    %36 = arith.extf %35 : vector<1x26x32x1xbf16> to vector<1x26x32x1xf32>
    %c3 = arith.constant 3 : index
    %c0_19 = arith.constant 0 : index
    %37 = vector.load %arg2[%c3, %c0_19] : memref<9x32xf32, #tpu.memory_space<vmem>>, vector<1x32xf32>
    %38 = arith.truncf %37 : vector<1x32xf32> to vector<1x32xbf16>
    %39 = arith.extf %38 : vector<1x32xbf16> to vector<1x32xf32>
    %40 = vector.shape_cast %39 : vector<1x32xf32> to vector<1x1x1x32xf32>
    %41 = vector.broadcast %36 : vector<1x26x32x1xf32> to vector<1x26x32x32xf32>
    %42 = vector.broadcast %40 : vector<1x1x1x32xf32> to vector<1x26x32x32xf32>
    %43 = arith.mulf %41, %42 : vector<1x26x32x32xf32>
    %44 = arith.addf %33, %43 : vector<1x26x32x32xf32>
    %c0_20 = arith.constant 0 : index
    %c1_21 = arith.constant 1 : index
    %c1_22 = arith.constant 1 : index
    %c0_23 = arith.constant 0 : index
    %45 = vector.load %arg1[%c0_20, %c1_21, %c1_22, %c0_23] : memref<1x28x34x1xf32, #tpu.memory_space<vmem>>, vector<1x26x32x1xf32>
    %46 = arith.truncf %45 : vector<1x26x32x1xf32> to vector<1x26x32x1xbf16>
    %47 = arith.extf %46 : vector<1x26x32x1xbf16> to vector<1x26x32x1xf32>
    %c4 = arith.constant 4 : index
    %c0_24 = arith.constant 0 : index
    %48 = vector.load %arg2[%c4, %c0_24] : memref<9x32xf32, #tpu.memory_space<vmem>>, vector<1x32xf32>
    %49 = arith.truncf %48 : vector<1x32xf32> to vector<1x32xbf16>
    %50 = arith.extf %49 : vector<1x32xbf16> to vector<1x32xf32>
    %51 = vector.shape_cast %50 : vector<1x32xf32> to vector<1x1x1x32xf32>
    %52 = vector.broadcast %47 : vector<1x26x32x1xf32> to vector<1x26x32x32xf32>
    %53 = vector.broadcast %51 : vector<1x1x1x32xf32> to vector<1x26x32x32xf32>
    %54 = arith.mulf %52, %53 : vector<1x26x32x32xf32>
    %55 = arith.addf %44, %54 : vector<1x26x32x32xf32>
    %c0_25 = arith.constant 0 : index
    %c1_26 = arith.constant 1 : index
    %c2_27 = arith.constant 2 : index
    %c0_28 = arith.constant 0 : index
    %56 = vector.load %arg1[%c0_25, %c1_26, %c2_27, %c0_28] : memref<1x28x34x1xf32, #tpu.memory_space<vmem>>, vector<1x26x32x1xf32>
    %57 = arith.truncf %56 : vector<1x26x32x1xf32> to vector<1x26x32x1xbf16>
    %58 = arith.extf %57 : vector<1x26x32x1xbf16> to vector<1x26x32x1xf32>
    %c5 = arith.constant 5 : index
    %c0_29 = arith.constant 0 : index
    %59 = vector.load %arg2[%c5, %c0_29] : memref<9x32xf32, #tpu.memory_space<vmem>>, vector<1x32xf32>
    %60 = arith.truncf %59 : vector<1x32xf32> to vector<1x32xbf16>
    %61 = arith.extf %60 : vector<1x32xbf16> to vector<1x32xf32>
    %62 = vector.shape_cast %61 : vector<1x32xf32> to vector<1x1x1x32xf32>
    %63 = vector.broadcast %58 : vector<1x26x32x1xf32> to vector<1x26x32x32xf32>
    %64 = vector.broadcast %62 : vector<1x1x1x32xf32> to vector<1x26x32x32xf32>
    %65 = arith.mulf %63, %64 : vector<1x26x32x32xf32>
    %66 = arith.addf %55, %65 : vector<1x26x32x32xf32>
    %c0_30 = arith.constant 0 : index
    %c2_31 = arith.constant 2 : index
    %c0_32 = arith.constant 0 : index
    %c0_33 = arith.constant 0 : index
    %67 = vector.load %arg1[%c0_30, %c2_31, %c0_32, %c0_33] : memref<1x28x34x1xf32, #tpu.memory_space<vmem>>, vector<1x26x32x1xf32>
    %68 = arith.truncf %67 : vector<1x26x32x1xf32> to vector<1x26x32x1xbf16>
    %69 = arith.extf %68 : vector<1x26x32x1xbf16> to vector<1x26x32x1xf32>
    %c6 = arith.constant 6 : index
    %c0_34 = arith.constant 0 : index
    %70 = vector.load %arg2[%c6, %c0_34] : memref<9x32xf32, #tpu.memory_space<vmem>>, vector<1x32xf32>
    %71 = arith.truncf %70 : vector<1x32xf32> to vector<1x32xbf16>
    %72 = arith.extf %71 : vector<1x32xbf16> to vector<1x32xf32>
    %73 = vector.shape_cast %72 : vector<1x32xf32> to vector<1x1x1x32xf32>
    %74 = vector.broadcast %69 : vector<1x26x32x1xf32> to vector<1x26x32x32xf32>
    %75 = vector.broadcast %73 : vector<1x1x1x32xf32> to vector<1x26x32x32xf32>
    %76 = arith.mulf %74, %75 : vector<1x26x32x32xf32>
    %77 = arith.addf %66, %76 : vector<1x26x32x32xf32>
    %c0_35 = arith.constant 0 : index
    %c2_36 = arith.constant 2 : index
    %c1_37 = arith.constant 1 : index
    %c0_38 = arith.constant 0 : index
    %78 = vector.load %arg1[%c0_35, %c2_36, %c1_37, %c0_38] : memref<1x28x34x1xf32, #tpu.memory_space<vmem>>, vector<1x26x32x1xf32>
    %79 = arith.truncf %78 : vector<1x26x32x1xf32> to vector<1x26x32x1xbf16>
    %80 = arith.extf %79 : vector<1x26x32x1xbf16> to vector<1x26x32x1xf32>
    %c7 = arith.constant 7 : index
    %c0_39 = arith.constant 0 : index
    %81 = vector.load %arg2[%c7, %c0_39] : memref<9x32xf32, #tpu.memory_space<vmem>>, vector<1x32xf32>
    %82 = arith.truncf %81 : vector<1x32xf32> to vector<1x32xbf16>
    %83 = arith.extf %82 : vector<1x32xbf16> to vector<1x32xf32>
    %84 = vector.shape_cast %83 : vector<1x32xf32> to vector<1x1x1x32xf32>
    %85 = vector.broadcast %80 : vector<1x26x32x1xf32> to vector<1x26x32x32xf32>
    %86 = vector.broadcast %84 : vector<1x1x1x32xf32> to vector<1x26x32x32xf32>
    %87 = arith.mulf %85, %86 : vector<1x26x32x32xf32>
    %88 = arith.addf %77, %87 : vector<1x26x32x32xf32>
    %c0_40 = arith.constant 0 : index
    %c2_41 = arith.constant 2 : index
    %c2_42 = arith.constant 2 : index
    %c0_43 = arith.constant 0 : index
    %89 = vector.load %arg1[%c0_40, %c2_41, %c2_42, %c0_43] : memref<1x28x34x1xf32, #tpu.memory_space<vmem>>, vector<1x26x32x1xf32>
    %90 = arith.truncf %89 : vector<1x26x32x1xf32> to vector<1x26x32x1xbf16>
    %91 = arith.extf %90 : vector<1x26x32x1xbf16> to vector<1x26x32x1xf32>
    %c8 = arith.constant 8 : index
    %c0_44 = arith.constant 0 : index
    %92 = vector.load %arg2[%c8, %c0_44] : memref<9x32xf32, #tpu.memory_space<vmem>>, vector<1x32xf32>
    %93 = arith.truncf %92 : vector<1x32xf32> to vector<1x32xbf16>
    %94 = arith.extf %93 : vector<1x32xbf16> to vector<1x32xf32>
    %95 = vector.shape_cast %94 : vector<1x32xf32> to vector<1x1x1x32xf32>
    %96 = vector.broadcast %91 : vector<1x26x32x1xf32> to vector<1x26x32x32xf32>
    %97 = vector.broadcast %95 : vector<1x1x1x32xf32> to vector<1x26x32x32xf32>
    %98 = arith.mulf %96, %97 : vector<1x26x32x32xf32>
    %99 = arith.addf %88, %98 : vector<1x26x32x32xf32>
    %c0_45 = arith.constant 0 : index
    %c0_46 = arith.constant 0 : index
    %100 = vector.load %arg3[%c0_45, %c0_46] : memref<1x32xf32, #tpu.memory_space<vmem>>, vector<1x32xf32>
    %101 = vector.shape_cast %100 : vector<1x32xf32> to vector<1x1x1x32xf32>
    %102 = vector.broadcast %101 : vector<1x1x1x32xf32> to vector<1x26x32x32xf32>
    %103 = arith.addf %99, %102 : vector<1x26x32x32xf32>
    %cst_47 = arith.constant 0.000000e+00 : f32
    %104 = vector.broadcast %cst_47 : f32 to vector<1x26x32x32xf32>
    %105 = arith.maximumf %103, %104 : vector<1x26x32x32xf32>
    %106 = vector.extract_strided_slice %105 {offsets = [0, 0, 0, 0], sizes = [1, 1, 32, 32], strides = [1, 1, 1, 1]} : vector<1x26x32x32xf32> to vector<1x1x32x32xf32>
    %107 = vector.extract_strided_slice %105 {offsets = [0, 1, 0, 0], sizes = [1, 1, 32, 32], strides = [1, 1, 1, 1]} : vector<1x26x32x32xf32> to vector<1x1x32x32xf32>
    %108 = arith.maximumf %106, %107 : vector<1x1x32x32xf32>
    %109 = vector.extract_strided_slice %105 {offsets = [0, 2, 0, 0], sizes = [1, 1, 32, 32], strides = [1, 1, 1, 1]} : vector<1x26x32x32xf32> to vector<1x1x32x32xf32>
    %110 = vector.extract_strided_slice %105 {offsets = [0, 3, 0, 0], sizes = [1, 1, 32, 32], strides = [1, 1, 1, 1]} : vector<1x26x32x32xf32> to vector<1x1x32x32xf32>
    %111 = arith.maximumf %109, %110 : vector<1x1x32x32xf32>
    %112 = vector.extract_strided_slice %105 {offsets = [0, 4, 0, 0], sizes = [1, 1, 32, 32], strides = [1, 1, 1, 1]} : vector<1x26x32x32xf32> to vector<1x1x32x32xf32>
    %113 = vector.extract_strided_slice %105 {offsets = [0, 5, 0, 0], sizes = [1, 1, 32, 32], strides = [1, 1, 1, 1]} : vector<1x26x32x32xf32> to vector<1x1x32x32xf32>
    %114 = arith.maximumf %112, %113 : vector<1x1x32x32xf32>
    %115 = vector.extract_strided_slice %105 {offsets = [0, 6, 0, 0], sizes = [1, 1, 32, 32], strides = [1, 1, 1, 1]} : vector<1x26x32x32xf32> to vector<1x1x32x32xf32>
    %116 = vector.extract_strided_slice %105 {offsets = [0, 7, 0, 0], sizes = [1, 1, 32, 32], strides = [1, 1, 1, 1]} : vector<1x26x32x32xf32> to vector<1x1x32x32xf32>
    %117 = arith.maximumf %115, %116 : vector<1x1x32x32xf32>
    %118 = vector.extract_strided_slice %105 {offsets = [0, 8, 0, 0], sizes = [1, 1, 32, 32], strides = [1, 1, 1, 1]} : vector<1x26x32x32xf32> to vector<1x1x32x32xf32>
    %119 = vector.extract_strided_slice %105 {offsets = [0, 9, 0, 0], sizes = [1, 1, 32, 32], strides = [1, 1, 1, 1]} : vector<1x26x32x32xf32> to vector<1x1x32x32xf32>
    %120 = arith.maximumf %118, %119 : vector<1x1x32x32xf32>
    %121 = vector.extract_strided_slice %105 {offsets = [0, 10, 0, 0], sizes = [1, 1, 32, 32], strides = [1, 1, 1, 1]} : vector<1x26x32x32xf32> to vector<1x1x32x32xf32>
    %122 = vector.extract_strided_slice %105 {offsets = [0, 11, 0, 0], sizes = [1, 1, 32, 32], strides = [1, 1, 1, 1]} : vector<1x26x32x32xf32> to vector<1x1x32x32xf32>
    %123 = arith.maximumf %121, %122 : vector<1x1x32x32xf32>
    %124 = vector.extract_strided_slice %105 {offsets = [0, 12, 0, 0], sizes = [1, 1, 32, 32], strides = [1, 1, 1, 1]} : vector<1x26x32x32xf32> to vector<1x1x32x32xf32>
    %125 = vector.extract_strided_slice %105 {offsets = [0, 13, 0, 0], sizes = [1, 1, 32, 32], strides = [1, 1, 1, 1]} : vector<1x26x32x32xf32> to vector<1x1x32x32xf32>
    %126 = arith.maximumf %124, %125 : vector<1x1x32x32xf32>
    %127 = vector.extract_strided_slice %105 {offsets = [0, 14, 0, 0], sizes = [1, 1, 32, 32], strides = [1, 1, 1, 1]} : vector<1x26x32x32xf32> to vector<1x1x32x32xf32>
    %128 = vector.extract_strided_slice %105 {offsets = [0, 15, 0, 0], sizes = [1, 1, 32, 32], strides = [1, 1, 1, 1]} : vector<1x26x32x32xf32> to vector<1x1x32x32xf32>
    %129 = arith.maximumf %127, %128 : vector<1x1x32x32xf32>
    %130 = vector.extract_strided_slice %105 {offsets = [0, 16, 0, 0], sizes = [1, 1, 32, 32], strides = [1, 1, 1, 1]} : vector<1x26x32x32xf32> to vector<1x1x32x32xf32>
    %131 = vector.extract_strided_slice %105 {offsets = [0, 17, 0, 0], sizes = [1, 1, 32, 32], strides = [1, 1, 1, 1]} : vector<1x26x32x32xf32> to vector<1x1x32x32xf32>
    %132 = arith.maximumf %130, %131 : vector<1x1x32x32xf32>
    %133 = vector.extract_strided_slice %105 {offsets = [0, 18, 0, 0], sizes = [1, 1, 32, 32], strides = [1, 1, 1, 1]} : vector<1x26x32x32xf32> to vector<1x1x32x32xf32>
    %134 = vector.extract_strided_slice %105 {offsets = [0, 19, 0, 0], sizes = [1, 1, 32, 32], strides = [1, 1, 1, 1]} : vector<1x26x32x32xf32> to vector<1x1x32x32xf32>
    %135 = arith.maximumf %133, %134 : vector<1x1x32x32xf32>
    %136 = vector.extract_strided_slice %105 {offsets = [0, 20, 0, 0], sizes = [1, 1, 32, 32], strides = [1, 1, 1, 1]} : vector<1x26x32x32xf32> to vector<1x1x32x32xf32>
    %137 = vector.extract_strided_slice %105 {offsets = [0, 21, 0, 0], sizes = [1, 1, 32, 32], strides = [1, 1, 1, 1]} : vector<1x26x32x32xf32> to vector<1x1x32x32xf32>
    %138 = arith.maximumf %136, %137 : vector<1x1x32x32xf32>
    %139 = vector.extract_strided_slice %105 {offsets = [0, 22, 0, 0], sizes = [1, 1, 32, 32], strides = [1, 1, 1, 1]} : vector<1x26x32x32xf32> to vector<1x1x32x32xf32>
    %140 = vector.extract_strided_slice %105 {offsets = [0, 23, 0, 0], sizes = [1, 1, 32, 32], strides = [1, 1, 1, 1]} : vector<1x26x32x32xf32> to vector<1x1x32x32xf32>
    %141 = arith.maximumf %139, %140 : vector<1x1x32x32xf32>
    %142 = vector.extract_strided_slice %105 {offsets = [0, 24, 0, 0], sizes = [1, 1, 32, 32], strides = [1, 1, 1, 1]} : vector<1x26x32x32xf32> to vector<1x1x32x32xf32>
    %143 = vector.extract_strided_slice %105 {offsets = [0, 25, 0, 0], sizes = [1, 1, 32, 32], strides = [1, 1, 1, 1]} : vector<1x26x32x32xf32> to vector<1x1x32x32xf32>
    %144 = arith.maximumf %142, %143 : vector<1x1x32x32xf32>
    %145 = tpu.concatenate %108, %111, %114, %117, %120, %123, %126, %129, %132, %135, %138, %141, %144 in 1 : vector<1x1x32x32xf32>, vector<1x1x32x32xf32>, vector<1x1x32x32xf32>, vector<1x1x32x32xf32>, vector<1x1x32x32xf32>, vector<1x1x32x32xf32>, vector<1x1x32x32xf32>, vector<1x1x32x32xf32>, vector<1x1x32x32xf32>, vector<1x1x32x32xf32>, vector<1x1x32x32xf32>, vector<1x1x32x32xf32>, vector<1x1x32x32xf32> -> vector<1x13x32x32xf32>
    %146 = vector.extract_strided_slice %145 {offsets = [0, 0, 0, 0], sizes = [1, 13, 1, 32], strides = [1, 1, 1, 1]} : vector<1x13x32x32xf32> to vector<1x13x1x32xf32>
    %147 = vector.extract_strided_slice %145 {offsets = [0, 0, 1, 0], sizes = [1, 13, 1, 32], strides = [1, 1, 1, 1]} : vector<1x13x32x32xf32> to vector<1x13x1x32xf32>
    %148 = arith.maximumf %146, %147 : vector<1x13x1x32xf32>
    %149 = vector.extract_strided_slice %145 {offsets = [0, 0, 2, 0], sizes = [1, 13, 1, 32], strides = [1, 1, 1, 1]} : vector<1x13x32x32xf32> to vector<1x13x1x32xf32>
    %150 = vector.extract_strided_slice %145 {offsets = [0, 0, 3, 0], sizes = [1, 13, 1, 32], strides = [1, 1, 1, 1]} : vector<1x13x32x32xf32> to vector<1x13x1x32xf32>
    %151 = arith.maximumf %149, %150 : vector<1x13x1x32xf32>
    %152 = vector.extract_strided_slice %145 {offsets = [0, 0, 4, 0], sizes = [1, 13, 1, 32], strides = [1, 1, 1, 1]} : vector<1x13x32x32xf32> to vector<1x13x1x32xf32>
    %153 = vector.extract_strided_slice %145 {offsets = [0, 0, 5, 0], sizes = [1, 13, 1, 32], strides = [1, 1, 1, 1]} : vector<1x13x32x32xf32> to vector<1x13x1x32xf32>
    %154 = arith.maximumf %152, %153 : vector<1x13x1x32xf32>
    %155 = vector.extract_strided_slice %145 {offsets = [0, 0, 6, 0], sizes = [1, 13, 1, 32], strides = [1, 1, 1, 1]} : vector<1x13x32x32xf32> to vector<1x13x1x32xf32>
    %156 = vector.extract_strided_slice %145 {offsets = [0, 0, 7, 0], sizes = [1, 13, 1, 32], strides = [1, 1, 1, 1]} : vector<1x13x32x32xf32> to vector<1x13x1x32xf32>
    %157 = arith.maximumf %155, %156 : vector<1x13x1x32xf32>
    %158 = vector.extract_strided_slice %145 {offsets = [0, 0, 8, 0], sizes = [1, 13, 1, 32], strides = [1, 1, 1, 1]} : vector<1x13x32x32xf32> to vector<1x13x1x32xf32>
    %159 = vector.extract_strided_slice %145 {offsets = [0, 0, 9, 0], sizes = [1, 13, 1, 32], strides = [1, 1, 1, 1]} : vector<1x13x32x32xf32> to vector<1x13x1x32xf32>
    %160 = arith.maximumf %158, %159 : vector<1x13x1x32xf32>
    %161 = vector.extract_strided_slice %145 {offsets = [0, 0, 10, 0], sizes = [1, 13, 1, 32], strides = [1, 1, 1, 1]} : vector<1x13x32x32xf32> to vector<1x13x1x32xf32>
    %162 = vector.extract_strided_slice %145 {offsets = [0, 0, 11, 0], sizes = [1, 13, 1, 32], strides = [1, 1, 1, 1]} : vector<1x13x32x32xf32> to vector<1x13x1x32xf32>
    %163 = arith.maximumf %161, %162 : vector<1x13x1x32xf32>
    %164 = vector.extract_strided_slice %145 {offsets = [0, 0, 12, 0], sizes = [1, 13, 1, 32], strides = [1, 1, 1, 1]} : vector<1x13x32x32xf32> to vector<1x13x1x32xf32>
    %165 = vector.extract_strided_slice %145 {offsets = [0, 0, 13, 0], sizes = [1, 13, 1, 32], strides = [1, 1, 1, 1]} : vector<1x13x32x32xf32> to vector<1x13x1x32xf32>
    %166 = arith.maximumf %164, %165 : vector<1x13x1x32xf32>
    %167 = vector.extract_strided_slice %145 {offsets = [0, 0, 14, 0], sizes = [1, 13, 1, 32], strides = [1, 1, 1, 1]} : vector<1x13x32x32xf32> to vector<1x13x1x32xf32>
    %168 = vector.extract_strided_slice %145 {offsets = [0, 0, 15, 0], sizes = [1, 13, 1, 32], strides = [1, 1, 1, 1]} : vector<1x13x32x32xf32> to vector<1x13x1x32xf32>
    %169 = arith.maximumf %167, %168 : vector<1x13x1x32xf32>
    %170 = vector.extract_strided_slice %145 {offsets = [0, 0, 16, 0], sizes = [1, 13, 1, 32], strides = [1, 1, 1, 1]} : vector<1x13x32x32xf32> to vector<1x13x1x32xf32>
    %171 = vector.extract_strided_slice %145 {offsets = [0, 0, 17, 0], sizes = [1, 13, 1, 32], strides = [1, 1, 1, 1]} : vector<1x13x32x32xf32> to vector<1x13x1x32xf32>
    %172 = arith.maximumf %170, %171 : vector<1x13x1x32xf32>
    %173 = vector.extract_strided_slice %145 {offsets = [0, 0, 18, 0], sizes = [1, 13, 1, 32], strides = [1, 1, 1, 1]} : vector<1x13x32x32xf32> to vector<1x13x1x32xf32>
    %174 = vector.extract_strided_slice %145 {offsets = [0, 0, 19, 0], sizes = [1, 13, 1, 32], strides = [1, 1, 1, 1]} : vector<1x13x32x32xf32> to vector<1x13x1x32xf32>
    %175 = arith.maximumf %173, %174 : vector<1x13x1x32xf32>
    %176 = vector.extract_strided_slice %145 {offsets = [0, 0, 20, 0], sizes = [1, 13, 1, 32], strides = [1, 1, 1, 1]} : vector<1x13x32x32xf32> to vector<1x13x1x32xf32>
    %177 = vector.extract_strided_slice %145 {offsets = [0, 0, 21, 0], sizes = [1, 13, 1, 32], strides = [1, 1, 1, 1]} : vector<1x13x32x32xf32> to vector<1x13x1x32xf32>
    %178 = arith.maximumf %176, %177 : vector<1x13x1x32xf32>
    %179 = vector.extract_strided_slice %145 {offsets = [0, 0, 22, 0], sizes = [1, 13, 1, 32], strides = [1, 1, 1, 1]} : vector<1x13x32x32xf32> to vector<1x13x1x32xf32>
    %180 = vector.extract_strided_slice %145 {offsets = [0, 0, 23, 0], sizes = [1, 13, 1, 32], strides = [1, 1, 1, 1]} : vector<1x13x32x32xf32> to vector<1x13x1x32xf32>
    %181 = arith.maximumf %179, %180 : vector<1x13x1x32xf32>
    %182 = vector.extract_strided_slice %145 {offsets = [0, 0, 24, 0], sizes = [1, 13, 1, 32], strides = [1, 1, 1, 1]} : vector<1x13x32x32xf32> to vector<1x13x1x32xf32>
    %183 = vector.extract_strided_slice %145 {offsets = [0, 0, 25, 0], sizes = [1, 13, 1, 32], strides = [1, 1, 1, 1]} : vector<1x13x32x32xf32> to vector<1x13x1x32xf32>
    %184 = arith.maximumf %182, %183 : vector<1x13x1x32xf32>
    %cst_48 = arith.constant 0.000000e+00 : f32
    %185 = vector.broadcast %cst_48 : f32 to vector<1x13x5x32xf32>
    %186 = tpu.concatenate %148, %151, %154, %157, %160, %163, %166, %169, %172, %175, %178, %181, %184, %185 in 2 : vector<1x13x1x32xf32>, vector<1x13x1x32xf32>, vector<1x13x1x32xf32>, vector<1x13x1x32xf32>, vector<1x13x1x32xf32>, vector<1x13x1x32xf32>, vector<1x13x1x32xf32>, vector<1x13x1x32xf32>, vector<1x13x1x32xf32>, vector<1x13x1x32xf32>, vector<1x13x1x32xf32>, vector<1x13x1x32xf32>, vector<1x13x1x32xf32>, vector<1x13x5x32xf32> -> vector<1x13x18x32xf32>
    %c0_49 = arith.constant 0 : index
    %c0_50 = arith.constant 0 : index
    %c0_51 = arith.constant 0 : index
    %c0_52 = arith.constant 0 : index
    %187 = vector.load %arg4[%c0_49, %c0_50, %c0_51, %c0_52] : memref<1x13x18x32xf32, #tpu.memory_space<vmem>>, vector<1x13x18x32xf32>
    tpu.vector_store %arg4[%c0_49, %c0_50, %c0_51, %c0_52], %186 {strides = array<i32>} : memref<1x13x18x32xf32, #tpu.memory_space<vmem>>, vector<1x13x18x32xf32>,
    return
  }
  func.func @transform_0(%arg0: i32) -> (i32, i32, i32, i32) {
    %c0_i32 = arith.constant 0 : i32
    %c0_i32_0 = arith.constant 0 : i32
    %c0_i32_1 = arith.constant 0 : i32
    %c0_i32_2 = arith.constant 0 : i32
    return %arg0, %c0_i32, %c0_i32_0, %c0_i32_1 : i32, i32, i32, i32
  }
  func.func @transform_1(%arg0: i32) -> (i32, i32) {
    %c0_i32 = arith.constant 0 : i32
    %c0_i32_0 = arith.constant 0 : i32
    %c0_i32_1 = arith.constant 0 : i32
    return %c0_i32, %c0_i32_0 : i32, i32
  }
  func.func @transform_2(%arg0: i32) -> (i32, i32) {
    %c0_i32 = arith.constant 0 : i32
    %c0_i32_0 = arith.constant 0 : i32
    %c0_i32_1 = arith.constant 0 : i32
    return %c0_i32, %c0_i32_0 : i32, i32
  }
  func.func @transform_3(%arg0: i32) -> (i32, i32, i32, i32) {
    %c0_i32 = arith.constant 0 : i32
    %c0_i32_0 = arith.constant 0 : i32
    %c0_i32_1 = arith.constant 0 : i32
    %c0_i32_2 = arith.constant 0 : i32
    return %arg0, %c0_i32, %c0_i32_0, %c0_i32_1 : i32, i32, i32, i32
  }
}

module attributes {stable_mosaic.version = 11 : i64} {
  func.func @fc_softmax_kernel(%arg0: i32, %arg1: memref<2x800xf32, #tpu.memory_space<vmem>>, %arg2: memref<800x128xf32, #tpu.memory_space<vmem>>, %arg3: memref<1x128xf32, #tpu.memory_space<vmem>>, %arg4: memref<128x10xf32, #tpu.memory_space<vmem>>, %arg5: memref<1x10xf32, #tpu.memory_space<vmem>>, %arg6: memref<2x10xf32, #tpu.memory_space<vmem>>) attributes {dimension_semantics = [#tpu.dimension_semantics<parallel>], iteration_bounds = array<i64: 1>, scalar_prefetch = 0 : i64, scratch_operands = 0 : i64, tpu.core_type = #tpu.core_type<tc>, window_params = [{transform_indices = @transform_0, window_bounds = array<i64: 2, 800>}, {pipeline_mode = #tpu.pipeline_mode<synchronous>, transform_indices = @transform_1, window_bounds = array<i64: 800, 128>}, {pipeline_mode = #tpu.pipeline_mode<synchronous>, transform_indices = @transform_2, window_bounds = array<i64: 1, 128>}, {pipeline_mode = #tpu.pipeline_mode<synchronous>, transform_indices = @transform_3, window_bounds = array<i64: 128, 10>}, {pipeline_mode = #tpu.pipeline_mode<synchronous>, transform_indices = @transform_4, window_bounds = array<i64: 1, 10>}, {transform_indices = @transform_5, window_bounds = array<i64: 2, 10>}]} {
    %c0 = arith.constant 0 : index
    %c0_0 = arith.constant 0 : index
    %0 = vector.load %arg1[%c0, %c0_0] : memref<2x800xf32, #tpu.memory_space<vmem>>, vector<2x800xf32>
    %1 = arith.truncf %0 : vector<2x800xf32> to vector<2x800xbf16>
    %c0_1 = arith.constant 0 : index
    %c0_2 = arith.constant 0 : index
    %2 = vector.load %arg2[%c0_1, %c0_2] : memref<800x128xf32, #tpu.memory_space<vmem>>, vector<800x128xf32>
    %3 = arith.truncf %2 : vector<800x128xf32> to vector<800x128xbf16>
    %cst = arith.constant dense<0.000000e+00> : vector<2x128xf32>
    %4 = tpu.matmul %1, %3, %cst {dimension_numbers = #tpu.dot_dimension_numbers<[1], [0], [0], [1], [0, 0, 1, 1], [], []>} : vector<2x800xbf16>, vector<800x128xbf16>, vector<2x128xf32> -> vector<2x128xf32>
    %c0_3 = arith.constant 0 : index
    %c0_4 = arith.constant 0 : index
    %5 = vector.load %arg3[%c0_3, %c0_4] : memref<1x128xf32, #tpu.memory_space<vmem>>, vector<1x128xf32>
    %6 = vector.broadcast %5 : vector<1x128xf32> to vector<2x128xf32>
    %7 = arith.addf %4, %6 : vector<2x128xf32>
    %cst_5 = arith.constant 0.000000e+00 : f32
    %8 = vector.broadcast %cst_5 : f32 to vector<2x128xf32>
    %9 = arith.maximumf %7, %8 : vector<2x128xf32>
    %10 = arith.truncf %9 : vector<2x128xf32> to vector<2x128xbf16>
    %c0_6 = arith.constant 0 : index
    %c0_7 = arith.constant 0 : index
    %11 = vector.load %arg4[%c0_6, %c0_7] : memref<128x10xf32, #tpu.memory_space<vmem>>, vector<128x10xf32>
    %12 = arith.truncf %11 : vector<128x10xf32> to vector<128x10xbf16>
    %cst_8 = arith.constant dense<0.000000e+00> : vector<2x10xf32>
    %13 = tpu.matmul %10, %12, %cst_8 {dimension_numbers = #tpu.dot_dimension_numbers<[1], [0], [0], [1], [0, 0, 1, 1], [], []>} : vector<2x128xbf16>, vector<128x10xbf16>, vector<2x10xf32> -> vector<2x10xf32>
    %c0_9 = arith.constant 0 : index
    %c0_10 = arith.constant 0 : index
    %14 = vector.load %arg5[%c0_9, %c0_10] : memref<1x10xf32, #tpu.memory_space<vmem>>, vector<1x10xf32>
    %15 = vector.broadcast %14 : vector<1x10xf32> to vector<2x10xf32>
    %16 = arith.addf %13, %15 : vector<2x10xf32>
    %cst_11 = arith.constant dense<0xFF800000> : vector<2xf32>
    %17 = vector.multi_reduction <maximumf>, %16, %cst_11 [1] : vector<2x10xf32> to vector<2xf32>
    %18 = vector.shape_cast %17 : vector<2xf32> to vector<2x1xf32>
    %19 = vector.broadcast %18 : vector<2x1xf32> to vector<2x10xf32>
    %20 = arith.subf %16, %19 : vector<2x10xf32>
    %21 = math.exp %20 : vector<2x10xf32>
    %cst_12 = arith.constant dense<0.000000e+00> : vector<2xf32>
    %22 = vector.multi_reduction <add>, %21, %cst_12 [1] : vector<2x10xf32> to vector<2xf32>
    %23 = vector.shape_cast %22 : vector<2xf32> to vector<2x1xf32>
    %24 = vector.broadcast %23 : vector<2x1xf32> to vector<2x10xf32>
    %25 = arith.divf %21, %24 : vector<2x10xf32>
    %c0_13 = arith.constant 0 : index
    %c0_14 = arith.constant 0 : index
    %26 = vector.load %arg6[%c0_13, %c0_14] : memref<2x10xf32, #tpu.memory_space<vmem>>, vector<2x10xf32>
    tpu.vector_store %arg6[%c0_13, %c0_14], %25 {strides = array<i32>} : memref<2x10xf32, #tpu.memory_space<vmem>>, vector<2x10xf32>,
    return
  }
  func.func @transform_0(%arg0: i32) -> (i32, i32) {
    %c0_i32 = arith.constant 0 : i32
    %c0_i32_0 = arith.constant 0 : i32
    return %arg0, %c0_i32 : i32, i32
  }
  func.func @transform_1(%arg0: i32) -> (i32, i32) {
    %c0_i32 = arith.constant 0 : i32
    %c0_i32_0 = arith.constant 0 : i32
    %c0_i32_1 = arith.constant 0 : i32
    return %c0_i32, %c0_i32_0 : i32, i32
  }
  func.func @transform_2(%arg0: i32) -> (i32, i32) {
    %c0_i32 = arith.constant 0 : i32
    %c0_i32_0 = arith.constant 0 : i32
    %c0_i32_1 = arith.constant 0 : i32
    return %c0_i32, %c0_i32_0 : i32, i32
  }
  func.func @transform_3(%arg0: i32) -> (i32, i32) {
    %c0_i32 = arith.constant 0 : i32
    %c0_i32_0 = arith.constant 0 : i32
    %c0_i32_1 = arith.constant 0 : i32
    return %c0_i32, %c0_i32_0 : i32, i32
  }
  func.func @transform_4(%arg0: i32) -> (i32, i32) {
    %c0_i32 = arith.constant 0 : i32
    %c0_i32_0 = arith.constant 0 : i32
    %c0_i32_1 = arith.constant 0 : i32
    return %c0_i32, %c0_i32_0 : i32, i32
  }
  func.func @transform_5(%arg0: i32) -> (i32, i32) {
    %c0_i32 = arith.constant 0 : i32
    %c0_i32_0 = arith.constant 0 : i32
    return %arg0, %c0_i32 : i32, i32
  }
}

</mosaic_0001>

<llo_original>
// kernel: cnn_forward.4
$region0: #{cnn_forward.4}
  #allocation0 [shape = 'u32[]', space=smem, size = 0x4, offset = 0x4, fixed_abs, tag = 'smem constant byte address 0x4 - core index']
  #allocation1 [shape = 'u32[144,128]{1,0:T(1,128)}', space=vmem, size = 0x12000, scoped, tag = 'internal scratch']
  %s0 = inlined_call_operand.vmem [shape: f32[2,13,18,32], index: 0, kind: input, shape index: {}]
  %s1 = inlined_call_operand.vmem [shape: f32[288,32], index: 1, kind: input, shape index: {}]
  %s2 = inlined_call_operand.vmem [shape: f32[1,32], index: 2, kind: input, shape index: {}]
  %s3 = inlined_call_operand.vmem [shape: f32[2,5,5,32], index: 3, kind: output, shape index: {}]
  %s4 = sld [smem:[#allocation0]]
  $region45: #{cnn_forward.4} parent=0
    _
  %s6 = ssub.s32 1, %s4
  %s7 = scalar_select 0, %s6, %s4
  loop: start=0, step=1, limit=4
  $region2: #{cnn_forward.4} parent=0 // loop_pre_header
    _
  $region3: #{cnn_forward.4} parent=0 // loop_header
    %s9 = sphi 0, %s13
    %p10 = scmp.ge.s32.totalorder %s9, 4
    %s19 = sphi 0, %s21
    %s22 = sphi 0, %s19
    %s23 = sphi 0, %s22
    %s39 = sphi 0, %s23
    %s43 = sphi 0, %s43
    %s45 = sphi 0, %s43
    %s46 = sphi 0, %s45
    %s60 = sphi 0, %s46
    %s64 = sphi 0, %s64
    %s66 = sphi 0, %s64
    %s67 = sphi 0, %s66
    %s81 = sphi 0, %s67
    %s87 = sphi 0, %s89
    %s90 = sphi 0, %s87
    %s91 = sphi 0, %s90
    %s107 = sphi 0, %s91
  $region4: #{cnn_forward.4} parent=0 // loop_header_branch
    %12 = sbr.rel (%p10) target = $region8
  $region5: #{cnn_forward.4} parent=0 // loop_body
    %s14 = ssub.s32 %s9, 1
    %s15 = ssub.s32 %s9, 2
    %s16 = sadd.s32 %s9, 1
    %s17 = ssub.s32 %s9, %s16
    %p18 = scmp.eq.s32.totalorder %s17, 0
    %s20 = sadd.s32 %s19, 1
    %s21 = scalar_select %p18, %s19, %s20
    %p24 = pneg %p18
    %p25 = scmp.eq.s32.totalorder %s9, 1
    %p26 = por %p24, %p25
    %p27 = scmp.ne.s32.totalorder %s19, %s22
    %p28 = scmp.eq.s32.totalorder %s9, 0
    %p29 = por %p27, %p28
    %p30 = scmp.ne.s32.totalorder %s19, %s22
    %p31 = scmp.eq.s32.totalorder %s14, 1
    %p32 = por %p30, %p31
    %p33 = scmp.ne.s32.totalorder %s22, %s23
    %p34 = scmp.eq.s32.totalorder %s14, 0
    %p35 = por %p33, %p34
    %p36 = scmp.ne.s32.totalorder %s22, %s23
    %p37 = scmp.eq.s32.totalorder %s15, 1
    %p38 = por %p36, %p37
    %p40 = scmp.ne.s32.totalorder %s23, %s39
    %p41 = scmp.eq.s32.totalorder %s15, 0
    %p42 = por %p40, %p41
    %s44 = sadd.s32 %s43, 1
    %p47 = scmp.eq.s32.totalorder %s9, 1
    %p48 = scmp.ne.s32.totalorder %s43, %s45
    %p49 = scmp.eq.s32.totalorder %s9, 0
    %p50 = por %p48, %p49
    %p51 = scmp.ne.s32.totalorder %s43, %s45
    %p52 = scmp.eq.s32.totalorder %s14, 1
    %p53 = por %p51, %p52
    %p54 = scmp.ne.s32.totalorder %s45, %s46
    %p55 = scmp.eq.s32.totalorder %s14, 0
    %p56 = por %p54, %p55
    %p57 = scmp.ne.s32.totalorder %s45, %s46
    %p58 = scmp.eq.s32.totalorder %s15, 1
    %p59 = por %p57, %p58
    %p61 = scmp.ne.s32.totalorder %s46, %s60
    %p62 = scmp.eq.s32.totalorder %s15, 0
    %p63 = por %p61, %p62
    %s65 = sadd.s32 %s64, 1
    %p68 = scmp.eq.s32.totalorder %s9, 1
    %p69 = scmp.ne.s32.totalorder %s64, %s66
    %p70 = scmp.eq.s32.totalorder %s9, 0
    %p71 = por %p69, %p70
    %p72 = scmp.ne.s32.totalorder %s64, %s66
    %p73 = scmp.eq.s32.totalorder %s14, 1
    %p74 = por %p72, %p73
    %p75 = scmp.ne.s32.totalorder %s66, %s67
    %p76 = scmp.eq.s32.totalorder %s14, 0
    %p77 = por %p75, %p76
    %p78 = scmp.ne.s32.totalorder %s66, %s67
    %p79 = scmp.eq.s32.totalorder %s15, 1
    %p80 = por %p78, %p79
    %p82 = scmp.ne.s32.totalorder %s67, %s81
    %p83 = scmp.eq.s32.totalorder %s15, 0
    %p84 = por %p82, %p83
    %s85 = ssub.s32 %s9, %s16
    %p86 = scmp.eq.s32.totalorder %s85, 0
    %s88 = sadd.s32 %s87, 1
    %s89 = scalar_select %p86, %s87, %s88
    %p92 = pneg %p86
    %p93 = scmp.eq.s32.totalorder %s9, 1
    %p94 = por %p92, %p93
    %p95 = scmp.ne.s32.totalorder %s87, %s90
    %p96 = scmp.eq.s32.totalorder %s9, 0
    %p97 = por %p95, %p96
    %p98 = scmp.ne.s32.totalorder %s87, %s90
    %p99 = scmp.eq.s32.totalorder %s14, 1
    %p100 = por %p98, %p99
    %p101 = scmp.ne.s32.totalorder %s90, %s91
    %p102 = scmp.eq.s32.totalorder %s14, 0
    %p103 = por %p101, %p102
    %p104 = scmp.ne.s32.totalorder %s90, %s91
    %p105 = scmp.eq.s32.totalorder %s15, 1
    %p106 = por %p104, %p105
    %p108 = scmp.ne.s32.totalorder %s91, %s107
    %p109 = scmp.eq.s32.totalorder %s15, 0
    %p110 = por %p108, %p109
    %p111 = scmp.le.s32.totalorder 1, %s9
    %p112 = scmp.lt.s32.totalorder %s9, 3
    %p113 = pnand %p111, %p112
    %p114 = pneg %p113
    // Predicated region
    $region9: #{cnn_forward.4} parent=5 // pred_check
      _
    $region10: #{cnn_forward.4} parent=5 // pred_check_branch
      %116 = sbr.rel (%p113) target = $region12
    $region11: #{cnn_forward.4} parent=5 // pred_region
      %s117 = ssub.s32 %s9, 1
      // Predicated region
      $region13: #{cnn_forward.4} parent=11 // pred_check
        %p118 = pneg %p56
      $region14: #{cnn_forward.4} parent=11 // pred_check_branch
        %120 = sbr.rel (%p118) target = $region16
      $region15: #{cnn_forward.4} parent=11 // pred_region
        _
      $region16: #{cnn_forward.4} parent=11 // pred_fallthru
        _
      // Predicated region
      $region17: #{cnn_forward.4} parent=11 // pred_check
        %p121 = pneg %p77
      $region18: #{cnn_forward.4} parent=11 // pred_check_branch
        %123 = sbr.rel (%p121) target = $region20
      $region19: #{cnn_forward.4} parent=11 // pred_region
        _
      $region20: #{cnn_forward.4} parent=11 // pred_fallthru
        _
    $region12: #{cnn_forward.4} parent=5 // pred_fallthru
      _
    %p124 = scmp.lt.s32.totalorder %s9, 2
    // Predicated region
    $region21: #{cnn_forward.4} parent=5 // pred_check
      %p125 = pneg %p124
    $region22: #{cnn_forward.4} parent=5 // pred_check_branch
      %127 = sbr.rel (%p125) target = $region24
    $region23: #{cnn_forward.4} parent=5 // pred_region
      // Predicated region
      $region25: #{cnn_forward.4} parent=23 // pred_check
        %p128 = pneg %p29
      $region26: #{cnn_forward.4} parent=23 // pred_check_branch
        %130 = sbr.rel (%p128) target = $region28
      $region27: #{cnn_forward.4} parent=23 // pred_region
        %p131 = scmp.lt.s32.totalorder %s9, 1
        %s132 = scalar_select %p131, %s9, 1
        %s133 = smul.addr %s132, 39
        %s134 = smul.addr %s133, 8
        %s135 = scalar_lea.vmem %s0, %s134
      $region28: #{cnn_forward.4} parent=23 // pred_fallthru
        _
    $region24: #{cnn_forward.4} parent=5 // pred_fallthru
      _
    %p136 = scmp.le.s32.totalorder 1, %s9
    %p137 = scmp.lt.s32.totalorder %s9, 3
    %p138 = pnand %p136, %p137
    %p139 = pneg %p138
    // Predicated region
    $region29: #{cnn_forward.4} parent=5 // pred_check
      _
    $region30: #{cnn_forward.4} parent=5 // pred_check_branch
      %141 = sbr.rel (%p138) target = $region32
    $region31: #{cnn_forward.4} parent=5 // pred_region
      %s142 = ssub.s32 %s9, 1
      %p143 = scmp.lt.s32.totalorder %s14, 1
      %s144 = scalar_select %p143, %s14, 1
      %s145 = smul.addr %s144, 39
      %s146 = smul.addr %s145, 8
      %s147 = scalar_lea.vmem %s0, %s146
      %p148 = pneg %p35
      %p149 = pneg %p32
      %p150 = pneg %p56
      %p151 = pneg %p53
      %p152 = pneg %p77
      %p153 = pneg %p74
      %p154 = pneg %p103
      %p155 = pneg %p100
      %p156 = scmp.lt.s32.totalorder %s14, 1
      %s157 = scalar_select %p156, %s14, 1
      %s158 = smul.addr %s157, 5
      %s159 = smul.addr %s158, 8
      %s160 = scalar_lea.vmem %s3, %s159
      %p161 = scmp.lt.s32.totalorder %s14, 1
      %s162 = scalar_select %p161, %s14, 1
      %s163 = smul.addr %s162, 39
      %s164 = smul.addr %s163, 8
      %s165 = scalar_lea.vmem %s0, %s164
      %p166 = scmp.lt.s32.totalorder %s14, 1
      %s167 = scalar_select %p166, %s14, 1
      %s168 = smul.addr %s167, 5
      %s169 = smul.addr %s168, 8
      %s170 = scalar_lea.vmem %s3, %s169
      %v172 = vld [vmem:[%s165] sm:$0xff]
      %v173 = vld [vmem:[%s165 + $0x8] sm:$0xff]
      %v174 = vld [vmem:[%s165 + $0x18] sm:$0xff]
      %v175 = vld [vmem:[%s165 + $0x20] sm:$0xff]
      %v176 = vld [vmem:[%s165 + $0x30] sm:$0xff]
      %v177 = vld [vmem:[%s165 + $0x38] sm:$0xff]
      %v178 = vld [vmem:[%s165 + $0x48] sm:$0xff]
      %v179 = vld [vmem:[%s165 + $0x50] sm:$0xff]
      %v180 = vld [vmem:[%s165 + $0x60] sm:$0xff]
      %v181 = vld [vmem:[%s165 + $0x68] sm:$0xff]
      %v182 = vld [vmem:[%s165 + $0x78] sm:$0xff]
      %v183 = vld [vmem:[%s165 + $0x80] sm:$0xff]
      %v184 = vld [vmem:[%s165 + $0x90] sm:$0xff]
      %v185 = vld [vmem:[%s165 + $0x98] sm:$0xff]
      %v186 = vld [vmem:[%s165 + $0xa8] sm:$0xff]
      %v187 = vld [vmem:[%s165 + $0xb0] sm:$0xff]
      %v188 = vld [vmem:[%s165 + $0xc0] sm:$0xff]
      %v189 = vld [vmem:[%s165 + $0xc8] sm:$0xff]
      %v190 = vld [vmem:[%s165 + $0xd8] sm:$0xff]
      %v191 = vld [vmem:[%s165 + $0xe0] sm:$0xff]
      %v192 = vld [vmem:[%s165 + $0xf0] sm:$0xff]
      %v193 = vld [vmem:[%s165 + $0xf8] sm:$0xff]
      %v194 = vld [vmem:[%s165 + $0x1] sm:$0xff]
      %v195 = vld [vmem:[%s165 + $0x9] sm:$0xff]
      %v196 = vld [vmem:[%s165 + $0x19] sm:$0xff]
      %v197 = vld [vmem:[%s165 + $0x21] sm:$0xff]
      %v198 = vld [vmem:[%s165 + $0x31] sm:$0xff]
      %v199 = vld [vmem:[%s165 + $0x39] sm:$0xff]
      %v200 = vld [vmem:[%s165 + $0x49] sm:$0xff]
      %v201 = vld [vmem:[%s165 + $0x51] sm:$0xff]
      %v202 = vld [vmem:[%s165 + $0x61] sm:$0xff]
      %v203 = vld [vmem:[%s165 + $0x69] sm:$0xff]
      %v204 = vld [vmem:[%s165 + $0x79] sm:$0xff]
      %v205 = vld [vmem:[%s165 + $0x81] sm:$0xff]
      %v206 = vld [vmem:[%s165 + $0x91] sm:$0xff]
      %v207 = vld [vmem:[%s165 + $0x99] sm:$0xff]
      %v208 = vld [vmem:[%s165 + $0xa9] sm:$0xff]
      %v209 = vld [vmem:[%s165 + $0xb1] sm:$0xff]
      %v210 = vld [vmem:[%s165 + $0xc1] sm:$0xff]
      %v211 = vld [vmem:[%s165 + $0xc9] sm:$0xff]
      %v212 = vld [vmem:[%s165 + $0xd9] sm:$0xff]
      %v213 = vld [vmem:[%s165 + $0xe1] sm:$0xff]
      %v214 = vld [vmem:[%s165 + $0xf1] sm:$0xff]
      %v215 = vld [vmem:[%s165 + $0xf9] sm:$0xff]
      %v216 = vld [vmem:[%s165 + $0x2] sm:$0xff]
      %v217 = vld [vmem:[%s165 + $0xa] sm:$0xff]
      %v218 = vld [vmem:[%s165 + $0x1a] sm:$0xff]
      %v219 = vld [vmem:[%s165 + $0x22] sm:$0xff]
      %v220 = vld [vmem:[%s165 + $0x32] sm:$0xff]
      %v221 = vld [vmem:[%s165 + $0x3a] sm:$0xff]
      %v222 = vld [vmem:[%s165 + $0x4a] sm:$0xff]
      %v223 = vld [vmem:[%s165 + $0x52] sm:$0xff]
      %v224 = vld [vmem:[%s165 + $0x62] sm:$0xff]
      %v225 = vld [vmem:[%s165 + $0x6a] sm:$0xff]
      %v226 = vld [vmem:[%s165 + $0x7a] sm:$0xff]
      %v227 = vld [vmem:[%s165 + $0x82] sm:$0xff]
      %v228 = vld [vmem:[%s165 + $0x92] sm:$0xff]
      %v229 = vld [vmem:[%s165 + $0x9a] sm:$0xff]
      %v230 = vld [vmem:[%s165 + $0xaa] sm:$0xff]
      %v231 = vld [vmem:[%s165 + $0xb2] sm:$0xff]
      %v232 = vld [vmem:[%s165 + $0xc2] sm:$0xff]
      %v233 = vld [vmem:[%s165 + $0xca] sm:$0xff]
      %v234 = vld [vmem:[%s165 + $0xda] sm:$0xff]
      %v235 = vld [vmem:[%s165 + $0xe2] sm:$0xff]
      %v236 = vld [vmem:[%s165 + $0xf2] sm:$0xff]
      %v237 = vld [vmem:[%s165 + $0xfa] sm:$0xff]
      %s238 = scalar_lea.vmem %s165, 24
      %v239 = vld [vmem:[%s238] sm:$0xff]
      %v240 = vld [vmem:[%s238 + $0x8] sm:$0xff]
      %v241 = vld [vmem:[%s238 + $0x18] sm:$0xff]
      %v242 = vld [vmem:[%s238 + $0x20] sm:$0xff]
      %v243 = vld [vmem:[%s238 + $0x30] sm:$0xff]
      %v244 = vld [vmem:[%s238 + $0x38] sm:$0xff]
      %v245 = vld [vmem:[%s238 + $0x48] sm:$0xff]
      %v246 = vld [vmem:[%s238 + $0x50] sm:$0xff]
      %v247 = vld [vmem:[%s238 + $0x60] sm:$0xff]
      %v248 = vld [vmem:[%s238 + $0x68] sm:$0xff]
      %v249 = vld [vmem:[%s238 + $0x78] sm:$0xff]
      %v250 = vld [vmem:[%s238 + $0x80] sm:$0xff]
      %v251 = vld [vmem:[%s238 + $0x90] sm:$0xff]
      %v252 = vld [vmem:[%s238 + $0x98] sm:$0xff]
      %v253 = vld [vmem:[%s238 + $0xa8] sm:$0xff]
      %v254 = vld [vmem:[%s238 + $0xb0] sm:$0xff]
      %v255 = vld [vmem:[%s238 + $0xc0] sm:$0xff]
      %v256 = vld [vmem:[%s238 + $0xc8] sm:$0xff]
      %v257 = vld [vmem:[%s238 + $0xd8] sm:$0xff]
      %v258 = vld [vmem:[%s238 + $0xe0] sm:$0xff]
      %v259 = vld [vmem:[%s238 + $0xf0] sm:$0xff]
      %v260 = vld [vmem:[%s238 + $0xf8] sm:$0xff]
      %v261 = vld [vmem:[%s238 + $0x1] sm:$0xff]
      %v262 = vld [vmem:[%s238 + $0x9] sm:$0xff]
      %v263 = vld [vmem:[%s238 + $0x19] sm:$0xff]
      %v264 = vld [vmem:[%s238 + $0x21] sm:$0xff]
      %v265 = vld [vmem:[%s238 + $0x31] sm:$0xff]
      %v266 = vld [vmem:[%s238 + $0x39] sm:$0xff]
      %v267 = vld [vmem:[%s238 + $0x49] sm:$0xff]
      %v268 = vld [vmem:[%s238 + $0x51] sm:$0xff]
      %v269 = vld [vmem:[%s238 + $0x61] sm:$0xff]
      %v270 = vld [vmem:[%s238 + $0x69] sm:$0xff]
      %v271 = vld [vmem:[%s238 + $0x79] sm:$0xff]
      %v272 = vld [vmem:[%s238 + $0x81] sm:$0xff]
      %v273 = vld [vmem:[%s238 + $0x91] sm:$0xff]
      %v274 = vld [vmem:[%s238 + $0x99] sm:$0xff]
      %v275 = vld [vmem:[%s238 + $0xa9] sm:$0xff]
      %v276 = vld [vmem:[%s238 + $0xb1] sm:$0xff]
      %v277 = vld [vmem:[%s238 + $0xc1] sm:$0xff]
      %v278 = vld [vmem:[%s238 + $0xc9] sm:$0xff]
      %v279 = vld [vmem:[%s238 + $0xd9] sm:$0xff]
      %v280 = vld [vmem:[%s238 + $0xe1] sm:$0xff]
      %v281 = vld [vmem:[%s238 + $0xf1] sm:$0xff]
      %v282 = vld [vmem:[%s238 + $0xf9] sm:$0xff]
      %v283 = vld [vmem:[%s238 + $0x2] sm:$0xff]
      %v284 = vld [vmem:[%s238 + $0xa] sm:$0xff]
      %v285 = vld [vmem:[%s238 + $0x1a] sm:$0xff]
      %v286 = vld [vmem:[%s238 + $0x22] sm:$0xff]
      %v287 = vld [vmem:[%s238 + $0x32] sm:$0xff]
      %v288 = vld [vmem:[%s238 + $0x3a] sm:$0xff]
      %v289 = vld [vmem:[%s238 + $0x4a] sm:$0xff]
      %v290 = vld [vmem:[%s238 + $0x52] sm:$0xff]
      %v291 = vld [vmem:[%s238 + $0x62] sm:$0xff]
      %v292 = vld [vmem:[%s238 + $0x6a] sm:$0xff]
      %v293 = vld [vmem:[%s238 + $0x7a] sm:$0xff]
      %v294 = vld [vmem:[%s238 + $0x82] sm:$0xff]
      %v295 = vld [vmem:[%s238 + $0x92] sm:$0xff]
      %v296 = vld [vmem:[%s238 + $0x9a] sm:$0xff]
      %v297 = vld [vmem:[%s238 + $0xaa] sm:$0xff]
      %v298 = vld [vmem:[%s238 + $0xb2] sm:$0xff]
      %v299 = vld [vmem:[%s238 + $0xc2] sm:$0xff]
      %v300 = vld [vmem:[%s238 + $0xca] sm:$0xff]
      %v301 = vld [vmem:[%s238 + $0xda] sm:$0xff]
      %v302 = vld [vmem:[%s238 + $0xe2] sm:$0xff]
      %v303 = vld [vmem:[%s238 + $0xf2] sm:$0xff]
      %v304 = vld [vmem:[%s238 + $0xfa] sm:$0xff]
      %s305 = scalar_lea.vmem %s165, 48
      %v306 = vld [vmem:[%s305] sm:$0xff]
      %v307 = vld [vmem:[%s305 + $0x8] sm:$0xff]
      %v308 = vld [vmem:[%s305 + $0x18] sm:$0xff]
      %v309 = vld [vmem:[%s305 + $0x20] sm:$0xff]
      %v310 = vld [vmem:[%s305 + $0x30] sm:$0xff]
      %v311 = vld [vmem:[%s305 + $0x38] sm:$0xff]
      %v312 = vld [vmem:[%s305 + $0x48] sm:$0xff]
      %v313 = vld [vmem:[%s305 + $0x50] sm:$0xff]
      %v314 = vld [vmem:[%s305 + $0x60] sm:$0xff]
      %v315 = vld [vmem:[%s305 + $0x68] sm:$0xff]
      %v316 = vld [vmem:[%s305 + $0x78] sm:$0xff]
      %v317 = vld [vmem:[%s305 + $0x80] sm:$0xff]
      %v318 = vld [vmem:[%s305 + $0x90] sm:$0xff]
      %v319 = vld [vmem:[%s305 + $0x98] sm:$0xff]
      %v320 = vld [vmem:[%s305 + $0xa8] sm:$0xff]
      %v321 = vld [vmem:[%s305 + $0xb0] sm:$0xff]
      %v322 = vld [vmem:[%s305 + $0xc0] sm:$0xff]
      %v323 = vld [vmem:[%s305 + $0xc8] sm:$0xff]
      %v324 = vld [vmem:[%s305 + $0xd8] sm:$0xff]
      %v325 = vld [vmem:[%s305 + $0xe0] sm:$0xff]
      %v326 = vld [vmem:[%s305 + $0xf0] sm:$0xff]
      %v327 = vld [vmem:[%s305 + $0xf8] sm:$0xff]
      %v328 = vld [vmem:[%s305 + $0x1] sm:$0xff]
      %v329 = vld [vmem:[%s305 + $0x9] sm:$0xff]
      %v330 = vld [vmem:[%s305 + $0x19] sm:$0xff]
      %v331 = vld [vmem:[%s305 + $0x21] sm:$0xff]
      %v332 = vld [vmem:[%s305 + $0x31] sm:$0xff]
      %v333 = vld [vmem:[%s305 + $0x39] sm:$0xff]
      %v334 = vld [vmem:[%s305 + $0x49] sm:$0xff]
      %v335 = vld [vmem:[%s305 + $0x51] sm:$0xff]
      %v336 = vld [vmem:[%s305 + $0x61] sm:$0xff]
      %v337 = vld [vmem:[%s305 + $0x69] sm:$0xff]
      %v338 = vld [vmem:[%s305 + $0x79] sm:$0xff]
      %v339 = vld [vmem:[%s305 + $0x81] sm:$0xff]
      %v340 = vld [vmem:[%s305 + $0x91] sm:$0xff]
      %v341 = vld [vmem:[%s305 + $0x99] sm:$0xff]
      %v342 = vld [vmem:[%s305 + $0xa9] sm:$0xff]
      %v343 = vld [vmem:[%s305 + $0xb1] sm:$0xff]
      %v344 = vld [vmem:[%s305 + $0xc1] sm:$0xff]
      %v345 = vld [vmem:[%s305 + $0xc9] sm:$0xff]
      %v346 = vld [vmem:[%s305 + $0xd9] sm:$0xff]
      %v347 = vld [vmem:[%s305 + $0xe1] sm:$0xff]
      %v348 = vld [vmem:[%s305 + $0xf1] sm:$0xff]
      %v349 = vld [vmem:[%s305 + $0xf9] sm:$0xff]
      %v350 = vld [vmem:[%s305 + $0x2] sm:$0xff]
      %v351 = vld [vmem:[%s305 + $0xa] sm:$0xff]
      %v352 = vld [vmem:[%s305 + $0x1a] sm:$0xff]
      %v353 = vld [vmem:[%s305 + $0x22] sm:$0xff]
      %v354 = vld [vmem:[%s305 + $0x32] sm:$0xff]
      %v355 = vld [vmem:[%s305 + $0x3a] sm:$0xff]
      %v356 = vld [vmem:[%s305 + $0x4a] sm:$0xff]
      %v357 = vld [vmem:[%s305 + $0x52] sm:$0xff]
      %v358 = vld [vmem:[%s305 + $0x62] sm:$0xff]
      %v359 = vld [vmem:[%s305 + $0x6a] sm:$0xff]
      %v360 = vld [vmem:[%s305 + $0x7a] sm:$0xff]
      %v361 = vld [vmem:[%s305 + $0x82] sm:$0xff]
      %v362 = vld [vmem:[%s305 + $0x92] sm:$0xff]
      %v363 = vld [vmem:[%s305 + $0x9a] sm:$0xff]
      %v364 = vld [vmem:[%s305 + $0xaa] sm:$0xff]
      %v365 = vld [vmem:[%s305 + $0xb2] sm:$0xff]
      %v366 = vld [vmem:[%s305 + $0xc2] sm:$0xff]
      %v367 = vld [vmem:[%s305 + $0xca] sm:$0xff]
      %v368 = vld [vmem:[%s305 + $0xda] sm:$0xff]
      %v369 = vld [vmem:[%s305 + $0xe2] sm:$0xff]
      %v370 = vld [vmem:[%s305 + $0xf2] sm:$0xff]
      %v371 = vld [vmem:[%s305 + $0xfa] sm:$0xff]
      %394 = vrot.lane.b32.xlu0 %v194, 32
      %v395 = vpop.permute.xlu0 %394
      %396 = vrot.lane.b32.xlu0 %v195, 32
      %v397 = vpop.permute.xlu0 %396
      %398 = vrot.lane.b32.xlu0 %v196, 32
      %v399 = vpop.permute.xlu0 %398
      %400 = vrot.lane.b32.xlu0 %v197, 32
      %v401 = vpop.permute.xlu0 %400
      %402 = vrot.lane.b32.xlu0 %v198, 32
      %v403 = vpop.permute.xlu0 %402
      %404 = vrot.lane.b32.xlu0 %v199, 32
      %v405 = vpop.permute.xlu0 %404
      %406 = vrot.lane.b32.xlu0 %v200, 32
      %v407 = vpop.permute.xlu0 %406
      %408 = vrot.lane.b32.xlu0 %v201, 32
      %v409 = vpop.permute.xlu0 %408
      %410 = vrot.lane.b32.xlu0 %v202, 32
      %v411 = vpop.permute.xlu0 %410
      %412 = vrot.lane.b32.xlu0 %v203, 32
      %v413 = vpop.permute.xlu0 %412
      %414 = vrot.lane.b32.xlu0 %v204, 32
      %v415 = vpop.permute.xlu0 %414
      %416 = vrot.lane.b32.xlu0 %v205, 32
      %v417 = vpop.permute.xlu0 %416
      %418 = vrot.lane.b32.xlu0 %v206, 32
      %v419 = vpop.permute.xlu0 %418
      %420 = vrot.lane.b32.xlu0 %v207, 32
      %v421 = vpop.permute.xlu0 %420
      %422 = vrot.lane.b32.xlu0 %v208, 32
      %v423 = vpop.permute.xlu0 %422
      %424 = vrot.lane.b32.xlu0 %v209, 32
      %v425 = vpop.permute.xlu0 %424
      %426 = vrot.lane.b32.xlu0 %v210, 32
      %v427 = vpop.permute.xlu0 %426
      %428 = vrot.lane.b32.xlu0 %v211, 32
      %v429 = vpop.permute.xlu0 %428
      %430 = vrot.lane.b32.xlu0 %v212, 32
      %v431 = vpop.permute.xlu0 %430
      %432 = vrot.lane.b32.xlu0 %v213, 32
      %v433 = vpop.permute.xlu0 %432
      %434 = vrot.lane.b32.xlu0 %v214, 32
      %v435 = vpop.permute.xlu0 %434
      %436 = vrot.lane.b32.xlu0 %v215, 32
      %v437 = vpop.permute.xlu0 %436
      %482 = vrot.lane.b32.xlu0 %v216, 64
      %v483 = vpop.permute.xlu0 %482
      %484 = vrot.lane.b32.xlu0 %v217, 64
      %v485 = vpop.permute.xlu0 %484
      %486 = vrot.lane.b32.xlu0 %v218, 64
      %v487 = vpop.permute.xlu0 %486
      %488 = vrot.lane.b32.xlu0 %v219, 64
      %v489 = vpop.permute.xlu0 %488
      %490 = vrot.lane.b32.xlu0 %v220, 64
      %v491 = vpop.permute.xlu0 %490
      %492 = vrot.lane.b32.xlu0 %v221, 64
      %v493 = vpop.permute.xlu0 %492
      %494 = vrot.lane.b32.xlu0 %v222, 64
      %v495 = vpop.permute.xlu0 %494
      %496 = vrot.lane.b32.xlu0 %v223, 64
      %v497 = vpop.permute.xlu0 %496
      %498 = vrot.lane.b32.xlu0 %v224, 64
      %v499 = vpop.permute.xlu0 %498
      %500 = vrot.lane.b32.xlu0 %v225, 64
      %v501 = vpop.permute.xlu0 %500
      %502 = vrot.lane.b32.xlu0 %v226, 64
      %v503 = vpop.permute.xlu0 %502
      %504 = vrot.lane.b32.xlu0 %v227, 64
      %v505 = vpop.permute.xlu0 %504
      %506 = vrot.lane.b32.xlu0 %v228, 64
      %v507 = vpop.permute.xlu0 %506
      %508 = vrot.lane.b32.xlu0 %v229, 64
      %v509 = vpop.permute.xlu0 %508
      %510 = vrot.lane.b32.xlu0 %v230, 64
      %v511 = vpop.permute.xlu0 %510
      %512 = vrot.lane.b32.xlu0 %v231, 64
      %v513 = vpop.permute.xlu0 %512
      %514 = vrot.lane.b32.xlu0 %v232, 64
      %v515 = vpop.permute.xlu0 %514
      %516 = vrot.lane.b32.xlu0 %v233, 64
      %v517 = vpop.permute.xlu0 %516
      %518 = vrot.lane.b32.xlu0 %v234, 64
      %v519 = vpop.permute.xlu0 %518
      %520 = vrot.lane.b32.xlu0 %v235, 64
      %v521 = vpop.permute.xlu0 %520
      %522 = vrot.lane.b32.xlu0 %v236, 64
      %v523 = vpop.permute.xlu0 %522
      %524 = vrot.lane.b32.xlu0 %v237, 64
      %v525 = vpop.permute.xlu0 %524
      %570 = vrot.lane.b32.xlu0 %v239, 96
      %v571 = vpop.permute.xlu0 %570
      %572 = vrot.lane.b32.xlu0 %v240, 96
      %v573 = vpop.permute.xlu0 %572
      %574 = vrot.lane.b32.xlu0 %v241, 96
      %v575 = vpop.permute.xlu0 %574
      %576 = vrot.lane.b32.xlu0 %v242, 96
      %v577 = vpop.permute.xlu0 %576
      %578 = vrot.lane.b32.xlu0 %v243, 96
      %v579 = vpop.permute.xlu0 %578
      %580 = vrot.lane.b32.xlu0 %v244, 96
      %v581 = vpop.permute.xlu0 %580
      %582 = vrot.lane.b32.xlu0 %v245, 96
      %v583 = vpop.permute.xlu0 %582
      %584 = vrot.lane.b32.xlu0 %v246, 96
      %v585 = vpop.permute.xlu0 %584
      %586 = vrot.lane.b32.xlu0 %v247, 96
      %v587 = vpop.permute.xlu0 %586
      %588 = vrot.lane.b32.xlu0 %v248, 96
      %v589 = vpop.permute.xlu0 %588
      %590 = vrot.lane.b32.xlu0 %v249, 96
      %v591 = vpop.permute.xlu0 %590
      %592 = vrot.lane.b32.xlu0 %v250, 96
      %v593 = vpop.permute.xlu0 %592
      %594 = vrot.lane.b32.xlu0 %v251, 96
      %v595 = vpop.permute.xlu0 %594
      %596 = vrot.lane.b32.xlu0 %v252, 96
      %v597 = vpop.permute.xlu0 %596
      %598 = vrot.lane.b32.xlu0 %v253, 96
      %v599 = vpop.permute.xlu0 %598
      %600 = vrot.lane.b32.xlu0 %v254, 96
      %v601 = vpop.permute.xlu0 %600
      %602 = vrot.lane.b32.xlu0 %v255, 96
      %v603 = vpop.permute.xlu0 %602
      %604 = vrot.lane.b32.xlu0 %v256, 96
      %v605 = vpop.permute.xlu0 %604
      %606 = vrot.lane.b32.xlu0 %v257, 96
      %v607 = vpop.permute.xlu0 %606
      %608 = vrot.lane.b32.xlu0 %v258, 96
      %v609 = vpop.permute.xlu0 %608
      %610 = vrot.lane.b32.xlu0 %v259, 96
      %v611 = vpop.permute.xlu0 %610
      %612 = vrot.lane.b32.xlu0 %v260, 96
      %v613 = vpop.permute.xlu0 %612
      %658 = vrot.lane.b32.xlu0 %v283, 32
      %v659 = vpop.permute.xlu0 %658
      %660 = vrot.lane.b32.xlu0 %v284, 32
      %v661 = vpop.permute.xlu0 %660
      %662 = vrot.lane.b32.xlu0 %v285, 32
      %v663 = vpop.permute.xlu0 %662
      %664 = vrot.lane.b32.xlu0 %v286, 32
      %v665 = vpop.permute.xlu0 %664
      %666 = vrot.lane.b32.xlu0 %v287, 32
      %v667 = vpop.permute.xlu0 %666
      %668 = vrot.lane.b32.xlu0 %v288, 32
      %v669 = vpop.permute.xlu0 %668
      %670 = vrot.lane.b32.xlu0 %v289, 32
      %v671 = vpop.permute.xlu0 %670
      %672 = vrot.lane.b32.xlu0 %v290, 32
      %v673 = vpop.permute.xlu0 %672
      %674 = vrot.lane.b32.xlu0 %v291, 32
      %v675 = vpop.permute.xlu0 %674
      %676 = vrot.lane.b32.xlu0 %v292, 32
      %v677 = vpop.permute.xlu0 %676
      %678 = vrot.lane.b32.xlu0 %v293, 32
      %v679 = vpop.permute.xlu0 %678
      %680 = vrot.lane.b32.xlu0 %v294, 32
      %v681 = vpop.permute.xlu0 %680
      %682 = vrot.lane.b32.xlu0 %v295, 32
      %v683 = vpop.permute.xlu0 %682
      %684 = vrot.lane.b32.xlu0 %v296, 32
      %v685 = vpop.permute.xlu0 %684
      %686 = vrot.lane.b32.xlu0 %v297, 32
      %v687 = vpop.permute.xlu0 %686
      %688 = vrot.lane.b32.xlu0 %v298, 32
      %v689 = vpop.permute.xlu0 %688
      %690 = vrot.lane.b32.xlu0 %v299, 32
      %v691 = vpop.permute.xlu0 %690
      %692 = vrot.lane.b32.xlu0 %v300, 32
      %v693 = vpop.permute.xlu0 %692
      %694 = vrot.lane.b32.xlu0 %v301, 32
      %v695 = vpop.permute.xlu0 %694
      %696 = vrot.lane.b32.xlu0 %v302, 32
      %v697 = vpop.permute.xlu0 %696
      %698 = vrot.lane.b32.xlu0 %v303, 32
      %v699 = vpop.permute.xlu0 %698
      %700 = vrot.lane.b32.xlu0 %v304, 32
      %v701 = vpop.permute.xlu0 %700
      %746 = vrot.lane.b32.xlu0 %v306, 64
      %v747 = vpop.permute.xlu0 %746
      %748 = vrot.lane.b32.xlu0 %v307, 64
      %v749 = vpop.permute.xlu0 %748
      %750 = vrot.lane.b32.xlu0 %v308, 64
      %v751 = vpop.permute.xlu0 %750
      %752 = vrot.lane.b32.xlu0 %v309, 64
      %v753 = vpop.permute.xlu0 %752
      %754 = vrot.lane.b32.xlu0 %v310, 64
      %v755 = vpop.permute.xlu0 %754
      %756 = vrot.lane.b32.xlu0 %v311, 64
      %v757 = vpop.permute.xlu0 %756
      %758 = vrot.lane.b32.xlu0 %v312, 64
      %v759 = vpop.permute.xlu0 %758
      %760 = vrot.lane.b32.xlu0 %v313, 64
      %v761 = vpop.permute.xlu0 %760
      %762 = vrot.lane.b32.xlu0 %v314, 64
      %v763 = vpop.permute.xlu0 %762
      %764 = vrot.lane.b32.xlu0 %v315, 64
      %v765 = vpop.permute.xlu0 %764
      %766 = vrot.lane.b32.xlu0 %v316, 64
      %v767 = vpop.permute.xlu0 %766
      %768 = vrot.lane.b32.xlu0 %v317, 64
      %v769 = vpop.permute.xlu0 %768
      %770 = vrot.lane.b32.xlu0 %v318, 64
      %v771 = vpop.permute.xlu0 %770
      %772 = vrot.lane.b32.xlu0 %v319, 64
      %v773 = vpop.permute.xlu0 %772
      %774 = vrot.lane.b32.xlu0 %v320, 64
      %v775 = vpop.permute.xlu0 %774
      %776 = vrot.lane.b32.xlu0 %v321, 64
      %v777 = vpop.permute.xlu0 %776
      %778 = vrot.lane.b32.xlu0 %v322, 64
      %v779 = vpop.permute.xlu0 %778
      %780 = vrot.lane.b32.xlu0 %v323, 64
      %v781 = vpop.permute.xlu0 %780
      %782 = vrot.lane.b32.xlu0 %v324, 64
      %v783 = vpop.permute.xlu0 %782
      %784 = vrot.lane.b32.xlu0 %v325, 64
      %v785 = vpop.permute.xlu0 %784
      %786 = vrot.lane.b32.xlu0 %v326, 64
      %v787 = vpop.permute.xlu0 %786
      %788 = vrot.lane.b32.xlu0 %v327, 64
      %v789 = vpop.permute.xlu0 %788
      %834 = vrot.lane.b32.xlu0 %v328, 96
      %v835 = vpop.permute.xlu0 %834
      %836 = vrot.lane.b32.xlu0 %v329, 96
      %v837 = vpop.permute.xlu0 %836
      %838 = vrot.lane.b32.xlu0 %v330, 96
      %v839 = vpop.permute.xlu0 %838
      %840 = vrot.lane.b32.xlu0 %v331, 96
      %v841 = vpop.permute.xlu0 %840
      %842 = vrot.lane.b32.xlu0 %v332, 96
      %v843 = vpop.permute.xlu0 %842
      %844 = vrot.lane.b32.xlu0 %v333, 96
      %v845 = vpop.permute.xlu0 %844
      %846 = vrot.lane.b32.xlu0 %v334, 96
      %v847 = vpop.permute.xlu0 %846
      %848 = vrot.lane.b32.xlu0 %v335, 96
      %v849 = vpop.permute.xlu0 %848
      %850 = vrot.lane.b32.xlu0 %v336, 96
      %v851 = vpop.permute.xlu0 %850
      %852 = vrot.lane.b32.xlu0 %v337, 96
      %v853 = vpop.permute.xlu0 %852
      %854 = vrot.lane.b32.xlu0 %v338, 96
      %v855 = vpop.permute.xlu0 %854
      %856 = vrot.lane.b32.xlu0 %v339, 96
      %v857 = vpop.permute.xlu0 %856
      %858 = vrot.lane.b32.xlu0 %v340, 96
      %v859 = vpop.permute.xlu0 %858
      %860 = vrot.lane.b32.xlu0 %v341, 96
      %v861 = vpop.permute.xlu0 %860
      %862 = vrot.lane.b32.xlu0 %v342, 96
      %v863 = vpop.permute.xlu0 %862
      %864 = vrot.lane.b32.xlu0 %v343, 96
      %v865 = vpop.permute.xlu0 %864
      %866 = vrot.lane.b32.xlu0 %v344, 96
      %v867 = vpop.permute.xlu0 %866
      %868 = vrot.lane.b32.xlu0 %v345, 96
      %v869 = vpop.permute.xlu0 %868
      %870 = vrot.lane.b32.xlu0 %v346, 96
      %v871 = vpop.permute.xlu0 %870
      %872 = vrot.lane.b32.xlu0 %v347, 96
      %v873 = vpop.permute.xlu0 %872
      %874 = vrot.lane.b32.xlu0 %v348, 96
      %v875 = vpop.permute.xlu0 %874
      %876 = vrot.lane.b32.xlu0 %v349, 96
      %v877 = vpop.permute.xlu0 %876
      %vm900 = vcmask 261120
      %v901 = vsel %vm900, %v172, %v395
      %v902 = vsel %vm900, %v173, %v397
      %v903 = vsel %vm900, %v174, %v399
      %v904 = vsel %vm900, %v175, %v401
      %v905 = vsel %vm900, %v176, %v403
      %v906 = vsel %vm900, %v177, %v405
      %v907 = vsel %vm900, %v178, %v407
      %v908 = vsel %vm900, %v179, %v409
      %v909 = vsel %vm900, %v180, %v411
      %v910 = vsel %vm900, %v181, %v413
      %v911 = vsel %vm900, %v182, %v415
      %v912 = vsel %vm900, %v183, %v417
      %v913 = vsel %vm900, %v184, %v419
      %v914 = vsel %vm900, %v185, %v421
      %v915 = vsel %vm900, %v186, %v423
      %v916 = vsel %vm900, %v187, %v425
      %v917 = vsel %vm900, %v188, %v427
      %v918 = vsel %vm900, %v189, %v429
      %v919 = vsel %vm900, %v190, %v431
      %v920 = vsel %vm900, %v191, %v433
      %v921 = vsel %vm900, %v192, %v435
      %v922 = vsel %vm900, %v193, %v437
      %vm923 = vcmask 523264
      %v924 = vsel %vm923, %v901, %v483
      %v925 = vsel %vm923, %v902, %v485
      %v926 = vsel %vm923, %v903, %v487
      %v927 = vsel %vm923, %v904, %v489
      %v928 = vsel %vm923, %v905, %v491
      %v929 = vsel %vm923, %v906, %v493
      %v930 = vsel %vm923, %v907, %v495
      %v931 = vsel %vm923, %v908, %v497
      %v932 = vsel %vm923, %v909, %v499
      %v933 = vsel %vm923, %v910, %v501
      %v934 = vsel %vm923, %v911, %v503
      %v935 = vsel %vm923, %v912, %v505
      %v936 = vsel %vm923, %v913, %v507
      %v937 = vsel %vm923, %v914, %v509
      %v938 = vsel %vm923, %v915, %v511
      %v939 = vsel %vm923, %v916, %v513
      %v940 = vsel %vm923, %v917, %v515
      %v941 = vsel %vm923, %v918, %v517
      %v942 = vsel %vm923, %v919, %v519
      %v943 = vsel %vm923, %v920, %v521
      %v944 = vsel %vm923, %v921, %v523
      %v945 = vsel %vm923, %v922, %v525
      %vm946 = vcmask 785408
      %v947 = vsel %vm946, %v924, %v571
      %v948 = vsel %vm946, %v925, %v573
      %v949 = vsel %vm946, %v926, %v575
      %v950 = vsel %vm946, %v927, %v577
      %v951 = vsel %vm946, %v928, %v579
      %v952 = vsel %vm946, %v929, %v581
      %v953 = vsel %vm946, %v930, %v583
      %v954 = vsel %vm946, %v931, %v585
      %v955 = vsel %vm946, %v932, %v587
      %v956 = vsel %vm946, %v933, %v589
      %v957 = vsel %vm946, %v934, %v591
      %v958 = vsel %vm946, %v935, %v593
      %v959 = vsel %vm946, %v936, %v595
      %v960 = vsel %vm946, %v937, %v597
      %v961 = vsel %vm946, %v938, %v599
      %v962 = vsel %vm946, %v939, %v601
      %v963 = vsel %vm946, %v940, %v603
      %v964 = vsel %vm946, %v941, %v605
      %v965 = vsel %vm946, %v942, %v607
      %v966 = vsel %vm946, %v943, %v609
      %v967 = vsel %vm946, %v944, %v611
      %v968 = vsel %vm946, %v945, %v613
      %v969 = vsel %vm900, %v261, %v659
      %v970 = vsel %vm900, %v262, %v661
      %v971 = vsel %vm900, %v263, %v663
      %v972 = vsel %vm900, %v264, %v665
      %v973 = vsel %vm900, %v265, %v667
      %v974 = vsel %vm900, %v266, %v669
      %v975 = vsel %vm900, %v267, %v671
      %v976 = vsel %vm900, %v268, %v673
      %v977 = vsel %vm900, %v269, %v675
      %v978 = vsel %vm900, %v270, %v677
      %v979 = vsel %vm900, %v271, %v679
      %v980 = vsel %vm900, %v272, %v681
      %v981 = vsel %vm900, %v273, %v683
      %v982 = vsel %vm900, %v274, %v685
      %v983 = vsel %vm900, %v275, %v687
      %v984 = vsel %vm900, %v276, %v689
      %v985 = vsel %vm900, %v277, %v691
      %v986 = vsel %vm900, %v278, %v693
      %v987 = vsel %vm900, %v279, %v695
      %v988 = vsel %vm900, %v280, %v697
      %v989 = vsel %vm900, %v281, %v699
      %v990 = vsel %vm900, %v282, %v701
      %v991 = vsel %vm923, %v969, %v747
      %v992 = vsel %vm923, %v970, %v749
      %v993 = vsel %vm923, %v971, %v751
      %v994 = vsel %vm923, %v972, %v753
      %v995 = vsel %vm923, %v973, %v755
      %v996 = vsel %vm923, %v974, %v757
      %v997 = vsel %vm923, %v975, %v759
      %v998 = vsel %vm923, %v976, %v761
      %v999 = vsel %vm923, %v977, %v763
      %v1000 = vsel %vm923, %v978, %v765
      %v1001 = vsel %vm923, %v979, %v767
      %v1002 = vsel %vm923, %v980, %v769
      %v1003 = vsel %vm923, %v981, %v771
      %v1004 = vsel %vm923, %v982, %v773
      %v1005 = vsel %vm923, %v983, %v775
      %v1006 = vsel %vm923, %v984, %v777
      %v1007 = vsel %vm923, %v985, %v779
      %v1008 = vsel %vm923, %v986, %v781
      %v1009 = vsel %vm923, %v987, %v783
      %v1010 = vsel %vm923, %v988, %v785
      %v1011 = vsel %vm923, %v989, %v787
      %v1012 = vsel %vm923, %v990, %v789
      %v1013 = vsel %vm946, %v991, %v835
      %v1014 = vsel %vm946, %v992, %v837
      %v1015 = vsel %vm946, %v993, %v839
      %v1016 = vsel %vm946, %v994, %v841
      %v1017 = vsel %vm946, %v995, %v843
      %v1018 = vsel %vm946, %v996, %v845
      %v1019 = vsel %vm946, %v997, %v847
      %v1020 = vsel %vm946, %v998, %v849
      %v1021 = vsel %vm946, %v999, %v851
      %v1022 = vsel %vm946, %v1000, %v853
      %v1023 = vsel %vm946, %v1001, %v855
      %v1024 = vsel %vm946, %v1002, %v857
      %v1025 = vsel %vm946, %v1003, %v859
      %v1026 = vsel %vm946, %v1004, %v861
      %v1027 = vsel %vm946, %v1005, %v863
      %v1028 = vsel %vm946, %v1006, %v865
      %v1029 = vsel %vm946, %v1007, %v867
      %v1030 = vsel %vm946, %v1008, %v869
      %v1031 = vsel %vm946, %v1009, %v871
      %v1032 = vsel %vm946, %v1010, %v873
      %v1033 = vsel %vm946, %v1011, %v875
      %v1034 = vsel %vm946, %v1012, %v877
      %v1035 = vpack.c.bf16 %v948, %v947
      %v1036 = vpack.c.bf16 %v1014, %v1013
      %v1037 = vpack.c.bf16 %v351, %v350
      %v1038 = vpack.c.bf16 %v950, %v949
      %v1039 = vpack.c.bf16 %v1016, %v1015
      %v1040 = vpack.c.bf16 %v353, %v352
      %v1041 = vpack.c.bf16 %v952, %v951
      %v1042 = vpack.c.bf16 %v1018, %v1017
      %v1043 = vpack.c.bf16 %v355, %v354
      %v1044 = vpack.c.bf16 %v954, %v953
      %v1045 = vpack.c.bf16 %v1020, %v1019
      %v1046 = vpack.c.bf16 %v357, %v356
      %v1047 = vpack.c.bf16 %v956, %v955
      %v1048 = vpack.c.bf16 %v1022, %v1021
      %v1049 = vpack.c.bf16 %v359, %v358
      %v1050 = vpack.c.bf16 %v958, %v957
      %v1051 = vpack.c.bf16 %v1024, %v1023
      %v1052 = vpack.c.bf16 %v361, %v360
      %v1053 = vpack.c.bf16 %v960, %v959
      %v1054 = vpack.c.bf16 %v1026, %v1025
      %v1055 = vpack.c.bf16 %v363, %v362
      %v1056 = vpack.c.bf16 %v962, %v961
      %v1057 = vpack.c.bf16 %v1028, %v1027
      %v1058 = vpack.c.bf16 %v365, %v364
      %v1059 = vpack.c.bf16 %v964, %v963
      %v1060 = vpack.c.bf16 %v1030, %v1029
      %v1061 = vpack.c.bf16 %v367, %v366
      %v1062 = vpack.c.bf16 %v966, %v965
      %v1063 = vpack.c.bf16 %v1032, %v1031
      %v1064 = vpack.c.bf16 %v369, %v368
      %v1065 = vpack.c.bf16 %v968, %v967
      %v1066 = vpack.c.bf16 %v1034, %v1033
      %v1067 = vpack.c.bf16 %v371, %v370
      %v1068 = vld [vmem:[%s1] sm:$0xff]
      %v1069 = vld [vmem:[%s1 + $0x8] sm:$0xff]
      %v1070 = vld [vmem:[%s1 + $0x10] sm:$0xff]
      %v1071 = vld [vmem:[%s1 + $0x18] sm:$0xff]
      %v1072 = vld [vmem:[%s1 + $0x20] sm:$0xff]
      %v1073 = vld [vmem:[%s1 + $0x28] sm:$0xff]
      %v1074 = vld [vmem:[%s1 + $0x30] sm:$0xff]
      %v1075 = vld [vmem:[%s1 + $0x38] sm:$0xff]
      %v1076 = vld [vmem:[%s1 + $0x40] sm:$0xff]
      %v1077 = vld [vmem:[%s1 + $0x48] sm:$0xff]
      %v1078 = vld [vmem:[%s1 + $0x50] sm:$0xff]
      %v1079 = vld [vmem:[%s1 + $0x58] sm:$0xff]
      %v1080 = vld [vmem:[%s1 + $0x60] sm:$0xff]
      %v1081 = vld [vmem:[%s1 + $0x68] sm:$0xff]
      %v1082 = vld [vmem:[%s1 + $0x70] sm:$0xff]
      %v1083 = vld [vmem:[%s1 + $0x78] sm:$0xff]
      %v1084 = vld [vmem:[%s1 + $0x80] sm:$0xff]
      %v1085 = vld [vmem:[%s1 + $0x88] sm:$0xff]
      %v1086 = vld [vmem:[%s1 + $0x90] sm:$0xff]
      %v1087 = vld [vmem:[%s1 + $0x98] sm:$0xff]
      %v1088 = vld [vmem:[%s1 + $0xa0] sm:$0xff]
      %v1089 = vld [vmem:[%s1 + $0xa8] sm:$0xff]
      %v1090 = vld [vmem:[%s1 + $0xb0] sm:$0xff]
      %v1091 = vld [vmem:[%s1 + $0xb8] sm:$0xff]
      %v1092 = vld [vmem:[%s1 + $0xc0] sm:$0xff]
      %v1093 = vld [vmem:[%s1 + $0xc8] sm:$0xff]
      %v1094 = vld [vmem:[%s1 + $0xd0] sm:$0xff]
      %v1095 = vld [vmem:[%s1 + $0xd8] sm:$0xff]
      %v1096 = vld [vmem:[%s1 + $0xe0] sm:$0xff]
      %v1097 = vld [vmem:[%s1 + $0xe8] sm:$0xff]
      %v1098 = vld [vmem:[%s1 + $0xf0] sm:$0xff]
      %v1099 = vld [vmem:[%s1 + $0xf8] sm:$0xff]
      %v1100 = vld [vmem:[%s1 + $0x100] sm:$0xff]
      %v1101 = vld [vmem:[%s1 + $0x108] sm:$0xff]
      %v1102 = vld [vmem:[%s1 + $0x110] sm:$0xff]
      %v1103 = vld [vmem:[%s1 + $0x118] sm:$0xff]
      %v1104 = vpack.c.bf16 %v1069, %v1068
      %v1105 = vpack.c.bf16 %v1071, %v1070
      %v1106 = vpack.c.bf16 %v1073, %v1072
      %v1107 = vpack.c.bf16 %v1075, %v1074
      %v1108 = vpack.c.bf16 %v1077, %v1076
      %v1109 = vpack.c.bf16 %v1079, %v1078
      %v1110 = vpack.c.bf16 %v1081, %v1080
      %v1111 = vpack.c.bf16 %v1083, %v1082
      %v1112 = vpack.c.bf16 %v1085, %v1084
      %v1113 = vpack.c.bf16 %v1087, %v1086
      %v1114 = vpack.c.bf16 %v1089, %v1088
      %v1115 = vpack.c.bf16 %v1091, %v1090
      %v1116 = vpack.c.bf16 %v1093, %v1092
      %v1117 = vpack.c.bf16 %v1095, %v1094
      %v1118 = vpack.c.bf16 %v1097, %v1096
      %v1119 = vpack.c.bf16 %v1099, %v1098
      %v1120 = vpack.c.bf16 %v1101, %v1100
      %v1121 = vpack.c.bf16 %v1103, %v1102
      %v1123 = vsel %vm900, %v1037, 0
      %v1126 = vsel %vm900, %v1040, 0
      %v1129 = vsel %vm900, %v1043, 0
      %v1132 = vsel %vm900, %v1046, 0
      %v1135 = vsel %vm900, %v1049, 0
      %v1138 = vsel %vm900, %v1052, 0
      %v1141 = vsel %vm900, %v1055, 0
      %v1144 = vsel %vm900, %v1058, 0
      %v1147 = vsel %vm900, %v1061, 0
      %v1150 = vsel %vm900, %v1064, 0
      %v1153 = vsel %vm900, %v1067, 0
      %1155 = vmatprep.subr.bf16.mxu0 0
      %1156 = vmatpush1.bf16.msra.mxu0 %v1104
      %1157 = vmatprep.subr.bf16.mxu0 0
      %1158 = vmatpush1.bf16.msra.mxu0 %v1105
      %1159 = vmatprep.subr.bf16.mxu0 0
      %1160 = vmatpush1.bf16.msra.mxu0 %v1106
      %1161 = vmatprep.subr.bf16.mxu0 0
      %1162 = vmatpush1.bf16.msra.mxu0 %v1107
      %1163 = vmatprep.subr.bf16.mxu0 0
      %1164 = vmatpush1.bf16.msra.mxu0 %v1108
      %1165 = vmatprep.subr.bf16.mxu0 0
      %1166 = vmatpush1.bf16.msra.mxu0 %v1109
      %1167 = vmatprep.subr.bf16.mxu0 0
      %1168 = vmatpush1.bf16.msra.mxu0 %v1110
      %1169 = vmatprep.subr.bf16.mxu0 0
      %1170 = vmatpush1.bf16.msra.mxu0 %v1111
      %1171 = vmatprep.subr.bf16.mxu0 0
      %1172 = vmatpush1.bf16.msra.mxu0 %v1112
      %1173 = vmatprep.subr.bf16.mxu0 0
      %1174 = vmatpush1.bf16.msra.mxu0 %v1113
      %1175 = vmatprep.subr.bf16.mxu0 0
      %1176 = vmatpush1.bf16.msra.mxu0 %v1114
      %1177 = vmatprep.subr.bf16.mxu0 0
      %1178 = vmatpush1.bf16.msra.mxu0 %v1115
      %1179 = vmatprep.subr.bf16.mxu0 0
      %1180 = vmatpush1.bf16.msra.mxu0 %v1116
      %1181 = vmatprep.subr.bf16.mxu0 0
      %1182 = vmatpush1.bf16.msra.mxu0 %v1117
      %1183 = vmatprep.subr.bf16.mxu0 0
      %1184 = vmatpush1.bf16.msra.mxu0 %v1118
      %1185 = vmatprep.subr.bf16.mxu0 0
      %1186 = vmatpush1.bf16.msra.mxu0 %v1119
      %1187 = vmatprep.mubr.bf16.mxu0 %v1036
      %1188 = vmatmul.mubr.bf16.gmra.mrb[0].mxu0 %v1035
      %v1189 = vpop.f32.mrb[0].mxu0
      %v1190 = vadd.f32 0.0, %v1189
      %v1191 = vpop.f32.mrb[0].mxu0
      %v1192 = vpop.f32.mrb[0].mxu0
      %v1193 = vadd.f32 0.0, %v1192
      %v1194 = vpop.f32.mrb[0].mxu0
      %1195 = vmatprep.mubr.bf16.mxu0 %v1039
      %1196 = vmatmul.mubr.bf16.gmra.mrb[0].mxu0 %v1038
      %v1197 = vpop.f32.mrb[0].mxu0
      %v1198 = vadd.f32 0.0, %v1197
      %v1199 = vpop.f32.mrb[0].mxu0
      %v1200 = vpop.f32.mrb[0].mxu0
      %v1201 = vadd.f32 0.0, %v1200
      %v1202 = vpop.f32.mrb[0].mxu0
      %1203 = vmatprep.mubr.bf16.mxu0 %v1042
      %1204 = vmatmul.mubr.bf16.gmra.mrb[0].mxu0 %v1041
      %v1205 = vpop.f32.mrb[0].mxu0
      %v1206 = vadd.f32 0.0, %v1205
      %v1207 = vpop.f32.mrb[0].mxu0
      %v1208 = vpop.f32.mrb[0].mxu0
      %v1209 = vadd.f32 0.0, %v1208
      %v1210 = vpop.f32.mrb[0].mxu0
      %1211 = vmatprep.mubr.bf16.mxu0 %v1045
      %1212 = vmatmul.mubr.bf16.gmra.mrb[0].mxu0 %v1044
      %v1213 = vpop.f32.mrb[0].mxu0
      %v1214 = vadd.f32 0.0, %v1213
      %v1215 = vpop.f32.mrb[0].mxu0
      %v1216 = vpop.f32.mrb[0].mxu0
      %v1217 = vadd.f32 0.0, %v1216
      %v1218 = vpop.f32.mrb[0].mxu0
      %1219 = vmatprep.mubr.bf16.mxu0 %v1048
      %1220 = vmatmul.mubr.bf16.gmra.mrb[0].mxu0 %v1047
      %v1221 = vpop.f32.mrb[0].mxu0
      %v1222 = vadd.f32 0.0, %v1221
      %v1223 = vpop.f32.mrb[0].mxu0
      %v1224 = vpop.f32.mrb[0].mxu0
      %v1225 = vadd.f32 0.0, %v1224
      %v1226 = vpop.f32.mrb[0].mxu0
      %1227 = vmatprep.mubr.bf16.mxu0 %v1051
      %1228 = vmatmul.mubr.bf16.gmra.mrb[0].mxu0 %v1050
      %v1229 = vpop.f32.mrb[0].mxu0
      %v1230 = vadd.f32 0.0, %v1229
      %v1231 = vpop.f32.mrb[0].mxu0
      %v1232 = vpop.f32.mrb[0].mxu0
      %v1233 = vadd.f32 0.0, %v1232
      %v1234 = vpop.f32.mrb[0].mxu0
      %1235 = vmatprep.mubr.bf16.mxu0 %v1054
      %1236 = vmatmul.mubr.bf16.gmra.mrb[0].mxu0 %v1053
      %v1237 = vpop.f32.mrb[0].mxu0
      %v1238 = vadd.f32 0.0, %v1237
      %v1239 = vpop.f32.mrb[0].mxu0
      %v1240 = vpop.f32.mrb[0].mxu0
      %v1241 = vadd.f32 0.0, %v1240
      %v1242 = vpop.f32.mrb[0].mxu0
      %1243 = vmatprep.mubr.bf16.mxu0 %v1057
      %1244 = vmatmul.mubr.bf16.gmra.mrb[0].mxu0 %v1056
      %v1245 = vpop.f32.mrb[0].mxu0
      %v1246 = vadd.f32 0.0, %v1245
      %v1247 = vpop.f32.mrb[0].mxu0
      %v1248 = vpop.f32.mrb[0].mxu0
      %v1249 = vadd.f32 0.0, %v1248
      %v1250 = vpop.f32.mrb[0].mxu0
      %1251 = vmatprep.mubr.bf16.mxu0 %v1060
      %1252 = vmatmul.mubr.bf16.gmra.mrb[0].mxu0 %v1059
      %v1253 = vpop.f32.mrb[0].mxu0
      %v1254 = vadd.f32 0.0, %v1253
      %v1255 = vpop.f32.mrb[0].mxu0
      %v1256 = vpop.f32.mrb[0].mxu0
      %v1257 = vadd.f32 0.0, %v1256
      %v1258 = vpop.f32.mrb[0].mxu0
      %1259 = vmatprep.mubr.bf16.mxu0 %v1063
      %1260 = vmatmul.mubr.bf16.gmra.mrb[0].mxu0 %v1062
      %v1261 = vpop.f32.mrb[0].mxu0
      %v1262 = vadd.f32 0.0, %v1261
      %v1263 = vpop.f32.mrb[0].mxu0
      %v1264 = vpop.f32.mrb[0].mxu0
      %v1265 = vadd.f32 0.0, %v1264
      %v1266 = vpop.f32.mrb[0].mxu0
      %1267 = vmatprep.mubr.bf16.mxu0 %v1066
      %1268 = vmatmul.mubr.bf16.gmra.mrb[0].mxu0 %v1065
      %v1269 = vpop.f32.mrb[0].mxu0
      %v1270 = vpop.f32.mrb[0].mxu0
      %v1271 = vpop.f32.mrb[0].mxu0
      %v1272 = vpop.f32.mrb[0].mxu0
      %1273 = vdwg.mxu0
      %1274 = vmatprep.subr.bf16.mxu0 0
      %1275 = vmatpush1.bf16.msra.mxu0 %v1120
      %1276 = vmatprep.subr.bf16.mxu0 0
      %1277 = vmatpush1.bf16.msra.mxu0 %v1121
      %1278 = vmatprep.subr.bf16.mxu0 0
      %1279 = vmatpush1.bf16.msra.mxu0 0
      %1280 = vmatprep.subr.bf16.mxu0 0
      %1281 = vmatpush1.bf16.msra.mxu0 0
      %1282 = vmatprep.subr.bf16.mxu0 0
      %1283 = vmatpush1.bf16.msra.mxu0 0
      %1284 = vmatprep.subr.bf16.mxu0 0
      %1285 = vmatpush1.bf16.msra.mxu0 0
      %1286 = vmatprep.subr.bf16.mxu0 0
      %1287 = vmatpush1.bf16.msra.mxu0 0
      %1288 = vmatprep.subr.bf16.mxu0 0
      %1289 = vmatpush1.bf16.msra.mxu0 0
      %1290 = vmatprep.subr.bf16.mxu0 0
      %1291 = vmatpush1.bf16.msra.mxu0 0
      %1292 = vmatprep.subr.bf16.mxu0 0
      %1293 = vmatpush1.bf16.msra.mxu0 0
      %1294 = vmatprep.subr.bf16.mxu0 0
      %1295 = vmatpush1.bf16.msra.mxu0 0
      %1296 = vmatprep.subr.bf16.mxu0 0
      %1297 = vmatpush1.bf16.msra.mxu0 0
      %1298 = vmatprep.subr.bf16.mxu0 0
      %1299 = vmatpush1.bf16.msra.mxu0 0
      %1300 = vmatprep.subr.bf16.mxu0 0
      %1301 = vmatpush1.bf16.msra.mxu0 0
      %1302 = vmatprep.subr.bf16.mxu0 0
      %1303 = vmatpush1.bf16.msra.mxu0 0
      %1304 = vmatprep.subr.bf16.mxu0 0
      %1305 = vmatpush1.bf16.msra.mxu0 0
      %1306 = vmatprep.mubr.bf16.mxu0 0
      %1307 = vmatmul.mubr.bf16.gmra.mrb[0].mxu0 %v1123
      %v1308 = vpop.f32.mrb[0].mxu0
      %v1309 = vadd.f32 %v1190, %v1308
      %v1310 = vpop.f32.mrb[0].mxu0
      %v1311 = vpop.f32.mrb[0].mxu0
      %v1312 = vadd.f32 %v1193, %v1311
      %v1313 = vpop.f32.mrb[0].mxu0
      %1314 = vmatprep.mubr.bf16.mxu0 0
      %1315 = vmatmul.mubr.bf16.gmra.mrb[0].mxu0 %v1126
      %v1316 = vpop.f32.mrb[0].mxu0
      %v1317 = vadd.f32 %v1198, %v1316
      %v1318 = vpop.f32.mrb[0].mxu0
      %v1319 = vpop.f32.mrb[0].mxu0
      %v1320 = vadd.f32 %v1201, %v1319
      %v1321 = vpop.f32.mrb[0].mxu0
      %1322 = vmatprep.mubr.bf16.mxu0 0
      %1323 = vmatmul.mubr.bf16.gmra.mrb[0].mxu0 %v1129
      %v1324 = vpop.f32.mrb[0].mxu0
      %v1325 = vadd.f32 %v1206, %v1324
      %v1326 = vpop.f32.mrb[0].mxu0
      %v1327 = vpop.f32.mrb[0].mxu0
      %v1328 = vadd.f32 %v1209, %v1327
      %v1329 = vpop.f32.mrb[0].mxu0
      %1330 = vmatprep.mubr.bf16.mxu0 0
      %1331 = vmatmul.mubr.bf16.gmra.mrb[0].mxu0 %v1132
      %v1332 = vpop.f32.mrb[0].mxu0
      %v1333 = vadd.f32 %v1214, %v1332
      %v1334 = vpop.f32.mrb[0].mxu0
      %v1335 = vpop.f32.mrb[0].mxu0
      %v1336 = vadd.f32 %v1217, %v1335
      %v1337 = vpop.f32.mrb[0].mxu0
      %1338 = vmatprep.mubr.bf16.mxu0 0
      %1339 = vmatmul.mubr.bf16.gmra.mrb[0].mxu0 %v1135
      %v1340 = vpop.f32.mrb[0].mxu0
      %v1341 = vadd.f32 %v1222, %v1340
      %v1342 = vpop.f32.mrb[0].mxu0
      %v1343 = vpop.f32.mrb[0].mxu0
      %v1344 = vadd.f32 %v1225, %v1343
      %v1345 = vpop.f32.mrb[0].mxu0
      %1346 = vmatprep.mubr.bf16.mxu0 0
      %1347 = vmatmul.mubr.bf16.gmra.mrb[0].mxu0 %v1138
      %v1348 = vpop.f32.mrb[0].mxu0
      %v1349 = vadd.f32 %v1230, %v1348
      %v1350 = vpop.f32.mrb[0].mxu0
      %v1351 = vpop.f32.mrb[0].mxu0
      %v1352 = vadd.f32 %v1233, %v1351
      %v1353 = vpop.f32.mrb[0].mxu0
      %1354 = vmatprep.mubr.bf16.mxu0 0
      %1355 = vmatmul.mubr.bf16.gmra.mrb[0].mxu0 %v1141
      %v1356 = vpop.f32.mrb[0].mxu0
      %v1357 = vadd.f32 %v1238, %v1356
      %v1358 = vpop.f32.mrb[0].mxu0
      %v1359 = vpop.f32.mrb[0].mxu0
      %v1360 = vadd.f32 %v1241, %v1359
      %v1361 = vpop.f32.mrb[0].mxu0
      %1362 = vmatprep.mubr.bf16.mxu0 0
      %1363 = vmatmul.mubr.bf16.gmra.mrb[0].mxu0 %v1144
      %v1364 = vpop.f32.mrb[0].mxu0
      %v1365 = vadd.f32 %v1246, %v1364
      %v1366 = vpop.f32.mrb[0].mxu0
      %v1367 = vpop.f32.mrb[0].mxu0
      %v1368 = vadd.f32 %v1249, %v1367
      %v1369 = vpop.f32.mrb[0].mxu0
      %1370 = vmatprep.mubr.bf16.mxu0 0
      %1371 = vmatmul.mubr.bf16.gmra.mrb[0].mxu0 %v1147
      %v1372 = vpop.f32.mrb[0].mxu0
      %v1373 = vadd.f32 %v1254, %v1372
      %v1374 = vpop.f32.mrb[0].mxu0
      %v1375 = vpop.f32.mrb[0].mxu0
      %v1376 = vadd.f32 %v1257, %v1375
      %v1377 = vpop.f32.mrb[0].mxu0
      %1378 = vmatprep.mubr.bf16.mxu0 0
      %1379 = vmatmul.mubr.bf16.gmra.mrb[0].mxu0 %v1150
      %v1380 = vpop.f32.mrb[0].mxu0
      %v1381 = vadd.f32 %v1262, %v1380
      %v1382 = vpop.f32.mrb[0].mxu0
      %v1383 = vpop.f32.mrb[0].mxu0
      %v1384 = vadd.f32 %v1265, %v1383
      %v1385 = vpop.f32.mrb[0].mxu0
      %1386 = vmatprep.mubr.bf16.mxu0 0
      %1387 = vmatmul.mubr.bf16.gmra.mrb[0].mxu0 %v1153
      %v1388 = vpop.f32.mrb[0].mxu0
      %v1389 = vpop.f32.mrb[0].mxu0
      %v1390 = vpop.f32.mrb[0].mxu0
      %v1391 = vpop.f32.mrb[0].mxu0
      %1392 = vdwg.mxu0
      %v1393 = vld [vmem:[%s2] sm:$0x1]
      %v1395 = vlaneseq
      %v1396 = vshrl.u32 %v1395, 7
      %v1397 = vsub.s32 0, %v1396
      %v1398 = vrot.slane %v1393, %v1397
      %v1400 = vadd.f32 %v1309, %v1398
      %v1401 = vadd.f32 %v1312, %v1398
      %v1402 = vadd.f32 %v1317, %v1398
      %v1403 = vadd.f32 %v1320, %v1398
      %v1404 = vadd.f32 %v1325, %v1398
      %v1405 = vadd.f32 %v1328, %v1398
      %v1406 = vadd.f32 %v1333, %v1398
      %v1407 = vadd.f32 %v1336, %v1398
      %v1408 = vadd.f32 %v1341, %v1398
      %v1409 = vadd.f32 %v1344, %v1398
      %v1410 = vadd.f32 %v1349, %v1398
      %v1411 = vadd.f32 %v1352, %v1398
      %v1412 = vadd.f32 %v1357, %v1398
      %v1413 = vadd.f32 %v1360, %v1398
      %v1414 = vadd.f32 %v1365, %v1398
      %v1415 = vadd.f32 %v1368, %v1398
      %v1416 = vadd.f32 %v1373, %v1398
      %v1417 = vadd.f32 %v1376, %v1398
      %v1418 = vadd.f32 %v1381, %v1398
      %v1419 = vadd.f32 %v1384, %v1398
      %v1420 = vmax.f32 %v1400, 0.0
      %v1421 = vmax.f32 %v1401, 0.0
      %v1422 = vmax.f32 %v1402, 0.0
      %v1423 = vmax.f32 %v1403, 0.0
      %v1424 = vmax.f32 %v1404, 0.0
      %v1425 = vmax.f32 %v1405, 0.0
      %v1426 = vmax.f32 %v1406, 0.0
      %v1427 = vmax.f32 %v1407, 0.0
      %v1428 = vmax.f32 %v1408, 0.0
      %v1429 = vmax.f32 %v1409, 0.0
      %v1430 = vmax.f32 %v1410, 0.0
      %v1431 = vmax.f32 %v1411, 0.0
      %v1432 = vmax.f32 %v1412, 0.0
      %v1433 = vmax.f32 %v1413, 0.0
      %v1434 = vmax.f32 %v1414, 0.0
      %v1435 = vmax.f32 %v1415, 0.0
      %v1436 = vmax.f32 %v1416, 0.0
      %v1437 = vmax.f32 %v1417, 0.0
      %v1438 = vmax.f32 %v1418, 0.0
      %v1439 = vmax.f32 %v1419, 0.0
      %v1440 = vmax.f32 %v1420, %v1422
      %v1441 = vmax.f32 %v1421, %v1423
      %v1442 = vmax.f32 %v1424, %v1426
      %v1443 = vmax.f32 %v1425, %v1427
      %v1444 = vmax.f32 %v1428, %v1430
      %v1445 = vmax.f32 %v1429, %v1431
      %v1446 = vmax.f32 %v1432, %v1434
      %v1447 = vmax.f32 %v1433, %v1435
      %v1448 = vmax.f32 %v1436, %v1438
      %v1449 = vmax.f32 %v1437, %v1439
      %v1455 = vrot.slane %v1440, 1
      %v1456 = vrot.slane %v1442, 1
      %v1457 = vrot.slane %v1444, 1
      %v1458 = vrot.slane %v1446, 1
      %v1459 = vrot.slane %v1448, 1
      %v1465 = vmax.f32 %v1440, %v1455
      %v1466 = vmax.f32 %v1442, %v1456
      %v1467 = vmax.f32 %v1444, %v1457
      %v1468 = vmax.f32 %v1446, %v1458
      %v1469 = vmax.f32 %v1448, %v1459
      %v1475 = vrot.slane %v1441, 1
      %v1476 = vrot.slane %v1443, 1
      %v1477 = vrot.slane %v1445, 1
      %v1478 = vrot.slane %v1447, 1
      %v1479 = vrot.slane %v1449, 1
      %v1485 = vmax.f32 %v1441, %v1475
      %v1486 = vmax.f32 %v1443, %v1476
      %v1487 = vmax.f32 %v1445, %v1477
      %v1488 = vmax.f32 %v1447, %v1478
      %v1489 = vmax.f32 %v1449, %v1479
      %v1495 = vrot.slane %v1465, 1
      %v1496 = vrot.slane %v1466, 1
      %v1497 = vrot.slane %v1467, 1
      %v1498 = vrot.slane %v1468, 1
      %v1499 = vrot.slane %v1469, 1
      %v1505 = vrot.slane %v1465, 2
      %v1506 = vrot.slane %v1466, 2
      %v1507 = vrot.slane %v1467, 2
      %v1508 = vrot.slane %v1468, 2
      %v1509 = vrot.slane %v1469, 2
      %v1515 = vrot.slane %v1465, 3
      %v1516 = vrot.slane %v1466, 3
      %v1517 = vrot.slane %v1467, 3
      %v1518 = vrot.slane %v1468, 3
      %v1519 = vrot.slane %v1469, 3
      %v1530 = vrot.slane %v1485, 4
      %v1531 = vrot.slane %v1486, 4
      %v1532 = vrot.slane %v1487, 4
      %v1533 = vrot.slane %v1488, 4
      %v1534 = vrot.slane %v1489, 4
      %vm1540 = vcmask 1040384
      %v1541 = vsel %vm1540, %v1465, %v1495
      %v1542 = vsel %vm1540, %v1466, %v1496
      %v1543 = vsel %vm1540, %v1467, %v1497
      %v1544 = vsel %vm1540, %v1468, %v1498
      %v1545 = vsel %vm1540, %v1469, %v1499
      %vm1546 = vcmask 1041408
      %v1547 = vsel %vm1546, %v1541, %v1505
      %v1548 = vsel %vm1546, %v1542, %v1506
      %v1549 = vsel %vm1546, %v1543, %v1507
      %v1550 = vsel %vm1546, %v1544, %v1508
      %v1551 = vsel %vm1546, %v1545, %v1509
      %vm1552 = vcmask 1042432
      %v1553 = vsel %vm1552, %v1547, %v1515
      %v1554 = vsel %vm1552, %v1548, %v1516
      %v1555 = vsel %vm1552, %v1549, %v1517
      %v1556 = vsel %vm1552, %v1550, %v1518
      %v1557 = vsel %vm1552, %v1551, %v1519
      %vm1558 = vcmask 1043456
      %v1559 = vsel %vm1558, %v1553, %v1530
      %v1560 = vsel %vm1558, %v1554, %v1531
      %v1561 = vsel %vm1558, %v1555, %v1532
      %v1562 = vsel %vm1558, %v1556, %v1533
      %v1563 = vsel %vm1558, %v1557, %v1534
      %vm1564 = vcmask 258048
      %1565 = vst.msk [vmem:[%s170] sm:$0x1f] %vm1564, %v1559
      %1566 = vst.msk [vmem:[%s170 + $0x8] sm:$0x1f] %vm1564, %v1560
      %1567 = vst.msk [vmem:[%s170 + $0x10] sm:$0x1f] %vm1564, %v1561
      %1568 = vst.msk [vmem:[%s170 + $0x18] sm:$0x1f] %vm1564, %v1562
      %1569 = vst.msk [vmem:[%s170 + $0x20] sm:$0x1f] %vm1564, %v1563
      %p1570 = scmp.lt.s32.totalorder %s14, 1
      %s1571 = scalar_select %p1570, %s14, 1
      %s1572 = smul.addr %s1571, 5
      %s1573 = smul.addr %s1572, 8
      %s1574 = scalar_lea.vmem %s3, %s1573
      // Predicated region
      $region33: #{cnn_forward.4} parent=31 // pred_check
        %p1575 = pneg %p100
      $region34: #{cnn_forward.4} parent=31 // pred_check_branch
        %1577 = sbr.rel (%p1575) target = $region36
      $region35: #{cnn_forward.4} parent=31 // pred_region
        _
      $region36: #{cnn_forward.4} parent=31 // pred_fallthru
        _
    $region32: #{cnn_forward.4} parent=5 // pred_fallthru
      _
    %p1578 = scmp.le.s32.totalorder 2, %s9
    // Predicated region
    $region37: #{cnn_forward.4} parent=5 // pred_check
      %p1579 = pneg %p1578
    $region38: #{cnn_forward.4} parent=5 // pred_check_branch
      %1581 = sbr.rel (%p1579) target = $region40
    $region39: #{cnn_forward.4} parent=5 // pred_region
      %s1582 = ssub.s32 %s9, 2
      // Predicated region
      $region41: #{cnn_forward.4} parent=39 // pred_check
        %p1583 = pneg %p106
      $region42: #{cnn_forward.4} parent=39 // pred_check_branch
        %1585 = sbr.rel (%p1583) target = $region44
      $region43: #{cnn_forward.4} parent=39 // pred_region
        %p1586 = scmp.lt.s32.totalorder %s15, 1
        %s1587 = scalar_select %p1586, %s15, 1
        %s1588 = smul.addr %s1587, 5
        %s1589 = smul.addr %s1588, 8
        %s1590 = scalar_lea.vmem %s3, %s1589
      $region44: #{cnn_forward.4} parent=39 // pred_fallthru
        _
    $region40: #{cnn_forward.4} parent=5 // pred_fallthru
      _
  $region6: #{cnn_forward.4} parent=0 // loop_footer
    %s13 = sadd.s32 1, %s9
  $region7: #{cnn_forward.4} parent=0 // loop_footer_branch
    %8 = sbr.rel target = $region3
  $region8: #{cnn_forward.4} parent=0 // loop_exit
    _

// kernel: cnn_forward.5
$region0: #{cnn_forward.5}
  #allocation0 [shape = 'u32[]', space=smem, size = 0x4, offset = 0x4, fixed_abs, tag = 'smem constant byte address 0x4 - core index']
  #allocation1 [shape = 'u32[144,128]{1,0:T(1,128)}', space=vmem, size = 0x12000, scoped, tag = 'internal scratch']
  %s0 = inlined_call_operand.vmem [shape: f32[2,800], index: 0, kind: input, shape index: {}]
  %s1 = inlined_call_operand.vmem [shape: f32[800,128], index: 1, kind: input, shape index: {}]
  %s2 = inlined_call_operand.vmem [shape: f32[1,128], index: 2, kind: input, shape index: {}]
  %s3 = inlined_call_operand.vmem [shape: f32[128,10], index: 3, kind: input, shape index: {}]
  %s4 = inlined_call_operand.vmem [shape: f32[1,10], index: 4, kind: input, shape index: {}]
  %s5 = inlined_call_operand.hbm [shape: f32[2,10], index: 5, kind: output, shape index: {}]
  %s6 = sld [smem:[#allocation0]]
  $region30: #{cnn_forward.5} parent=0
    _
  %s8 = ssub.s32 1, %s6
  %s9 = scalar_select 0, %s8, %s6
  $region1: #{cnn_forward.5} parent=0
    #allocation2 [shape = 'u8[1024]{0}', space=vmem, size = 0x400, scoped, tag = 'output window, operand 0, single buffered']
    #allocation3 [shape = 's32[1]{0}', space=sflag, size = 0x4, scoped, tag = 'scoped memory for cnn_forward.5']
    %10 = vsyncpa [#allocation3], 0
    // Predicated region
    $region2: #{cnn_forward.5} parent=1 // pred_check
      _
    $region3: #{cnn_forward.5} parent=1 // pred_check_branch
      %12 = sbr.rel (0) target = $region5
    $region4: #{cnn_forward.5} parent=1 // pred_region
      _
    $region5: #{cnn_forward.5} parent=1 // pred_fallthru
      _
    // Predicated region
    $region6: #{cnn_forward.5} parent=1 // pred_check
      _
    $region7: #{cnn_forward.5} parent=1 // pred_check_branch
      %14 = sbr.rel (0) target = $region9
    $region8: #{cnn_forward.5} parent=1 // pred_region
      _
    $region9: #{cnn_forward.5} parent=1 // pred_fallthru
      _
    // Predicated region
    $region10: #{cnn_forward.5} parent=1 // pred_check
      _
    $region11: #{cnn_forward.5} parent=1 // pred_check_branch
      %16 = sbr.rel (0) target = $region13
    $region12: #{cnn_forward.5} parent=1 // pred_region
      _
    $region13: #{cnn_forward.5} parent=1 // pred_fallthru
      _
    // Predicated region
    $region14: #{cnn_forward.5} parent=1 // pred_check
      _
    $region15: #{cnn_forward.5} parent=1 // pred_check_branch
      %18 = sbr.rel (0) target = $region17
    $region16: #{cnn_forward.5} parent=1 // pred_region
      _
    $region17: #{cnn_forward.5} parent=1 // pred_fallthru
      _
    // Predicated region
    $region18: #{cnn_forward.5} parent=1 // pred_check
      _
    $region19: #{cnn_forward.5} parent=1 // pred_check_branch
      %20 = sbr.rel (0) target = $region21
    $region20: #{cnn_forward.5} parent=1 // pred_region
      _
    $region21: #{cnn_forward.5} parent=1 // pred_fallthru
      _
    %v22 = vld [vmem:[%s0] sm:$0xff]
    %v23 = vld [vmem:[%s0 + $0x8] sm:$0x3f]
    %v26 = vcombine.high %v22, %v22
    %v28 = vunpack.c.l.s4 1983009808
    %v29 = vunpack.c.0.s8 %v28
    %v30 = vlaneseq
    %v31 = vshrl.u32 %v30, 7
    %v32 = vsub.s32 %v29, %v31
    %v33 = vrot.slane %v22, %v32
    %v35 = vunpack.c.l.s4 1983009808
    %v36 = vunpack.c.0.s8 %v35
    %v37 = vlaneseq
    %v38 = vshrl.u32 %v37, 7
    %v39 = vsub.s32 %v36, %v38
    %v40 = vrot.slane %v26, %v39
    %v41 = vcombine.high %v33, %v33
    %v42 = vcombine.high %v40, %v40
    %v43 = vcombine.high %v23, %v23
    %v45 = vunpack.c.l.s4 1983009808
    %v46 = vunpack.c.0.s8 %v45
    %v47 = vlaneseq
    %v48 = vshrl.u32 %v47, 7
    %v49 = vsub.s32 %v46, %v48
    %v50 = vrot.slane %v23, %v49
    %v52 = vunpack.c.l.s4 1983009808
    %v53 = vunpack.c.0.s8 %v52
    %v54 = vlaneseq
    %v55 = vshrl.u32 %v54, 7
    %v56 = vsub.s32 %v53, %v55
    %v57 = vrot.slane %v43, %v56
    %v58 = vcombine.high %v50, %v50
    %v66 = vpack.c.bf16 %v33, %v33
    %v67 = vpack.c.bf16 %v41, %v41
    %v68 = vpack.c.bf16 %v40, %v40
    %v69 = vpack.c.bf16 %v42, %v42
    %v70 = vpack.c.bf16 %v50, %v50
    %v71 = vpack.c.bf16 %v58, %v58
    %v72 = vpack.c.bf16 %v57, %v57
    %v73 = vld [vmem:[%s1] sm:$0xff]
    %v74 = vld [vmem:[%s1 + $0x8] sm:$0xff]
    %v75 = vld [vmem:[%s1 + $0x10] sm:$0xff]
    %v76 = vld [vmem:[%s1 + $0x18] sm:$0xff]
    %v77 = vld [vmem:[%s1 + $0x20] sm:$0xff]
    %v78 = vld [vmem:[%s1 + $0x28] sm:$0xff]
    %v79 = vld [vmem:[%s1 + $0x30] sm:$0xff]
    %v80 = vld [vmem:[%s1 + $0x38] sm:$0xff]
    %v81 = vld [vmem:[%s1 + $0x40] sm:$0xff]
    %v82 = vld [vmem:[%s1 + $0x48] sm:$0xff]
    %v83 = vld [vmem:[%s1 + $0x50] sm:$0xff]
    %v84 = vld [vmem:[%s1 + $0x58] sm:$0xff]
    %v85 = vld [vmem:[%s1 + $0x60] sm:$0xff]
    %v86 = vld [vmem:[%s1 + $0x68] sm:$0xff]
    %v87 = vld [vmem:[%s1 + $0x70] sm:$0xff]
    %v88 = vld [vmem:[%s1 + $0x78] sm:$0xff]
    %v89 = vld [vmem:[%s1 + $0x80] sm:$0xff]
    %v90 = vld [vmem:[%s1 + $0x88] sm:$0xff]
    %v91 = vld [vmem:[%s1 + $0x90] sm:$0xff]
    %v92 = vld [vmem:[%s1 + $0x98] sm:$0xff]
    %v93 = vld [vmem:[%s1 + $0xa0] sm:$0xff]
    %v94 = vld [vmem:[%s1 + $0xa8] sm:$0xff]
    %v95 = vld [vmem:[%s1 + $0xb0] sm:$0xff]
    %v96 = vld [vmem:[%s1 + $0xb8] sm:$0xff]
    %v97 = vld [vmem:[%s1 + $0xc0] sm:$0xff]
    %v98 = vld [vmem:[%s1 + $0xc8] sm:$0xff]
    %v99 = vld [vmem:[%s1 + $0xd0] sm:$0xff]
    %v100 = vld [vmem:[%s1 + $0xd8] sm:$0xff]
    %v101 = vld [vmem:[%s1 + $0xe0] sm:$0xff]
    %v102 = vld [vmem:[%s1 + $0xe8] sm:$0xff]
    %v103 = vld [vmem:[%s1 + $0xf0] sm:$0xff]
    %v104 = vld [vmem:[%s1 + $0xf8] sm:$0xff]
    %v105 = vld [vmem:[%s1 + $0x100] sm:$0xff]
    %v106 = vld [vmem:[%s1 + $0x108] sm:$0xff]
    %v107 = vld [vmem:[%s1 + $0x110] sm:$0xff]
    %v108 = vld [vmem:[%s1 + $0x118] sm:$0xff]
    %v109 = vld [vmem:[%s1 + $0x120] sm:$0xff]
    %v110 = vld [vmem:[%s1 + $0x128] sm:$0xff]
    %v111 = vld [vmem:[%s1 + $0x130] sm:$0xff]
    %v112 = vld [vmem:[%s1 + $0x138] sm:$0xff]
    %v113 = vld [vmem:[%s1 + $0x140] sm:$0xff]
    %v114 = vld [vmem:[%s1 + $0x148] sm:$0xff]
    %v115 = vld [vmem:[%s1 + $0x150] sm:$0xff]
    %v116 = vld [vmem:[%s1 + $0x158] sm:$0xff]
    %v117 = vld [vmem:[%s1 + $0x160] sm:$0xff]
    %v118 = vld [vmem:[%s1 + $0x168] sm:$0xff]
    %v119 = vld [vmem:[%s1 + $0x170] sm:$0xff]
    %v120 = vld [vmem:[%s1 + $0x178] sm:$0xff]
    %v121 = vld [vmem:[%s1 + $0x180] sm:$0xff]
    %v122 = vld [vmem:[%s1 + $0x188] sm:$0xff]
    %v123 = vld [vmem:[%s1 + $0x190] sm:$0xff]
    %v124 = vld [vmem:[%s1 + $0x198] sm:$0xff]
    %v125 = vld [vmem:[%s1 + $0x1a0] sm:$0xff]
    %v126 = vld [vmem:[%s1 + $0x1a8] sm:$0xff]
    %v127 = vld [vmem:[%s1 + $0x1b0] sm:$0xff]
    %v128 = vld [vmem:[%s1 + $0x1b8] sm:$0xff]
    %v129 = vld [vmem:[%s1 + $0x1c0] sm:$0xff]
    %v130 = vld [vmem:[%s1 + $0x1c8] sm:$0xff]
    %v131 = vld [vmem:[%s1 + $0x1d0] sm:$0xff]
    %v132 = vld [vmem:[%s1 + $0x1d8] sm:$0xff]
    %v133 = vld [vmem:[%s1 + $0x1e0] sm:$0xff]
    %v134 = vld [vmem:[%s1 + $0x1e8] sm:$0xff]
    %v135 = vld [vmem:[%s1 + $0x1f0] sm:$0xff]
    %v136 = vld [vmem:[%s1 + $0x1f8] sm:$0xff]
    %v137 = vld [vmem:[%s1 + $0x200] sm:$0xff]
    %v138 = vld [vmem:[%s1 + $0x208] sm:$0xff]
    %v139 = vld [vmem:[%s1 + $0x210] sm:$0xff]
    %v140 = vld [vmem:[%s1 + $0x218] sm:$0xff]
    %v141 = vld [vmem:[%s1 + $0x220] sm:$0xff]
    %v142 = vld [vmem:[%s1 + $0x228] sm:$0xff]
    %v143 = vld [vmem:[%s1 + $0x230] sm:$0xff]
    %v144 = vld [vmem:[%s1 + $0x238] sm:$0xff]
    %v145 = vld [vmem:[%s1 + $0x240] sm:$0xff]
    %v146 = vld [vmem:[%s1 + $0x248] sm:$0xff]
    %v147 = vld [vmem:[%s1 + $0x250] sm:$0xff]
    %v148 = vld [vmem:[%s1 + $0x258] sm:$0xff]
    %v149 = vld [vmem:[%s1 + $0x260] sm:$0xff]
    %v150 = vld [vmem:[%s1 + $0x268] sm:$0xff]
    %v151 = vld [vmem:[%s1 + $0x270] sm:$0xff]
    %v152 = vld [vmem:[%s1 + $0x278] sm:$0xff]
    %v153 = vld [vmem:[%s1 + $0x280] sm:$0xff]
    %v154 = vld [vmem:[%s1 + $0x288] sm:$0xff]
    %v155 = vld [vmem:[%s1 + $0x290] sm:$0xff]
    %v156 = vld [vmem:[%s1 + $0x298] sm:$0xff]
    %v157 = vld [vmem:[%s1 + $0x2a0] sm:$0xff]
    %v158 = vld [vmem:[%s1 + $0x2a8] sm:$0xff]
    %v159 = vld [vmem:[%s1 + $0x2b0] sm:$0xff]
    %v160 = vld [vmem:[%s1 + $0x2b8] sm:$0xff]
    %v161 = vld [vmem:[%s1 + $0x2c0] sm:$0xff]
    %v162 = vld [vmem:[%s1 + $0x2c8] sm:$0xff]
    %v163 = vld [vmem:[%s1 + $0x2d0] sm:$0xff]
    %v164 = vld [vmem:[%s1 + $0x2d8] sm:$0xff]
    %v165 = vld [vmem:[%s1 + $0x2e0] sm:$0xff]
    %v166 = vld [vmem:[%s1 + $0x2e8] sm:$0xff]
    %v167 = vld [vmem:[%s1 + $0x2f0] sm:$0xff]
    %v168 = vld [vmem:[%s1 + $0x2f8] sm:$0xff]
    %v169 = vld [vmem:[%s1 + $0x300] sm:$0xff]
    %v170 = vld [vmem:[%s1 + $0x308] sm:$0xff]
    %v171 = vld [vmem:[%s1 + $0x310] sm:$0xff]
    %v172 = vld [vmem:[%s1 + $0x318] sm:$0xff]
    %v173 = vpack.c.bf16 %v74, %v73
    %v174 = vpack.c.bf16 %v76, %v75
    %v175 = vpack.c.bf16 %v78, %v77
    %v176 = vpack.c.bf16 %v80, %v79
    %v177 = vpack.c.bf16 %v82, %v81
    %v178 = vpack.c.bf16 %v84, %v83
    %v179 = vpack.c.bf16 %v86, %v85
    %v180 = vpack.c.bf16 %v88, %v87
    %v181 = vpack.c.bf16 %v90, %v89
    %v182 = vpack.c.bf16 %v92, %v91
    %v183 = vpack.c.bf16 %v94, %v93
    %v184 = vpack.c.bf16 %v96, %v95
    %v185 = vpack.c.bf16 %v98, %v97
    %v186 = vpack.c.bf16 %v100, %v99
    %v187 = vpack.c.bf16 %v102, %v101
    %v188 = vpack.c.bf16 %v104, %v103
    %v189 = vpack.c.bf16 %v106, %v105
    %v190 = vpack.c.bf16 %v108, %v107
    %v191 = vpack.c.bf16 %v110, %v109
    %v192 = vpack.c.bf16 %v112, %v111
    %v193 = vpack.c.bf16 %v114, %v113
    %v194 = vpack.c.bf16 %v116, %v115
    %v195 = vpack.c.bf16 %v118, %v117
    %v196 = vpack.c.bf16 %v120, %v119
    %v197 = vpack.c.bf16 %v122, %v121
    %v198 = vpack.c.bf16 %v124, %v123
    %v199 = vpack.c.bf16 %v126, %v125
    %v200 = vpack.c.bf16 %v128, %v127
    %v201 = vpack.c.bf16 %v130, %v129
    %v202 = vpack.c.bf16 %v132, %v131
    %v203 = vpack.c.bf16 %v134, %v133
    %v204 = vpack.c.bf16 %v136, %v135
    %v205 = vpack.c.bf16 %v138, %v137
    %v206 = vpack.c.bf16 %v140, %v139
    %v207 = vpack.c.bf16 %v142, %v141
    %v208 = vpack.c.bf16 %v144, %v143
    %v209 = vpack.c.bf16 %v146, %v145
    %v210 = vpack.c.bf16 %v148, %v147
    %v211 = vpack.c.bf16 %v150, %v149
    %v212 = vpack.c.bf16 %v152, %v151
    %v213 = vpack.c.bf16 %v154, %v153
    %v214 = vpack.c.bf16 %v156, %v155
    %v215 = vpack.c.bf16 %v158, %v157
    %v216 = vpack.c.bf16 %v160, %v159
    %v217 = vpack.c.bf16 %v162, %v161
    %v218 = vpack.c.bf16 %v164, %v163
    %v219 = vpack.c.bf16 %v166, %v165
    %v220 = vpack.c.bf16 %v168, %v167
    %v221 = vpack.c.bf16 %v170, %v169
    %v222 = vpack.c.bf16 %v172, %v171
    %v223 = vld [vmem:[%s2] sm:$0x1]
    %v225 = vlaneseq
    %v226 = vshrl.u32 %v225, 7
    %v227 = vsub.s32 0, %v226
    %v228 = vrot.slane %v223, %v227
    %vm230 = vcmask 261120
    %v232 = vsel %vm230, %v72, 0
    %234 = vmatprep.subr.bf16.mxu0 0
    %235 = vmatpush1.bf16.msra.mxu0 %v173
    %236 = vmatprep.subr.bf16.mxu0 0
    %237 = vmatpush1.bf16.msra.mxu0 %v174
    %238 = vmatprep.subr.bf16.mxu0 0
    %239 = vmatpush1.bf16.msra.mxu0 %v175
    %240 = vmatprep.subr.bf16.mxu0 0
    %241 = vmatpush1.bf16.msra.mxu0 %v176
    %242 = vmatprep.subr.bf16.mxu0 0
    %243 = vmatpush1.bf16.msra.mxu0 %v177
    %244 = vmatprep.subr.bf16.mxu0 0
    %245 = vmatpush1.bf16.msra.mxu0 %v178
    %246 = vmatprep.subr.bf16.mxu0 0
    %247 = vmatpush1.bf16.msra.mxu0 %v179
    %248 = vmatprep.subr.bf16.mxu0 0
    %249 = vmatpush1.bf16.msra.mxu0 %v180
    %250 = vmatprep.subr.bf16.mxu0 0
    %251 = vmatpush1.bf16.msra.mxu0 %v181
    %252 = vmatprep.subr.bf16.mxu0 0
    %253 = vmatpush1.bf16.msra.mxu0 %v182
    %254 = vmatprep.subr.bf16.mxu0 0
    %255 = vmatpush1.bf16.msra.mxu0 %v183
    %256 = vmatprep.subr.bf16.mxu0 0
    %257 = vmatpush1.bf16.msra.mxu0 %v184
    %258 = vmatprep.subr.bf16.mxu0 0
    %259 = vmatpush1.bf16.msra.mxu0 %v185
    %260 = vmatprep.subr.bf16.mxu0 0
    %261 = vmatpush1.bf16.msra.mxu0 %v186
    %262 = vmatprep.subr.bf16.mxu0 0
    %263 = vmatpush1.bf16.msra.mxu0 %v187
    %264 = vmatprep.subr.bf16.mxu0 0
    %265 = vmatpush1.bf16.msra.mxu0 %v188
    %266 = vmatprep.mubr.bf16.mxu0 %v67
    %267 = vmatmul.mubr.bf16.gmra.mrb[0].mxu0 %v66
    %v268 = vpop.f32.mrb[0].mxu0
    %v269 = vadd.f32 %v228, %v268
    %v270 = vpop.f32.mrb[0].mxu0
    %v271 = vpop.f32.mrb[0].mxu0
    %v272 = vpop.f32.mrb[0].mxu0
    %273 = vdwg.mxu0
    %274 = vmatprep.subr.bf16.mxu0 0
    %275 = vmatpush1.bf16.msra.mxu0 %v189
    %276 = vmatprep.subr.bf16.mxu0 0
    %277 = vmatpush1.bf16.msra.mxu0 %v190
    %278 = vmatprep.subr.bf16.mxu0 0
    %279 = vmatpush1.bf16.msra.mxu0 %v191
    %280 = vmatprep.subr.bf16.mxu0 0
    %281 = vmatpush1.bf16.msra.mxu0 %v192
    %282 = vmatprep.subr.bf16.mxu0 0
    %283 = vmatpush1.bf16.msra.mxu0 %v193
    %284 = vmatprep.subr.bf16.mxu0 0
    %285 = vmatpush1.bf16.msra.mxu0 %v194
    %286 = vmatprep.subr.bf16.mxu0 0
    %287 = vmatpush1.bf16.msra.mxu0 %v195
    %288 = vmatprep.subr.bf16.mxu0 0
    %289 = vmatpush1.bf16.msra.mxu0 %v196
    %290 = vmatprep.subr.bf16.mxu0 0
    %291 = vmatpush1.bf16.msra.mxu0 %v197
    %292 = vmatprep.subr.bf16.mxu0 0
    %293 = vmatpush1.bf16.msra.mxu0 %v198
    %294 = vmatprep.subr.bf16.mxu0 0
    %295 = vmatpush1.bf16.msra.mxu0 %v199
    %296 = vmatprep.subr.bf16.mxu0 0
    %297 = vmatpush1.bf16.msra.mxu0 %v200
    %298 = vmatprep.subr.bf16.mxu0 0
    %299 = vmatpush1.bf16.msra.mxu0 %v201
    %300 = vmatprep.subr.bf16.mxu0 0
    %301 = vmatpush1.bf16.msra.mxu0 %v202
    %302 = vmatprep.subr.bf16.mxu0 0
    %303 = vmatpush1.bf16.msra.mxu0 %v203
    %304 = vmatprep.subr.bf16.mxu0 0
    %305 = vmatpush1.bf16.msra.mxu0 %v204
    %306 = vmatprep.mubr.bf16.mxu0 %v69
    %307 = vmatmul.mubr.bf16.gmra.mrb[0].mxu0 %v68
    %v308 = vpop.f32.mrb[0].mxu0
    %v309 = vadd.f32 %v269, %v308
    %v310 = vpop.f32.mrb[0].mxu0
    %v311 = vpop.f32.mrb[0].mxu0
    %v312 = vpop.f32.mrb[0].mxu0
    %313 = vdwg.mxu0
    %314 = vmatprep.subr.bf16.mxu0 0
    %315 = vmatpush1.bf16.msra.mxu0 %v205
    %316 = vmatprep.subr.bf16.mxu0 0
    %317 = vmatpush1.bf16.msra.mxu0 %v206
    %318 = vmatprep.subr.bf16.mxu0 0
    %319 = vmatpush1.bf16.msra.mxu0 %v207
    %320 = vmatprep.subr.bf16.mxu0 0
    %321 = vmatpush1.bf16.msra.mxu0 %v208
    %322 = vmatprep.subr.bf16.mxu0 0
    %323 = vmatpush1.bf16.msra.mxu0 %v209
    %324 = vmatprep.subr.bf16.mxu0 0
    %325 = vmatpush1.bf16.msra.mxu0 %v210
    %326 = vmatprep.subr.bf16.mxu0 0
    %327 = vmatpush1.bf16.msra.mxu0 %v211
    %328 = vmatprep.subr.bf16.mxu0 0
    %329 = vmatpush1.bf16.msra.mxu0 %v212
    %330 = vmatprep.subr.bf16.mxu0 0
    %331 = vmatpush1.bf16.msra.mxu0 %v213
    %332 = vmatprep.subr.bf16.mxu0 0
    %333 = vmatpush1.bf16.msra.mxu0 %v214
    %334 = vmatprep.subr.bf16.mxu0 0
    %335 = vmatpush1.bf16.msra.mxu0 %v215
    %336 = vmatprep.subr.bf16.mxu0 0
    %337 = vmatpush1.bf16.msra.mxu0 %v216
    %338 = vmatprep.subr.bf16.mxu0 0
    %339 = vmatpush1.bf16.msra.mxu0 %v217
    %340 = vmatprep.subr.bf16.mxu0 0
    %341 = vmatpush1.bf16.msra.mxu0 %v218
    %342 = vmatprep.subr.bf16.mxu0 0
    %343 = vmatpush1.bf16.msra.mxu0 %v219
    %344 = vmatprep.subr.bf16.mxu0 0
    %345 = vmatpush1.bf16.msra.mxu0 %v220
    %346 = vmatprep.mubr.bf16.mxu0 %v71
    %347 = vmatmul.mubr.bf16.gmra.mrb[0].mxu0 %v70
    %v348 = vpop.f32.mrb[0].mxu0
    %v349 = vadd.f32 %v309, %v348
    %v350 = vpop.f32.mrb[0].mxu0
    %v351 = vpop.f32.mrb[0].mxu0
    %v352 = vpop.f32.mrb[0].mxu0
    %353 = vdwg.mxu0
    %354 = vmatprep.subr.bf16.mxu0 0
    %355 = vmatpush1.bf16.msra.mxu0 %v221
    %356 = vmatprep.subr.bf16.mxu0 0
    %357 = vmatpush1.bf16.msra.mxu0 %v222
    %358 = vmatprep.subr.bf16.mxu0 0
    %359 = vmatpush1.bf16.msra.mxu0 0
    %360 = vmatprep.subr.bf16.mxu0 0
    %361 = vmatpush1.bf16.msra.mxu0 0
    %362 = vmatprep.subr.bf16.mxu0 0
    %363 = vmatpush1.bf16.msra.mxu0 0
    %364 = vmatprep.subr.bf16.mxu0 0
    %365 = vmatpush1.bf16.msra.mxu0 0
    %366 = vmatprep.subr.bf16.mxu0 0
    %367 = vmatpush1.bf16.msra.mxu0 0
    %368 = vmatprep.subr.bf16.mxu0 0
    %369 = vmatpush1.bf16.msra.mxu0 0
    %370 = vmatprep.subr.bf16.mxu0 0
    %371 = vmatpush1.bf16.msra.mxu0 0
    %372 = vmatprep.subr.bf16.mxu0 0
    %373 = vmatpush1.bf16.msra.mxu0 0
    %374 = vmatprep.subr.bf16.mxu0 0
    %375 = vmatpush1.bf16.msra.mxu0 0
    %376 = vmatprep.subr.bf16.mxu0 0
    %377 = vmatpush1.bf16.msra.mxu0 0
    %378 = vmatprep.subr.bf16.mxu0 0
    %379 = vmatpush1.bf16.msra.mxu0 0
    %380 = vmatprep.subr.bf16.mxu0 0
    %381 = vmatpush1.bf16.msra.mxu0 0
    %382 = vmatprep.subr.bf16.mxu0 0
    %383 = vmatpush1.bf16.msra.mxu0 0
    %384 = vmatprep.subr.bf16.mxu0 0
    %385 = vmatpush1.bf16.msra.mxu0 0
    %386 = vmatprep.mubr.bf16.mxu0 0
    %387 = vmatmul.mubr.bf16.gmra.mrb[0].mxu0 %v232
    %v388 = vpop.f32.mrb[0].mxu0
    %v389 = vadd.f32 %v349, %v388
    %v390 = vpop.f32.mrb[0].mxu0
    %v391 = vpop.f32.mrb[0].mxu0
    %v392 = vpop.f32.mrb[0].mxu0
    %393 = vdwg.mxu0
    %v394 = vmax.f32 %v389, 0.0
    %v395 = vpack.c.bf16 %v394, %v394
    %v396 = vld [vmem:[%s3] sm:$0xff]
    %v397 = vld [vmem:[%s3 + $0x8] sm:$0xff]
    %v398 = vld [vmem:[%s3 + $0x10] sm:$0xff]
    %v399 = vld [vmem:[%s3 + $0x18] sm:$0xff]
    %v400 = vld [vmem:[%s3 + $0x20] sm:$0xff]
    %v401 = vld [vmem:[%s3 + $0x28] sm:$0xff]
    %v402 = vld [vmem:[%s3 + $0x30] sm:$0xff]
    %v403 = vld [vmem:[%s3 + $0x38] sm:$0xff]
    %v404 = vld [vmem:[%s3 + $0x40] sm:$0xff]
    %v405 = vld [vmem:[%s3 + $0x48] sm:$0xff]
    %v406 = vld [vmem:[%s3 + $0x50] sm:$0xff]
    %v407 = vld [vmem:[%s3 + $0x58] sm:$0xff]
    %v408 = vld [vmem:[%s3 + $0x60] sm:$0xff]
    %v409 = vld [vmem:[%s3 + $0x68] sm:$0xff]
    %v410 = vld [vmem:[%s3 + $0x70] sm:$0xff]
    %v411 = vld [vmem:[%s3 + $0x78] sm:$0xff]
    %v412 = vpack.c.bf16 %v397, %v396
    %v413 = vpack.c.bf16 %v399, %v398
    %v414 = vpack.c.bf16 %v401, %v400
    %v415 = vpack.c.bf16 %v403, %v402
    %v416 = vpack.c.bf16 %v405, %v404
    %v417 = vpack.c.bf16 %v407, %v406
    %v418 = vpack.c.bf16 %v409, %v408
    %v419 = vpack.c.bf16 %v411, %v410
    %v420 = vld [vmem:[%s4] sm:$0x1]
    %v422 = vlaneseq
    %v423 = vshrl.u32 %v422, 7
    %v424 = vsub.s32 0, %v423
    %v425 = vrot.slane %v420, %v424
    %427 = vmatprep.subr.bf16.mxu0 0
    %428 = vmatpush1.bf16.msra.mxu0 %v412
    %429 = vmatprep.subr.bf16.mxu0 0
    %430 = vmatpush1.bf16.msra.mxu0 %v413
    %431 = vmatprep.subr.bf16.mxu0 0
    %432 = vmatpush1.bf16.msra.mxu0 %v414
    %433 = vmatprep.subr.bf16.mxu0 0
    %434 = vmatpush1.bf16.msra.mxu0 %v415
    %435 = vmatprep.subr.bf16.mxu0 0
    %436 = vmatpush1.bf16.msra.mxu0 %v416
    %437 = vmatprep.subr.bf16.mxu0 0
    %438 = vmatpush1.bf16.msra.mxu0 %v417
    %439 = vmatprep.subr.bf16.mxu0 0
    %440 = vmatpush1.bf16.msra.mxu0 %v418
    %441 = vmatprep.subr.bf16.mxu0 0
    %442 = vmatpush1.bf16.msra.mxu0 %v419
    %443 = vmatprep.subr.bf16.mxu0 0
    %444 = vmatpush1.bf16.msra.mxu0 0
    %445 = vmatprep.subr.bf16.mxu0 0
    %446 = vmatpush1.bf16.msra.mxu0 0
    %447 = vmatprep.subr.bf16.mxu0 0
    %448 = vmatpush1.bf16.msra.mxu0 0
    %449 = vmatprep.subr.bf16.mxu0 0
    %450 = vmatpush1.bf16.msra.mxu0 0
    %451 = vmatprep.subr.bf16.mxu0 0
    %452 = vmatpush1.bf16.msra.mxu0 0
    %453 = vmatprep.subr.bf16.mxu0 0
    %454 = vmatpush1.bf16.msra.mxu0 0
    %455 = vmatprep.subr.bf16.mxu0 0
    %456 = vmatpush1.bf16.msra.mxu0 0
    %457 = vmatprep.subr.bf16.mxu0 0
    %458 = vmatpush1.bf16.msra.mxu0 0
    %459 = vmatprep.mubr.bf16.mxu0 0
    %460 = vmatmul.mubr.bf16.gmra.mrb[0].mxu0 %v395
    %v461 = vpop.f32.mrb[0].mxu0
    %v462 = vadd.f32 %v425, %v461
    %v463 = vpop.f32.mrb[0].mxu0
    %v464 = vpop.f32.mrb[0].mxu0
    %v465 = vpop.f32.mrb[0].mxu0
    %466 = vdwg.mxu0
    %vm467 = vcmask 74752
    %v468 = vsel %vm467, %v462, -inf
    %469 = vmax.xlane.f32.xlu0 %v468
    %v470 = vpop.xlane.xlu0 %469
    %v471 = vsub.f32 %v462, %v470
    %v472 = vmul.f32 %v471, 1.442695
    %v473 = vpow.pop %v472
    %v474 = vsel %vm467, %v473, 0.0
    %475 = vadd.xlane.f32.xlu0 %v474
    %v476 = vpop.xlane.xlu0 %475
    %v477 = vrcp.pop %v476
    %v478 = vmul.f32 %v473, %v477
    %479 = vst.msk [vmem:[#allocation2] sm:$0x3] %vm467, %v478
    // Predicated region
    $region22: #{cnn_forward.5} parent=1 // pred_check
      _
    $region23: #{cnn_forward.5} parent=1 // pred_check_branch
      %481 = sbr.rel (0) target = $region25
    $region24: #{cnn_forward.5} parent=1 // pred_region
      %s483 = ssub.s32 32, 32
      %484 = vsyncadd [#allocation3], %s483
      %s486 = sshll.u32 [#allocation2], 4
      %s487 = int_to_ptr.vmem [resolvable:$true] %s486
      %489 = dma.vmem_to_hbm [thread:$0]  %s487, 32, %s5, [#allocation3]
    $region25: #{cnn_forward.5} parent=1 // pred_fallthru
      _
    // Predicated region
    $region26: #{cnn_forward.5} parent=1 // pred_check
      _
    $region27: #{cnn_forward.5} parent=1 // pred_check_branch
      %491 = sbr.rel (0) target = $region29
    $region28: #{cnn_forward.5} parent=1 // pred_region
      %492 = dma.done [#allocation3], 32
    $region29: #{cnn_forward.5} parent=1 // pred_fallthru
      _
    %493 = vsyncpa [#allocation3], 1

// kernel: cnn_forward.3
$region0: #{cnn_forward.3}
  #allocation0 [shape = 'u32[]', space=smem, size = 0x4, offset = 0x4, fixed_abs, tag = 'smem constant byte address 0x4 - core index']
  #allocation1 [shape = 'u32[144,128]{1,0:T(1,128)}', space=vmem, size = 0x12000, scoped, tag = 'internal scratch']
  %s0 = inlined_call_operand.vmem [shape: f32[2,28,34,1], index: 0, kind: input, shape index: {}]
  %s1 = inlined_call_operand.vmem [shape: f32[9,32], index: 1, kind: input, shape index: {}]
  %s2 = inlined_call_operand.vmem [shape: f32[1,32], index: 2, kind: input, shape index: {}]
  %s3 = inlined_call_operand.vmem [shape: f32[2,13,18,32], index: 3, kind: output, shape index: {}]
  %s4 = sld [smem:[#allocation0]]
  $region45: #{cnn_forward.3} parent=0
    _
  %s6 = ssub.s32 1, %s4
  %s7 = scalar_select 0, %s6, %s4
  loop: start=0, step=1, limit=4
  $region2: #{cnn_forward.3} parent=0 // loop_pre_header
    _
  $region3: #{cnn_forward.3} parent=0 // loop_header
    %s9 = sphi 0, %s13
    %p10 = scmp.ge.s32.totalorder %s9, 4
    %s19 = sphi 0, %s21
    %s22 = sphi 0, %s19
    %s23 = sphi 0, %s22
    %s39 = sphi 0, %s23
    %s43 = sphi 0, %s43
    %s45 = sphi 0, %s43
    %s46 = sphi 0, %s45
    %s60 = sphi 0, %s46
    %s64 = sphi 0, %s64
    %s66 = sphi 0, %s64
    %s67 = sphi 0, %s66
    %s81 = sphi 0, %s67
    %s87 = sphi 0, %s89
    %s90 = sphi 0, %s87
    %s91 = sphi 0, %s90
    %s107 = sphi 0, %s91
  $region4: #{cnn_forward.3} parent=0 // loop_header_branch
    %12 = sbr.rel (%p10) target = $region8
  $region5: #{cnn_forward.3} parent=0 // loop_body
    %s14 = ssub.s32 %s9, 1
    %s15 = ssub.s32 %s9, 2
    %s16 = sadd.s32 %s9, 1
    %s17 = ssub.s32 %s9, %s16
    %p18 = scmp.eq.s32.totalorder %s17, 0
    %s20 = sadd.s32 %s19, 1
    %s21 = scalar_select %p18, %s19, %s20
    %p24 = pneg %p18
    %p25 = scmp.eq.s32.totalorder %s9, 1
    %p26 = por %p24, %p25
    %p27 = scmp.ne.s32.totalorder %s19, %s22
    %p28 = scmp.eq.s32.totalorder %s9, 0
    %p29 = por %p27, %p28
    %p30 = scmp.ne.s32.totalorder %s19, %s22
    %p31 = scmp.eq.s32.totalorder %s14, 1
    %p32 = por %p30, %p31
    %p33 = scmp.ne.s32.totalorder %s22, %s23
    %p34 = scmp.eq.s32.totalorder %s14, 0
    %p35 = por %p33, %p34
    %p36 = scmp.ne.s32.totalorder %s22, %s23
    %p37 = scmp.eq.s32.totalorder %s15, 1
    %p38 = por %p36, %p37
    %p40 = scmp.ne.s32.totalorder %s23, %s39
    %p41 = scmp.eq.s32.totalorder %s15, 0
    %p42 = por %p40, %p41
    %s44 = sadd.s32 %s43, 1
    %p47 = scmp.eq.s32.totalorder %s9, 1
    %p48 = scmp.ne.s32.totalorder %s43, %s45
    %p49 = scmp.eq.s32.totalorder %s9, 0
    %p50 = por %p48, %p49
    %p51 = scmp.ne.s32.totalorder %s43, %s45
    %p52 = scmp.eq.s32.totalorder %s14, 1
    %p53 = por %p51, %p52
    %p54 = scmp.ne.s32.totalorder %s45, %s46
    %p55 = scmp.eq.s32.totalorder %s14, 0
    %p56 = por %p54, %p55
    %p57 = scmp.ne.s32.totalorder %s45, %s46
    %p58 = scmp.eq.s32.totalorder %s15, 1
    %p59 = por %p57, %p58
    %p61 = scmp.ne.s32.totalorder %s46, %s60
    %p62 = scmp.eq.s32.totalorder %s15, 0
    %p63 = por %p61, %p62
    %s65 = sadd.s32 %s64, 1
    %p68 = scmp.eq.s32.totalorder %s9, 1
    %p69 = scmp.ne.s32.totalorder %s64, %s66
    %p70 = scmp.eq.s32.totalorder %s9, 0
    %p71 = por %p69, %p70
    %p72 = scmp.ne.s32.totalorder %s64, %s66
    %p73 = scmp.eq.s32.totalorder %s14, 1
    %p74 = por %p72, %p73
    %p75 = scmp.ne.s32.totalorder %s66, %s67
    %p76 = scmp.eq.s32.totalorder %s14, 0
    %p77 = por %p75, %p76
    %p78 = scmp.ne.s32.totalorder %s66, %s67
    %p79 = scmp.eq.s32.totalorder %s15, 1
    %p80 = por %p78, %p79
    %p82 = scmp.ne.s32.totalorder %s67, %s81
    %p83 = scmp.eq.s32.totalorder %s15, 0
    %p84 = por %p82, %p83
    %s85 = ssub.s32 %s9, %s16
    %p86 = scmp.eq.s32.totalorder %s85, 0
    %s88 = sadd.s32 %s87, 1
    %s89 = scalar_select %p86, %s87, %s88
    %p92 = pneg %p86
    %p93 = scmp.eq.s32.totalorder %s9, 1
    %p94 = por %p92, %p93
    %p95 = scmp.ne.s32.totalorder %s87, %s90
    %p96 = scmp.eq.s32.totalorder %s9, 0
    %p97 = por %p95, %p96
    %p98 = scmp.ne.s32.totalorder %s87, %s90
    %p99 = scmp.eq.s32.totalorder %s14, 1
    %p100 = por %p98, %p99
    %p101 = scmp.ne.s32.totalorder %s90, %s91
    %p102 = scmp.eq.s32.totalorder %s14, 0
    %p103 = por %p101, %p102
    %p104 = scmp.ne.s32.totalorder %s90, %s91
    %p105 = scmp.eq.s32.totalorder %s15, 1
    %p106 = por %p104, %p105
    %p108 = scmp.ne.s32.totalorder %s91, %s107
    %p109 = scmp.eq.s32.totalorder %s15, 0
    %p110 = por %p108, %p109
    %p111 = scmp.le.s32.totalorder 1, %s9
    %p112 = scmp.lt.s32.totalorder %s9, 3
    %p113 = pnand %p111, %p112
    %p114 = pneg %p113
    // Predicated region
    $region9: #{cnn_forward.3} parent=5 // pred_check
      _
    $region10: #{cnn_forward.3} parent=5 // pred_check_branch
      %116 = sbr.rel (%p113) target = $region12
    $region11: #{cnn_forward.3} parent=5 // pred_region
      %s117 = ssub.s32 %s9, 1
      // Predicated region
      $region13: #{cnn_forward.3} parent=11 // pred_check
        %p118 = pneg %p56
      $region14: #{cnn_forward.3} parent=11 // pred_check_branch
        %120 = sbr.rel (%p118) target = $region16
      $region15: #{cnn_forward.3} parent=11 // pred_region
        _
      $region16: #{cnn_forward.3} parent=11 // pred_fallthru
        _
      // Predicated region
      $region17: #{cnn_forward.3} parent=11 // pred_check
        %p121 = pneg %p77
      $region18: #{cnn_forward.3} parent=11 // pred_check_branch
        %123 = sbr.rel (%p121) target = $region20
      $region19: #{cnn_forward.3} parent=11 // pred_region
        _
      $region20: #{cnn_forward.3} parent=11 // pred_fallthru
        _
    $region12: #{cnn_forward.3} parent=5 // pred_fallthru
      _
    %p124 = scmp.lt.s32.totalorder %s9, 2
    // Predicated region
    $region21: #{cnn_forward.3} parent=5 // pred_check
      %p125 = pneg %p124
    $region22: #{cnn_forward.3} parent=5 // pred_check_branch
      %127 = sbr.rel (%p125) target = $region24
    $region23: #{cnn_forward.3} parent=5 // pred_region
      // Predicated region
      $region25: #{cnn_forward.3} parent=23 // pred_check
        %p128 = pneg %p29
      $region26: #{cnn_forward.3} parent=23 // pred_check_branch
        %130 = sbr.rel (%p128) target = $region28
      $region27: #{cnn_forward.3} parent=23 // pred_region
        %p131 = scmp.lt.s32.totalorder %s9, 1
        %s132 = scalar_select %p131, %s9, 1
        %s133 = smul.addr %s132, 140
        %s134 = smul.addr %s133, 8
        %s135 = scalar_lea.vmem %s0, %s134
      $region28: #{cnn_forward.3} parent=23 // pred_fallthru
        _
    $region24: #{cnn_forward.3} parent=5 // pred_fallthru
      _
    %p136 = scmp.le.s32.totalorder 1, %s9
    %p137 = scmp.lt.s32.totalorder %s9, 3
    %p138 = pnand %p136, %p137
    %p139 = pneg %p138
    // Predicated region
    $region29: #{cnn_forward.3} parent=5 // pred_check
      _
    $region30: #{cnn_forward.3} parent=5 // pred_check_branch
      %141 = sbr.rel (%p138) target = $region32
    $region31: #{cnn_forward.3} parent=5 // pred_region
      %s142 = ssub.s32 %s9, 1
      %p143 = scmp.lt.s32.totalorder %s14, 1
      %s144 = scalar_select %p143, %s14, 1
      %s145 = smul.addr %s144, 140
      %s146 = smul.addr %s145, 8
      %s147 = scalar_lea.vmem %s0, %s146
      %p148 = pneg %p35
      %p149 = pneg %p32
      %p150 = pneg %p56
      %p151 = pneg %p53
      %p152 = pneg %p77
      %p153 = pneg %p74
      %p154 = pneg %p103
      %p155 = pneg %p100
      %p156 = scmp.lt.s32.totalorder %s14, 1
      %s157 = scalar_select %p156, %s14, 1
      %s158 = smul.addr %s157, 39
      %s159 = smul.addr %s158, 8
      %s160 = scalar_lea.vmem %s3, %s159
      %p161 = scmp.lt.s32.totalorder %s14, 1
      %s162 = scalar_select %p161, %s14, 1
      %s163 = smul.addr %s162, 140
      %s164 = smul.addr %s163, 8
      %s165 = scalar_lea.vmem %s0, %s164
      %p166 = scmp.lt.s32.totalorder %s14, 1
      %s167 = scalar_select %p166, %s14, 1
      %s168 = smul.addr %s167, 39
      %s169 = smul.addr %s168, 8
      %s170 = scalar_lea.vmem %s3, %s169
      %v171 = vld [vmem:[%s165] sm:$0xff]
      %v172 = vld [vmem:[%s165 + $0x8] sm:$0xff]
      %v173 = vld [vmem:[%s165 + $0x10] sm:$0xff]
      %v174 = vld [vmem:[%s165 + $0x18] sm:$0xff]
      %v175 = vld [vmem:[%s165 + $0x28] sm:$0xff]
      %v176 = vld [vmem:[%s165 + $0x30] sm:$0xff]
      %v177 = vld [vmem:[%s165 + $0x38] sm:$0xff]
      %v178 = vld [vmem:[%s165 + $0x40] sm:$0xff]
      %v179 = vld [vmem:[%s165 + $0x50] sm:$0xff]
      %v180 = vld [vmem:[%s165 + $0x58] sm:$0xff]
      %v181 = vld [vmem:[%s165 + $0x60] sm:$0xff]
      %v182 = vld [vmem:[%s165 + $0x68] sm:$0xff]
      %v183 = vld [vmem:[%s165 + $0x78] sm:$0xff]
      %v184 = vld [vmem:[%s165 + $0x80] sm:$0xff]
      %v185 = vld [vmem:[%s165 + $0x88] sm:$0xff]
      %v186 = vld [vmem:[%s165 + $0x90] sm:$0xff]
      %v187 = vld [vmem:[%s165 + $0xa0] sm:$0xff]
      %v188 = vld [vmem:[%s165 + $0xa8] sm:$0xff]
      %v189 = vld [vmem:[%s165 + $0xb0] sm:$0xff]
      %v190 = vld [vmem:[%s165 + $0xb8] sm:$0xff]
      %v191 = vld [vmem:[%s165 + $0xc8] sm:$0xff]
      %v192 = vld [vmem:[%s165 + $0xd0] sm:$0xff]
      %v193 = vld [vmem:[%s165 + $0xd8] sm:$0xff]
      %v194 = vld [vmem:[%s165 + $0xe0] sm:$0xff]
      %v195 = vld [vmem:[%s165 + $0xf0] sm:$0xff]
      %v196 = vld [vmem:[%s165 + $0xf8] sm:$0xff]
      %v197 = vld [vmem:[%s165 + $0x100] sm:$0xff]
      %v198 = vld [vmem:[%s165 + $0x108] sm:$0xff]
      %v199 = vld [vmem:[%s165 + $0x118] sm:$0xff]
      %v200 = vld [vmem:[%s165 + $0x120] sm:$0xff]
      %v201 = vld [vmem:[%s165 + $0x128] sm:$0xff]
      %v202 = vld [vmem:[%s165 + $0x130] sm:$0xff]
      %v203 = vld [vmem:[%s165 + $0x140] sm:$0xff]
      %v204 = vld [vmem:[%s165 + $0x148] sm:$0xff]
      %v205 = vld [vmem:[%s165 + $0x150] sm:$0xff]
      %v206 = vld [vmem:[%s165 + $0x158] sm:$0xff]
      %v207 = vld [vmem:[%s165 + $0x168] sm:$0xff]
      %v208 = vld [vmem:[%s165 + $0x170] sm:$0xff]
      %v209 = vld [vmem:[%s165 + $0x178] sm:$0xff]
      %v210 = vld [vmem:[%s165 + $0x180] sm:$0xff]
      %v211 = vld [vmem:[%s165 + $0x190] sm:$0xff]
      %v212 = vld [vmem:[%s165 + $0x198] sm:$0xff]
      %v213 = vld [vmem:[%s165 + $0x1a0] sm:$0xff]
      %v214 = vld [vmem:[%s165 + $0x1a8] sm:$0xff]
      %v215 = vld [vmem:[%s165 + $0x1b8] sm:$0xff]
      %v216 = vld [vmem:[%s165 + $0x1c0] sm:$0xff]
      %v217 = vld [vmem:[%s165 + $0x1c8] sm:$0xff]
      %v218 = vld [vmem:[%s165 + $0x1d0] sm:$0xff]
      %v219 = vld [vmem:[%s165 + $0x1e0] sm:$0xff]
      %v220 = vld [vmem:[%s165 + $0x1e8] sm:$0xff]
      %v221 = vld [vmem:[%s165 + $0x1f0] sm:$0xff]
      %v222 = vld [vmem:[%s165 + $0x1f8] sm:$0xff]
      %v223 = vld [vmem:[%s165 + $0x208] sm:$0xff]
      %v224 = vld [vmem:[%s165 + $0x210] sm:$0xff]
      %v225 = vld [vmem:[%s165 + $0x218] sm:$0xff]
      %v226 = vld [vmem:[%s165 + $0x220] sm:$0xff]
      %v227 = vld [vmem:[%s165 + $0x230] sm:$0xff]
      %v228 = vld [vmem:[%s165 + $0x238] sm:$0xff]
      %v229 = vld [vmem:[%s165 + $0x240] sm:$0xff]
      %v230 = vld [vmem:[%s165 + $0x248] sm:$0xff]
      %v231 = vld [vmem:[%s165 + $0x258] sm:$0xff]
      %v232 = vld [vmem:[%s165 + $0x260] sm:$0xff]
      %v233 = vld [vmem:[%s165 + $0x268] sm:$0xff]
      %v234 = vld [vmem:[%s165 + $0x270] sm:$0xff]
      %v235 = vld [vmem:[%s165 + $0x280] sm:$0xff]
      %v236 = vld [vmem:[%s165 + $0x288] sm:$0xff]
      %v237 = vld [vmem:[%s165 + $0x290] sm:$0xff]
      %v238 = vld [vmem:[%s165 + $0x298] sm:$0xff]
      %v239 = vld [vmem:[%s165 + $0x2a8] sm:$0xff]
      %v240 = vld [vmem:[%s165 + $0x2b0] sm:$0xff]
      %v241 = vld [vmem:[%s165 + $0x2b8] sm:$0xff]
      %v242 = vld [vmem:[%s165 + $0x2c0] sm:$0xff]
      %v243 = vld [vmem:[%s165 + $0x2d0] sm:$0xff]
      %v244 = vld [vmem:[%s165 + $0x2d8] sm:$0xff]
      %v245 = vld [vmem:[%s165 + $0x2e0] sm:$0xff]
      %v246 = vld [vmem:[%s165 + $0x2e8] sm:$0xff]
      %v247 = vld [vmem:[%s165 + $0x2f8] sm:$0xff]
      %v248 = vld [vmem:[%s165 + $0x300] sm:$0xff]
      %v249 = vld [vmem:[%s165 + $0x308] sm:$0xff]
      %v250 = vld [vmem:[%s165 + $0x310] sm:$0xff]
      %v251 = vld [vmem:[%s165 + $0x320] sm:$0xff]
      %v252 = vld [vmem:[%s165 + $0x328] sm:$0xff]
      %v253 = vld [vmem:[%s165 + $0x330] sm:$0xff]
      %v254 = vld [vmem:[%s165 + $0x338] sm:$0xff]
      %v255 = vld [vmem:[%s165 + $0x348] sm:$0xff]
      %v256 = vld [vmem:[%s165 + $0x350] sm:$0xff]
      %v257 = vld [vmem:[%s165 + $0x358] sm:$0xff]
      %v258 = vld [vmem:[%s165 + $0x360] sm:$0xff]
      %v259 = vld [vmem:[%s165 + $0x370] sm:$0xff]
      %v260 = vld [vmem:[%s165 + $0x378] sm:$0xff]
      %v261 = vld [vmem:[%s165 + $0x380] sm:$0xff]
      %v262 = vld [vmem:[%s165 + $0x388] sm:$0xff]
      %v263 = vld [vmem:[%s165 + $0x398] sm:$0xff]
      %v264 = vld [vmem:[%s165 + $0x3a0] sm:$0xff]
      %v265 = vld [vmem:[%s165 + $0x3a8] sm:$0xff]
      %v266 = vld [vmem:[%s165 + $0x3b0] sm:$0xff]
      %v267 = vld [vmem:[%s165 + $0x3c0] sm:$0xff]
      %v268 = vld [vmem:[%s165 + $0x3c8] sm:$0xff]
      %v269 = vld [vmem:[%s165 + $0x3d0] sm:$0xff]
      %v270 = vld [vmem:[%s165 + $0x3d8] sm:$0xff]
      %v271 = vld [vmem:[%s165 + $0x3e8] sm:$0xff]
      %v272 = vld [vmem:[%s165 + $0x3f0] sm:$0xff]
      %v273 = vld [vmem:[%s165 + $0x3f8] sm:$0xff]
      %v274 = vld [vmem:[%s165 + $0x400] sm:$0xff]
      %v275 = vpack.c.bf16 %v172, %v171
      %v276 = vpack.c.bf16 %v174, %v173
      %v277 = vpack.c.bf16 %v176, %v175
      %v278 = vpack.c.bf16 %v178, %v177
      %v279 = vpack.c.bf16 %v180, %v179
      %v280 = vpack.c.bf16 %v182, %v181
      %v281 = vpack.c.bf16 %v184, %v183
      %v282 = vpack.c.bf16 %v186, %v185
      %v283 = vpack.c.bf16 %v188, %v187
      %v284 = vpack.c.bf16 %v190, %v189
      %v285 = vpack.c.bf16 %v192, %v191
      %v286 = vpack.c.bf16 %v194, %v193
      %v287 = vpack.c.bf16 %v196, %v195
      %v288 = vpack.c.bf16 %v198, %v197
      %v289 = vpack.c.bf16 %v200, %v199
      %v290 = vpack.c.bf16 %v202, %v201
      %v291 = vpack.c.bf16 %v204, %v203
      %v292 = vpack.c.bf16 %v206, %v205
      %v293 = vpack.c.bf16 %v208, %v207
      %v294 = vpack.c.bf16 %v210, %v209
      %v295 = vpack.c.bf16 %v212, %v211
      %v296 = vpack.c.bf16 %v214, %v213
      %v297 = vpack.c.bf16 %v216, %v215
      %v298 = vpack.c.bf16 %v218, %v217
      %v299 = vpack.c.bf16 %v220, %v219
      %v300 = vpack.c.bf16 %v222, %v221
      %v301 = vpack.c.bf16 %v224, %v223
      %v302 = vpack.c.bf16 %v226, %v225
      %v303 = vpack.c.bf16 %v228, %v227
      %v304 = vpack.c.bf16 %v230, %v229
      %v305 = vpack.c.bf16 %v232, %v231
      %v306 = vpack.c.bf16 %v234, %v233
      %v307 = vpack.c.bf16 %v236, %v235
      %v308 = vpack.c.bf16 %v238, %v237
      %v309 = vpack.c.bf16 %v240, %v239
      %v310 = vpack.c.bf16 %v242, %v241
      %v311 = vpack.c.bf16 %v244, %v243
      %v312 = vpack.c.bf16 %v246, %v245
      %v313 = vpack.c.bf16 %v248, %v247
      %v314 = vpack.c.bf16 %v250, %v249
      %v315 = vpack.c.bf16 %v252, %v251
      %v316 = vpack.c.bf16 %v254, %v253
      %v317 = vpack.c.bf16 %v256, %v255
      %v318 = vpack.c.bf16 %v258, %v257
      %v319 = vpack.c.bf16 %v260, %v259
      %v320 = vpack.c.bf16 %v262, %v261
      %v321 = vpack.c.bf16 %v264, %v263
      %v322 = vpack.c.bf16 %v266, %v265
      %v323 = vpack.c.bf16 %v268, %v267
      %v324 = vpack.c.bf16 %v270, %v269
      %v325 = vpack.c.bf16 %v272, %v271
      %v326 = vpack.c.bf16 %v274, %v273
      %v327 = vunpack.c.l.bf16 %v275
      %v328 = vunpack.c.h.bf16 %v275
      %v329 = vunpack.c.l.bf16 %v276
      %v330 = vunpack.c.h.bf16 %v276
      %v331 = vunpack.c.l.bf16 %v277
      %v332 = vunpack.c.h.bf16 %v277
      %v333 = vunpack.c.l.bf16 %v278
      %v334 = vunpack.c.h.bf16 %v278
      %v335 = vunpack.c.l.bf16 %v279
      %v336 = vunpack.c.h.bf16 %v279
      %v337 = vunpack.c.l.bf16 %v280
      %v338 = vunpack.c.h.bf16 %v280
      %v339 = vunpack.c.l.bf16 %v281
      %v340 = vunpack.c.h.bf16 %v281
      %v341 = vunpack.c.l.bf16 %v282
      %v342 = vunpack.c.h.bf16 %v282
      %v343 = vunpack.c.l.bf16 %v283
      %v344 = vunpack.c.h.bf16 %v283
      %v345 = vunpack.c.l.bf16 %v284
      %v346 = vunpack.c.h.bf16 %v284
      %v347 = vunpack.c.l.bf16 %v285
      %v348 = vunpack.c.h.bf16 %v285
      %v349 = vunpack.c.l.bf16 %v286
      %v350 = vunpack.c.h.bf16 %v286
      %v351 = vunpack.c.l.bf16 %v287
      %v352 = vunpack.c.h.bf16 %v287
      %v353 = vunpack.c.l.bf16 %v288
      %v354 = vunpack.c.h.bf16 %v288
      %v355 = vunpack.c.l.bf16 %v289
      %v356 = vunpack.c.h.bf16 %v289
      %v357 = vunpack.c.l.bf16 %v290
      %v358 = vunpack.c.h.bf16 %v290
      %v359 = vunpack.c.l.bf16 %v291
      %v360 = vunpack.c.h.bf16 %v291
      %v361 = vunpack.c.l.bf16 %v292
      %v362 = vunpack.c.h.bf16 %v292
      %v363 = vunpack.c.l.bf16 %v293
      %v364 = vunpack.c.h.bf16 %v293
      %v365 = vunpack.c.l.bf16 %v294
      %v366 = vunpack.c.h.bf16 %v294
      %v367 = vunpack.c.l.bf16 %v295
      %v368 = vunpack.c.h.bf16 %v295
      %v369 = vunpack.c.l.bf16 %v296
      %v370 = vunpack.c.h.bf16 %v296
      %v371 = vunpack.c.l.bf16 %v297
      %v372 = vunpack.c.h.bf16 %v297
      %v373 = vunpack.c.l.bf16 %v298
      %v374 = vunpack.c.h.bf16 %v298
      %v375 = vunpack.c.l.bf16 %v299
      %v376 = vunpack.c.h.bf16 %v299
      %v377 = vunpack.c.l.bf16 %v300
      %v378 = vunpack.c.h.bf16 %v300
      %v379 = vunpack.c.l.bf16 %v301
      %v380 = vunpack.c.h.bf16 %v301
      %v381 = vunpack.c.l.bf16 %v302
      %v382 = vunpack.c.h.bf16 %v302
      %v383 = vunpack.c.l.bf16 %v303
      %v384 = vunpack.c.h.bf16 %v303
      %v385 = vunpack.c.l.bf16 %v304
      %v386 = vunpack.c.h.bf16 %v304
      %v387 = vunpack.c.l.bf16 %v305
      %v388 = vunpack.c.h.bf16 %v305
      %v389 = vunpack.c.l.bf16 %v306
      %v390 = vunpack.c.h.bf16 %v306
      %v391 = vunpack.c.l.bf16 %v307
      %v392 = vunpack.c.h.bf16 %v307
      %v393 = vunpack.c.l.bf16 %v308
      %v394 = vunpack.c.h.bf16 %v308
      %v395 = vunpack.c.l.bf16 %v309
      %v396 = vunpack.c.h.bf16 %v309
      %v397 = vunpack.c.l.bf16 %v310
      %v398 = vunpack.c.h.bf16 %v310
      %v399 = vunpack.c.l.bf16 %v311
      %v400 = vunpack.c.h.bf16 %v311
      %v401 = vunpack.c.l.bf16 %v312
      %v402 = vunpack.c.h.bf16 %v312
      %v403 = vunpack.c.l.bf16 %v313
      %v404 = vunpack.c.h.bf16 %v313
      %v405 = vunpack.c.l.bf16 %v314
      %v406 = vunpack.c.h.bf16 %v314
      %v407 = vunpack.c.l.bf16 %v315
      %v408 = vunpack.c.h.bf16 %v315
      %v409 = vunpack.c.l.bf16 %v316
      %v410 = vunpack.c.h.bf16 %v316
      %v411 = vunpack.c.l.bf16 %v317
      %v412 = vunpack.c.h.bf16 %v317
      %v413 = vunpack.c.l.bf16 %v318
      %v414 = vunpack.c.h.bf16 %v318
      %v415 = vunpack.c.l.bf16 %v319
      %v416 = vunpack.c.h.bf16 %v319
      %v417 = vunpack.c.l.bf16 %v320
      %v418 = vunpack.c.h.bf16 %v320
      %v419 = vunpack.c.l.bf16 %v321
      %v420 = vunpack.c.h.bf16 %v321
      %v421 = vunpack.c.l.bf16 %v322
      %v422 = vunpack.c.h.bf16 %v322
      %v423 = vunpack.c.l.bf16 %v323
      %v424 = vunpack.c.h.bf16 %v323
      %v425 = vunpack.c.l.bf16 %v324
      %v426 = vunpack.c.h.bf16 %v324
      %v427 = vunpack.c.l.bf16 %v325
      %v428 = vunpack.c.h.bf16 %v325
      %v429 = vunpack.c.l.bf16 %v326
      %v430 = vunpack.c.h.bf16 %v326
      %v431 = vld [vmem:[%s1] sm:$0x1]
      %v432 = vpack.c.bf16 %v431, %v431
      %v433 = vunpack.c.l.bf16 %v432
      %435 = vset.pattern.permute.xlu0 0
      %436 = vperm.xlu0 %435, %v327
      %v437 = vpop.permute.xlu0 %436
      %440 = vset.pattern.permute.xlu0 0
      %441 = vperm.xlu0 %440, %v328
      %v442 = vpop.permute.xlu0 %441
      %445 = vset.pattern.permute.xlu0 0
      %446 = vperm.xlu0 %445, %v329
      %v447 = vpop.permute.xlu0 %446
      %450 = vset.pattern.permute.xlu0 0
      %451 = vperm.xlu0 %450, %v330
      %v452 = vpop.permute.xlu0 %451
      %455 = vset.pattern.permute.xlu0 0
      %456 = vperm.xlu0 %455, %v331
      %v457 = vpop.permute.xlu0 %456
      %460 = vset.pattern.permute.xlu0 0
      %461 = vperm.xlu0 %460, %v332
      %v462 = vpop.permute.xlu0 %461
      %465 = vset.pattern.permute.xlu0 0
      %466 = vperm.xlu0 %465, %v333
      %v467 = vpop.permute.xlu0 %466
      %470 = vset.pattern.permute.xlu0 0
      %471 = vperm.xlu0 %470, %v334
      %v472 = vpop.permute.xlu0 %471
      %475 = vset.pattern.permute.xlu0 0
      %476 = vperm.xlu0 %475, %v335
      %v477 = vpop.permute.xlu0 %476
      %480 = vset.pattern.permute.xlu0 0
      %481 = vperm.xlu0 %480, %v336
      %v482 = vpop.permute.xlu0 %481
      %485 = vset.pattern.permute.xlu0 0
      %486 = vperm.xlu0 %485, %v337
      %v487 = vpop.permute.xlu0 %486
      %490 = vset.pattern.permute.xlu0 0
      %491 = vperm.xlu0 %490, %v338
      %v492 = vpop.permute.xlu0 %491
      %495 = vset.pattern.permute.xlu0 0
      %496 = vperm.xlu0 %495, %v339
      %v497 = vpop.permute.xlu0 %496
      %500 = vset.pattern.permute.xlu0 0
      %501 = vperm.xlu0 %500, %v340
      %v502 = vpop.permute.xlu0 %501
      %505 = vset.pattern.permute.xlu0 0
      %506 = vperm.xlu0 %505, %v341
      %v507 = vpop.permute.xlu0 %506
      %510 = vset.pattern.permute.xlu0 0
      %511 = vperm.xlu0 %510, %v342
      %v512 = vpop.permute.xlu0 %511
      %515 = vset.pattern.permute.xlu0 0
      %516 = vperm.xlu0 %515, %v343
      %v517 = vpop.permute.xlu0 %516
      %520 = vset.pattern.permute.xlu0 0
      %521 = vperm.xlu0 %520, %v344
      %v522 = vpop.permute.xlu0 %521
      %525 = vset.pattern.permute.xlu0 0
      %526 = vperm.xlu0 %525, %v345
      %v527 = vpop.permute.xlu0 %526
      %530 = vset.pattern.permute.xlu0 0
      %531 = vperm.xlu0 %530, %v346
      %v532 = vpop.permute.xlu0 %531
      %535 = vset.pattern.permute.xlu0 0
      %536 = vperm.xlu0 %535, %v347
      %v537 = vpop.permute.xlu0 %536
      %540 = vset.pattern.permute.xlu0 0
      %541 = vperm.xlu0 %540, %v348
      %v542 = vpop.permute.xlu0 %541
      %545 = vset.pattern.permute.xlu0 0
      %546 = vperm.xlu0 %545, %v349
      %v547 = vpop.permute.xlu0 %546
      %550 = vset.pattern.permute.xlu0 0
      %551 = vperm.xlu0 %550, %v350
      %v552 = vpop.permute.xlu0 %551
      %555 = vset.pattern.permute.xlu0 0
      %556 = vperm.xlu0 %555, %v351
      %v557 = vpop.permute.xlu0 %556
      %560 = vset.pattern.permute.xlu0 0
      %561 = vperm.xlu0 %560, %v352
      %v562 = vpop.permute.xlu0 %561
      %565 = vset.pattern.permute.xlu0 0
      %566 = vperm.xlu0 %565, %v353
      %v567 = vpop.permute.xlu0 %566
      %570 = vset.pattern.permute.xlu0 0
      %571 = vperm.xlu0 %570, %v354
      %v572 = vpop.permute.xlu0 %571
      %575 = vset.pattern.permute.xlu0 0
      %576 = vperm.xlu0 %575, %v355
      %v577 = vpop.permute.xlu0 %576
      %580 = vset.pattern.permute.xlu0 0
      %581 = vperm.xlu0 %580, %v356
      %v582 = vpop.permute.xlu0 %581
      %585 = vset.pattern.permute.xlu0 0
      %586 = vperm.xlu0 %585, %v357
      %v587 = vpop.permute.xlu0 %586
      %590 = vset.pattern.permute.xlu0 0
      %591 = vperm.xlu0 %590, %v358
      %v592 = vpop.permute.xlu0 %591
      %595 = vset.pattern.permute.xlu0 0
      %596 = vperm.xlu0 %595, %v359
      %v597 = vpop.permute.xlu0 %596
      %600 = vset.pattern.permute.xlu0 0
      %601 = vperm.xlu0 %600, %v360
      %v602 = vpop.permute.xlu0 %601
      %605 = vset.pattern.permute.xlu0 0
      %606 = vperm.xlu0 %605, %v361
      %v607 = vpop.permute.xlu0 %606
      %610 = vset.pattern.permute.xlu0 0
      %611 = vperm.xlu0 %610, %v362
      %v612 = vpop.permute.xlu0 %611
      %615 = vset.pattern.permute.xlu0 0
      %616 = vperm.xlu0 %615, %v363
      %v617 = vpop.permute.xlu0 %616
      %620 = vset.pattern.permute.xlu0 0
      %621 = vperm.xlu0 %620, %v364
      %v622 = vpop.permute.xlu0 %621
      %625 = vset.pattern.permute.xlu0 0
      %626 = vperm.xlu0 %625, %v365
      %v627 = vpop.permute.xlu0 %626
      %630 = vset.pattern.permute.xlu0 0
      %631 = vperm.xlu0 %630, %v366
      %v632 = vpop.permute.xlu0 %631
      %635 = vset.pattern.permute.xlu0 0
      %636 = vperm.xlu0 %635, %v367
      %v637 = vpop.permute.xlu0 %636
      %640 = vset.pattern.permute.xlu0 0
      %641 = vperm.xlu0 %640, %v368
      %v642 = vpop.permute.xlu0 %641
      %645 = vset.pattern.permute.xlu0 0
      %646 = vperm.xlu0 %645, %v369
      %v647 = vpop.permute.xlu0 %646
      %650 = vset.pattern.permute.xlu0 0
      %651 = vperm.xlu0 %650, %v370
      %v652 = vpop.permute.xlu0 %651
      %655 = vset.pattern.permute.xlu0 0
      %656 = vperm.xlu0 %655, %v371
      %v657 = vpop.permute.xlu0 %656
      %660 = vset.pattern.permute.xlu0 0
      %661 = vperm.xlu0 %660, %v372
      %v662 = vpop.permute.xlu0 %661
      %665 = vset.pattern.permute.xlu0 0
      %666 = vperm.xlu0 %665, %v373
      %v667 = vpop.permute.xlu0 %666
      %670 = vset.pattern.permute.xlu0 0
      %671 = vperm.xlu0 %670, %v374
      %v672 = vpop.permute.xlu0 %671
      %675 = vset.pattern.permute.xlu0 0
      %676 = vperm.xlu0 %675, %v375
      %v677 = vpop.permute.xlu0 %676
      %680 = vset.pattern.permute.xlu0 0
      %681 = vperm.xlu0 %680, %v376
      %v682 = vpop.permute.xlu0 %681
      %685 = vset.pattern.permute.xlu0 0
      %686 = vperm.xlu0 %685, %v377
      %v687 = vpop.permute.xlu0 %686
      %690 = vset.pattern.permute.xlu0 0
      %691 = vperm.xlu0 %690, %v378
      %v692 = vpop.permute.xlu0 %691
      %695 = vset.pattern.permute.xlu0 0
      %696 = vperm.xlu0 %695, %v379
      %v697 = vpop.permute.xlu0 %696
      %700 = vset.pattern.permute.xlu0 0
      %701 = vperm.xlu0 %700, %v380
      %v702 = vpop.permute.xlu0 %701
      %705 = vset.pattern.permute.xlu0 0
      %706 = vperm.xlu0 %705, %v381
      %v707 = vpop.permute.xlu0 %706
      %710 = vset.pattern.permute.xlu0 0
      %711 = vperm.xlu0 %710, %v382
      %v712 = vpop.permute.xlu0 %711
      %715 = vset.pattern.permute.xlu0 0
      %716 = vperm.xlu0 %715, %v383
      %v717 = vpop.permute.xlu0 %716
      %720 = vset.pattern.permute.xlu0 0
      %721 = vperm.xlu0 %720, %v384
      %v722 = vpop.permute.xlu0 %721
      %725 = vset.pattern.permute.xlu0 0
      %726 = vperm.xlu0 %725, %v385
      %v727 = vpop.permute.xlu0 %726
      %730 = vset.pattern.permute.xlu0 0
      %731 = vperm.xlu0 %730, %v386
      %v732 = vpop.permute.xlu0 %731
      %735 = vset.pattern.permute.xlu0 0
      %736 = vperm.xlu0 %735, %v387
      %v737 = vpop.permute.xlu0 %736
      %740 = vset.pattern.permute.xlu0 0
      %741 = vperm.xlu0 %740, %v388
      %v742 = vpop.permute.xlu0 %741
      %745 = vset.pattern.permute.xlu0 0
      %746 = vperm.xlu0 %745, %v389
      %v747 = vpop.permute.xlu0 %746
      %750 = vset.pattern.permute.xlu0 0
      %751 = vperm.xlu0 %750, %v390
      %v752 = vpop.permute.xlu0 %751
      %755 = vset.pattern.permute.xlu0 0
      %756 = vperm.xlu0 %755, %v391
      %v757 = vpop.permute.xlu0 %756
      %760 = vset.pattern.permute.xlu0 0
      %761 = vperm.xlu0 %760, %v392
      %v762 = vpop.permute.xlu0 %761
      %765 = vset.pattern.permute.xlu0 0
      %766 = vperm.xlu0 %765, %v393
      %v767 = vpop.permute.xlu0 %766
      %770 = vset.pattern.permute.xlu0 0
      %771 = vperm.xlu0 %770, %v394
      %v772 = vpop.permute.xlu0 %771
      %775 = vset.pattern.permute.xlu0 0
      %776 = vperm.xlu0 %775, %v395
      %v777 = vpop.permute.xlu0 %776
      %780 = vset.pattern.permute.xlu0 0
      %781 = vperm.xlu0 %780, %v396
      %v782 = vpop.permute.xlu0 %781
      %785 = vset.pattern.permute.xlu0 0
      %786 = vperm.xlu0 %785, %v397
      %v787 = vpop.permute.xlu0 %786
      %790 = vset.pattern.permute.xlu0 0
      %791 = vperm.xlu0 %790, %v398
      %v792 = vpop.permute.xlu0 %791
      %795 = vset.pattern.permute.xlu0 0
      %796 = vperm.xlu0 %795, %v399
      %v797 = vpop.permute.xlu0 %796
      %800 = vset.pattern.permute.xlu0 0
      %801 = vperm.xlu0 %800, %v400
      %v802 = vpop.permute.xlu0 %801
      %805 = vset.pattern.permute.xlu0 0
      %806 = vperm.xlu0 %805, %v401
      %v807 = vpop.permute.xlu0 %806
      %810 = vset.pattern.permute.xlu0 0
      %811 = vperm.xlu0 %810, %v402
      %v812 = vpop.permute.xlu0 %811
      %815 = vset.pattern.permute.xlu0 0
      %816 = vperm.xlu0 %815, %v403
      %v817 = vpop.permute.xlu0 %816
      %820 = vset.pattern.permute.xlu0 0
      %821 = vperm.xlu0 %820, %v404
      %v822 = vpop.permute.xlu0 %821
      %825 = vset.pattern.permute.xlu0 0
      %826 = vperm.xlu0 %825, %v405
      %v827 = vpop.permute.xlu0 %826
      %830 = vset.pattern.permute.xlu0 0
      %831 = vperm.xlu0 %830, %v406
      %v832 = vpop.permute.xlu0 %831
      %835 = vset.pattern.permute.xlu0 0
      %836 = vperm.xlu0 %835, %v407
      %v837 = vpop.permute.xlu0 %836
      %840 = vset.pattern.permute.xlu0 0
      %841 = vperm.xlu0 %840, %v408
      %v842 = vpop.permute.xlu0 %841
      %845 = vset.pattern.permute.xlu0 0
      %846 = vperm.xlu0 %845, %v409
      %v847 = vpop.permute.xlu0 %846
      %850 = vset.pattern.permute.xlu0 0
      %851 = vperm.xlu0 %850, %v410
      %v852 = vpop.permute.xlu0 %851
      %855 = vset.pattern.permute.xlu0 0
      %856 = vperm.xlu0 %855, %v411
      %v857 = vpop.permute.xlu0 %856
      %860 = vset.pattern.permute.xlu0 0
      %861 = vperm.xlu0 %860, %v412
      %v862 = vpop.permute.xlu0 %861
      %865 = vset.pattern.permute.xlu0 0
      %866 = vperm.xlu0 %865, %v413
      %v867 = vpop.permute.xlu0 %866
      %870 = vset.pattern.permute.xlu0 0
      %871 = vperm.xlu0 %870, %v414
      %v872 = vpop.permute.xlu0 %871
      %875 = vset.pattern.permute.xlu0 0
      %876 = vperm.xlu0 %875, %v415
      %v877 = vpop.permute.xlu0 %876
      %880 = vset.pattern.permute.xlu0 0
      %881 = vperm.xlu0 %880, %v416
      %v882 = vpop.permute.xlu0 %881
      %885 = vset.pattern.permute.xlu0 0
      %886 = vperm.xlu0 %885, %v417
      %v887 = vpop.permute.xlu0 %886
      %890 = vset.pattern.permute.xlu0 0
      %891 = vperm.xlu0 %890, %v418
      %v892 = vpop.permute.xlu0 %891
      %895 = vset.pattern.permute.xlu0 0
      %896 = vperm.xlu0 %895, %v419
      %v897 = vpop.permute.xlu0 %896
      %900 = vset.pattern.permute.xlu0 0
      %901 = vperm.xlu0 %900, %v420
      %v902 = vpop.permute.xlu0 %901
      %905 = vset.pattern.permute.xlu0 0
      %906 = vperm.xlu0 %905, %v421
      %v907 = vpop.permute.xlu0 %906
      %910 = vset.pattern.permute.xlu0 0
      %911 = vperm.xlu0 %910, %v422
      %v912 = vpop.permute.xlu0 %911
      %915 = vset.pattern.permute.xlu0 0
      %916 = vperm.xlu0 %915, %v423
      %v917 = vpop.permute.xlu0 %916
      %920 = vset.pattern.permute.xlu0 0
      %921 = vperm.xlu0 %920, %v424
      %v922 = vpop.permute.xlu0 %921
      %925 = vset.pattern.permute.xlu0 0
      %926 = vperm.xlu0 %925, %v425
      %v927 = vpop.permute.xlu0 %926
      %930 = vset.pattern.permute.xlu0 0
      %931 = vperm.xlu0 %930, %v426
      %v932 = vpop.permute.xlu0 %931
      %935 = vset.pattern.permute.xlu0 0
      %936 = vperm.xlu0 %935, %v427
      %v937 = vpop.permute.xlu0 %936
      %940 = vset.pattern.permute.xlu0 0
      %941 = vperm.xlu0 %940, %v428
      %v942 = vpop.permute.xlu0 %941
      %945 = vset.pattern.permute.xlu0 0
      %946 = vperm.xlu0 %945, %v429
      %v947 = vpop.permute.xlu0 %946
      %950 = vset.pattern.permute.xlu0 0
      %951 = vperm.xlu0 %950, %v430
      %v952 = vpop.permute.xlu0 %951
      %v954 = vlaneseq
      %v955 = vshrl.u32 %v954, 7
      %v956 = vsub.s32 0, %v955
      %v957 = vrot.slane %v433, %v956
      %v958 = vmul.f32 %v437, %v957
      %v959 = vmul.f32 %v442, %v957
      %v960 = vmul.f32 %v447, %v957
      %v961 = vmul.f32 %v452, %v957
      %v962 = vmul.f32 %v457, %v957
      %v963 = vmul.f32 %v462, %v957
      %v964 = vmul.f32 %v467, %v957
      %v965 = vmul.f32 %v472, %v957
      %v966 = vmul.f32 %v477, %v957
      %v967 = vmul.f32 %v482, %v957
      %v968 = vmul.f32 %v487, %v957
      %v969 = vmul.f32 %v492, %v957
      %v970 = vmul.f32 %v497, %v957
      %v971 = vmul.f32 %v502, %v957
      %v972 = vmul.f32 %v507, %v957
      %v973 = vmul.f32 %v512, %v957
      %v974 = vmul.f32 %v517, %v957
      %v975 = vmul.f32 %v522, %v957
      %v976 = vmul.f32 %v527, %v957
      %v977 = vmul.f32 %v532, %v957
      %v978 = vmul.f32 %v537, %v957
      %v979 = vmul.f32 %v542, %v957
      %v980 = vmul.f32 %v547, %v957
      %v981 = vmul.f32 %v552, %v957
      %v982 = vmul.f32 %v557, %v957
      %v983 = vmul.f32 %v562, %v957
      %v984 = vmul.f32 %v567, %v957
      %v985 = vmul.f32 %v572, %v957
      %v986 = vmul.f32 %v577, %v957
      %v987 = vmul.f32 %v582, %v957
      %v988 = vmul.f32 %v587, %v957
      %v989 = vmul.f32 %v592, %v957
      %v990 = vmul.f32 %v597, %v957
      %v991 = vmul.f32 %v602, %v957
      %v992 = vmul.f32 %v607, %v957
      %v993 = vmul.f32 %v612, %v957
      %v994 = vmul.f32 %v617, %v957
      %v995 = vmul.f32 %v622, %v957
      %v996 = vmul.f32 %v627, %v957
      %v997 = vmul.f32 %v632, %v957
      %v998 = vmul.f32 %v637, %v957
      %v999 = vmul.f32 %v642, %v957
      %v1000 = vmul.f32 %v647, %v957
      %v1001 = vmul.f32 %v652, %v957
      %v1002 = vmul.f32 %v657, %v957
      %v1003 = vmul.f32 %v662, %v957
      %v1004 = vmul.f32 %v667, %v957
      %v1005 = vmul.f32 %v672, %v957
      %v1006 = vmul.f32 %v677, %v957
      %v1007 = vmul.f32 %v682, %v957
      %v1008 = vmul.f32 %v687, %v957
      %v1009 = vmul.f32 %v692, %v957
      %v1010 = vmul.f32 %v697, %v957
      %v1011 = vmul.f32 %v702, %v957
      %v1012 = vmul.f32 %v707, %v957
      %v1013 = vmul.f32 %v712, %v957
      %v1014 = vmul.f32 %v717, %v957
      %v1015 = vmul.f32 %v722, %v957
      %v1016 = vmul.f32 %v727, %v957
      %v1017 = vmul.f32 %v732, %v957
      %v1018 = vmul.f32 %v737, %v957
      %v1019 = vmul.f32 %v742, %v957
      %v1020 = vmul.f32 %v747, %v957
      %v1021 = vmul.f32 %v752, %v957
      %v1022 = vmul.f32 %v757, %v957
      %v1023 = vmul.f32 %v762, %v957
      %v1024 = vmul.f32 %v767, %v957
      %v1025 = vmul.f32 %v772, %v957
      %v1026 = vmul.f32 %v777, %v957
      %v1027 = vmul.f32 %v782, %v957
      %v1028 = vmul.f32 %v787, %v957
      %v1029 = vmul.f32 %v792, %v957
      %v1030 = vmul.f32 %v797, %v957
      %v1031 = vmul.f32 %v802, %v957
      %v1032 = vmul.f32 %v807, %v957
      %v1033 = vmul.f32 %v812, %v957
      %v1034 = vmul.f32 %v817, %v957
      %v1035 = vmul.f32 %v822, %v957
      %v1036 = vmul.f32 %v827, %v957
      %v1037 = vmul.f32 %v832, %v957
      %v1038 = vmul.f32 %v837, %v957
      %v1039 = vmul.f32 %v842, %v957
      %v1040 = vmul.f32 %v847, %v957
      %v1041 = vmul.f32 %v852, %v957
      %v1042 = vmul.f32 %v857, %v957
      %v1043 = vmul.f32 %v862, %v957
      %v1044 = vmul.f32 %v867, %v957
      %v1045 = vmul.f32 %v872, %v957
      %v1046 = vmul.f32 %v877, %v957
      %v1047 = vmul.f32 %v882, %v957
      %v1048 = vmul.f32 %v887, %v957
      %v1049 = vmul.f32 %v892, %v957
      %v1050 = vmul.f32 %v897, %v957
      %v1051 = vmul.f32 %v902, %v957
      %v1052 = vmul.f32 %v907, %v957
      %v1053 = vmul.f32 %v912, %v957
      %v1054 = vmul.f32 %v917, %v957
      %v1055 = vmul.f32 %v922, %v957
      %v1056 = vmul.f32 %v927, %v957
      %v1057 = vmul.f32 %v932, %v957
      %v1058 = vmul.f32 %v937, %v957
      %v1059 = vmul.f32 %v942, %v957
      %v1060 = vmul.f32 %v947, %v957
      %v1061 = vmul.f32 %v952, %v957
      %v1062 = vadd.f32 %v958, 0.0
      %v1063 = vadd.f32 %v959, 0.0
      %v1064 = vadd.f32 %v960, 0.0
      %v1065 = vadd.f32 %v961, 0.0
      %v1066 = vadd.f32 %v962, 0.0
      %v1067 = vadd.f32 %v963, 0.0
      %v1068 = vadd.f32 %v964, 0.0
      %v1069 = vadd.f32 %v965, 0.0
      %v1070 = vadd.f32 %v966, 0.0
      %v1071 = vadd.f32 %v967, 0.0
      %v1072 = vadd.f32 %v968, 0.0
      %v1073 = vadd.f32 %v969, 0.0
      %v1074 = vadd.f32 %v970, 0.0
      %v1075 = vadd.f32 %v971, 0.0
      %v1076 = vadd.f32 %v972, 0.0
      %v1077 = vadd.f32 %v973, 0.0
      %v1078 = vadd.f32 %v974, 0.0
      %v1079 = vadd.f32 %v975, 0.0
      %v1080 = vadd.f32 %v976, 0.0
      %v1081 = vadd.f32 %v977, 0.0
      %v1082 = vadd.f32 %v978, 0.0
      %v1083 = vadd.f32 %v979, 0.0
      %v1084 = vadd.f32 %v980, 0.0
      %v1085 = vadd.f32 %v981, 0.0
      %v1086 = vadd.f32 %v982, 0.0
      %v1087 = vadd.f32 %v983, 0.0
      %v1088 = vadd.f32 %v984, 0.0
      %v1089 = vadd.f32 %v985, 0.0
      %v1090 = vadd.f32 %v986, 0.0
      %v1091 = vadd.f32 %v987, 0.0
      %v1092 = vadd.f32 %v988, 0.0
      %v1093 = vadd.f32 %v989, 0.0
      %v1094 = vadd.f32 %v990, 0.0
      %v1095 = vadd.f32 %v991, 0.0
      %v1096 = vadd.f32 %v992, 0.0
      %v1097 = vadd.f32 %v993, 0.0
      %v1098 = vadd.f32 %v994, 0.0
      %v1099 = vadd.f32 %v995, 0.0
      %v1100 = vadd.f32 %v996, 0.0
      %v1101 = vadd.f32 %v997, 0.0
      %v1102 = vadd.f32 %v998, 0.0
      %v1103 = vadd.f32 %v999, 0.0
      %v1104 = vadd.f32 %v1000, 0.0
      %v1105 = vadd.f32 %v1001, 0.0
      %v1106 = vadd.f32 %v1002, 0.0
      %v1107 = vadd.f32 %v1003, 0.0
      %v1108 = vadd.f32 %v1004, 0.0
      %v1109 = vadd.f32 %v1005, 0.0
      %v1110 = vadd.f32 %v1006, 0.0
      %v1111 = vadd.f32 %v1007, 0.0
      %v1112 = vadd.f32 %v1008, 0.0
      %v1113 = vadd.f32 %v1009, 0.0
      %v1114 = vadd.f32 %v1010, 0.0
      %v1115 = vadd.f32 %v1011, 0.0
      %v1116 = vadd.f32 %v1012, 0.0
      %v1117 = vadd.f32 %v1013, 0.0
      %v1118 = vadd.f32 %v1014, 0.0
      %v1119 = vadd.f32 %v1015, 0.0
      %v1120 = vadd.f32 %v1016, 0.0
      %v1121 = vadd.f32 %v1017, 0.0
      %v1122 = vadd.f32 %v1018, 0.0
      %v1123 = vadd.f32 %v1019, 0.0
      %v1124 = vadd.f32 %v1020, 0.0
      %v1125 = vadd.f32 %v1021, 0.0
      %v1126 = vadd.f32 %v1022, 0.0
      %v1127 = vadd.f32 %v1023, 0.0
      %v1128 = vadd.f32 %v1024, 0.0
      %v1129 = vadd.f32 %v1025, 0.0
      %v1130 = vadd.f32 %v1026, 0.0
      %v1131 = vadd.f32 %v1027, 0.0
      %v1132 = vadd.f32 %v1028, 0.0
      %v1133 = vadd.f32 %v1029, 0.0
      %v1134 = vadd.f32 %v1030, 0.0
      %v1135 = vadd.f32 %v1031, 0.0
      %v1136 = vadd.f32 %v1032, 0.0
      %v1137 = vadd.f32 %v1033, 0.0
      %v1138 = vadd.f32 %v1034, 0.0
      %v1139 = vadd.f32 %v1035, 0.0
      %v1140 = vadd.f32 %v1036, 0.0
      %v1141 = vadd.f32 %v1037, 0.0
      %v1142 = vadd.f32 %v1038, 0.0
      %v1143 = vadd.f32 %v1039, 0.0
      %v1144 = vadd.f32 %v1040, 0.0
      %v1145 = vadd.f32 %v1041, 0.0
      %v1146 = vadd.f32 %v1042, 0.0
      %v1147 = vadd.f32 %v1043, 0.0
      %v1148 = vadd.f32 %v1044, 0.0
      %v1149 = vadd.f32 %v1045, 0.0
      %v1150 = vadd.f32 %v1046, 0.0
      %v1151 = vadd.f32 %v1047, 0.0
      %v1152 = vadd.f32 %v1048, 0.0
      %v1153 = vadd.f32 %v1049, 0.0
      %v1154 = vadd.f32 %v1050, 0.0
      %v1155 = vadd.f32 %v1051, 0.0
      %v1156 = vadd.f32 %v1052, 0.0
      %v1157 = vadd.f32 %v1053, 0.0
      %v1158 = vadd.f32 %v1054, 0.0
      %v1159 = vadd.f32 %v1055, 0.0
      %v1160 = vadd.f32 %v1056, 0.0
      %v1161 = vadd.f32 %v1057, 0.0
      %v1162 = vadd.f32 %v1058, 0.0
      %v1163 = vadd.f32 %v1059, 0.0
      %v1164 = vadd.f32 %v1060, 0.0
      %v1165 = vadd.f32 %v1061, 0.0
      %v1166 = vld [vmem:[%s165 + $0x1] sm:$0xff]
      %v1167 = vld [vmem:[%s165 + $0x9] sm:$0xff]
      %v1168 = vld [vmem:[%s165 + $0x11] sm:$0xff]
      %v1169 = vld [vmem:[%s165 + $0x19] sm:$0xff]
      %v1170 = vld [vmem:[%s165 + $0x29] sm:$0xff]
      %v1171 = vld [vmem:[%s165 + $0x31] sm:$0xff]
      %v1172 = vld [vmem:[%s165 + $0x39] sm:$0xff]
      %v1173 = vld [vmem:[%s165 + $0x41] sm:$0xff]
      %v1174 = vld [vmem:[%s165 + $0x51] sm:$0xff]
      %v1175 = vld [vmem:[%s165 + $0x59] sm:$0xff]
      %v1176 = vld [vmem:[%s165 + $0x61] sm:$0xff]
      %v1177 = vld [vmem:[%s165 + $0x69] sm:$0xff]
      %v1178 = vld [vmem:[%s165 + $0x79] sm:$0xff]
      %v1179 = vld [vmem:[%s165 + $0x81] sm:$0xff]
      %v1180 = vld [vmem:[%s165 + $0x89] sm:$0xff]
      %v1181 = vld [vmem:[%s165 + $0x91] sm:$0xff]
      %v1182 = vld [vmem:[%s165 + $0xa1] sm:$0xff]
      %v1183 = vld [vmem:[%s165 + $0xa9] sm:$0xff]
      %v1184 = vld [vmem:[%s165 + $0xb1] sm:$0xff]
      %v1185 = vld [vmem:[%s165 + $0xb9] sm:$0xff]
      %v1186 = vld [vmem:[%s165 + $0xc9] sm:$0xff]
      %v1187 = vld [vmem:[%s165 + $0xd1] sm:$0xff]
      %v1188 = vld [vmem:[%s165 + $0xd9] sm:$0xff]
      %v1189 = vld [vmem:[%s165 + $0xe1] sm:$0xff]
      %v1190 = vld [vmem:[%s165 + $0xf1] sm:$0xff]
      %v1191 = vld [vmem:[%s165 + $0xf9] sm:$0xff]
      %v1192 = vld [vmem:[%s165 + $0x101] sm:$0xff]
      %v1193 = vld [vmem:[%s165 + $0x109] sm:$0xff]
      %v1194 = vld [vmem:[%s165 + $0x119] sm:$0xff]
      %v1195 = vld [vmem:[%s165 + $0x121] sm:$0xff]
      %v1196 = vld [vmem:[%s165 + $0x129] sm:$0xff]
      %v1197 = vld [vmem:[%s165 + $0x131] sm:$0xff]
      %v1198 = vld [vmem:[%s165 + $0x141] sm:$0xff]
      %v1199 = vld [vmem:[%s165 + $0x149] sm:$0xff]
      %v1200 = vld [vmem:[%s165 + $0x151] sm:$0xff]
      %v1201 = vld [vmem:[%s165 + $0x159] sm:$0xff]
      %v1202 = vld [vmem:[%s165 + $0x169] sm:$0xff]
      %v1203 = vld [vmem:[%s165 + $0x171] sm:$0xff]
      %v1204 = vld [vmem:[%s165 + $0x179] sm:$0xff]
      %v1205 = vld [vmem:[%s165 + $0x181] sm:$0xff]
      %v1206 = vld [vmem:[%s165 + $0x191] sm:$0xff]
      %v1207 = vld [vmem:[%s165 + $0x199] sm:$0xff]
      %v1208 = vld [vmem:[%s165 + $0x1a1] sm:$0xff]
      %v1209 = vld [vmem:[%s165 + $0x1a9] sm:$0xff]
      %v1210 = vld [vmem:[%s165 + $0x1b9] sm:$0xff]
      %v1211 = vld [vmem:[%s165 + $0x1c1] sm:$0xff]
      %v1212 = vld [vmem:[%s165 + $0x1c9] sm:$0xff]
      %v1213 = vld [vmem:[%s165 + $0x1d1] sm:$0xff]
      %v1214 = vld [vmem:[%s165 + $0x1e1] sm:$0xff]
      %v1215 = vld [vmem:[%s165 + $0x1e9] sm:$0xff]
      %v1216 = vld [vmem:[%s165 + $0x1f1] sm:$0xff]
      %v1217 = vld [vmem:[%s165 + $0x1f9] sm:$0xff]
      %v1218 = vld [vmem:[%s165 + $0x209] sm:$0xff]
      %v1219 = vld [vmem:[%s165 + $0x211] sm:$0xff]
      %v1220 = vld [vmem:[%s165 + $0x219] sm:$0xff]
      %v1221 = vld [vmem:[%s165 + $0x221] sm:$0xff]
      %v1222 = vld [vmem:[%s165 + $0x231] sm:$0xff]
      %v1223 = vld [vmem:[%s165 + $0x239] sm:$0xff]
      %v1224 = vld [vmem:[%s165 + $0x241] sm:$0xff]
      %v1225 = vld [vmem:[%s165 + $0x249] sm:$0xff]
      %v1226 = vld [vmem:[%s165 + $0x259] sm:$0xff]
      %v1227 = vld [vmem:[%s165 + $0x261] sm:$0xff]
      %v1228 = vld [vmem:[%s165 + $0x269] sm:$0xff]
      %v1229 = vld [vmem:[%s165 + $0x271] sm:$0xff]
      %v1230 = vld [vmem:[%s165 + $0x281] sm:$0xff]
      %v1231 = vld [vmem:[%s165 + $0x289] sm:$0xff]
      %v1232 = vld [vmem:[%s165 + $0x291] sm:$0xff]
      %v1233 = vld [vmem:[%s165 + $0x299] sm:$0xff]
      %v1234 = vld [vmem:[%s165 + $0x2a9] sm:$0xff]
      %v1235 = vld [vmem:[%s165 + $0x2b1] sm:$0xff]
      %v1236 = vld [vmem:[%s165 + $0x2b9] sm:$0xff]
      %v1237 = vld [vmem:[%s165 + $0x2c1] sm:$0xff]
      %v1238 = vld [vmem:[%s165 + $0x2d1] sm:$0xff]
      %v1239 = vld [vmem:[%s165 + $0x2d9] sm:$0xff]
      %v1240 = vld [vmem:[%s165 + $0x2e1] sm:$0xff]
      %v1241 = vld [vmem:[%s165 + $0x2e9] sm:$0xff]
      %v1242 = vld [vmem:[%s165 + $0x2f9] sm:$0xff]
      %v1243 = vld [vmem:[%s165 + $0x301] sm:$0xff]
      %v1244 = vld [vmem:[%s165 + $0x309] sm:$0xff]
      %v1245 = vld [vmem:[%s165 + $0x311] sm:$0xff]
      %v1246 = vld [vmem:[%s165 + $0x321] sm:$0xff]
      %v1247 = vld [vmem:[%s165 + $0x329] sm:$0xff]
      %v1248 = vld [vmem:[%s165 + $0x331] sm:$0xff]
      %v1249 = vld [vmem:[%s165 + $0x339] sm:$0xff]
      %v1250 = vld [vmem:[%s165 + $0x349] sm:$0xff]
      %v1251 = vld [vmem:[%s165 + $0x351] sm:$0xff]
      %v1252 = vld [vmem:[%s165 + $0x359] sm:$0xff]
      %v1253 = vld [vmem:[%s165 + $0x361] sm:$0xff]
      %v1254 = vld [vmem:[%s165 + $0x371] sm:$0xff]
      %v1255 = vld [vmem:[%s165 + $0x379] sm:$0xff]
      %v1256 = vld [vmem:[%s165 + $0x381] sm:$0xff]
      %v1257 = vld [vmem:[%s165 + $0x389] sm:$0xff]
      %v1258 = vld [vmem:[%s165 + $0x399] sm:$0xff]
      %v1259 = vld [vmem:[%s165 + $0x3a1] sm:$0xff]
      %v1260 = vld [vmem:[%s165 + $0x3a9] sm:$0xff]
      %v1261 = vld [vmem:[%s165 + $0x3b1] sm:$0xff]
      %v1262 = vld [vmem:[%s165 + $0x3c1] sm:$0xff]
      %v1263 = vld [vmem:[%s165 + $0x3c9] sm:$0xff]
      %v1264 = vld [vmem:[%s165 + $0x3d1] sm:$0xff]
      %v1265 = vld [vmem:[%s165 + $0x3d9] sm:$0xff]
      %v1266 = vld [vmem:[%s165 + $0x3e9] sm:$0xff]
      %v1267 = vld [vmem:[%s165 + $0x3f1] sm:$0xff]
      %v1268 = vld [vmem:[%s165 + $0x3f9] sm:$0xff]
      %v1269 = vld [vmem:[%s165 + $0x401] sm:$0xff]
      %v1270 = vpack.c.bf16 %v1167, %v1166
      %v1271 = vpack.c.bf16 %v1169, %v1168
      %v1272 = vpack.c.bf16 %v1171, %v1170
      %v1273 = vpack.c.bf16 %v1173, %v1172
      %v1274 = vpack.c.bf16 %v1175, %v1174
      %v1275 = vpack.c.bf16 %v1177, %v1176
      %v1276 = vpack.c.bf16 %v1179, %v1178
      %v1277 = vpack.c.bf16 %v1181, %v1180
      %v1278 = vpack.c.bf16 %v1183, %v1182
      %v1279 = vpack.c.bf16 %v1185, %v1184
      %v1280 = vpack.c.bf16 %v1187, %v1186
      %v1281 = vpack.c.bf16 %v1189, %v1188
      %v1282 = vpack.c.bf16 %v1191, %v1190
      %v1283 = vpack.c.bf16 %v1193, %v1192
      %v1284 = vpack.c.bf16 %v1195, %v1194
      %v1285 = vpack.c.bf16 %v1197, %v1196
      %v1286 = vpack.c.bf16 %v1199, %v1198
      %v1287 = vpack.c.bf16 %v1201, %v1200
      %v1288 = vpack.c.bf16 %v1203, %v1202
      %v1289 = vpack.c.bf16 %v1205, %v1204
      %v1290 = vpack.c.bf16 %v1207, %v1206
      %v1291 = vpack.c.bf16 %v1209, %v1208
      %v1292 = vpack.c.bf16 %v1211, %v1210
      %v1293 = vpack.c.bf16 %v1213, %v1212
      %v1294 = vpack.c.bf16 %v1215, %v1214
      %v1295 = vpack.c.bf16 %v1217, %v1216
      %v1296 = vpack.c.bf16 %v1219, %v1218
      %v1297 = vpack.c.bf16 %v1221, %v1220
      %v1298 = vpack.c.bf16 %v1223, %v1222
      %v1299 = vpack.c.bf16 %v1225, %v1224
      %v1300 = vpack.c.bf16 %v1227, %v1226
      %v1301 = vpack.c.bf16 %v1229, %v1228
      %v1302 = vpack.c.bf16 %v1231, %v1230
      %v1303 = vpack.c.bf16 %v1233, %v1232
      %v1304 = vpack.c.bf16 %v1235, %v1234
      %v1305 = vpack.c.bf16 %v1237, %v1236
      %v1306 = vpack.c.bf16 %v1239, %v1238
      %v1307 = vpack.c.bf16 %v1241, %v1240
      %v1308 = vpack.c.bf16 %v1243, %v1242
      %v1309 = vpack.c.bf16 %v1245, %v1244
      %v1310 = vpack.c.bf16 %v1247, %v1246
      %v1311 = vpack.c.bf16 %v1249, %v1248
      %v1312 = vpack.c.bf16 %v1251, %v1250
      %v1313 = vpack.c.bf16 %v1253, %v1252
      %v1314 = vpack.c.bf16 %v1255, %v1254
      %v1315 = vpack.c.bf16 %v1257, %v1256
      %v1316 = vpack.c.bf16 %v1259, %v1258
      %v1317 = vpack.c.bf16 %v1261, %v1260
      %v1318 = vpack.c.bf16 %v1263, %v1262
      %v1319 = vpack.c.bf16 %v1265, %v1264
      %v1320 = vpack.c.bf16 %v1267, %v1266
      %v1321 = vpack.c.bf16 %v1269, %v1268
      %v1322 = vunpack.c.l.bf16 %v1270
      %v1323 = vunpack.c.h.bf16 %v1270
      %v1324 = vunpack.c.l.bf16 %v1271
      %v1325 = vunpack.c.h.bf16 %v1271
      %v1326 = vunpack.c.l.bf16 %v1272
      %v1327 = vunpack.c.h.bf16 %v1272
      %v1328 = vunpack.c.l.bf16 %v1273
      %v1329 = vunpack.c.h.bf16 %v1273
      %v1330 = vunpack.c.l.bf16 %v1274
      %v1331 = vunpack.c.h.bf16 %v1274
      %v1332 = vunpack.c.l.bf16 %v1275
      %v1333 = vunpack.c.h.bf16 %v1275
      %v1334 = vunpack.c.l.bf16 %v1276
      %v1335 = vunpack.c.h.bf16 %v1276
      %v1336 = vunpack.c.l.bf16 %v1277
      %v1337 = vunpack.c.h.bf16 %v1277
      %v1338 = vunpack.c.l.bf16 %v1278
      %v1339 = vunpack.c.h.bf16 %v1278
      %v1340 = vunpack.c.l.bf16 %v1279
      %v1341 = vunpack.c.h.bf16 %v1279
      %v1342 = vunpack.c.l.bf16 %v1280
      %v1343 = vunpack.c.h.bf16 %v1280
      %v1344 = vunpack.c.l.bf16 %v1281
      %v1345 = vunpack.c.h.bf16 %v1281
      %v1346 = vunpack.c.l.bf16 %v1282
      %v1347 = vunpack.c.h.bf16 %v1282
      %v1348 = vunpack.c.l.bf16 %v1283
      %v1349 = vunpack.c.h.bf16 %v1283
      %v1350 = vunpack.c.l.bf16 %v1284
      %v1351 = vunpack.c.h.bf16 %v1284
      %v1352 = vunpack.c.l.bf16 %v1285
      %v1353 = vunpack.c.h.bf16 %v1285
      %v1354 = vunpack.c.l.bf16 %v1286
      %v1355 = vunpack.c.h.bf16 %v1286
      %v1356 = vunpack.c.l.bf16 %v1287
      %v1357 = vunpack.c.h.bf16 %v1287
      %v1358 = vunpack.c.l.bf16 %v1288
      %v1359 = vunpack.c.h.bf16 %v1288
      %v1360 = vunpack.c.l.bf16 %v1289
      %v1361 = vunpack.c.h.bf16 %v1289
      %v1362 = vunpack.c.l.bf16 %v1290
      %v1363 = vunpack.c.h.bf16 %v1290
      %v1364 = vunpack.c.l.bf16 %v1291
      %v1365 = vunpack.c.h.bf16 %v1291
      %v1366 = vunpack.c.l.bf16 %v1292
      %v1367 = vunpack.c.h.bf16 %v1292
      %v1368 = vunpack.c.l.bf16 %v1293
      %v1369 = vunpack.c.h.bf16 %v1293
      %v1370 = vunpack.c.l.bf16 %v1294
      %v1371 = vunpack.c.h.bf16 %v1294
      %v1372 = vunpack.c.l.bf16 %v1295
      %v1373 = vunpack.c.h.bf16 %v1295
      %v1374 = vunpack.c.l.bf16 %v1296
      %v1375 = vunpack.c.h.bf16 %v1296
      %v1376 = vunpack.c.l.bf16 %v1297
      %v1377 = vunpack.c.h.bf16 %v1297
      %v1378 = vunpack.c.l.bf16 %v1298
      %v1379 = vunpack.c.h.bf16 %v1298
      %v1380 = vunpack.c.l.bf16 %v1299
      %v1381 = vunpack.c.h.bf16 %v1299
      %v1382 = vunpack.c.l.bf16 %v1300
      %v1383 = vunpack.c.h.bf16 %v1300
      %v1384 = vunpack.c.l.bf16 %v1301
      %v1385 = vunpack.c.h.bf16 %v1301
      %v1386 = vunpack.c.l.bf16 %v1302
      %v1387 = vunpack.c.h.bf16 %v1302
      %v1388 = vunpack.c.l.bf16 %v1303
      %v1389 = vunpack.c.h.bf16 %v1303
      %v1390 = vunpack.c.l.bf16 %v1304
      %v1391 = vunpack.c.h.bf16 %v1304
      %v1392 = vunpack.c.l.bf16 %v1305
      %v1393 = vunpack.c.h.bf16 %v1305
      %v1394 = vunpack.c.l.bf16 %v1306
      %v1395 = vunpack.c.h.bf16 %v1306
      %v1396 = vunpack.c.l.bf16 %v1307
      %v1397 = vunpack.c.h.bf16 %v1307
      %v1398 = vunpack.c.l.bf16 %v1308
      %v1399 = vunpack.c.h.bf16 %v1308
      %v1400 = vunpack.c.l.bf16 %v1309
      %v1401 = vunpack.c.h.bf16 %v1309
      %v1402 = vunpack.c.l.bf16 %v1310
      %v1403 = vunpack.c.h.bf16 %v1310
      %v1404 = vunpack.c.l.bf16 %v1311
      %v1405 = vunpack.c.h.bf16 %v1311
      %v1406 = vunpack.c.l.bf16 %v1312
      %v1407 = vunpack.c.h.bf16 %v1312
      %v1408 = vunpack.c.l.bf16 %v1313
      %v1409 = vunpack.c.h.bf16 %v1313
      %v1410 = vunpack.c.l.bf16 %v1314
      %v1411 = vunpack.c.h.bf16 %v1314
      %v1412 = vunpack.c.l.bf16 %v1315
      %v1413 = vunpack.c.h.bf16 %v1315
      %v1414 = vunpack.c.l.bf16 %v1316
      %v1415 = vunpack.c.h.bf16 %v1316
      %v1416 = vunpack.c.l.bf16 %v1317
      %v1417 = vunpack.c.h.bf16 %v1317
      %v1418 = vunpack.c.l.bf16 %v1318
      %v1419 = vunpack.c.h.bf16 %v1318
      %v1420 = vunpack.c.l.bf16 %v1319
      %v1421 = vunpack.c.h.bf16 %v1319
      %v1422 = vunpack.c.l.bf16 %v1320
      %v1423 = vunpack.c.h.bf16 %v1320
      %v1424 = vunpack.c.l.bf16 %v1321
      %v1425 = vunpack.c.h.bf16 %v1321
      %v1426 = vld [vmem:[%s1 + $0x1] sm:$0x1]
      %v1427 = vpack.c.bf16 %v1426, %v1426
      %v1428 = vunpack.c.l.bf16 %v1427
      %1430 = vset.pattern.permute.xlu0 0
      %1431 = vperm.xlu0 %1430, %v1322
      %v1432 = vpop.permute.xlu0 %1431
      %1435 = vset.pattern.permute.xlu0 0
      %1436 = vperm.xlu0 %1435, %v1323
      %v1437 = vpop.permute.xlu0 %1436
      %1440 = vset.pattern.permute.xlu0 0
      %1441 = vperm.xlu0 %1440, %v1324
      %v1442 = vpop.permute.xlu0 %1441
      %1445 = vset.pattern.permute.xlu0 0
      %1446 = vperm.xlu0 %1445, %v1325
      %v1447 = vpop.permute.xlu0 %1446
      %1450 = vset.pattern.permute.xlu0 0
      %1451 = vperm.xlu0 %1450, %v1326
      %v1452 = vpop.permute.xlu0 %1451
      %1455 = vset.pattern.permute.xlu0 0
      %1456 = vperm.xlu0 %1455, %v1327
      %v1457 = vpop.permute.xlu0 %1456
      %1460 = vset.pattern.permute.xlu0 0
      %1461 = vperm.xlu0 %1460, %v1328
      %v1462 = vpop.permute.xlu0 %1461
      %1465 = vset.pattern.permute.xlu0 0
      %1466 = vperm.xlu0 %1465, %v1329
      %v1467 = vpop.permute.xlu0 %1466
      %1470 = vset.pattern.permute.xlu0 0
      %1471 = vperm.xlu0 %1470, %v1330
      %v1472 = vpop.permute.xlu0 %1471
      %1475 = vset.pattern.permute.xlu0 0
      %1476 = vperm.xlu0 %1475, %v1331
      %v1477 = vpop.permute.xlu0 %1476
      %1480 = vset.pattern.permute.xlu0 0
      %1481 = vperm.xlu0 %1480, %v1332
      %v1482 = vpop.permute.xlu0 %1481
      %1485 = vset.pattern.permute.xlu0 0
      %1486 = vperm.xlu0 %1485, %v1333
      %v1487 = vpop.permute.xlu0 %1486
      %1490 = vset.pattern.permute.xlu0 0
      %1491 = vperm.xlu0 %1490, %v1334
      %v1492 = vpop.permute.xlu0 %1491
      %1495 = vset.pattern.permute.xlu0 0
      %1496 = vperm.xlu0 %1495, %v1335
      %v1497 = vpop.permute.xlu0 %1496
      %1500 = vset.pattern.permute.xlu0 0
      %1501 = vperm.xlu0 %1500, %v1336
      %v1502 = vpop.permute.xlu0 %1501
      %1505 = vset.pattern.permute.xlu0 0
      %1506 = vperm.xlu0 %1505, %v1337
      %v1507 = vpop.permute.xlu0 %1506
      %1510 = vset.pattern.permute.xlu0 0
      %1511 = vperm.xlu0 %1510, %v1338
      %v1512 = vpop.permute.xlu0 %1511
      %1515 = vset.pattern.permute.xlu0 0
      %1516 = vperm.xlu0 %1515, %v1339
      %v1517 = vpop.permute.xlu0 %1516
      %1520 = vset.pattern.permute.xlu0 0
      %1521 = vperm.xlu0 %1520, %v1340
      %v1522 = vpop.permute.xlu0 %1521
      %1525 = vset.pattern.permute.xlu0 0
      %1526 = vperm.xlu0 %1525, %v1341
      %v1527 = vpop.permute.xlu0 %1526
      %1530 = vset.pattern.permute.xlu0 0
      %1531 = vperm.xlu0 %1530, %v1342
      %v1532 = vpop.permute.xlu0 %1531
      %1535 = vset.pattern.permute.xlu0 0
      %1536 = vperm.xlu0 %1535, %v1343
      %v1537 = vpop.permute.xlu0 %1536
      %1540 = vset.pattern.permute.xlu0 0
      %1541 = vperm.xlu0 %1540, %v1344
      %v1542 = vpop.permute.xlu0 %1541
      %1545 = vset.pattern.permute.xlu0 0
      %1546 = vperm.xlu0 %1545, %v1345
      %v1547 = vpop.permute.xlu0 %1546
      %1550 = vset.pattern.permute.xlu0 0
      %1551 = vperm.xlu0 %1550, %v1346
      %v1552 = vpop.permute.xlu0 %1551
      %1555 = vset.pattern.permute.xlu0 0
      %1556 = vperm.xlu0 %1555, %v1347
      %v1557 = vpop.permute.xlu0 %1556
      %1560 = vset.pattern.permute.xlu0 0
      %1561 = vperm.xlu0 %1560, %v1348
      %v1562 = vpop.permute.xlu0 %1561
      %1565 = vset.pattern.permute.xlu0 0
      %1566 = vperm.xlu0 %1565, %v1349
      %v1567 = vpop.permute.xlu0 %1566
      %1570 = vset.pattern.permute.xlu0 0
      %1571 = vperm.xlu0 %1570, %v1350
      %v1572 = vpop.permute.xlu0 %1571
      %1575 = vset.pattern.permute.xlu0 0
      %1576 = vperm.xlu0 %1575, %v1351
      %v1577 = vpop.permute.xlu0 %1576
      %1580 = vset.pattern.permute.xlu0 0
      %1581 = vperm.xlu0 %1580, %v1352
      %v1582 = vpop.permute.xlu0 %1581
      %1585 = vset.pattern.permute.xlu0 0
      %1586 = vperm.xlu0 %1585, %v1353
      %v1587 = vpop.permute.xlu0 %1586
      %1590 = vset.pattern.permute.xlu0 0
      %1591 = vperm.xlu0 %1590, %v1354
      %v1592 = vpop.permute.xlu0 %1591
      %1595 = vset.pattern.permute.xlu0 0
      %1596 = vperm.xlu0 %1595, %v1355
      %v1597 = vpop.permute.xlu0 %1596
      %1600 = vset.pattern.permute.xlu0 0
      %1601 = vperm.xlu0 %1600, %v1356
      %v1602 = vpop.permute.xlu0 %1601
      %1605 = vset.pattern.permute.xlu0 0
      %1606 = vperm.xlu0 %1605, %v1357
      %v1607 = vpop.permute.xlu0 %1606
      %1610 = vset.pattern.permute.xlu0 0
      %1611 = vperm.xlu0 %1610, %v1358
      %v1612 = vpop.permute.xlu0 %1611
      %1615 = vset.pattern.permute.xlu0 0
      %1616 = vperm.xlu0 %1615, %v1359
      %v1617 = vpop.permute.xlu0 %1616
      %1620 = vset.pattern.permute.xlu0 0
      %1621 = vperm.xlu0 %1620, %v1360
      %v1622 = vpop.permute.xlu0 %1621
      %1625 = vset.pattern.permute.xlu0 0
      %1626 = vperm.xlu0 %1625, %v1361
      %v1627 = vpop.permute.xlu0 %1626
      %1630 = vset.pattern.permute.xlu0 0
      %1631 = vperm.xlu0 %1630, %v1362
      %v1632 = vpop.permute.xlu0 %1631
      %1635 = vset.pattern.permute.xlu0 0
      %1636 = vperm.xlu0 %1635, %v1363
      %v1637 = vpop.permute.xlu0 %1636
      %1640 = vset.pattern.permute.xlu0 0
      %1641 = vperm.xlu0 %1640, %v1364
      %v1642 = vpop.permute.xlu0 %1641
      %1645 = vset.pattern.permute.xlu0 0
      %1646 = vperm.xlu0 %1645, %v1365
      %v1647 = vpop.permute.xlu0 %1646
      %1650 = vset.pattern.permute.xlu0 0
      %1651 = vperm.xlu0 %1650, %v1366
      %v1652 = vpop.permute.xlu0 %1651
      %1655 = vset.pattern.permute.xlu0 0
      %1656 = vperm.xlu0 %1655, %v1367
      %v1657 = vpop.permute.xlu0 %1656
      %1660 = vset.pattern.permute.xlu0 0
      %1661 = vperm.xlu0 %1660, %v1368
      %v1662 = vpop.permute.xlu0 %1661
      %1665 = vset.pattern.permute.xlu0 0
      %1666 = vperm.xlu0 %1665, %v1369
      %v1667 = vpop.permute.xlu0 %1666
      %1670 = vset.pattern.permute.xlu0 0
      %1671 = vperm.xlu0 %1670, %v1370
      %v1672 = vpop.permute.xlu0 %1671
      %1675 = vset.pattern.permute.xlu0 0
      %1676 = vperm.xlu0 %1675, %v1371
      %v1677 = vpop.permute.xlu0 %1676
      %1680 = vset.pattern.permute.xlu0 0
      %1681 = vperm.xlu0 %1680, %v1372
      %v1682 = vpop.permute.xlu0 %1681
      %1685 = vset.pattern.permute.xlu0 0
      %1686 = vperm.xlu0 %1685, %v1373
      %v1687 = vpop.permute.xlu0 %1686
      %1690 = vset.pattern.permute.xlu0 0
      %1691 = vperm.xlu0 %1690, %v1374
      %v1692 = vpop.permute.xlu0 %1691
      %1695 = vset.pattern.permute.xlu0 0
      %1696 = vperm.xlu0 %1695, %v1375
      %v1697 = vpop.permute.xlu0 %1696
      %1700 = vset.pattern.permute.xlu0 0
      %1701 = vperm.xlu0 %1700, %v1376
      %v1702 = vpop.permute.xlu0 %1701
      %1705 = vset.pattern.permute.xlu0 0
      %1706 = vperm.xlu0 %1705, %v1377
      %v1707 = vpop.permute.xlu0 %1706
      %1710 = vset.pattern.permute.xlu0 0
      %1711 = vperm.xlu0 %1710, %v1378
      %v1712 = vpop.permute.xlu0 %1711
      %1715 = vset.pattern.permute.xlu0 0
      %1716 = vperm.xlu0 %1715, %v1379
      %v1717 = vpop.permute.xlu0 %1716
      %1720 = vset.pattern.permute.xlu0 0
      %1721 = vperm.xlu0 %1720, %v1380
      %v1722 = vpop.permute.xlu0 %1721
      %1725 = vset.pattern.permute.xlu0 0
      %1726 = vperm.xlu0 %1725, %v1381
      %v1727 = vpop.permute.xlu0 %1726
      %1730 = vset.pattern.permute.xlu0 0
      %1731 = vperm.xlu0 %1730, %v1382
      %v1732 = vpop.permute.xlu0 %1731
      %1735 = vset.pattern.permute.xlu0 0
      %1736 = vperm.xlu0 %1735, %v1383
      %v1737 = vpop.permute.xlu0 %1736
      %1740 = vset.pattern.permute.xlu0 0
      %1741 = vperm.xlu0 %1740, %v1384
      %v1742 = vpop.permute.xlu0 %1741
      %1745 = vset.pattern.permute.xlu0 0
      %1746 = vperm.xlu0 %1745, %v1385
      %v1747 = vpop.permute.xlu0 %1746
      %1750 = vset.pattern.permute.xlu0 0
      %1751 = vperm.xlu0 %1750, %v1386
      %v1752 = vpop.permute.xlu0 %1751
      %1755 = vset.pattern.permute.xlu0 0
      %1756 = vperm.xlu0 %1755, %v1387
      %v1757 = vpop.permute.xlu0 %1756
      %1760 = vset.pattern.permute.xlu0 0
      %1761 = vperm.xlu0 %1760, %v1388
      %v1762 = vpop.permute.xlu0 %1761
      %1765 = vset.pattern.permute.xlu0 0
      %1766 = vperm.xlu0 %1765, %v1389
      %v1767 = vpop.permute.xlu0 %1766
      %1770 = vset.pattern.permute.xlu0 0
      %1771 = vperm.xlu0 %1770, %v1390
      %v1772 = vpop.permute.xlu0 %1771
      %1775 = vset.pattern.permute.xlu0 0
      %1776 = vperm.xlu0 %1775, %v1391
      %v1777 = vpop.permute.xlu0 %1776
      %1780 = vset.pattern.permute.xlu0 0
      %1781 = vperm.xlu0 %1780, %v1392
      %v1782 = vpop.permute.xlu0 %1781
      %1785 = vset.pattern.permute.xlu0 0
      %1786 = vperm.xlu0 %1785, %v1393
      %v1787 = vpop.permute.xlu0 %1786
      %1790 = vset.pattern.permute.xlu0 0
      %1791 = vperm.xlu0 %1790, %v1394
      %v1792 = vpop.permute.xlu0 %1791
      %1795 = vset.pattern.permute.xlu0 0
      %1796 = vperm.xlu0 %1795, %v1395
      %v1797 = vpop.permute.xlu0 %1796
      %1800 = vset.pattern.permute.xlu0 0
      %1801 = vperm.xlu0 %1800, %v1396
      %v1802 = vpop.permute.xlu0 %1801
      %1805 = vset.pattern.permute.xlu0 0
      %1806 = vperm.xlu0 %1805, %v1397
      %v1807 = vpop.permute.xlu0 %1806
      %1810 = vset.pattern.permute.xlu0 0
      %1811 = vperm.xlu0 %1810, %v1398
      %v1812 = vpop.permute.xlu0 %1811
      %1815 = vset.pattern.permute.xlu0 0
      %1816 = vperm.xlu0 %1815, %v1399
      %v1817 = vpop.permute.xlu0 %1816
      %1820 = vset.pattern.permute.xlu0 0
      %1821 = vperm.xlu0 %1820, %v1400
      %v1822 = vpop.permute.xlu0 %1821
      %1825 = vset.pattern.permute.xlu0 0
      %1826 = vperm.xlu0 %1825, %v1401
      %v1827 = vpop.permute.xlu0 %1826
      %1830 = vset.pattern.permute.xlu0 0
      %1831 = vperm.xlu0 %1830, %v1402
      %v1832 = vpop.permute.xlu0 %1831
      %1835 = vset.pattern.permute.xlu0 0
      %1836 = vperm.xlu0 %1835, %v1403
      %v1837 = vpop.permute.xlu0 %1836
      %1840 = vset.pattern.permute.xlu0 0
      %1841 = vperm.xlu0 %1840, %v1404
      %v1842 = vpop.permute.xlu0 %1841
      %1845 = vset.pattern.permute.xlu0 0
      %1846 = vperm.xlu0 %1845, %v1405
      %v1847 = vpop.permute.xlu0 %1846
      %1850 = vset.pattern.permute.xlu0 0
      %1851 = vperm.xlu0 %1850, %v1406
      %v1852 = vpop.permute.xlu0 %1851
      %1855 = vset.pattern.permute.xlu0 0
      %1856 = vperm.xlu0 %1855, %v1407
      %v1857 = vpop.permute.xlu0 %1856
      %1860 = vset.pattern.permute.xlu0 0
      %1861 = vperm.xlu0 %1860, %v1408
      %v1862 = vpop.permute.xlu0 %1861
      %1865 = vset.pattern.permute.xlu0 0
      %1866 = vperm.xlu0 %1865, %v1409
      %v1867 = vpop.permute.xlu0 %1866
      %1870 = vset.pattern.permute.xlu0 0
      %1871 = vperm.xlu0 %1870, %v1410
      %v1872 = vpop.permute.xlu0 %1871
      %1875 = vset.pattern.permute.xlu0 0
      %1876 = vperm.xlu0 %1875, %v1411
      %v1877 = vpop.permute.xlu0 %1876
      %1880 = vset.pattern.permute.xlu0 0
      %1881 = vperm.xlu0 %1880, %v1412
      %v1882 = vpop.permute.xlu0 %1881
      %1885 = vset.pattern.permute.xlu0 0
      %1886 = vperm.xlu0 %1885, %v1413
      %v1887 = vpop.permute.xlu0 %1886
      %1890 = vset.pattern.permute.xlu0 0
      %1891 = vperm.xlu0 %1890, %v1414
      %v1892 = vpop.permute.xlu0 %1891
      %1895 = vset.pattern.permute.xlu0 0
      %1896 = vperm.xlu0 %1895, %v1415
      %v1897 = vpop.permute.xlu0 %1896
      %1900 = vset.pattern.permute.xlu0 0
      %1901 = vperm.xlu0 %1900, %v1416
      %v1902 = vpop.permute.xlu0 %1901
      %1905 = vset.pattern.permute.xlu0 0
      %1906 = vperm.xlu0 %1905, %v1417
      %v1907 = vpop.permute.xlu0 %1906
      %1910 = vset.pattern.permute.xlu0 0
      %1911 = vperm.xlu0 %1910, %v1418
      %v1912 = vpop.permute.xlu0 %1911
      %1915 = vset.pattern.permute.xlu0 0
      %1916 = vperm.xlu0 %1915, %v1419
      %v1917 = vpop.permute.xlu0 %1916
      %1920 = vset.pattern.permute.xlu0 0
      %1921 = vperm.xlu0 %1920, %v1420
      %v1922 = vpop.permute.xlu0 %1921
      %1925 = vset.pattern.permute.xlu0 0
      %1926 = vperm.xlu0 %1925, %v1421
      %v1927 = vpop.permute.xlu0 %1926
      %1930 = vset.pattern.permute.xlu0 0
      %1931 = vperm.xlu0 %1930, %v1422
      %v1932 = vpop.permute.xlu0 %1931
      %1935 = vset.pattern.permute.xlu0 0
      %1936 = vperm.xlu0 %1935, %v1423
      %v1937 = vpop.permute.xlu0 %1936
      %1940 = vset.pattern.permute.xlu0 0
      %1941 = vperm.xlu0 %1940, %v1424
      %v1942 = vpop.permute.xlu0 %1941
      %1945 = vset.pattern.permute.xlu0 0
      %1946 = vperm.xlu0 %1945, %v1425
      %v1947 = vpop.permute.xlu0 %1946
      %v1949 = vlaneseq
      %v1950 = vshrl.u32 %v1949, 7
      %v1951 = vsub.s32 0, %v1950
      %v1952 = vrot.slane %v1428, %v1951
      %v1953 = vmul.f32 %v1432, %v1952
      %v1954 = vmul.f32 %v1437, %v1952
      %v1955 = vmul.f32 %v1442, %v1952
      %v1956 = vmul.f32 %v1447, %v1952
      %v1957 = vmul.f32 %v1452, %v1952
      %v1958 = vmul.f32 %v1457, %v1952
      %v1959 = vmul.f32 %v1462, %v1952
      %v1960 = vmul.f32 %v1467, %v1952
      %v1961 = vmul.f32 %v1472, %v1952
      %v1962 = vmul.f32 %v1477, %v1952
      %v1963 = vmul.f32 %v1482, %v1952
      %v1964 = vmul.f32 %v1487, %v1952
      %v1965 = vmul.f32 %v1492, %v1952
      %v1966 = vmul.f32 %v1497, %v1952
      %v1967 = vmul.f32 %v1502, %v1952
      %v1968 = vmul.f32 %v1507, %v1952
      %v1969 = vmul.f32 %v1512, %v1952
      %v1970 = vmul.f32 %v1517, %v1952
      %v1971 = vmul.f32 %v1522, %v1952
      %v1972 = vmul.f32 %v1527, %v1952
      %v1973 = vmul.f32 %v1532, %v1952
      %v1974 = vmul.f32 %v1537, %v1952
      %v1975 = vmul.f32 %v1542, %v1952
      %v1976 = vmul.f32 %v1547, %v1952
      %v1977 = vmul.f32 %v1552, %v1952
      %v1978 = vmul.f32 %v1557, %v1952
      %v1979 = vmul.f32 %v1562, %v1952
      %v1980 = vmul.f32 %v1567, %v1952
      %v1981 = vmul.f32 %v1572, %v1952
      %v1982 = vmul.f32 %v1577, %v1952
      %v1983 = vmul.f32 %v1582, %v1952
      %v1984 = vmul.f32 %v1587, %v1952
      %v1985 = vmul.f32 %v1592, %v1952
      %v1986 = vmul.f32 %v1597, %v1952
      %v1987 = vmul.f32 %v1602, %v1952
      %v1988 = vmul.f32 %v1607, %v1952
      %v1989 = vmul.f32 %v1612, %v1952
      %v1990 = vmul.f32 %v1617, %v1952
      %v1991 = vmul.f32 %v1622, %v1952
      %v1992 = vmul.f32 %v1627, %v1952
      %v1993 = vmul.f32 %v1632, %v1952
      %v1994 = vmul.f32 %v1637, %v1952
      %v1995 = vmul.f32 %v1642, %v1952
      %v1996 = vmul.f32 %v1647, %v1952
      %v1997 = vmul.f32 %v1652, %v1952
      %v1998 = vmul.f32 %v1657, %v1952
      %v1999 = vmul.f32 %v1662, %v1952
      %v2000 = vmul.f32 %v1667, %v1952
      %v2001 = vmul.f32 %v1672, %v1952
      %v2002 = vmul.f32 %v1677, %v1952
      %v2003 = vmul.f32 %v1682, %v1952
      %v2004 = vmul.f32 %v1687, %v1952
      %v2005 = vmul.f32 %v1692, %v1952
      %v2006 = vmul.f32 %v1697, %v1952
      %v2007 = vmul.f32 %v1702, %v1952
      %v2008 = vmul.f32 %v1707, %v1952
      %v2009 = vmul.f32 %v1712, %v1952
      %v2010 = vmul.f32 %v1717, %v1952
      %v2011 = vmul.f32 %v1722, %v1952
      %v2012 = vmul.f32 %v1727, %v1952
      %v2013 = vmul.f32 %v1732, %v1952
      %v2014 = vmul.f32 %v1737, %v1952
      %v2015 = vmul.f32 %v1742, %v1952
      %v2016 = vmul.f32 %v1747, %v1952
      %v2017 = vmul.f32 %v1752, %v1952
      %v2018 = vmul.f32 %v1757, %v1952
      %v2019 = vmul.f32 %v1762, %v1952
      %v2020 = vmul.f32 %v1767, %v1952
      %v2021 = vmul.f32 %v1772, %v1952
      %v2022 = vmul.f32 %v1777, %v1952
      %v2023 = vmul.f32 %v1782, %v1952
      %v2024 = vmul.f32 %v1787, %v1952
      %v2025 = vmul.f32 %v1792, %v1952
      %v2026 = vmul.f32 %v1797, %v1952
      %v2027 = vmul.f32 %v1802, %v1952
      %v2028 = vmul.f32 %v1807, %v1952
      %v2029 = vmul.f32 %v1812, %v1952
      %v2030 = vmul.f32 %v1817, %v1952
      %v2031 = vmul.f32 %v1822, %v1952
      %v2032 = vmul.f32 %v1827, %v1952
      %v2033 = vmul.f32 %v1832, %v1952
      %v2034 = vmul.f32 %v1837, %v1952
      %v2035 = vmul.f32 %v1842, %v1952
      %v2036 = vmul.f32 %v1847, %v1952
      %v2037 = vmul.f32 %v1852, %v1952
      %v2038 = vmul.f32 %v1857, %v1952
      %v2039 = vmul.f32 %v1862, %v1952
      %v2040 = vmul.f32 %v1867, %v1952
      %v2041 = vmul.f32 %v1872, %v1952
      %v2042 = vmul.f32 %v1877, %v1952
      %v2043 = vmul.f32 %v1882, %v1952
      %v2044 = vmul.f32 %v1887, %v1952
      %v2045 = vmul.f32 %v1892, %v1952
      %v2046 = vmul.f32 %v1897, %v1952
      %v2047 = vmul.f32 %v1902, %v1952
      %v2048 = vmul.f32 %v1907, %v1952
      %v2049 = vmul.f32 %v1912, %v1952
      %v2050 = vmul.f32 %v1917, %v1952
      %v2051 = vmul.f32 %v1922, %v1952
      %v2052 = vmul.f32 %v1927, %v1952
      %v2053 = vmul.f32 %v1932, %v1952
      %v2054 = vmul.f32 %v1937, %v1952
      %v2055 = vmul.f32 %v1942, %v1952
      %v2056 = vmul.f32 %v1947, %v1952
      %v2057 = vadd.f32 %v1062, %v1953
      %v2058 = vadd.f32 %v1063, %v1954
      %v2059 = vadd.f32 %v1064, %v1955
      %v2060 = vadd.f32 %v1065, %v1956
      %v2061 = vadd.f32 %v1066, %v1957
      %v2062 = vadd.f32 %v1067, %v1958
      %v2063 = vadd.f32 %v1068, %v1959
      %v2064 = vadd.f32 %v1069, %v1960
      %v2065 = vadd.f32 %v1070, %v1961
      %v2066 = vadd.f32 %v1071, %v1962
      %v2067 = vadd.f32 %v1072, %v1963
      %v2068 = vadd.f32 %v1073, %v1964
      %v2069 = vadd.f32 %v1074, %v1965
      %v2070 = vadd.f32 %v1075, %v1966
      %v2071 = vadd.f32 %v1076, %v1967
      %v2072 = vadd.f32 %v1077, %v1968
      %v2073 = vadd.f32 %v1078, %v1969
      %v2074 = vadd.f32 %v1079, %v1970
      %v2075 = vadd.f32 %v1080, %v1971
      %v2076 = vadd.f32 %v1081, %v1972
      %v2077 = vadd.f32 %v1082, %v1973
      %v2078 = vadd.f32 %v1083, %v1974
      %v2079 = vadd.f32 %v1084, %v1975
      %v2080 = vadd.f32 %v1085, %v1976
      %v2081 = vadd.f32 %v1086, %v1977
      %v2082 = vadd.f32 %v1087, %v1978
      %v2083 = vadd.f32 %v1088, %v1979
      %v2084 = vadd.f32 %v1089, %v1980
      %v2085 = vadd.f32 %v1090, %v1981
      %v2086 = vadd.f32 %v1091, %v1982
      %v2087 = vadd.f32 %v1092, %v1983
      %v2088 = vadd.f32 %v1093, %v1984
      %v2089 = vadd.f32 %v1094, %v1985
      %v2090 = vadd.f32 %v1095, %v1986
      %v2091 = vadd.f32 %v1096, %v1987
      %v2092 = vadd.f32 %v1097, %v1988
      %v2093 = vadd.f32 %v1098, %v1989
      %v2094 = vadd.f32 %v1099, %v1990
      %v2095 = vadd.f32 %v1100, %v1991
      %v2096 = vadd.f32 %v1101, %v1992
      %v2097 = vadd.f32 %v1102, %v1993
      %v2098 = vadd.f32 %v1103, %v1994
      %v2099 = vadd.f32 %v1104, %v1995
      %v2100 = vadd.f32 %v1105, %v1996
      %v2101 = vadd.f32 %v1106, %v1997
      %v2102 = vadd.f32 %v1107, %v1998
      %v2103 = vadd.f32 %v1108, %v1999
      %v2104 = vadd.f32 %v1109, %v2000
      %v2105 = vadd.f32 %v1110, %v2001
      %v2106 = vadd.f32 %v1111, %v2002
      %v2107 = vadd.f32 %v1112, %v2003
      %v2108 = vadd.f32 %v1113, %v2004
      %v2109 = vadd.f32 %v1114, %v2005
      %v2110 = vadd.f32 %v1115, %v2006
      %v2111 = vadd.f32 %v1116, %v2007
      %v2112 = vadd.f32 %v1117, %v2008
      %v2113 = vadd.f32 %v1118, %v2009
      %v2114 = vadd.f32 %v1119, %v2010
      %v2115 = vadd.f32 %v1120, %v2011
      %v2116 = vadd.f32 %v1121, %v2012
      %v2117 = vadd.f32 %v1122, %v2013
      %v2118 = vadd.f32 %v1123, %v2014
      %v2119 = vadd.f32 %v1124, %v2015
      %v2120 = vadd.f32 %v1125, %v2016
      %v2121 = vadd.f32 %v1126, %v2017
      %v2122 = vadd.f32 %v1127, %v2018
      %v2123 = vadd.f32 %v1128, %v2019
      %v2124 = vadd.f32 %v1129, %v2020
      %v2125 = vadd.f32 %v1130, %v2021
      %v2126 = vadd.f32 %v1131, %v2022
      %v2127 = vadd.f32 %v1132, %v2023
      %v2128 = vadd.f32 %v1133, %v2024
      %v2129 = vadd.f32 %v1134, %v2025
      %v2130 = vadd.f32 %v1135, %v2026
      %v2131 = vadd.f32 %v1136, %v2027
      %v2132 = vadd.f32 %v1137, %v2028
      %v2133 = vadd.f32 %v1138, %v2029
      %v2134 = vadd.f32 %v1139, %v2030
      %v2135 = vadd.f32 %v1140, %v2031
      %v2136 = vadd.f32 %v1141, %v2032
      %v2137 = vadd.f32 %v1142, %v2033
      %v2138 = vadd.f32 %v1143, %v2034
      %v2139 = vadd.f32 %v1144, %v2035
      %v2140 = vadd.f32 %v1145, %v2036
      %v2141 = vadd.f32 %v1146, %v2037
      %v2142 = vadd.f32 %v1147, %v2038
      %v2143 = vadd.f32 %v1148, %v2039
      %v2144 = vadd.f32 %v1149, %v2040
      %v2145 = vadd.f32 %v1150, %v2041
      %v2146 = vadd.f32 %v1151, %v2042
      %v2147 = vadd.f32 %v1152, %v2043
      %v2148 = vadd.f32 %v1153, %v2044
      %v2149 = vadd.f32 %v1154, %v2045
      %v2150 = vadd.f32 %v1155, %v2046
      %v2151 = vadd.f32 %v1156, %v2047
      %v2152 = vadd.f32 %v1157, %v2048
      %v2153 = vadd.f32 %v1158, %v2049
      %v2154 = vadd.f32 %v1159, %v2050
      %v2155 = vadd.f32 %v1160, %v2051
      %v2156 = vadd.f32 %v1161, %v2052
      %v2157 = vadd.f32 %v1162, %v2053
      %v2158 = vadd.f32 %v1163, %v2054
      %v2159 = vadd.f32 %v1164, %v2055
      %v2160 = vadd.f32 %v1165, %v2056
      %v2161 = vld [vmem:[%s165 + $0x2] sm:$0xff]
      %v2162 = vld [vmem:[%s165 + $0xa] sm:$0xff]
      %v2163 = vld [vmem:[%s165 + $0x12] sm:$0xff]
      %v2164 = vld [vmem:[%s165 + $0x1a] sm:$0xff]
      %v2165 = vld [vmem:[%s165 + $0x2a] sm:$0xff]
      %v2166 = vld [vmem:[%s165 + $0x32] sm:$0xff]
      %v2167 = vld [vmem:[%s165 + $0x3a] sm:$0xff]
      %v2168 = vld [vmem:[%s165 + $0x42] sm:$0xff]
      %v2169 = vld [vmem:[%s165 + $0x52] sm:$0xff]
      %v2170 = vld [vmem:[%s165 + $0x5a] sm:$0xff]
      %v2171 = vld [vmem:[%s165 + $0x62] sm:$0xff]
      %v2172 = vld [vmem:[%s165 + $0x6a] sm:$0xff]
      %v2173 = vld [vmem:[%s165 + $0x7a] sm:$0xff]
      %v2174 = vld [vmem:[%s165 + $0x82] sm:$0xff]
      %v2175 = vld [vmem:[%s165 + $0x8a] sm:$0xff]
      %v2176 = vld [vmem:[%s165 + $0x92] sm:$0xff]
      %v2177 = vld [vmem:[%s165 + $0xa2] sm:$0xff]
      %v2178 = vld [vmem:[%s165 + $0xaa] sm:$0xff]
      %v2179 = vld [vmem:[%s165 + $0xb2] sm:$0xff]
      %v2180 = vld [vmem:[%s165 + $0xba] sm:$0xff]
      %v2181 = vld [vmem:[%s165 + $0xca] sm:$0xff]
      %v2182 = vld [vmem:[%s165 + $0xd2] sm:$0xff]
      %v2183 = vld [vmem:[%s165 + $0xda] sm:$0xff]
      %v2184 = vld [vmem:[%s165 + $0xe2] sm:$0xff]
      %v2185 = vld [vmem:[%s165 + $0xf2] sm:$0xff]
      %v2186 = vld [vmem:[%s165 + $0xfa] sm:$0xff]
      %v2187 = vld [vmem:[%s165 + $0x102] sm:$0xff]
      %v2188 = vld [vmem:[%s165 + $0x10a] sm:$0xff]
      %v2189 = vld [vmem:[%s165 + $0x11a] sm:$0xff]
      %v2190 = vld [vmem:[%s165 + $0x122] sm:$0xff]
      %v2191 = vld [vmem:[%s165 + $0x12a] sm:$0xff]
      %v2192 = vld [vmem:[%s165 + $0x132] sm:$0xff]
      %v2193 = vld [vmem:[%s165 + $0x142] sm:$0xff]
      %v2194 = vld [vmem:[%s165 + $0x14a] sm:$0xff]
      %v2195 = vld [vmem:[%s165 + $0x152] sm:$0xff]
      %v2196 = vld [vmem:[%s165 + $0x15a] sm:$0xff]
      %v2197 = vld [vmem:[%s165 + $0x16a] sm:$0xff]
      %v2198 = vld [vmem:[%s165 + $0x172] sm:$0xff]
      %v2199 = vld [vmem:[%s165 + $0x17a] sm:$0xff]
      %v2200 = vld [vmem:[%s165 + $0x182] sm:$0xff]
      %v2201 = vld [vmem:[%s165 + $0x192] sm:$0xff]
      %v2202 = vld [vmem:[%s165 + $0x19a] sm:$0xff]
      %v2203 = vld [vmem:[%s165 + $0x1a2] sm:$0xff]
      %v2204 = vld [vmem:[%s165 + $0x1aa] sm:$0xff]
      %v2205 = vld [vmem:[%s165 + $0x1ba] sm:$0xff]
      %v2206 = vld [vmem:[%s165 + $0x1c2] sm:$0xff]
      %v2207 = vld [vmem:[%s165 + $0x1ca] sm:$0xff]
      %v2208 = vld [vmem:[%s165 + $0x1d2] sm:$0xff]
      %v2209 = vld [vmem:[%s165 + $0x1e2] sm:$0xff]
      %v2210 = vld [vmem:[%s165 + $0x1ea] sm:$0xff]
      %v2211 = vld [vmem:[%s165 + $0x1f2] sm:$0xff]
      %v2212 = vld [vmem:[%s165 + $0x1fa] sm:$0xff]
      %v2213 = vld [vmem:[%s165 + $0x20a] sm:$0xff]
      %v2214 = vld [vmem:[%s165 + $0x212] sm:$0xff]
      %v2215 = vld [vmem:[%s165 + $0x21a] sm:$0xff]
      %v2216 = vld [vmem:[%s165 + $0x222] sm:$0xff]
      %v2217 = vld [vmem:[%s165 + $0x232] sm:$0xff]
      %v2218 = vld [vmem:[%s165 + $0x23a] sm:$0xff]
      %v2219 = vld [vmem:[%s165 + $0x242] sm:$0xff]
      %v2220 = vld [vmem:[%s165 + $0x24a] sm:$0xff]
      %v2221 = vld [vmem:[%s165 + $0x25a] sm:$0xff]
      %v2222 = vld [vmem:[%s165 + $0x262] sm:$0xff]
      %v2223 = vld [vmem:[%s165 + $0x26a] sm:$0xff]
      %v2224 = vld [vmem:[%s165 + $0x272] sm:$0xff]
      %v2225 = vld [vmem:[%s165 + $0x282] sm:$0xff]
      %v2226 = vld [vmem:[%s165 + $0x28a] sm:$0xff]
      %v2227 = vld [vmem:[%s165 + $0x292] sm:$0xff]
      %v2228 = vld [vmem:[%s165 + $0x29a] sm:$0xff]
      %v2229 = vld [vmem:[%s165 + $0x2aa] sm:$0xff]
      %v2230 = vld [vmem:[%s165 + $0x2b2] sm:$0xff]
      %v2231 = vld [vmem:[%s165 + $0x2ba] sm:$0xff]
      %v2232 = vld [vmem:[%s165 + $0x2c2] sm:$0xff]
      %v2233 = vld [vmem:[%s165 + $0x2d2] sm:$0xff]
      %v2234 = vld [vmem:[%s165 + $0x2da] sm:$0xff]
      %v2235 = vld [vmem:[%s165 + $0x2e2] sm:$0xff]
      %v2236 = vld [vmem:[%s165 + $0x2ea] sm:$0xff]
      %v2237 = vld [vmem:[%s165 + $0x2fa] sm:$0xff]
      %v2238 = vld [vmem:[%s165 + $0x302] sm:$0xff]
      %v2239 = vld [vmem:[%s165 + $0x30a] sm:$0xff]
      %v2240 = vld [vmem:[%s165 + $0x312] sm:$0xff]
      %v2241 = vld [vmem:[%s165 + $0x322] sm:$0xff]
      %v2242 = vld [vmem:[%s165 + $0x32a] sm:$0xff]
      %v2243 = vld [vmem:[%s165 + $0x332] sm:$0xff]
      %v2244 = vld [vmem:[%s165 + $0x33a] sm:$0xff]
      %v2245 = vld [vmem:[%s165 + $0x34a] sm:$0xff]
      %v2246 = vld [vmem:[%s165 + $0x352] sm:$0xff]
      %v2247 = vld [vmem:[%s165 + $0x35a] sm:$0xff]
      %v2248 = vld [vmem:[%s165 + $0x362] sm:$0xff]
      %v2249 = vld [vmem:[%s165 + $0x372] sm:$0xff]
      %v2250 = vld [vmem:[%s165 + $0x37a] sm:$0xff]
      %v2251 = vld [vmem:[%s165 + $0x382] sm:$0xff]
      %v2252 = vld [vmem:[%s165 + $0x38a] sm:$0xff]
      %v2253 = vld [vmem:[%s165 + $0x39a] sm:$0xff]
      %v2254 = vld [vmem:[%s165 + $0x3a2] sm:$0xff]
      %v2255 = vld [vmem:[%s165 + $0x3aa] sm:$0xff]
      %v2256 = vld [vmem:[%s165 + $0x3b2] sm:$0xff]
      %v2257 = vld [vmem:[%s165 + $0x3c2] sm:$0xff]
      %v2258 = vld [vmem:[%s165 + $0x3ca] sm:$0xff]
      %v2259 = vld [vmem:[%s165 + $0x3d2] sm:$0xff]
      %v2260 = vld [vmem:[%s165 + $0x3da] sm:$0xff]
      %v2261 = vld [vmem:[%s165 + $0x3ea] sm:$0xff]
      %v2262 = vld [vmem:[%s165 + $0x3f2] sm:$0xff]
      %v2263 = vld [vmem:[%s165 + $0x3fa] sm:$0xff]
      %v2264 = vld [vmem:[%s165 + $0x402] sm:$0xff]
      %v2265 = vpack.c.bf16 %v2162, %v2161
      %v2266 = vpack.c.bf16 %v2164, %v2163
      %v2267 = vpack.c.bf16 %v2166, %v2165
      %v2268 = vpack.c.bf16 %v2168, %v2167
      %v2269 = vpack.c.bf16 %v2170, %v2169
      %v2270 = vpack.c.bf16 %v2172, %v2171
      %v2271 = vpack.c.bf16 %v2174, %v2173
      %v2272 = vpack.c.bf16 %v2176, %v2175
      %v2273 = vpack.c.bf16 %v2178, %v2177
      %v2274 = vpack.c.bf16 %v2180, %v2179
      %v2275 = vpack.c.bf16 %v2182, %v2181
      %v2276 = vpack.c.bf16 %v2184, %v2183
      %v2277 = vpack.c.bf16 %v2186, %v2185
      %v2278 = vpack.c.bf16 %v2188, %v2187
      %v2279 = vpack.c.bf16 %v2190, %v2189
      %v2280 = vpack.c.bf16 %v2192, %v2191
      %v2281 = vpack.c.bf16 %v2194, %v2193
      %v2282 = vpack.c.bf16 %v2196, %v2195
      %v2283 = vpack.c.bf16 %v2198, %v2197
      %v2284 = vpack.c.bf16 %v2200, %v2199
      %v2285 = vpack.c.bf16 %v2202, %v2201
      %v2286 = vpack.c.bf16 %v2204, %v2203
      %v2287 = vpack.c.bf16 %v2206, %v2205
      %v2288 = vpack.c.bf16 %v2208, %v2207
      %v2289 = vpack.c.bf16 %v2210, %v2209
      %v2290 = vpack.c.bf16 %v2212, %v2211
      %v2291 = vpack.c.bf16 %v2214, %v2213
      %v2292 = vpack.c.bf16 %v2216, %v2215
      %v2293 = vpack.c.bf16 %v2218, %v2217
      %v2294 = vpack.c.bf16 %v2220, %v2219
      %v2295 = vpack.c.bf16 %v2222, %v2221
      %v2296 = vpack.c.bf16 %v2224, %v2223
      %v2297 = vpack.c.bf16 %v2226, %v2225
      %v2298 = vpack.c.bf16 %v2228, %v2227
      %v2299 = vpack.c.bf16 %v2230, %v2229
      %v2300 = vpack.c.bf16 %v2232, %v2231
      %v2301 = vpack.c.bf16 %v2234, %v2233
      %v2302 = vpack.c.bf16 %v2236, %v2235
      %v2303 = vpack.c.bf16 %v2238, %v2237
      %v2304 = vpack.c.bf16 %v2240, %v2239
      %v2305 = vpack.c.bf16 %v2242, %v2241
      %v2306 = vpack.c.bf16 %v2244, %v2243
      %v2307 = vpack.c.bf16 %v2246, %v2245
      %v2308 = vpack.c.bf16 %v2248, %v2247
      %v2309 = vpack.c.bf16 %v2250, %v2249
      %v2310 = vpack.c.bf16 %v2252, %v2251
      %v2311 = vpack.c.bf16 %v2254, %v2253
      %v2312 = vpack.c.bf16 %v2256, %v2255
      %v2313 = vpack.c.bf16 %v2258, %v2257
      %v2314 = vpack.c.bf16 %v2260, %v2259
      %v2315 = vpack.c.bf16 %v2262, %v2261
      %v2316 = vpack.c.bf16 %v2264, %v2263
      %v2317 = vunpack.c.l.bf16 %v2265
      %v2318 = vunpack.c.h.bf16 %v2265
      %v2319 = vunpack.c.l.bf16 %v2266
      %v2320 = vunpack.c.h.bf16 %v2266
      %v2321 = vunpack.c.l.bf16 %v2267
      %v2322 = vunpack.c.h.bf16 %v2267
      %v2323 = vunpack.c.l.bf16 %v2268
      %v2324 = vunpack.c.h.bf16 %v2268
      %v2325 = vunpack.c.l.bf16 %v2269
      %v2326 = vunpack.c.h.bf16 %v2269
      %v2327 = vunpack.c.l.bf16 %v2270
      %v2328 = vunpack.c.h.bf16 %v2270
      %v2329 = vunpack.c.l.bf16 %v2271
      %v2330 = vunpack.c.h.bf16 %v2271
      %v2331 = vunpack.c.l.bf16 %v2272
      %v2332 = vunpack.c.h.bf16 %v2272
      %v2333 = vunpack.c.l.bf16 %v2273
      %v2334 = vunpack.c.h.bf16 %v2273
      %v2335 = vunpack.c.l.bf16 %v2274
      %v2336 = vunpack.c.h.bf16 %v2274
      %v2337 = vunpack.c.l.bf16 %v2275
      %v2338 = vunpack.c.h.bf16 %v2275
      %v2339 = vunpack.c.l.bf16 %v2276
      %v2340 = vunpack.c.h.bf16 %v2276
      %v2341 = vunpack.c.l.bf16 %v2277
      %v2342 = vunpack.c.h.bf16 %v2277
      %v2343 = vunpack.c.l.bf16 %v2278
      %v2344 = vunpack.c.h.bf16 %v2278
      %v2345 = vunpack.c.l.bf16 %v2279
      %v2346 = vunpack.c.h.bf16 %v2279
      %v2347 = vunpack.c.l.bf16 %v2280
      %v2348 = vunpack.c.h.bf16 %v2280
      %v2349 = vunpack.c.l.bf16 %v2281
      %v2350 = vunpack.c.h.bf16 %v2281
      %v2351 = vunpack.c.l.bf16 %v2282
      %v2352 = vunpack.c.h.bf16 %v2282
      %v2353 = vunpack.c.l.bf16 %v2283
      %v2354 = vunpack.c.h.bf16 %v2283
      %v2355 = vunpack.c.l.bf16 %v2284
      %v2356 = vunpack.c.h.bf16 %v2284
      %v2357 = vunpack.c.l.bf16 %v2285
      %v2358 = vunpack.c.h.bf16 %v2285
      %v2359 = vunpack.c.l.bf16 %v2286
      %v2360 = vunpack.c.h.bf16 %v2286
      %v2361 = vunpack.c.l.bf16 %v2287
      %v2362 = vunpack.c.h.bf16 %v2287
      %v2363 = vunpack.c.l.bf16 %v2288
      %v2364 = vunpack.c.h.bf16 %v2288
      %v2365 = vunpack.c.l.bf16 %v2289
      %v2366 = vunpack.c.h.bf16 %v2289
      %v2367 = vunpack.c.l.bf16 %v2290
      %v2368 = vunpack.c.h.bf16 %v2290
      %v2369 = vunpack.c.l.bf16 %v2291
      %v2370 = vunpack.c.h.bf16 %v2291
      %v2371 = vunpack.c.l.bf16 %v2292
      %v2372 = vunpack.c.h.bf16 %v2292
      %v2373 = vunpack.c.l.bf16 %v2293
      %v2374 = vunpack.c.h.bf16 %v2293
      %v2375 = vunpack.c.l.bf16 %v2294
      %v2376 = vunpack.c.h.bf16 %v2294
      %v2377 = vunpack.c.l.bf16 %v2295
      %v2378 = vunpack.c.h.bf16 %v2295
      %v2379 = vunpack.c.l.bf16 %v2296
      %v2380 = vunpack.c.h.bf16 %v2296
      %v2381 = vunpack.c.l.bf16 %v2297
      %v2382 = vunpack.c.h.bf16 %v2297
      %v2383 = vunpack.c.l.bf16 %v2298
      %v2384 = vunpack.c.h.bf16 %v2298
      %v2385 = vunpack.c.l.bf16 %v2299
      %v2386 = vunpack.c.h.bf16 %v2299
      %v2387 = vunpack.c.l.bf16 %v2300
      %v2388 = vunpack.c.h.bf16 %v2300
      %v2389 = vunpack.c.l.bf16 %v2301
      %v2390 = vunpack.c.h.bf16 %v2301
      %v2391 = vunpack.c.l.bf16 %v2302
      %v2392 = vunpack.c.h.bf16 %v2302
      %v2393 = vunpack.c.l.bf16 %v2303
      %v2394 = vunpack.c.h.bf16 %v2303
      %v2395 = vunpack.c.l.bf16 %v2304
      %v2396 = vunpack.c.h.bf16 %v2304
      %v2397 = vunpack.c.l.bf16 %v2305
      %v2398 = vunpack.c.h.bf16 %v2305
      %v2399 = vunpack.c.l.bf16 %v2306
      %v2400 = vunpack.c.h.bf16 %v2306
      %v2401 = vunpack.c.l.bf16 %v2307
      %v2402 = vunpack.c.h.bf16 %v2307
      %v2403 = vunpack.c.l.bf16 %v2308
      %v2404 = vunpack.c.h.bf16 %v2308
      %v2405 = vunpack.c.l.bf16 %v2309
      %v2406 = vunpack.c.h.bf16 %v2309
      %v2407 = vunpack.c.l.bf16 %v2310
      %v2408 = vunpack.c.h.bf16 %v2310
      %v2409 = vunpack.c.l.bf16 %v2311
      %v2410 = vunpack.c.h.bf16 %v2311
      %v2411 = vunpack.c.l.bf16 %v2312
      %v2412 = vunpack.c.h.bf16 %v2312
      %v2413 = vunpack.c.l.bf16 %v2313
      %v2414 = vunpack.c.h.bf16 %v2313
      %v2415 = vunpack.c.l.bf16 %v2314
      %v2416 = vunpack.c.h.bf16 %v2314
      %v2417 = vunpack.c.l.bf16 %v2315
      %v2418 = vunpack.c.h.bf16 %v2315
      %v2419 = vunpack.c.l.bf16 %v2316
      %v2420 = vunpack.c.h.bf16 %v2316
      %v2421 = vld [vmem:[%s1 + $0x2] sm:$0x1]
      %v2422 = vpack.c.bf16 %v2421, %v2421
      %v2423 = vunpack.c.l.bf16 %v2422
      %2425 = vset.pattern.permute.xlu0 0
      %2426 = vperm.xlu0 %2425, %v2317
      %v2427 = vpop.permute.xlu0 %2426
      %2430 = vset.pattern.permute.xlu0 0
      %2431 = vperm.xlu0 %2430, %v2318
      %v2432 = vpop.permute.xlu0 %2431
      %2435 = vset.pattern.permute.xlu0 0
      %2436 = vperm.xlu0 %2435, %v2319
      %v2437 = vpop.permute.xlu0 %2436
      %2440 = vset.pattern.permute.xlu0 0
      %2441 = vperm.xlu0 %2440, %v2320
      %v2442 = vpop.permute.xlu0 %2441
      %2445 = vset.pattern.permute.xlu0 0
      %2446 = vperm.xlu0 %2445, %v2321
      %v2447 = vpop.permute.xlu0 %2446
      %2450 = vset.pattern.permute.xlu0 0
      %2451 = vperm.xlu0 %2450, %v2322
      %v2452 = vpop.permute.xlu0 %2451
      %2455 = vset.pattern.permute.xlu0 0
      %2456 = vperm.xlu0 %2455, %v2323
      %v2457 = vpop.permute.xlu0 %2456
      %2460 = vset.pattern.permute.xlu0 0
      %2461 = vperm.xlu0 %2460, %v2324
      %v2462 = vpop.permute.xlu0 %2461
      %2465 = vset.pattern.permute.xlu0 0
      %2466 = vperm.xlu0 %2465, %v2325
      %v2467 = vpop.permute.xlu0 %2466
      %2470 = vset.pattern.permute.xlu0 0
      %2471 = vperm.xlu0 %2470, %v2326
      %v2472 = vpop.permute.xlu0 %2471
      %2475 = vset.pattern.permute.xlu0 0
      %2476 = vperm.xlu0 %2475, %v2327
      %v2477 = vpop.permute.xlu0 %2476
      %2480 = vset.pattern.permute.xlu0 0
      %2481 = vperm.xlu0 %2480, %v2328
      %v2482 = vpop.permute.xlu0 %2481
      %2485 = vset.pattern.permute.xlu0 0
      %2486 = vperm.xlu0 %2485, %v2329
      %v2487 = vpop.permute.xlu0 %2486
      %2490 = vset.pattern.permute.xlu0 0
      %2491 = vperm.xlu0 %2490, %v2330
      %v2492 = vpop.permute.xlu0 %2491
      %2495 = vset.pattern.permute.xlu0 0
      %2496 = vperm.xlu0 %2495, %v2331
      %v2497 = vpop.permute.xlu0 %2496
      %2500 = vset.pattern.permute.xlu0 0
      %2501 = vperm.xlu0 %2500, %v2332
      %v2502 = vpop.permute.xlu0 %2501
      %2505 = vset.pattern.permute.xlu0 0
      %2506 = vperm.xlu0 %2505, %v2333
      %v2507 = vpop.permute.xlu0 %2506
      %2510 = vset.pattern.permute.xlu0 0
      %2511 = vperm.xlu0 %2510, %v2334
      %v2512 = vpop.permute.xlu0 %2511
      %2515 = vset.pattern.permute.xlu0 0
      %2516 = vperm.xlu0 %2515, %v2335
      %v2517 = vpop.permute.xlu0 %2516
      %2520 = vset.pattern.permute.xlu0 0
      %2521 = vperm.xlu0 %2520, %v2336
      %v2522 = vpop.permute.xlu0 %2521
      %2525 = vset.pattern.permute.xlu0 0
      %2526 = vperm.xlu0 %2525, %v2337
      %v2527 = vpop.permute.xlu0 %2526
      %2530 = vset.pattern.permute.xlu0 0
      %2531 = vperm.xlu0 %2530, %v2338
      %v2532 = vpop.permute.xlu0 %2531
      %2535 = vset.pattern.permute.xlu0 0
      %2536 = vperm.xlu0 %2535, %v2339
      %v2537 = vpop.permute.xlu0 %2536
      %2540 = vset.pattern.permute.xlu0 0
      %2541 = vperm.xlu0 %2540, %v2340
      %v2542 = vpop.permute.xlu0 %2541
      %2545 = vset.pattern.permute.xlu0 0
      %2546 = vperm.xlu0 %2545, %v2341
      %v2547 = vpop.permute.xlu0 %2546
      %2550 = vset.pattern.permute.xlu0 0
      %2551 = vperm.xlu0 %2550, %v2342
      %v2552 = vpop.permute.xlu0 %2551
      %2555 = vset.pattern.permute.xlu0 0
      %2556 = vperm.xlu0 %2555, %v2343
      %v2557 = vpop.permute.xlu0 %2556
      %2560 = vset.pattern.permute.xlu0 0
      %2561 = vperm.xlu0 %2560, %v2344
      %v2562 = vpop.permute.xlu0 %2561
      %2565 = vset.pattern.permute.xlu0 0
      %2566 = vperm.xlu0 %2565, %v2345
      %v2567 = vpop.permute.xlu0 %2566
      %2570 = vset.pattern.permute.xlu0 0
      %2571 = vperm.xlu0 %2570, %v2346
      %v2572 = vpop.permute.xlu0 %2571
      %2575 = vset.pattern.permute.xlu0 0
      %2576 = vperm.xlu0 %2575, %v2347
      %v2577 = vpop.permute.xlu0 %2576
      %2580 = vset.pattern.permute.xlu0 0
      %2581 = vperm.xlu0 %2580, %v2348
      %v2582 = vpop.permute.xlu0 %2581
      %2585 = vset.pattern.permute.xlu0 0
      %2586 = vperm.xlu0 %2585, %v2349
      %v2587 = vpop.permute.xlu0 %2586
      %2590 = vset.pattern.permute.xlu0 0
      %2591 = vperm.xlu0 %2590, %v2350
      %v2592 = vpop.permute.xlu0 %2591
      %2595 = vset.pattern.permute.xlu0 0
      %2596 = vperm.xlu0 %2595, %v2351
      %v2597 = vpop.permute.xlu0 %2596
      %2600 = vset.pattern.permute.xlu0 0
      %2601 = vperm.xlu0 %2600, %v2352
      %v2602 = vpop.permute.xlu0 %2601
      %2605 = vset.pattern.permute.xlu0 0
      %2606 = vperm.xlu0 %2605, %v2353
      %v2607 = vpop.permute.xlu0 %2606
      %2610 = vset.pattern.permute.xlu0 0
      %2611 = vperm.xlu0 %2610, %v2354
      %v2612 = vpop.permute.xlu0 %2611
      %2615 = vset.pattern.permute.xlu0 0
      %2616 = vperm.xlu0 %2615, %v2355
      %v2617 = vpop.permute.xlu0 %2616
      %2620 = vset.pattern.permute.xlu0 0
      %2621 = vperm.xlu0 %2620, %v2356
      %v2622 = vpop.permute.xlu0 %2621
      %2625 = vset.pattern.permute.xlu0 0
      %2626 = vperm.xlu0 %2625, %v2357
      %v2627 = vpop.permute.xlu0 %2626
      %2630 = vset.pattern.permute.xlu0 0
      %2631 = vperm.xlu0 %2630, %v2358
      %v2632 = vpop.permute.xlu0 %2631
      %2635 = vset.pattern.permute.xlu0 0
      %2636 = vperm.xlu0 %2635, %v2359
      %v2637 = vpop.permute.xlu0 %2636
      %2640 = vset.pattern.permute.xlu0 0
      %2641 = vperm.xlu0 %2640, %v2360
      %v2642 = vpop.permute.xlu0 %2641
      %2645 = vset.pattern.permute.xlu0 0
      %2646 = vperm.xlu0 %2645, %v2361
      %v2647 = vpop.permute.xlu0 %2646
      %2650 = vset.pattern.permute.xlu0 0
      %2651 = vperm.xlu0 %2650, %v2362
      %v2652 = vpop.permute.xlu0 %2651
      %2655 = vset.pattern.permute.xlu0 0
      %2656 = vperm.xlu0 %2655, %v2363
      %v2657 = vpop.permute.xlu0 %2656
      %2660 = vset.pattern.permute.xlu0 0
      %2661 = vperm.xlu0 %2660, %v2364
      %v2662 = vpop.permute.xlu0 %2661
      %2665 = vset.pattern.permute.xlu0 0
      %2666 = vperm.xlu0 %2665, %v2365
      %v2667 = vpop.permute.xlu0 %2666
      %2670 = vset.pattern.permute.xlu0 0
      %2671 = vperm.xlu0 %2670, %v2366
      %v2672 = vpop.permute.xlu0 %2671
      %2675 = vset.pattern.permute.xlu0 0
      %2676 = vperm.xlu0 %2675, %v2367
      %v2677 = vpop.permute.xlu0 %2676
      %2680 = vset.pattern.permute.xlu0 0
      %2681 = vperm.xlu0 %2680, %v2368
      %v2682 = vpop.permute.xlu0 %2681
      %2685 = vset.pattern.permute.xlu0 0
      %2686 = vperm.xlu0 %2685, %v2369
      %v2687 = vpop.permute.xlu0 %2686
      %2690 = vset.pattern.permute.xlu0 0
      %2691 = vperm.xlu0 %2690, %v2370
      %v2692 = vpop.permute.xlu0 %2691
      %2695 = vset.pattern.permute.xlu0 0
      %2696 = vperm.xlu0 %2695, %v2371
      %v2697 = vpop.permute.xlu0 %2696
      %2700 = vset.pattern.permute.xlu0 0
      %2701 = vperm.xlu0 %2700, %v2372
      %v2702 = vpop.permute.xlu0 %2701
      %2705 = vset.pattern.permute.xlu0 0
      %2706 = vperm.xlu0 %2705, %v2373
      %v2707 = vpop.permute.xlu0 %2706
      %2710 = vset.pattern.permute.xlu0 0
      %2711 = vperm.xlu0 %2710, %v2374
      %v2712 = vpop.permute.xlu0 %2711
      %2715 = vset.pattern.permute.xlu0 0
      %2716 = vperm.xlu0 %2715, %v2375
      %v2717 = vpop.permute.xlu0 %2716
      %2720 = vset.pattern.permute.xlu0 0
      %2721 = vperm.xlu0 %2720, %v2376
      %v2722 = vpop.permute.xlu0 %2721
      %2725 = vset.pattern.permute.xlu0 0
      %2726 = vperm.xlu0 %2725, %v2377
      %v2727 = vpop.permute.xlu0 %2726
      %2730 = vset.pattern.permute.xlu0 0
      %2731 = vperm.xlu0 %2730, %v2378
      %v2732 = vpop.permute.xlu0 %2731
      %2735 = vset.pattern.permute.xlu0 0
      %2736 = vperm.xlu0 %2735, %v2379
      %v2737 = vpop.permute.xlu0 %2736
      %2740 = vset.pattern.permute.xlu0 0
      %2741 = vperm.xlu0 %2740, %v2380
      %v2742 = vpop.permute.xlu0 %2741
      %2745 = vset.pattern.permute.xlu0 0
      %2746 = vperm.xlu0 %2745, %v2381
      %v2747 = vpop.permute.xlu0 %2746
      %2750 = vset.pattern.permute.xlu0 0
      %2751 = vperm.xlu0 %2750, %v2382
      %v2752 = vpop.permute.xlu0 %2751
      %2755 = vset.pattern.permute.xlu0 0
      %2756 = vperm.xlu0 %2755, %v2383
      %v2757 = vpop.permute.xlu0 %2756
      %2760 = vset.pattern.permute.xlu0 0
      %2761 = vperm.xlu0 %2760, %v2384
      %v2762 = vpop.permute.xlu0 %2761
      %2765 = vset.pattern.permute.xlu0 0
      %2766 = vperm.xlu0 %2765, %v2385
      %v2767 = vpop.permute.xlu0 %2766
      %2770 = vset.pattern.permute.xlu0 0
      %2771 = vperm.xlu0 %2770, %v2386
      %v2772 = vpop.permute.xlu0 %2771
      %2775 = vset.pattern.permute.xlu0 0
      %2776 = vperm.xlu0 %2775, %v2387
      %v2777 = vpop.permute.xlu0 %2776
      %2780 = vset.pattern.permute.xlu0 0
      %2781 = vperm.xlu0 %2780, %v2388
      %v2782 = vpop.permute.xlu0 %2781
      %2785 = vset.pattern.permute.xlu0 0
      %2786 = vperm.xlu0 %2785, %v2389
      %v2787 = vpop.permute.xlu0 %2786
      %2790 = vset.pattern.permute.xlu0 0
      %2791 = vperm.xlu0 %2790, %v2390
      %v2792 = vpop.permute.xlu0 %2791
      %2795 = vset.pattern.permute.xlu0 0
      %2796 = vperm.xlu0 %2795, %v2391
      %v2797 = vpop.permute.xlu0 %2796
      %2800 = vset.pattern.permute.xlu0 0
      %2801 = vperm.xlu0 %2800, %v2392
      %v2802 = vpop.permute.xlu0 %2801
      %2805 = vset.pattern.permute.xlu0 0
      %2806 = vperm.xlu0 %2805, %v2393
      %v2807 = vpop.permute.xlu0 %2806
      %2810 = vset.pattern.permute.xlu0 0
      %2811 = vperm.xlu0 %2810, %v2394
      %v2812 = vpop.permute.xlu0 %2811
      %2815 = vset.pattern.permute.xlu0 0
      %2816 = vperm.xlu0 %2815, %v2395
      %v2817 = vpop.permute.xlu0 %2816
      %2820 = vset.pattern.permute.xlu0 0
      %2821 = vperm.xlu0 %2820, %v2396
      %v2822 = vpop.permute.xlu0 %2821
      %2825 = vset.pattern.permute.xlu0 0
      %2826 = vperm.xlu0 %2825, %v2397
      %v2827 = vpop.permute.xlu0 %2826
      %2830 = vset.pattern.permute.xlu0 0
      %2831 = vperm.xlu0 %2830, %v2398
      %v2832 = vpop.permute.xlu0 %2831
      %2835 = vset.pattern.permute.xlu0 0
      %2836 = vperm.xlu0 %2835, %v2399
      %v2837 = vpop.permute.xlu0 %2836
      %2840 = vset.pattern.permute.xlu0 0
      %2841 = vperm.xlu0 %2840, %v2400
      %v2842 = vpop.permute.xlu0 %2841
      %2845 = vset.pattern.permute.xlu0 0
      %2846 = vperm.xlu0 %2845, %v2401
      %v2847 = vpop.permute.xlu0 %2846
      %2850 = vset.pattern.permute.xlu0 0
      %2851 = vperm.xlu0 %2850, %v2402
      %v2852 = vpop.permute.xlu0 %2851
      %2855 = vset.pattern.permute.xlu0 0
      %2856 = vperm.xlu0 %2855, %v2403
      %v2857 = vpop.permute.xlu0 %2856
      %2860 = vset.pattern.permute.xlu0 0
      %2861 = vperm.xlu0 %2860, %v2404
      %v2862 = vpop.permute.xlu0 %2861
      %2865 = vset.pattern.permute.xlu0 0
      %2866 = vperm.xlu0 %2865, %v2405
      %v2867 = vpop.permute.xlu0 %2866
      %2870 = vset.pattern.permute.xlu0 0
      %2871 = vperm.xlu0 %2870, %v2406
      %v2872 = vpop.permute.xlu0 %2871
      %2875 = vset.pattern.permute.xlu0 0
      %2876 = vperm.xlu0 %2875, %v2407
      %v2877 = vpop.permute.xlu0 %2876
      %2880 = vset.pattern.permute.xlu0 0
      %2881 = vperm.xlu0 %2880, %v2408
      %v2882 = vpop.permute.xlu0 %2881
      %2885 = vset.pattern.permute.xlu0 0
      %2886 = vperm.xlu0 %2885, %v2409
      %v2887 = vpop.permute.xlu0 %2886
      %2890 = vset.pattern.permute.xlu0 0
      %2891 = vperm.xlu0 %2890, %v2410
      %v2892 = vpop.permute.xlu0 %2891
      %2895 = vset.pattern.permute.xlu0 0
      %2896 = vperm.xlu0 %2895, %v2411
      %v2897 = vpop.permute.xlu0 %2896
      %2900 = vset.pattern.permute.xlu0 0
      %2901 = vperm.xlu0 %2900, %v2412
      %v2902 = vpop.permute.xlu0 %2901
      %2905 = vset.pattern.permute.xlu0 0
      %2906 = vperm.xlu0 %2905, %v2413
      %v2907 = vpop.permute.xlu0 %2906
      %2910 = vset.pattern.permute.xlu0 0
      %2911 = vperm.xlu0 %2910, %v2414
      %v2912 = vpop.permute.xlu0 %2911
      %2915 = vset.pattern.permute.xlu0 0
      %2916 = vperm.xlu0 %2915, %v2415
      %v2917 = vpop.permute.xlu0 %2916
      %2920 = vset.pattern.permute.xlu0 0
      %2921 = vperm.xlu0 %2920, %v2416
      %v2922 = vpop.permute.xlu0 %2921
      %2925 = vset.pattern.permute.xlu0 0
      %2926 = vperm.xlu0 %2925, %v2417
      %v2927 = vpop.permute.xlu0 %2926
      %2930 = vset.pattern.permute.xlu0 0
      %2931 = vperm.xlu0 %2930, %v2418
      %v2932 = vpop.permute.xlu0 %2931
      %2935 = vset.pattern.permute.xlu0 0
      %2936 = vperm.xlu0 %2935, %v2419
      %v2937 = vpop.permute.xlu0 %2936
      %2940 = vset.pattern.permute.xlu0 0
      %2941 = vperm.xlu0 %2940, %v2420
      %v2942 = vpop.permute.xlu0 %2941
      %v2944 = vlaneseq
      %v2945 = vshrl.u32 %v2944, 7
      %v2946 = vsub.s32 0, %v2945
      %v2947 = vrot.slane %v2423, %v2946
      %v2948 = vmul.f32 %v2427, %v2947
      %v2949 = vmul.f32 %v2432, %v2947
      %v2950 = vmul.f32 %v2437, %v2947
      %v2951 = vmul.f32 %v2442, %v2947
      %v2952 = vmul.f32 %v2447, %v2947
      %v2953 = vmul.f32 %v2452, %v2947
      %v2954 = vmul.f32 %v2457, %v2947
      %v2955 = vmul.f32 %v2462, %v2947
      %v2956 = vmul.f32 %v2467, %v2947
      %v2957 = vmul.f32 %v2472, %v2947
      %v2958 = vmul.f32 %v2477, %v2947
      %v2959 = vmul.f32 %v2482, %v2947
      %v2960 = vmul.f32 %v2487, %v2947
      %v2961 = vmul.f32 %v2492, %v2947
      %v2962 = vmul.f32 %v2497, %v2947
      %v2963 = vmul.f32 %v2502, %v2947
      %v2964 = vmul.f32 %v2507, %v2947
      %v2965 = vmul.f32 %v2512, %v2947
      %v2966 = vmul.f32 %v2517, %v2947
      %v2967 = vmul.f32 %v2522, %v2947
      %v2968 = vmul.f32 %v2527, %v2947
      %v2969 = vmul.f32 %v2532, %v2947
      %v2970 = vmul.f32 %v2537, %v2947
      %v2971 = vmul.f32 %v2542, %v2947
      %v2972 = vmul.f32 %v2547, %v2947
      %v2973 = vmul.f32 %v2552, %v2947
      %v2974 = vmul.f32 %v2557, %v2947
      %v2975 = vmul.f32 %v2562, %v2947
      %v2976 = vmul.f32 %v2567, %v2947
      %v2977 = vmul.f32 %v2572, %v2947
      %v2978 = vmul.f32 %v2577, %v2947
      %v2979 = vmul.f32 %v2582, %v2947
      %v2980 = vmul.f32 %v2587, %v2947
      %v2981 = vmul.f32 %v2592, %v2947
      %v2982 = vmul.f32 %v2597, %v2947
      %v2983 = vmul.f32 %v2602, %v2947
      %v2984 = vmul.f32 %v2607, %v2947
      %v2985 = vmul.f32 %v2612, %v2947
      %v2986 = vmul.f32 %v2617, %v2947
      %v2987 = vmul.f32 %v2622, %v2947
      %v2988 = vmul.f32 %v2627, %v2947
      %v2989 = vmul.f32 %v2632, %v2947
      %v2990 = vmul.f32 %v2637, %v2947
      %v2991 = vmul.f32 %v2642, %v2947
      %v2992 = vmul.f32 %v2647, %v2947
      %v2993 = vmul.f32 %v2652, %v2947
      %v2994 = vmul.f32 %v2657, %v2947
      %v2995 = vmul.f32 %v2662, %v2947
      %v2996 = vmul.f32 %v2667, %v2947
      %v2997 = vmul.f32 %v2672, %v2947
      %v2998 = vmul.f32 %v2677, %v2947
      %v2999 = vmul.f32 %v2682, %v2947
      %v3000 = vmul.f32 %v2687, %v2947
      %v3001 = vmul.f32 %v2692, %v2947
      %v3002 = vmul.f32 %v2697, %v2947
      %v3003 = vmul.f32 %v2702, %v2947
      %v3004 = vmul.f32 %v2707, %v2947
      %v3005 = vmul.f32 %v2712, %v2947
      %v3006 = vmul.f32 %v2717, %v2947
      %v3007 = vmul.f32 %v2722, %v2947
      %v3008 = vmul.f32 %v2727, %v2947
      %v3009 = vmul.f32 %v2732, %v2947
      %v3010 = vmul.f32 %v2737, %v2947
      %v3011 = vmul.f32 %v2742, %v2947
      %v3012 = vmul.f32 %v2747, %v2947
      %v3013 = vmul.f32 %v2752, %v2947
      %v3014 = vmul.f32 %v2757, %v2947
      %v3015 = vmul.f32 %v2762, %v2947
      %v3016 = vmul.f32 %v2767, %v2947
      %v3017 = vmul.f32 %v2772, %v2947
      %v3018 = vmul.f32 %v2777, %v2947
      %v3019 = vmul.f32 %v2782, %v2947
      %v3020 = vmul.f32 %v2787, %v2947
      %v3021 = vmul.f32 %v2792, %v2947
      %v3022 = vmul.f32 %v2797, %v2947
      %v3023 = vmul.f32 %v2802, %v2947
      %v3024 = vmul.f32 %v2807, %v2947
      %v3025 = vmul.f32 %v2812, %v2947
      %v3026 = vmul.f32 %v2817, %v2947
      %v3027 = vmul.f32 %v2822, %v2947
      %v3028 = vmul.f32 %v2827, %v2947
      %v3029 = vmul.f32 %v2832, %v2947
      %v3030 = vmul.f32 %v2837, %v2947
      %v3031 = vmul.f32 %v2842, %v2947
      %v3032 = vmul.f32 %v2847, %v2947
      %v3033 = vmul.f32 %v2852, %v2947
      %v3034 = vmul.f32 %v2857, %v2947
      %v3035 = vmul.f32 %v2862, %v2947
      %v3036 = vmul.f32 %v2867, %v2947
      %v3037 = vmul.f32 %v2872, %v2947
      %v3038 = vmul.f32 %v2877, %v2947
      %v3039 = vmul.f32 %v2882, %v2947
      %v3040 = vmul.f32 %v2887, %v2947
      %v3041 = vmul.f32 %v2892, %v2947
      %v3042 = vmul.f32 %v2897, %v2947
      %v3043 = vmul.f32 %v2902, %v2947
      %v3044 = vmul.f32 %v2907, %v2947
      %v3045 = vmul.f32 %v2912, %v2947
      %v3046 = vmul.f32 %v2917, %v2947
      %v3047 = vmul.f32 %v2922, %v2947
      %v3048 = vmul.f32 %v2927, %v2947
      %v3049 = vmul.f32 %v2932, %v2947
      %v3050 = vmul.f32 %v2937, %v2947
      %v3051 = vmul.f32 %v2942, %v2947
      %v3052 = vadd.f32 %v2057, %v2948
      %v3053 = vadd.f32 %v2058, %v2949
      %v3054 = vadd.f32 %v2059, %v2950
      %v3055 = vadd.f32 %v2060, %v2951
      %v3056 = vadd.f32 %v2061, %v2952
      %v3057 = vadd.f32 %v2062, %v2953
      %v3058 = vadd.f32 %v2063, %v2954
      %v3059 = vadd.f32 %v2064, %v2955
      %v3060 = vadd.f32 %v2065, %v2956
      %v3061 = vadd.f32 %v2066, %v2957
      %v3062 = vadd.f32 %v2067, %v2958
      %v3063 = vadd.f32 %v2068, %v2959
      %v3064 = vadd.f32 %v2069, %v2960
      %v3065 = vadd.f32 %v2070, %v2961
      %v3066 = vadd.f32 %v2071, %v2962
      %v3067 = vadd.f32 %v2072, %v2963
      %v3068 = vadd.f32 %v2073, %v2964
      %v3069 = vadd.f32 %v2074, %v2965
      %v3070 = vadd.f32 %v2075, %v2966
      %v3071 = vadd.f32 %v2076, %v2967
      %v3072 = vadd.f32 %v2077, %v2968
      %v3073 = vadd.f32 %v2078, %v2969
      %v3074 = vadd.f32 %v2079, %v2970
      %v3075 = vadd.f32 %v2080, %v2971
      %v3076 = vadd.f32 %v2081, %v2972
      %v3077 = vadd.f32 %v2082, %v2973
      %v3078 = vadd.f32 %v2083, %v2974
      %v3079 = vadd.f32 %v2084, %v2975
      %v3080 = vadd.f32 %v2085, %v2976
      %v3081 = vadd.f32 %v2086, %v2977
      %v3082 = vadd.f32 %v2087, %v2978
      %v3083 = vadd.f32 %v2088, %v2979
      %v3084 = vadd.f32 %v2089, %v2980
      %v3085 = vadd.f32 %v2090, %v2981
      %v3086 = vadd.f32 %v2091, %v2982
      %v3087 = vadd.f32 %v2092, %v2983
      %v3088 = vadd.f32 %v2093, %v2984
      %v3089 = vadd.f32 %v2094, %v2985
      %v3090 = vadd.f32 %v2095, %v2986
      %v3091 = vadd.f32 %v2096, %v2987
      %v3092 = vadd.f32 %v2097, %v2988
      %v3093 = vadd.f32 %v2098, %v2989
      %v3094 = vadd.f32 %v2099, %v2990
      %v3095 = vadd.f32 %v2100, %v2991
      %v3096 = vadd.f32 %v2101, %v2992
      %v3097 = vadd.f32 %v2102, %v2993
      %v3098 = vadd.f32 %v2103, %v2994
      %v3099 = vadd.f32 %v2104, %v2995
      %v3100 = vadd.f32 %v2105, %v2996
      %v3101 = vadd.f32 %v2106, %v2997
      %v3102 = vadd.f32 %v2107, %v2998
      %v3103 = vadd.f32 %v2108, %v2999
      %v3104 = vadd.f32 %v2109, %v3000
      %v3105 = vadd.f32 %v2110, %v3001
      %v3106 = vadd.f32 %v2111, %v3002
      %v3107 = vadd.f32 %v2112, %v3003
      %v3108 = vadd.f32 %v2113, %v3004
      %v3109 = vadd.f32 %v2114, %v3005
      %v3110 = vadd.f32 %v2115, %v3006
      %v3111 = vadd.f32 %v2116, %v3007
      %v3112 = vadd.f32 %v2117, %v3008
      %v3113 = vadd.f32 %v2118, %v3009
      %v3114 = vadd.f32 %v2119, %v3010
      %v3115 = vadd.f32 %v2120, %v3011
      %v3116 = vadd.f32 %v2121, %v3012
      %v3117 = vadd.f32 %v2122, %v3013
      %v3118 = vadd.f32 %v2123, %v3014
      %v3119 = vadd.f32 %v2124, %v3015
      %v3120 = vadd.f32 %v2125, %v3016
      %v3121 = vadd.f32 %v2126, %v3017
      %v3122 = vadd.f32 %v2127, %v3018
      %v3123 = vadd.f32 %v2128, %v3019
      %v3124 = vadd.f32 %v2129, %v3020
      %v3125 = vadd.f32 %v2130, %v3021
      %v3126 = vadd.f32 %v2131, %v3022
      %v3127 = vadd.f32 %v2132, %v3023
      %v3128 = vadd.f32 %v2133, %v3024
      %v3129 = vadd.f32 %v2134, %v3025
      %v3130 = vadd.f32 %v2135, %v3026
      %v3131 = vadd.f32 %v2136, %v3027
      %v3132 = vadd.f32 %v2137, %v3028
      %v3133 = vadd.f32 %v2138, %v3029
      %v3134 = vadd.f32 %v2139, %v3030
      %v3135 = vadd.f32 %v2140, %v3031
      %v3136 = vadd.f32 %v2141, %v3032
      %v3137 = vadd.f32 %v2142, %v3033
      %v3138 = vadd.f32 %v2143, %v3034
      %v3139 = vadd.f32 %v2144, %v3035
      %v3140 = vadd.f32 %v2145, %v3036
      %v3141 = vadd.f32 %v2146, %v3037
      %v3142 = vadd.f32 %v2147, %v3038
      %v3143 = vadd.f32 %v2148, %v3039
      %v3144 = vadd.f32 %v2149, %v3040
      %v3145 = vadd.f32 %v2150, %v3041
      %v3146 = vadd.f32 %v2151, %v3042
      %v3147 = vadd.f32 %v2152, %v3043
      %v3148 = vadd.f32 %v2153, %v3044
      %v3149 = vadd.f32 %v2154, %v3045
      %v3150 = vadd.f32 %v2155, %v3046
      %v3151 = vadd.f32 %v2156, %v3047
      %v3152 = vadd.f32 %v2157, %v3048
      %v3153 = vadd.f32 %v2158, %v3049
      %v3154 = vadd.f32 %v2159, %v3050
      %v3155 = vadd.f32 %v2160, %v3051
      %s3156 = scalar_lea.vmem %s165, 40
      %v3157 = vld [vmem:[%s3156] sm:$0xff]
      %v3158 = vld [vmem:[%s3156 + $0x8] sm:$0xff]
      %v3159 = vld [vmem:[%s3156 + $0x10] sm:$0xff]
      %v3160 = vld [vmem:[%s3156 + $0x18] sm:$0xff]
      %v3161 = vld [vmem:[%s3156 + $0x28] sm:$0xff]
      %v3162 = vld [vmem:[%s3156 + $0x30] sm:$0xff]
      %v3163 = vld [vmem:[%s3156 + $0x38] sm:$0xff]
      %v3164 = vld [vmem:[%s3156 + $0x40] sm:$0xff]
      %v3165 = vld [vmem:[%s3156 + $0x50] sm:$0xff]
      %v3166 = vld [vmem:[%s3156 + $0x58] sm:$0xff]
      %v3167 = vld [vmem:[%s3156 + $0x60] sm:$0xff]
      %v3168 = vld [vmem:[%s3156 + $0x68] sm:$0xff]
      %v3169 = vld [vmem:[%s3156 + $0x78] sm:$0xff]
      %v3170 = vld [vmem:[%s3156 + $0x80] sm:$0xff]
      %v3171 = vld [vmem:[%s3156 + $0x88] sm:$0xff]
      %v3172 = vld [vmem:[%s3156 + $0x90] sm:$0xff]
      %v3173 = vld [vmem:[%s3156 + $0xa0] sm:$0xff]
      %v3174 = vld [vmem:[%s3156 + $0xa8] sm:$0xff]
      %v3175 = vld [vmem:[%s3156 + $0xb0] sm:$0xff]
      %v3176 = vld [vmem:[%s3156 + $0xb8] sm:$0xff]
      %v3177 = vld [vmem:[%s3156 + $0xc8] sm:$0xff]
      %v3178 = vld [vmem:[%s3156 + $0xd0] sm:$0xff]
      %v3179 = vld [vmem:[%s3156 + $0xd8] sm:$0xff]
      %v3180 = vld [vmem:[%s3156 + $0xe0] sm:$0xff]
      %v3181 = vld [vmem:[%s3156 + $0xf0] sm:$0xff]
      %v3182 = vld [vmem:[%s3156 + $0xf8] sm:$0xff]
      %v3183 = vld [vmem:[%s3156 + $0x100] sm:$0xff]
      %v3184 = vld [vmem:[%s3156 + $0x108] sm:$0xff]
      %v3185 = vld [vmem:[%s3156 + $0x118] sm:$0xff]
      %v3186 = vld [vmem:[%s3156 + $0x120] sm:$0xff]
      %v3187 = vld [vmem:[%s3156 + $0x128] sm:$0xff]
      %v3188 = vld [vmem:[%s3156 + $0x130] sm:$0xff]
      %v3189 = vld [vmem:[%s3156 + $0x140] sm:$0xff]
      %v3190 = vld [vmem:[%s3156 + $0x148] sm:$0xff]
      %v3191 = vld [vmem:[%s3156 + $0x150] sm:$0xff]
      %v3192 = vld [vmem:[%s3156 + $0x158] sm:$0xff]
      %v3193 = vld [vmem:[%s3156 + $0x168] sm:$0xff]
      %v3194 = vld [vmem:[%s3156 + $0x170] sm:$0xff]
      %v3195 = vld [vmem:[%s3156 + $0x178] sm:$0xff]
      %v3196 = vld [vmem:[%s3156 + $0x180] sm:$0xff]
      %v3197 = vld [vmem:[%s3156 + $0x190] sm:$0xff]
      %v3198 = vld [vmem:[%s3156 + $0x198] sm:$0xff]
      %v3199 = vld [vmem:[%s3156 + $0x1a0] sm:$0xff]
      %v3200 = vld [vmem:[%s3156 + $0x1a8] sm:$0xff]
      %v3201 = vld [vmem:[%s3156 + $0x1b8] sm:$0xff]
      %v3202 = vld [vmem:[%s3156 + $0x1c0] sm:$0xff]
      %v3203 = vld [vmem:[%s3156 + $0x1c8] sm:$0xff]
      %v3204 = vld [vmem:[%s3156 + $0x1d0] sm:$0xff]
      %v3205 = vld [vmem:[%s3156 + $0x1e0] sm:$0xff]
      %v3206 = vld [vmem:[%s3156 + $0x1e8] sm:$0xff]
      %v3207 = vld [vmem:[%s3156 + $0x1f0] sm:$0xff]
      %v3208 = vld [vmem:[%s3156 + $0x1f8] sm:$0xff]
      %v3209 = vld [vmem:[%s3156 + $0x208] sm:$0xff]
      %v3210 = vld [vmem:[%s3156 + $0x210] sm:$0xff]
      %v3211 = vld [vmem:[%s3156 + $0x218] sm:$0xff]
      %v3212 = vld [vmem:[%s3156 + $0x220] sm:$0xff]
      %v3213 = vld [vmem:[%s3156 + $0x230] sm:$0xff]
      %v3214 = vld [vmem:[%s3156 + $0x238] sm:$0xff]
      %v3215 = vld [vmem:[%s3156 + $0x240] sm:$0xff]
      %v3216 = vld [vmem:[%s3156 + $0x248] sm:$0xff]
      %v3217 = vld [vmem:[%s3156 + $0x258] sm:$0xff]
      %v3218 = vld [vmem:[%s3156 + $0x260] sm:$0xff]
      %v3219 = vld [vmem:[%s3156 + $0x268] sm:$0xff]
      %v3220 = vld [vmem:[%s3156 + $0x270] sm:$0xff]
      %v3221 = vld [vmem:[%s3156 + $0x280] sm:$0xff]
      %v3222 = vld [vmem:[%s3156 + $0x288] sm:$0xff]
      %v3223 = vld [vmem:[%s3156 + $0x290] sm:$0xff]
      %v3224 = vld [vmem:[%s3156 + $0x298] sm:$0xff]
      %v3225 = vld [vmem:[%s3156 + $0x2a8] sm:$0xff]
      %v3226 = vld [vmem:[%s3156 + $0x2b0] sm:$0xff]
      %v3227 = vld [vmem:[%s3156 + $0x2b8] sm:$0xff]
      %v3228 = vld [vmem:[%s3156 + $0x2c0] sm:$0xff]
      %v3229 = vld [vmem:[%s3156 + $0x2d0] sm:$0xff]
      %v3230 = vld [vmem:[%s3156 + $0x2d8] sm:$0xff]
      %v3231 = vld [vmem:[%s3156 + $0x2e0] sm:$0xff]
      %v3232 = vld [vmem:[%s3156 + $0x2e8] sm:$0xff]
      %v3233 = vld [vmem:[%s3156 + $0x2f8] sm:$0xff]
      %v3234 = vld [vmem:[%s3156 + $0x300] sm:$0xff]
      %v3235 = vld [vmem:[%s3156 + $0x308] sm:$0xff]
      %v3236 = vld [vmem:[%s3156 + $0x310] sm:$0xff]
      %v3237 = vld [vmem:[%s3156 + $0x320] sm:$0xff]
      %v3238 = vld [vmem:[%s3156 + $0x328] sm:$0xff]
      %v3239 = vld [vmem:[%s3156 + $0x330] sm:$0xff]
      %v3240 = vld [vmem:[%s3156 + $0x338] sm:$0xff]
      %v3241 = vld [vmem:[%s3156 + $0x348] sm:$0xff]
      %v3242 = vld [vmem:[%s3156 + $0x350] sm:$0xff]
      %v3243 = vld [vmem:[%s3156 + $0x358] sm:$0xff]
      %v3244 = vld [vmem:[%s3156 + $0x360] sm:$0xff]
      %v3245 = vld [vmem:[%s3156 + $0x370] sm:$0xff]
      %v3246 = vld [vmem:[%s3156 + $0x378] sm:$0xff]
      %v3247 = vld [vmem:[%s3156 + $0x380] sm:$0xff]
      %v3248 = vld [vmem:[%s3156 + $0x388] sm:$0xff]
      %v3249 = vld [vmem:[%s3156 + $0x398] sm:$0xff]
      %v3250 = vld [vmem:[%s3156 + $0x3a0] sm:$0xff]
      %v3251 = vld [vmem:[%s3156 + $0x3a8] sm:$0xff]
      %v3252 = vld [vmem:[%s3156 + $0x3b0] sm:$0xff]
      %v3253 = vld [vmem:[%s3156 + $0x3c0] sm:$0xff]
      %v3254 = vld [vmem:[%s3156 + $0x3c8] sm:$0xff]
      %v3255 = vld [vmem:[%s3156 + $0x3d0] sm:$0xff]
      %v3256 = vld [vmem:[%s3156 + $0x3d8] sm:$0xff]
      %v3257 = vld [vmem:[%s3156 + $0x3e8] sm:$0xff]
      %v3258 = vld [vmem:[%s3156 + $0x3f0] sm:$0xff]
      %v3259 = vld [vmem:[%s3156 + $0x3f8] sm:$0xff]
      %v3260 = vld [vmem:[%s3156 + $0x400] sm:$0xff]
      %v3261 = vpack.c.bf16 %v3158, %v3157
      %v3262 = vpack.c.bf16 %v3160, %v3159
      %v3263 = vpack.c.bf16 %v3162, %v3161
      %v3264 = vpack.c.bf16 %v3164, %v3163
      %v3265 = vpack.c.bf16 %v3166, %v3165
      %v3266 = vpack.c.bf16 %v3168, %v3167
      %v3267 = vpack.c.bf16 %v3170, %v3169
      %v3268 = vpack.c.bf16 %v3172, %v3171
      %v3269 = vpack.c.bf16 %v3174, %v3173
      %v3270 = vpack.c.bf16 %v3176, %v3175
      %v3271 = vpack.c.bf16 %v3178, %v3177
      %v3272 = vpack.c.bf16 %v3180, %v3179
      %v3273 = vpack.c.bf16 %v3182, %v3181
      %v3274 = vpack.c.bf16 %v3184, %v3183
      %v3275 = vpack.c.bf16 %v3186, %v3185
      %v3276 = vpack.c.bf16 %v3188, %v3187
      %v3277 = vpack.c.bf16 %v3190, %v3189
      %v3278 = vpack.c.bf16 %v3192, %v3191
      %v3279 = vpack.c.bf16 %v3194, %v3193
      %v3280 = vpack.c.bf16 %v3196, %v3195
      %v3281 = vpack.c.bf16 %v3198, %v3197
      %v3282 = vpack.c.bf16 %v3200, %v3199
      %v3283 = vpack.c.bf16 %v3202, %v3201
      %v3284 = vpack.c.bf16 %v3204, %v3203
      %v3285 = vpack.c.bf16 %v3206, %v3205
      %v3286 = vpack.c.bf16 %v3208, %v3207
      %v3287 = vpack.c.bf16 %v3210, %v3209
      %v3288 = vpack.c.bf16 %v3212, %v3211
      %v3289 = vpack.c.bf16 %v3214, %v3213
      %v3290 = vpack.c.bf16 %v3216, %v3215
      %v3291 = vpack.c.bf16 %v3218, %v3217
      %v3292 = vpack.c.bf16 %v3220, %v3219
      %v3293 = vpack.c.bf16 %v3222, %v3221
      %v3294 = vpack.c.bf16 %v3224, %v3223
      %v3295 = vpack.c.bf16 %v3226, %v3225
      %v3296 = vpack.c.bf16 %v3228, %v3227
      %v3297 = vpack.c.bf16 %v3230, %v3229
      %v3298 = vpack.c.bf16 %v3232, %v3231
      %v3299 = vpack.c.bf16 %v3234, %v3233
      %v3300 = vpack.c.bf16 %v3236, %v3235
      %v3301 = vpack.c.bf16 %v3238, %v3237
      %v3302 = vpack.c.bf16 %v3240, %v3239
      %v3303 = vpack.c.bf16 %v3242, %v3241
      %v3304 = vpack.c.bf16 %v3244, %v3243
      %v3305 = vpack.c.bf16 %v3246, %v3245
      %v3306 = vpack.c.bf16 %v3248, %v3247
      %v3307 = vpack.c.bf16 %v3250, %v3249
      %v3308 = vpack.c.bf16 %v3252, %v3251
      %v3309 = vpack.c.bf16 %v3254, %v3253
      %v3310 = vpack.c.bf16 %v3256, %v3255
      %v3311 = vpack.c.bf16 %v3258, %v3257
      %v3312 = vpack.c.bf16 %v3260, %v3259
      %v3313 = vunpack.c.l.bf16 %v3261
      %v3314 = vunpack.c.h.bf16 %v3261
      %v3315 = vunpack.c.l.bf16 %v3262
      %v3316 = vunpack.c.h.bf16 %v3262
      %v3317 = vunpack.c.l.bf16 %v3263
      %v3318 = vunpack.c.h.bf16 %v3263
      %v3319 = vunpack.c.l.bf16 %v3264
      %v3320 = vunpack.c.h.bf16 %v3264
      %v3321 = vunpack.c.l.bf16 %v3265
      %v3322 = vunpack.c.h.bf16 %v3265
      %v3323 = vunpack.c.l.bf16 %v3266
      %v3324 = vunpack.c.h.bf16 %v3266
      %v3325 = vunpack.c.l.bf16 %v3267
      %v3326 = vunpack.c.h.bf16 %v3267
      %v3327 = vunpack.c.l.bf16 %v3268
      %v3328 = vunpack.c.h.bf16 %v3268
      %v3329 = vunpack.c.l.bf16 %v3269
      %v3330 = vunpack.c.h.bf16 %v3269
      %v3331 = vunpack.c.l.bf16 %v3270
      %v3332 = vunpack.c.h.bf16 %v3270
      %v3333 = vunpack.c.l.bf16 %v3271
      %v3334 = vunpack.c.h.bf16 %v3271
      %v3335 = vunpack.c.l.bf16 %v3272
      %v3336 = vunpack.c.h.bf16 %v3272
      %v3337 = vunpack.c.l.bf16 %v3273
      %v3338 = vunpack.c.h.bf16 %v3273
      %v3339 = vunpack.c.l.bf16 %v3274
      %v3340 = vunpack.c.h.bf16 %v3274
      %v3341 = vunpack.c.l.bf16 %v3275
      %v3342 = vunpack.c.h.bf16 %v3275
      %v3343 = vunpack.c.l.bf16 %v3276
      %v3344 = vunpack.c.h.bf16 %v3276
      %v3345 = vunpack.c.l.bf16 %v3277
      %v3346 = vunpack.c.h.bf16 %v3277
      %v3347 = vunpack.c.l.bf16 %v3278
      %v3348 = vunpack.c.h.bf16 %v3278
      %v3349 = vunpack.c.l.bf16 %v3279
      %v3350 = vunpack.c.h.bf16 %v3279
      %v3351 = vunpack.c.l.bf16 %v3280
      %v3352 = vunpack.c.h.bf16 %v3280
      %v3353 = vunpack.c.l.bf16 %v3281
      %v3354 = vunpack.c.h.bf16 %v3281
      %v3355 = vunpack.c.l.bf16 %v3282
      %v3356 = vunpack.c.h.bf16 %v3282
      %v3357 = vunpack.c.l.bf16 %v3283
      %v3358 = vunpack.c.h.bf16 %v3283
      %v3359 = vunpack.c.l.bf16 %v3284
      %v3360 = vunpack.c.h.bf16 %v3284
      %v3361 = vunpack.c.l.bf16 %v3285
      %v3362 = vunpack.c.h.bf16 %v3285
      %v3363 = vunpack.c.l.bf16 %v3286
      %v3364 = vunpack.c.h.bf16 %v3286
      %v3365 = vunpack.c.l.bf16 %v3287
      %v3366 = vunpack.c.h.bf16 %v3287
      %v3367 = vunpack.c.l.bf16 %v3288
      %v3368 = vunpack.c.h.bf16 %v3288
      %v3369 = vunpack.c.l.bf16 %v3289
      %v3370 = vunpack.c.h.bf16 %v3289
      %v3371 = vunpack.c.l.bf16 %v3290
      %v3372 = vunpack.c.h.bf16 %v3290
      %v3373 = vunpack.c.l.bf16 %v3291
      %v3374 = vunpack.c.h.bf16 %v3291
      %v3375 = vunpack.c.l.bf16 %v3292
      %v3376 = vunpack.c.h.bf16 %v3292
      %v3377 = vunpack.c.l.bf16 %v3293
      %v3378 = vunpack.c.h.bf16 %v3293
      %v3379 = vunpack.c.l.bf16 %v3294
      %v3380 = vunpack.c.h.bf16 %v3294
      %v3381 = vunpack.c.l.bf16 %v3295
      %v3382 = vunpack.c.h.bf16 %v3295
      %v3383 = vunpack.c.l.bf16 %v3296
      %v3384 = vunpack.c.h.bf16 %v3296
      %v3385 = vunpack.c.l.bf16 %v3297
      %v3386 = vunpack.c.h.bf16 %v3297
      %v3387 = vunpack.c.l.bf16 %v3298
      %v3388 = vunpack.c.h.bf16 %v3298
      %v3389 = vunpack.c.l.bf16 %v3299
      %v3390 = vunpack.c.h.bf16 %v3299
      %v3391 = vunpack.c.l.bf16 %v3300
      %v3392 = vunpack.c.h.bf16 %v3300
      %v3393 = vunpack.c.l.bf16 %v3301
      %v3394 = vunpack.c.h.bf16 %v3301
      %v3395 = vunpack.c.l.bf16 %v3302
      %v3396 = vunpack.c.h.bf16 %v3302
      %v3397 = vunpack.c.l.bf16 %v3303
      %v3398 = vunpack.c.h.bf16 %v3303
      %v3399 = vunpack.c.l.bf16 %v3304
      %v3400 = vunpack.c.h.bf16 %v3304
      %v3401 = vunpack.c.l.bf16 %v3305
      %v3402 = vunpack.c.h.bf16 %v3305
      %v3403 = vunpack.c.l.bf16 %v3306
      %v3404 = vunpack.c.h.bf16 %v3306
      %v3405 = vunpack.c.l.bf16 %v3307
      %v3406 = vunpack.c.h.bf16 %v3307
      %v3407 = vunpack.c.l.bf16 %v3308
      %v3408 = vunpack.c.h.bf16 %v3308
      %v3409 = vunpack.c.l.bf16 %v3309
      %v3410 = vunpack.c.h.bf16 %v3309
      %v3411 = vunpack.c.l.bf16 %v3310
      %v3412 = vunpack.c.h.bf16 %v3310
      %v3413 = vunpack.c.l.bf16 %v3311
      %v3414 = vunpack.c.h.bf16 %v3311
      %v3415 = vunpack.c.l.bf16 %v3312
      %v3416 = vunpack.c.h.bf16 %v3312
      %v3417 = vld [vmem:[%s1 + $0x3] sm:$0x1]
      %v3418 = vpack.c.bf16 %v3417, %v3417
      %v3419 = vunpack.c.l.bf16 %v3418
      %3421 = vset.pattern.permute.xlu0 0
      %3422 = vperm.xlu0 %3421, %v3313
      %v3423 = vpop.permute.xlu0 %3422
      %3426 = vset.pattern.permute.xlu0 0
      %3427 = vperm.xlu0 %3426, %v3314
      %v3428 = vpop.permute.xlu0 %3427
      %3431 = vset.pattern.permute.xlu0 0
      %3432 = vperm.xlu0 %3431, %v3315
      %v3433 = vpop.permute.xlu0 %3432
      %3436 = vset.pattern.permute.xlu0 0
      %3437 = vperm.xlu0 %3436, %v3316
      %v3438 = vpop.permute.xlu0 %3437
      %3441 = vset.pattern.permute.xlu0 0
      %3442 = vperm.xlu0 %3441, %v3317
      %v3443 = vpop.permute.xlu0 %3442
      %3446 = vset.pattern.permute.xlu0 0
      %3447 = vperm.xlu0 %3446, %v3318
      %v3448 = vpop.permute.xlu0 %3447
      %3451 = vset.pattern.permute.xlu0 0
      %3452 = vperm.xlu0 %3451, %v3319
      %v3453 = vpop.permute.xlu0 %3452
      %3456 = vset.pattern.permute.xlu0 0
      %3457 = vperm.xlu0 %3456, %v3320
      %v3458 = vpop.permute.xlu0 %3457
      %3461 = vset.pattern.permute.xlu0 0
      %3462 = vperm.xlu0 %3461, %v3321
      %v3463 = vpop.permute.xlu0 %3462
      %3466 = vset.pattern.permute.xlu0 0
      %3467 = vperm.xlu0 %3466, %v3322
      %v3468 = vpop.permute.xlu0 %3467
      %3471 = vset.pattern.permute.xlu0 0
      %3472 = vperm.xlu0 %3471, %v3323
      %v3473 = vpop.permute.xlu0 %3472
      %3476 = vset.pattern.permute.xlu0 0
      %3477 = vperm.xlu0 %3476, %v3324
      %v3478 = vpop.permute.xlu0 %3477
      %3481 = vset.pattern.permute.xlu0 0
      %3482 = vperm.xlu0 %3481, %v3325
      %v3483 = vpop.permute.xlu0 %3482
      %3486 = vset.pattern.permute.xlu0 0
      %3487 = vperm.xlu0 %3486, %v3326
      %v3488 = vpop.permute.xlu0 %3487
      %3491 = vset.pattern.permute.xlu0 0
      %3492 = vperm.xlu0 %3491, %v3327
      %v3493 = vpop.permute.xlu0 %3492
      %3496 = vset.pattern.permute.xlu0 0
      %3497 = vperm.xlu0 %3496, %v3328
      %v3498 = vpop.permute.xlu0 %3497
      %3501 = vset.pattern.permute.xlu0 0
      %3502 = vperm.xlu0 %3501, %v3329
      %v3503 = vpop.permute.xlu0 %3502
      %3506 = vset.pattern.permute.xlu0 0
      %3507 = vperm.xlu0 %3506, %v3330
      %v3508 = vpop.permute.xlu0 %3507
      %3511 = vset.pattern.permute.xlu0 0
      %3512 = vperm.xlu0 %3511, %v3331
      %v3513 = vpop.permute.xlu0 %3512
      %3516 = vset.pattern.permute.xlu0 0
      %3517 = vperm.xlu0 %3516, %v3332
      %v3518 = vpop.permute.xlu0 %3517
      %3521 = vset.pattern.permute.xlu0 0
      %3522 = vperm.xlu0 %3521, %v3333
      %v3523 = vpop.permute.xlu0 %3522
      %3526 = vset.pattern.permute.xlu0 0
      %3527 = vperm.xlu0 %3526, %v3334
      %v3528 = vpop.permute.xlu0 %3527
      %3531 = vset.pattern.permute.xlu0 0
      %3532 = vperm.xlu0 %3531, %v3335
      %v3533 = vpop.permute.xlu0 %3532
      %3536 = vset.pattern.permute.xlu0 0
      %3537 = vperm.xlu0 %3536, %v3336
      %v3538 = vpop.permute.xlu0 %3537
      %3541 = vset.pattern.permute.xlu0 0
      %3542 = vperm.xlu0 %3541, %v3337
      %v3543 = vpop.permute.xlu0 %3542
      %3546 = vset.pattern.permute.xlu0 0
      %3547 = vperm.xlu0 %3546, %v3338
      %v3548 = vpop.permute.xlu0 %3547
      %3551 = vset.pattern.permute.xlu0 0
      %3552 = vperm.xlu0 %3551, %v3339
      %v3553 = vpop.permute.xlu0 %3552
      %3556 = vset.pattern.permute.xlu0 0
      %3557 = vperm.xlu0 %3556, %v3340
      %v3558 = vpop.permute.xlu0 %3557
      %3561 = vset.pattern.permute.xlu0 0
      %3562 = vperm.xlu0 %3561, %v3341
      %v3563 = vpop.permute.xlu0 %3562
      %3566 = vset.pattern.permute.xlu0 0
      %3567 = vperm.xlu0 %3566, %v3342
      %v3568 = vpop.permute.xlu0 %3567
      %3571 = vset.pattern.permute.xlu0 0
      %3572 = vperm.xlu0 %3571, %v3343
      %v3573 = vpop.permute.xlu0 %3572
      %3576 = vset.pattern.permute.xlu0 0
      %3577 = vperm.xlu0 %3576, %v3344
      %v3578 = vpop.permute.xlu0 %3577
      %3581 = vset.pattern.permute.xlu0 0
      %3582 = vperm.xlu0 %3581, %v3345
      %v3583 = vpop.permute.xlu0 %3582
      %3586 = vset.pattern.permute.xlu0 0
      %3587 = vperm.xlu0 %3586, %v3346
      %v3588 = vpop.permute.xlu0 %3587
      %3591 = vset.pattern.permute.xlu0 0
      %3592 = vperm.xlu0 %3591, %v3347
      %v3593 = vpop.permute.xlu0 %3592
      %3596 = vset.pattern.permute.xlu0 0
      %3597 = vperm.xlu0 %3596, %v3348
      %v3598 = vpop.permute.xlu0 %3597
      %3601 = vset.pattern.permute.xlu0 0
      %3602 = vperm.xlu0 %3601, %v3349
      %v3603 = vpop.permute.xlu0 %3602
      %3606 = vset.pattern.permute.xlu0 0
      %3607 = vperm.xlu0 %3606, %v3350
      %v3608 = vpop.permute.xlu0 %3607
      %3611 = vset.pattern.permute.xlu0 0
      %3612 = vperm.xlu0 %3611, %v3351
      %v3613 = vpop.permute.xlu0 %3612
      %3616 = vset.pattern.permute.xlu0 0
      %3617 = vperm.xlu0 %3616, %v3352
      %v3618 = vpop.permute.xlu0 %3617
      %3621 = vset.pattern.permute.xlu0 0
      %3622 = vperm.xlu0 %3621, %v3353
      %v3623 = vpop.permute.xlu0 %3622
      %3626 = vset.pattern.permute.xlu0 0
      %3627 = vperm.xlu0 %3626, %v3354
      %v3628 = vpop.permute.xlu0 %3627
      %3631 = vset.pattern.permute.xlu0 0
      %3632 = vperm.xlu0 %3631, %v3355
      %v3633 = vpop.permute.xlu0 %3632
      %3636 = vset.pattern.permute.xlu0 0
      %3637 = vperm.xlu0 %3636, %v3356
      %v3638 = vpop.permute.xlu0 %3637
      %3641 = vset.pattern.permute.xlu0 0
      %3642 = vperm.xlu0 %3641, %v3357
      %v3643 = vpop.permute.xlu0 %3642
      %3646 = vset.pattern.permute.xlu0 0
      %3647 = vperm.xlu0 %3646, %v3358
      %v3648 = vpop.permute.xlu0 %3647
      %3651 = vset.pattern.permute.xlu0 0
      %3652 = vperm.xlu0 %3651, %v3359
      %v3653 = vpop.permute.xlu0 %3652
      %3656 = vset.pattern.permute.xlu0 0
      %3657 = vperm.xlu0 %3656, %v3360
      %v3658 = vpop.permute.xlu0 %3657
      %3661 = vset.pattern.permute.xlu0 0
      %3662 = vperm.xlu0 %3661, %v3361
      %v3663 = vpop.permute.xlu0 %3662
      %3666 = vset.pattern.permute.xlu0 0
      %3667 = vperm.xlu0 %3666, %v3362
      %v3668 = vpop.permute.xlu0 %3667
      %3671 = vset.pattern.permute.xlu0 0
      %3672 = vperm.xlu0 %3671, %v3363
      %v3673 = vpop.permute.xlu0 %3672
      %3676 = vset.pattern.permute.xlu0 0
      %3677 = vperm.xlu0 %3676, %v3364
      %v3678 = vpop.permute.xlu0 %3677
      %3681 = vset.pattern.permute.xlu0 0
      %3682 = vperm.xlu0 %3681, %v3365
      %v3683 = vpop.permute.xlu0 %3682
      %3686 = vset.pattern.permute.xlu0 0
      %3687 = vperm.xlu0 %3686, %v3366
      %v3688 = vpop.permute.xlu0 %3687
      %3691 = vset.pattern.permute.xlu0 0
      %3692 = vperm.xlu0 %3691, %v3367
      %v3693 = vpop.permute.xlu0 %3692
      %3696 = vset.pattern.permute.xlu0 0
      %3697 = vperm.xlu0 %3696, %v3368
      %v3698 = vpop.permute.xlu0 %3697
      %3701 = vset.pattern.permute.xlu0 0
      %3702 = vperm.xlu0 %3701, %v3369
      %v3703 = vpop.permute.xlu0 %3702
      %3706 = vset.pattern.permute.xlu0 0
      %3707 = vperm.xlu0 %3706, %v3370
      %v3708 = vpop.permute.xlu0 %3707
      %3711 = vset.pattern.permute.xlu0 0
      %3712 = vperm.xlu0 %3711, %v3371
      %v3713 = vpop.permute.xlu0 %3712
      %3716 = vset.pattern.permute.xlu0 0
      %3717 = vperm.xlu0 %3716, %v3372
      %v3718 = vpop.permute.xlu0 %3717
      %3721 = vset.pattern.permute.xlu0 0
      %3722 = vperm.xlu0 %3721, %v3373
      %v3723 = vpop.permute.xlu0 %3722
      %3726 = vset.pattern.permute.xlu0 0
      %3727 = vperm.xlu0 %3726, %v3374
      %v3728 = vpop.permute.xlu0 %3727
      %3731 = vset.pattern.permute.xlu0 0
      %3732 = vperm.xlu0 %3731, %v3375
      %v3733 = vpop.permute.xlu0 %3732
      %3736 = vset.pattern.permute.xlu0 0
      %3737 = vperm.xlu0 %3736, %v3376
      %v3738 = vpop.permute.xlu0 %3737
      %3741 = vset.pattern.permute.xlu0 0
      %3742 = vperm.xlu0 %3741, %v3377
      %v3743 = vpop.permute.xlu0 %3742
      %3746 = vset.pattern.permute.xlu0 0
      %3747 = vperm.xlu0 %3746, %v3378
      %v3748 = vpop.permute.xlu0 %3747
      %3751 = vset.pattern.permute.xlu0 0
      %3752 = vperm.xlu0 %3751, %v3379
      %v3753 = vpop.permute.xlu0 %3752
      %3756 = vset.pattern.permute.xlu0 0
      %3757 = vperm.xlu0 %3756, %v3380
      %v3758 = vpop.permute.xlu0 %3757
      %3761 = vset.pattern.permute.xlu0 0
      %3762 = vperm.xlu0 %3761, %v3381
      %v3763 = vpop.permute.xlu0 %3762
      %3766 = vset.pattern.permute.xlu0 0
      %3767 = vperm.xlu0 %3766, %v3382
      %v3768 = vpop.permute.xlu0 %3767
      %3771 = vset.pattern.permute.xlu0 0
      %3772 = vperm.xlu0 %3771, %v3383
      %v3773 = vpop.permute.xlu0 %3772
      %3776 = vset.pattern.permute.xlu0 0
      %3777 = vperm.xlu0 %3776, %v3384
      %v3778 = vpop.permute.xlu0 %3777
      %3781 = vset.pattern.permute.xlu0 0
      %3782 = vperm.xlu0 %3781, %v3385
      %v3783 = vpop.permute.xlu0 %3782
      %3786 = vset.pattern.permute.xlu0 0
      %3787 = vperm.xlu0 %3786, %v3386
      %v3788 = vpop.permute.xlu0 %3787
      %3791 = vset.pattern.permute.xlu0 0
      %3792 = vperm.xlu0 %3791, %v3387
      %v3793 = vpop.permute.xlu0 %3792
      %3796 = vset.pattern.permute.xlu0 0
      %3797 = vperm.xlu0 %3796, %v3388
      %v3798 = vpop.permute.xlu0 %3797
      %3801 = vset.pattern.permute.xlu0 0
      %3802 = vperm.xlu0 %3801, %v3389
      %v3803 = vpop.permute.xlu0 %3802
      %3806 = vset.pattern.permute.xlu0 0
      %3807 = vperm.xlu0 %3806, %v3390
      %v3808 = vpop.permute.xlu0 %3807
      %3811 = vset.pattern.permute.xlu0 0
      %3812 = vperm.xlu0 %3811, %v3391
      %v3813 = vpop.permute.xlu0 %3812
      %3816 = vset.pattern.permute.xlu0 0
      %3817 = vperm.xlu0 %3816, %v3392
      %v3818 = vpop.permute.xlu0 %3817
      %3821 = vset.pattern.permute.xlu0 0
      %3822 = vperm.xlu0 %3821, %v3393
      %v3823 = vpop.permute.xlu0 %3822
      %3826 = vset.pattern.permute.xlu0 0
      %3827 = vperm.xlu0 %3826, %v3394
      %v3828 = vpop.permute.xlu0 %3827
      %3831 = vset.pattern.permute.xlu0 0
      %3832 = vperm.xlu0 %3831, %v3395
      %v3833 = vpop.permute.xlu0 %3832
      %3836 = vset.pattern.permute.xlu0 0
      %3837 = vperm.xlu0 %3836, %v3396
      %v3838 = vpop.permute.xlu0 %3837
      %3841 = vset.pattern.permute.xlu0 0
      %3842 = vperm.xlu0 %3841, %v3397
      %v3843 = vpop.permute.xlu0 %3842
      %3846 = vset.pattern.permute.xlu0 0
      %3847 = vperm.xlu0 %3846, %v3398
      %v3848 = vpop.permute.xlu0 %3847
      %3851 = vset.pattern.permute.xlu0 0
      %3852 = vperm.xlu0 %3851, %v3399
      %v3853 = vpop.permute.xlu0 %3852
      %3856 = vset.pattern.permute.xlu0 0
      %3857 = vperm.xlu0 %3856, %v3400
      %v3858 = vpop.permute.xlu0 %3857
      %3861 = vset.pattern.permute.xlu0 0
      %3862 = vperm.xlu0 %3861, %v3401
      %v3863 = vpop.permute.xlu0 %3862
      %3866 = vset.pattern.permute.xlu0 0
      %3867 = vperm.xlu0 %3866, %v3402
      %v3868 = vpop.permute.xlu0 %3867
      %3871 = vset.pattern.permute.xlu0 0
      %3872 = vperm.xlu0 %3871, %v3403
      %v3873 = vpop.permute.xlu0 %3872
      %3876 = vset.pattern.permute.xlu0 0
      %3877 = vperm.xlu0 %3876, %v3404
      %v3878 = vpop.permute.xlu0 %3877
      %3881 = vset.pattern.permute.xlu0 0
      %3882 = vperm.xlu0 %3881, %v3405
      %v3883 = vpop.permute.xlu0 %3882
      %3886 = vset.pattern.permute.xlu0 0
      %3887 = vperm.xlu0 %3886, %v3406
      %v3888 = vpop.permute.xlu0 %3887
      %3891 = vset.pattern.permute.xlu0 0
      %3892 = vperm.xlu0 %3891, %v3407
      %v3893 = vpop.permute.xlu0 %3892
      %3896 = vset.pattern.permute.xlu0 0
      %3897 = vperm.xlu0 %3896, %v3408
      %v3898 = vpop.permute.xlu0 %3897
      %3901 = vset.pattern.permute.xlu0 0
      %3902 = vperm.xlu0 %3901, %v3409
      %v3903 = vpop.permute.xlu0 %3902
      %3906 = vset.pattern.permute.xlu0 0
      %3907 = vperm.xlu0 %3906, %v3410
      %v3908 = vpop.permute.xlu0 %3907
      %3911 = vset.pattern.permute.xlu0 0
      %3912 = vperm.xlu0 %3911, %v3411
      %v3913 = vpop.permute.xlu0 %3912
      %3916 = vset.pattern.permute.xlu0 0
      %3917 = vperm.xlu0 %3916, %v3412
      %v3918 = vpop.permute.xlu0 %3917
      %3921 = vset.pattern.permute.xlu0 0
      %3922 = vperm.xlu0 %3921, %v3413
      %v3923 = vpop.permute.xlu0 %3922
      %3926 = vset.pattern.permute.xlu0 0
      %3927 = vperm.xlu0 %3926, %v3414
      %v3928 = vpop.permute.xlu0 %3927
      %3931 = vset.pattern.permute.xlu0 0
      %3932 = vperm.xlu0 %3931, %v3415
      %v3933 = vpop.permute.xlu0 %3932
      %3936 = vset.pattern.permute.xlu0 0
      %3937 = vperm.xlu0 %3936, %v3416
      %v3938 = vpop.permute.xlu0 %3937
      %v3940 = vlaneseq
      %v3941 = vshrl.u32 %v3940, 7
      %v3942 = vsub.s32 0, %v3941
      %v3943 = vrot.slane %v3419, %v3942
      %v3944 = vmul.f32 %v3423, %v3943
      %v3945 = vmul.f32 %v3428, %v3943
      %v3946 = vmul.f32 %v3433, %v3943
      %v3947 = vmul.f32 %v3438, %v3943
      %v3948 = vmul.f32 %v3443, %v3943
      %v3949 = vmul.f32 %v3448, %v3943
      %v3950 = vmul.f32 %v3453, %v3943
      %v3951 = vmul.f32 %v3458, %v3943
      %v3952 = vmul.f32 %v3463, %v3943
      %v3953 = vmul.f32 %v3468, %v3943
      %v3954 = vmul.f32 %v3473, %v3943
      %v3955 = vmul.f32 %v3478, %v3943
      %v3956 = vmul.f32 %v3483, %v3943
      %v3957 = vmul.f32 %v3488, %v3943
      %v3958 = vmul.f32 %v3493, %v3943
      %v3959 = vmul.f32 %v3498, %v3943
      %v3960 = vmul.f32 %v3503, %v3943
      %v3961 = vmul.f32 %v3508, %v3943
      %v3962 = vmul.f32 %v3513, %v3943
      %v3963 = vmul.f32 %v3518, %v3943
      %v3964 = vmul.f32 %v3523, %v3943
      %v3965 = vmul.f32 %v3528, %v3943
      %v3966 = vmul.f32 %v3533, %v3943
      %v3967 = vmul.f32 %v3538, %v3943
      %v3968 = vmul.f32 %v3543, %v3943
      %v3969 = vmul.f32 %v3548, %v3943
      %v3970 = vmul.f32 %v3553, %v3943
      %v3971 = vmul.f32 %v3558, %v3943
      %v3972 = vmul.f32 %v3563, %v3943
      %v3973 = vmul.f32 %v3568, %v3943
      %v3974 = vmul.f32 %v3573, %v3943
      %v3975 = vmul.f32 %v3578, %v3943
      %v3976 = vmul.f32 %v3583, %v3943
      %v3977 = vmul.f32 %v3588, %v3943
      %v3978 = vmul.f32 %v3593, %v3943
      %v3979 = vmul.f32 %v3598, %v3943
      %v3980 = vmul.f32 %v3603, %v3943
      %v3981 = vmul.f32 %v3608, %v3943
      %v3982 = vmul.f32 %v3613, %v3943
      %v3983 = vmul.f32 %v3618, %v3943
      %v3984 = vmul.f32 %v3623, %v3943
      %v3985 = vmul.f32 %v3628, %v3943
      %v3986 = vmul.f32 %v3633, %v3943
      %v3987 = vmul.f32 %v3638, %v3943
      %v3988 = vmul.f32 %v3643, %v3943
      %v3989 = vmul.f32 %v3648, %v3943
      %v3990 = vmul.f32 %v3653, %v3943
      %v3991 = vmul.f32 %v3658, %v3943
      %v3992 = vmul.f32 %v3663, %v3943
      %v3993 = vmul.f32 %v3668, %v3943
      %v3994 = vmul.f32 %v3673, %v3943
      %v3995 = vmul.f32 %v3678, %v3943
      %v3996 = vmul.f32 %v3683, %v3943
      %v3997 = vmul.f32 %v3688, %v3943
      %v3998 = vmul.f32 %v3693, %v3943
      %v3999 = vmul.f32 %v3698, %v3943
      %v4000 = vmul.f32 %v3703, %v3943
      %v4001 = vmul.f32 %v3708, %v3943
      %v4002 = vmul.f32 %v3713, %v3943
      %v4003 = vmul.f32 %v3718, %v3943
      %v4004 = vmul.f32 %v3723, %v3943
      %v4005 = vmul.f32 %v3728, %v3943
      %v4006 = vmul.f32 %v3733, %v3943
      %v4007 = vmul.f32 %v3738, %v3943
      %v4008 = vmul.f32 %v3743, %v3943
      %v4009 = vmul.f32 %v3748, %v3943
      %v4010 = vmul.f32 %v3753, %v3943
      %v4011 = vmul.f32 %v3758, %v3943
      %v4012 = vmul.f32 %v3763, %v3943
      %v4013 = vmul.f32 %v3768, %v3943
      %v4014 = vmul.f32 %v3773, %v3943
      %v4015 = vmul.f32 %v3778, %v3943
      %v4016 = vmul.f32 %v3783, %v3943
      %v4017 = vmul.f32 %v3788, %v3943
      %v4018 = vmul.f32 %v3793, %v3943
      %v4019 = vmul.f32 %v3798, %v3943
      %v4020 = vmul.f32 %v3803, %v3943
      %v4021 = vmul.f32 %v3808, %v3943
      %v4022 = vmul.f32 %v3813, %v3943
      %v4023 = vmul.f32 %v3818, %v3943
      %v4024 = vmul.f32 %v3823, %v3943
      %v4025 = vmul.f32 %v3828, %v3943
      %v4026 = vmul.f32 %v3833, %v3943
      %v4027 = vmul.f32 %v3838, %v3943
      %v4028 = vmul.f32 %v3843, %v3943
      %v4029 = vmul.f32 %v3848, %v3943
      %v4030 = vmul.f32 %v3853, %v3943
      %v4031 = vmul.f32 %v3858, %v3943
      %v4032 = vmul.f32 %v3863, %v3943
      %v4033 = vmul.f32 %v3868, %v3943
      %v4034 = vmul.f32 %v3873, %v3943
      %v4035 = vmul.f32 %v3878, %v3943
      %v4036 = vmul.f32 %v3883, %v3943
      %v4037 = vmul.f32 %v3888, %v3943
      %v4038 = vmul.f32 %v3893, %v3943
      %v4039 = vmul.f32 %v3898, %v3943
      %v4040 = vmul.f32 %v3903, %v3943
      %v4041 = vmul.f32 %v3908, %v3943
      %v4042 = vmul.f32 %v3913, %v3943
      %v4043 = vmul.f32 %v3918, %v3943
      %v4044 = vmul.f32 %v3923, %v3943
      %v4045 = vmul.f32 %v3928, %v3943
      %v4046 = vmul.f32 %v3933, %v3943
      %v4047 = vmul.f32 %v3938, %v3943
      %v4048 = vadd.f32 %v3052, %v3944
      %v4049 = vadd.f32 %v3053, %v3945
      %v4050 = vadd.f32 %v3054, %v3946
      %v4051 = vadd.f32 %v3055, %v3947
      %v4052 = vadd.f32 %v3056, %v3948
      %v4053 = vadd.f32 %v3057, %v3949
      %v4054 = vadd.f32 %v3058, %v3950
      %v4055 = vadd.f32 %v3059, %v3951
      %v4056 = vadd.f32 %v3060, %v3952
      %v4057 = vadd.f32 %v3061, %v3953
      %v4058 = vadd.f32 %v3062, %v3954
      %v4059 = vadd.f32 %v3063, %v3955
      %v4060 = vadd.f32 %v3064, %v3956
      %v4061 = vadd.f32 %v3065, %v3957
      %v4062 = vadd.f32 %v3066, %v3958
      %v4063 = vadd.f32 %v3067, %v3959
      %v4064 = vadd.f32 %v3068, %v3960
      %v4065 = vadd.f32 %v3069, %v3961
      %v4066 = vadd.f32 %v3070, %v3962
      %v4067 = vadd.f32 %v3071, %v3963
      %v4068 = vadd.f32 %v3072, %v3964
      %v4069 = vadd.f32 %v3073, %v3965
      %v4070 = vadd.f32 %v3074, %v3966
      %v4071 = vadd.f32 %v3075, %v3967
      %v4072 = vadd.f32 %v3076, %v3968
      %v4073 = vadd.f32 %v3077, %v3969
      %v4074 = vadd.f32 %v3078, %v3970
      %v4075 = vadd.f32 %v3079, %v3971
      %v4076 = vadd.f32 %v3080, %v3972
      %v4077 = vadd.f32 %v3081, %v3973
      %v4078 = vadd.f32 %v3082, %v3974
      %v4079 = vadd.f32 %v3083, %v3975
      %v4080 = vadd.f32 %v3084, %v3976
      %v4081 = vadd.f32 %v3085, %v3977
      %v4082 = vadd.f32 %v3086, %v3978
      %v4083 = vadd.f32 %v3087, %v3979
      %v4084 = vadd.f32 %v3088, %v3980
      %v4085 = vadd.f32 %v3089, %v3981
      %v4086 = vadd.f32 %v3090, %v3982
      %v4087 = vadd.f32 %v3091, %v3983
      %v4088 = vadd.f32 %v3092, %v3984
      %v4089 = vadd.f32 %v3093, %v3985
      %v4090 = vadd.f32 %v3094, %v3986
      %v4091 = vadd.f32 %v3095, %v3987
      %v4092 = vadd.f32 %v3096, %v3988
      %v4093 = vadd.f32 %v3097, %v3989
      %v4094 = vadd.f32 %v3098, %v3990
      %v4095 = vadd.f32 %v3099, %v3991
      %v4096 = vadd.f32 %v3100, %v3992
      %v4097 = vadd.f32 %v3101, %v3993
      %v4098 = vadd.f32 %v3102, %v3994
      %v4099 = vadd.f32 %v3103, %v3995
      %v4100 = vadd.f32 %v3104, %v3996
      %v4101 = vadd.f32 %v3105, %v3997
      %v4102 = vadd.f32 %v3106, %v3998
      %v4103 = vadd.f32 %v3107, %v3999
      %v4104 = vadd.f32 %v3108, %v4000
      %v4105 = vadd.f32 %v3109, %v4001
      %v4106 = vadd.f32 %v3110, %v4002
      %v4107 = vadd.f32 %v3111, %v4003
      %v4108 = vadd.f32 %v3112, %v4004
      %v4109 = vadd.f32 %v3113, %v4005
      %v4110 = vadd.f32 %v3114, %v4006
      %v4111 = vadd.f32 %v3115, %v4007
      %v4112 = vadd.f32 %v3116, %v4008
      %v4113 = vadd.f32 %v3117, %v4009
      %v4114 = vadd.f32 %v3118, %v4010
      %v4115 = vadd.f32 %v3119, %v4011
      %v4116 = vadd.f32 %v3120, %v4012
      %v4117 = vadd.f32 %v3121, %v4013
      %v4118 = vadd.f32 %v3122, %v4014
      %v4119 = vadd.f32 %v3123, %v4015
      %v4120 = vadd.f32 %v3124, %v4016
      %v4121 = vadd.f32 %v3125, %v4017
      %v4122 = vadd.f32 %v3126, %v4018
      %v4123 = vadd.f32 %v3127, %v4019
      %v4124 = vadd.f32 %v3128, %v4020
      %v4125 = vadd.f32 %v3129, %v4021
      %v4126 = vadd.f32 %v3130, %v4022
      %v4127 = vadd.f32 %v3131, %v4023
      %v4128 = vadd.f32 %v3132, %v4024
      %v4129 = vadd.f32 %v3133, %v4025
      %v4130 = vadd.f32 %v3134, %v4026
      %v4131 = vadd.f32 %v3135, %v4027
      %v4132 = vadd.f32 %v3136, %v4028
      %v4133 = vadd.f32 %v3137, %v4029
      %v4134 = vadd.f32 %v3138, %v4030
      %v4135 = vadd.f32 %v3139, %v4031
      %v4136 = vadd.f32 %v3140, %v4032
      %v4137 = vadd.f32 %v3141, %v4033
      %v4138 = vadd.f32 %v3142, %v4034
      %v4139 = vadd.f32 %v3143, %v4035
      %v4140 = vadd.f32 %v3144, %v4036
      %v4141 = vadd.f32 %v3145, %v4037
      %v4142 = vadd.f32 %v3146, %v4038
      %v4143 = vadd.f32 %v3147, %v4039
      %v4144 = vadd.f32 %v3148, %v4040
      %v4145 = vadd.f32 %v3149, %v4041
      %v4146 = vadd.f32 %v3150, %v4042
      %v4147 = vadd.f32 %v3151, %v4043
      %v4148 = vadd.f32 %v3152, %v4044
      %v4149 = vadd.f32 %v3153, %v4045
      %v4150 = vadd.f32 %v3154, %v4046
      %v4151 = vadd.f32 %v3155, %v4047
      %v4152 = vld [vmem:[%s3156 + $0x1] sm:$0xff]
      %v4153 = vld [vmem:[%s3156 + $0x9] sm:$0xff]
      %v4154 = vld [vmem:[%s3156 + $0x11] sm:$0xff]
      %v4155 = vld [vmem:[%s3156 + $0x19] sm:$0xff]
      %v4156 = vld [vmem:[%s3156 + $0x29] sm:$0xff]
      %v4157 = vld [vmem:[%s3156 + $0x31] sm:$0xff]
      %v4158 = vld [vmem:[%s3156 + $0x39] sm:$0xff]
      %v4159 = vld [vmem:[%s3156 + $0x41] sm:$0xff]
      %v4160 = vld [vmem:[%s3156 + $0x51] sm:$0xff]
      %v4161 = vld [vmem:[%s3156 + $0x59] sm:$0xff]
      %v4162 = vld [vmem:[%s3156 + $0x61] sm:$0xff]
      %v4163 = vld [vmem:[%s3156 + $0x69] sm:$0xff]
      %v4164 = vld [vmem:[%s3156 + $0x79] sm:$0xff]
      %v4165 = vld [vmem:[%s3156 + $0x81] sm:$0xff]
      %v4166 = vld [vmem:[%s3156 + $0x89] sm:$0xff]
      %v4167 = vld [vmem:[%s3156 + $0x91] sm:$0xff]
      %v4168 = vld [vmem:[%s3156 + $0xa1] sm:$0xff]
      %v4169 = vld [vmem:[%s3156 + $0xa9] sm:$0xff]
      %v4170 = vld [vmem:[%s3156 + $0xb1] sm:$0xff]
      %v4171 = vld [vmem:[%s3156 + $0xb9] sm:$0xff]
      %v4172 = vld [vmem:[%s3156 + $0xc9] sm:$0xff]
      %v4173 = vld [vmem:[%s3156 + $0xd1] sm:$0xff]
      %v4174 = vld [vmem:[%s3156 + $0xd9] sm:$0xff]
      %v4175 = vld [vmem:[%s3156 + $0xe1] sm:$0xff]
      %v4176 = vld [vmem:[%s3156 + $0xf1] sm:$0xff]
      %v4177 = vld [vmem:[%s3156 + $0xf9] sm:$0xff]
      %v4178 = vld [vmem:[%s3156 + $0x101] sm:$0xff]
      %v4179 = vld [vmem:[%s3156 + $0x109] sm:$0xff]
      %v4180 = vld [vmem:[%s3156 + $0x119] sm:$0xff]
      %v4181 = vld [vmem:[%s3156 + $0x121] sm:$0xff]
      %v4182 = vld [vmem:[%s3156 + $0x129] sm:$0xff]
      %v4183 = vld [vmem:[%s3156 + $0x131] sm:$0xff]
      %v4184 = vld [vmem:[%s3156 + $0x141] sm:$0xff]
      %v4185 = vld [vmem:[%s3156 + $0x149] sm:$0xff]
      %v4186 = vld [vmem:[%s3156 + $0x151] sm:$0xff]
      %v4187 = vld [vmem:[%s3156 + $0x159] sm:$0xff]
      %v4188 = vld [vmem:[%s3156 + $0x169] sm:$0xff]
      %v4189 = vld [vmem:[%s3156 + $0x171] sm:$0xff]
      %v4190 = vld [vmem:[%s3156 + $0x179] sm:$0xff]
      %v4191 = vld [vmem:[%s3156 + $0x181] sm:$0xff]
      %v4192 = vld [vmem:[%s3156 + $0x191] sm:$0xff]
      %v4193 = vld [vmem:[%s3156 + $0x199] sm:$0xff]
      %v4194 = vld [vmem:[%s3156 + $0x1a1] sm:$0xff]
      %v4195 = vld [vmem:[%s3156 + $0x1a9] sm:$0xff]
      %v4196 = vld [vmem:[%s3156 + $0x1b9] sm:$0xff]
      %v4197 = vld [vmem:[%s3156 + $0x1c1] sm:$0xff]
      %v4198 = vld [vmem:[%s3156 + $0x1c9] sm:$0xff]
      %v4199 = vld [vmem:[%s3156 + $0x1d1] sm:$0xff]
      %v4200 = vld [vmem:[%s3156 + $0x1e1] sm:$0xff]
      %v4201 = vld [vmem:[%s3156 + $0x1e9] sm:$0xff]
      %v4202 = vld [vmem:[%s3156 + $0x1f1] sm:$0xff]
      %v4203 = vld [vmem:[%s3156 + $0x1f9] sm:$0xff]
      %v4204 = vld [vmem:[%s3156 + $0x209] sm:$0xff]
      %v4205 = vld [vmem:[%s3156 + $0x211] sm:$0xff]
      %v4206 = vld [vmem:[%s3156 + $0x219] sm:$0xff]
      %v4207 = vld [vmem:[%s3156 + $0x221] sm:$0xff]
      %v4208 = vld [vmem:[%s3156 + $0x231] sm:$0xff]
      %v4209 = vld [vmem:[%s3156 + $0x239] sm:$0xff]
      %v4210 = vld [vmem:[%s3156 + $0x241] sm:$0xff]
      %v4211 = vld [vmem:[%s3156 + $0x249] sm:$0xff]
      %v4212 = vld [vmem:[%s3156 + $0x259] sm:$0xff]
      %v4213 = vld [vmem:[%s3156 + $0x261] sm:$0xff]
      %v4214 = vld [vmem:[%s3156 + $0x269] sm:$0xff]
      %v4215 = vld [vmem:[%s3156 + $0x271] sm:$0xff]
      %v4216 = vld [vmem:[%s3156 + $0x281] sm:$0xff]
      %v4217 = vld [vmem:[%s3156 + $0x289] sm:$0xff]
      %v4218 = vld [vmem:[%s3156 + $0x291] sm:$0xff]
      %v4219 = vld [vmem:[%s3156 + $0x299] sm:$0xff]
      %v4220 = vld [vmem:[%s3156 + $0x2a9] sm:$0xff]
      %v4221 = vld [vmem:[%s3156 + $0x2b1] sm:$0xff]
      %v4222 = vld [vmem:[%s3156 + $0x2b9] sm:$0xff]
      %v4223 = vld [vmem:[%s3156 + $0x2c1] sm:$0xff]
      %v4224 = vld [vmem:[%s3156 + $0x2d1] sm:$0xff]
      %v4225 = vld [vmem:[%s3156 + $0x2d9] sm:$0xff]
      %v4226 = vld [vmem:[%s3156 + $0x2e1] sm:$0xff]
      %v4227 = vld [vmem:[%s3156 + $0x2e9] sm:$0xff]
      %v4228 = vld [vmem:[%s3156 + $0x2f9] sm:$0xff]
      %v4229 = vld [vmem:[%s3156 + $0x301] sm:$0xff]
      %v4230 = vld [vmem:[%s3156 + $0x309] sm:$0xff]
      %v4231 = vld [vmem:[%s3156 + $0x311] sm:$0xff]
      %v4232 = vld [vmem:[%s3156 + $0x321] sm:$0xff]
      %v4233 = vld [vmem:[%s3156 + $0x329] sm:$0xff]
      %v4234 = vld [vmem:[%s3156 + $0x331] sm:$0xff]
      %v4235 = vld [vmem:[%s3156 + $0x339] sm:$0xff]
      %v4236 = vld [vmem:[%s3156 + $0x349] sm:$0xff]
      %v4237 = vld [vmem:[%s3156 + $0x351] sm:$0xff]
      %v4238 = vld [vmem:[%s3156 + $0x359] sm:$0xff]
      %v4239 = vld [vmem:[%s3156 + $0x361] sm:$0xff]
      %v4240 = vld [vmem:[%s3156 + $0x371] sm:$0xff]
      %v4241 = vld [vmem:[%s3156 + $0x379] sm:$0xff]
      %v4242 = vld [vmem:[%s3156 + $0x381] sm:$0xff]
      %v4243 = vld [vmem:[%s3156 + $0x389] sm:$0xff]
      %v4244 = vld [vmem:[%s3156 + $0x399] sm:$0xff]
      %v4245 = vld [vmem:[%s3156 + $0x3a1] sm:$0xff]
      %v4246 = vld [vmem:[%s3156 + $0x3a9] sm:$0xff]
      %v4247 = vld [vmem:[%s3156 + $0x3b1] sm:$0xff]
      %v4248 = vld [vmem:[%s3156 + $0x3c1] sm:$0xff]
      %v4249 = vld [vmem:[%s3156 + $0x3c9] sm:$0xff]
      %v4250 = vld [vmem:[%s3156 + $0x3d1] sm:$0xff]
      %v4251 = vld [vmem:[%s3156 + $0x3d9] sm:$0xff]
      %v4252 = vld [vmem:[%s3156 + $0x3e9] sm:$0xff]
      %v4253 = vld [vmem:[%s3156 + $0x3f1] sm:$0xff]
      %v4254 = vld [vmem:[%s3156 + $0x3f9] sm:$0xff]
      %v4255 = vld [vmem:[%s3156 + $0x401] sm:$0xff]
      %v4256 = vpack.c.bf16 %v4153, %v4152
      %v4257 = vpack.c.bf16 %v4155, %v4154
      %v4258 = vpack.c.bf16 %v4157, %v4156
      %v4259 = vpack.c.bf16 %v4159, %v4158
      %v4260 = vpack.c.bf16 %v4161, %v4160
      %v4261 = vpack.c.bf16 %v4163, %v4162
      %v4262 = vpack.c.bf16 %v4165, %v4164
      %v4263 = vpack.c.bf16 %v4167, %v4166
      %v4264 = vpack.c.bf16 %v4169, %v4168
      %v4265 = vpack.c.bf16 %v4171, %v4170
      %v4266 = vpack.c.bf16 %v4173, %v4172
      %v4267 = vpack.c.bf16 %v4175, %v4174
      %v4268 = vpack.c.bf16 %v4177, %v4176
      %v4269 = vpack.c.bf16 %v4179, %v4178
      %v4270 = vpack.c.bf16 %v4181, %v4180
      %v4271 = vpack.c.bf16 %v4183, %v4182
      %v4272 = vpack.c.bf16 %v4185, %v4184
      %v4273 = vpack.c.bf16 %v4187, %v4186
      %v4274 = vpack.c.bf16 %v4189, %v4188
      %v4275 = vpack.c.bf16 %v4191, %v4190
      %v4276 = vpack.c.bf16 %v4193, %v4192
      %v4277 = vpack.c.bf16 %v4195, %v4194
      %v4278 = vpack.c.bf16 %v4197, %v4196
      %v4279 = vpack.c.bf16 %v4199, %v4198
      %v4280 = vpack.c.bf16 %v4201, %v4200
      %v4281 = vpack.c.bf16 %v4203, %v4202
      %v4282 = vpack.c.bf16 %v4205, %v4204
      %v4283 = vpack.c.bf16 %v4207, %v4206
      %v4284 = vpack.c.bf16 %v4209, %v4208
      %v4285 = vpack.c.bf16 %v4211, %v4210
      %v4286 = vpack.c.bf16 %v4213, %v4212
      %v4287 = vpack.c.bf16 %v4215, %v4214
      %v4288 = vpack.c.bf16 %v4217, %v4216
      %v4289 = vpack.c.bf16 %v4219, %v4218
      %v4290 = vpack.c.bf16 %v4221, %v4220
      %v4291 = vpack.c.bf16 %v4223, %v4222
      %v4292 = vpack.c.bf16 %v4225, %v4224
      %v4293 = vpack.c.bf16 %v4227, %v4226
      %v4294 = vpack.c.bf16 %v4229, %v4228
      %v4295 = vpack.c.bf16 %v4231, %v4230
      %v4296 = vpack.c.bf16 %v4233, %v4232
      %v4297 = vpack.c.bf16 %v4235, %v4234
      %v4298 = vpack.c.bf16 %v4237, %v4236
      %v4299 = vpack.c.bf16 %v4239, %v4238
      %v4300 = vpack.c.bf16 %v4241, %v4240
      %v4301 = vpack.c.bf16 %v4243, %v4242
      %v4302 = vpack.c.bf16 %v4245, %v4244
      %v4303 = vpack.c.bf16 %v4247, %v4246
      %v4304 = vpack.c.bf16 %v4249, %v4248
      %v4305 = vpack.c.bf16 %v4251, %v4250
      %v4306 = vpack.c.bf16 %v4253, %v4252
      %v4307 = vpack.c.bf16 %v4255, %v4254
      %v4308 = vunpack.c.l.bf16 %v4256
      %v4309 = vunpack.c.h.bf16 %v4256
      %v4310 = vunpack.c.l.bf16 %v4257
      %v4311 = vunpack.c.h.bf16 %v4257
      %v4312 = vunpack.c.l.bf16 %v4258
      %v4313 = vunpack.c.h.bf16 %v4258
      %v4314 = vunpack.c.l.bf16 %v4259
      %v4315 = vunpack.c.h.bf16 %v4259
      %v4316 = vunpack.c.l.bf16 %v4260
      %v4317 = vunpack.c.h.bf16 %v4260
      %v4318 = vunpack.c.l.bf16 %v4261
      %v4319 = vunpack.c.h.bf16 %v4261
      %v4320 = vunpack.c.l.bf16 %v4262
      %v4321 = vunpack.c.h.bf16 %v4262
      %v4322 = vunpack.c.l.bf16 %v4263
      %v4323 = vunpack.c.h.bf16 %v4263
      %v4324 = vunpack.c.l.bf16 %v4264
      %v4325 = vunpack.c.h.bf16 %v4264
      %v4326 = vunpack.c.l.bf16 %v4265
      %v4327 = vunpack.c.h.bf16 %v4265
      %v4328 = vunpack.c.l.bf16 %v4266
      %v4329 = vunpack.c.h.bf16 %v4266
      %v4330 = vunpack.c.l.bf16 %v4267
      %v4331 = vunpack.c.h.bf16 %v4267
      %v4332 = vunpack.c.l.bf16 %v4268
      %v4333 = vunpack.c.h.bf16 %v4268
      %v4334 = vunpack.c.l.bf16 %v4269
      %v4335 = vunpack.c.h.bf16 %v4269
      %v4336 = vunpack.c.l.bf16 %v4270
      %v4337 = vunpack.c.h.bf16 %v4270
      %v4338 = vunpack.c.l.bf16 %v4271
      %v4339 = vunpack.c.h.bf16 %v4271
      %v4340 = vunpack.c.l.bf16 %v4272
      %v4341 = vunpack.c.h.bf16 %v4272
      %v4342 = vunpack.c.l.bf16 %v4273
      %v4343 = vunpack.c.h.bf16 %v4273
      %v4344 = vunpack.c.l.bf16 %v4274
      %v4345 = vunpack.c.h.bf16 %v4274
      %v4346 = vunpack.c.l.bf16 %v4275
      %v4347 = vunpack.c.h.bf16 %v4275
      %v4348 = vunpack.c.l.bf16 %v4276
      %v4349 = vunpack.c.h.bf16 %v4276
      %v4350 = vunpack.c.l.bf16 %v4277
      %v4351 = vunpack.c.h.bf16 %v4277
      %v4352 = vunpack.c.l.bf16 %v4278
      %v4353 = vunpack.c.h.bf16 %v4278
      %v4354 = vunpack.c.l.bf16 %v4279
      %v4355 = vunpack.c.h.bf16 %v4279
      %v4356 = vunpack.c.l.bf16 %v4280
      %v4357 = vunpack.c.h.bf16 %v4280
      %v4358 = vunpack.c.l.bf16 %v4281
      %v4359 = vunpack.c.h.bf16 %v4281
      %v4360 = vunpack.c.l.bf16 %v4282
      %v4361 = vunpack.c.h.bf16 %v4282
      %v4362 = vunpack.c.l.bf16 %v4283
      %v4363 = vunpack.c.h.bf16 %v4283
      %v4364 = vunpack.c.l.bf16 %v4284
      %v4365 = vunpack.c.h.bf16 %v4284
      %v4366 = vunpack.c.l.bf16 %v4285
      %v4367 = vunpack.c.h.bf16 %v4285
      %v4368 = vunpack.c.l.bf16 %v4286
      %v4369 = vunpack.c.h.bf16 %v4286
      %v4370 = vunpack.c.l.bf16 %v4287
      %v4371 = vunpack.c.h.bf16 %v4287
      %v4372 = vunpack.c.l.bf16 %v4288
      %v4373 = vunpack.c.h.bf16 %v4288
      %v4374 = vunpack.c.l.bf16 %v4289
      %v4375 = vunpack.c.h.bf16 %v4289
      %v4376 = vunpack.c.l.bf16 %v4290
      %v4377 = vunpack.c.h.bf16 %v4290
      %v4378 = vunpack.c.l.bf16 %v4291
      %v4379 = vunpack.c.h.bf16 %v4291
      %v4380 = vunpack.c.l.bf16 %v4292
      %v4381 = vunpack.c.h.bf16 %v4292
      %v4382 = vunpack.c.l.bf16 %v4293
      %v4383 = vunpack.c.h.bf16 %v4293
      %v4384 = vunpack.c.l.bf16 %v4294
      %v4385 = vunpack.c.h.bf16 %v4294
      %v4386 = vunpack.c.l.bf16 %v4295
      %v4387 = vunpack.c.h.bf16 %v4295
      %v4388 = vunpack.c.l.bf16 %v4296
      %v4389 = vunpack.c.h.bf16 %v4296
      %v4390 = vunpack.c.l.bf16 %v4297
      %v4391 = vunpack.c.h.bf16 %v4297
      %v4392 = vunpack.c.l.bf16 %v4298
      %v4393 = vunpack.c.h.bf16 %v4298
      %v4394 = vunpack.c.l.bf16 %v4299
      %v4395 = vunpack.c.h.bf16 %v4299
      %v4396 = vunpack.c.l.bf16 %v4300
      %v4397 = vunpack.c.h.bf16 %v4300
      %v4398 = vunpack.c.l.bf16 %v4301
      %v4399 = vunpack.c.h.bf16 %v4301
      %v4400 = vunpack.c.l.bf16 %v4302
      %v4401 = vunpack.c.h.bf16 %v4302
      %v4402 = vunpack.c.l.bf16 %v4303
      %v4403 = vunpack.c.h.bf16 %v4303
      %v4404 = vunpack.c.l.bf16 %v4304
      %v4405 = vunpack.c.h.bf16 %v4304
      %v4406 = vunpack.c.l.bf16 %v4305
      %v4407 = vunpack.c.h.bf16 %v4305
      %v4408 = vunpack.c.l.bf16 %v4306
      %v4409 = vunpack.c.h.bf16 %v4306
      %v4410 = vunpack.c.l.bf16 %v4307
      %v4411 = vunpack.c.h.bf16 %v4307
      %v4412 = vld [vmem:[%s1 + $0x4] sm:$0x1]
      %v4413 = vpack.c.bf16 %v4412, %v4412
      %v4414 = vunpack.c.l.bf16 %v4413
      %4416 = vset.pattern.permute.xlu0 0
      %4417 = vperm.xlu0 %4416, %v4308
      %v4418 = vpop.permute.xlu0 %4417
      %4421 = vset.pattern.permute.xlu0 0
      %4422 = vperm.xlu0 %4421, %v4309
      %v4423 = vpop.permute.xlu0 %4422
      %4426 = vset.pattern.permute.xlu0 0
      %4427 = vperm.xlu0 %4426, %v4310
      %v4428 = vpop.permute.xlu0 %4427
      %4431 = vset.pattern.permute.xlu0 0
      %4432 = vperm.xlu0 %4431, %v4311
      %v4433 = vpop.permute.xlu0 %4432
      %4436 = vset.pattern.permute.xlu0 0
      %4437 = vperm.xlu0 %4436, %v4312
      %v4438 = vpop.permute.xlu0 %4437
      %4441 = vset.pattern.permute.xlu0 0
      %4442 = vperm.xlu0 %4441, %v4313
      %v4443 = vpop.permute.xlu0 %4442
      %4446 = vset.pattern.permute.xlu0 0
      %4447 = vperm.xlu0 %4446, %v4314
      %v4448 = vpop.permute.xlu0 %4447
      %4451 = vset.pattern.permute.xlu0 0
      %4452 = vperm.xlu0 %4451, %v4315
      %v4453 = vpop.permute.xlu0 %4452
      %4456 = vset.pattern.permute.xlu0 0
      %4457 = vperm.xlu0 %4456, %v4316
      %v4458 = vpop.permute.xlu0 %4457
      %4461 = vset.pattern.permute.xlu0 0
      %4462 = vperm.xlu0 %4461, %v4317
      %v4463 = vpop.permute.xlu0 %4462
      %4466 = vset.pattern.permute.xlu0 0
      %4467 = vperm.xlu0 %4466, %v4318
      %v4468 = vpop.permute.xlu0 %4467
      %4471 = vset.pattern.permute.xlu0 0
      %4472 = vperm.xlu0 %4471, %v4319
      %v4473 = vpop.permute.xlu0 %4472
      %4476 = vset.pattern.permute.xlu0 0
      %4477 = vperm.xlu0 %4476, %v4320
      %v4478 = vpop.permute.xlu0 %4477
      %4481 = vset.pattern.permute.xlu0 0
      %4482 = vperm.xlu0 %4481, %v4321
      %v4483 = vpop.permute.xlu0 %4482
      %4486 = vset.pattern.permute.xlu0 0
      %4487 = vperm.xlu0 %4486, %v4322
      %v4488 = vpop.permute.xlu0 %4487
      %4491 = vset.pattern.permute.xlu0 0
      %4492 = vperm.xlu0 %4491, %v4323
      %v4493 = vpop.permute.xlu0 %4492
      %4496 = vset.pattern.permute.xlu0 0
      %4497 = vperm.xlu0 %4496, %v4324
      %v4498 = vpop.permute.xlu0 %4497
      %4501 = vset.pattern.permute.xlu0 0
      %4502 = vperm.xlu0 %4501, %v4325
      %v4503 = vpop.permute.xlu0 %4502
      %4506 = vset.pattern.permute.xlu0 0
      %4507 = vperm.xlu0 %4506, %v4326
      %v4508 = vpop.permute.xlu0 %4507
      %4511 = vset.pattern.permute.xlu0 0
      %4512 = vperm.xlu0 %4511, %v4327
      %v4513 = vpop.permute.xlu0 %4512
      %4516 = vset.pattern.permute.xlu0 0
      %4517 = vperm.xlu0 %4516, %v4328
      %v4518 = vpop.permute.xlu0 %4517
      %4521 = vset.pattern.permute.xlu0 0
      %4522 = vperm.xlu0 %4521, %v4329
      %v4523 = vpop.permute.xlu0 %4522
      %4526 = vset.pattern.permute.xlu0 0
      %4527 = vperm.xlu0 %4526, %v4330
      %v4528 = vpop.permute.xlu0 %4527
      %4531 = vset.pattern.permute.xlu0 0
      %4532 = vperm.xlu0 %4531, %v4331
      %v4533 = vpop.permute.xlu0 %4532
      %4536 = vset.pattern.permute.xlu0 0
      %4537 = vperm.xlu0 %4536, %v4332
      %v4538 = vpop.permute.xlu0 %4537
      %4541 = vset.pattern.permute.xlu0 0
      %4542 = vperm.xlu0 %4541, %v4333
      %v4543 = vpop.permute.xlu0 %4542
      %4546 = vset.pattern.permute.xlu0 0
      %4547 = vperm.xlu0 %4546, %v4334
      %v4548 = vpop.permute.xlu0 %4547
      %4551 = vset.pattern.permute.xlu0 0
      %4552 = vperm.xlu0 %4551, %v4335
      %v4553 = vpop.permute.xlu0 %4552
      %4556 = vset.pattern.permute.xlu0 0
      %4557 = vperm.xlu0 %4556, %v4336
      %v4558 = vpop.permute.xlu0 %4557
      %4561 = vset.pattern.permute.xlu0 0
      %4562 = vperm.xlu0 %4561, %v4337
      %v4563 = vpop.permute.xlu0 %4562
      %4566 = vset.pattern.permute.xlu0 0
      %4567 = vperm.xlu0 %4566, %v4338
      %v4568 = vpop.permute.xlu0 %4567
      %4571 = vset.pattern.permute.xlu0 0
      %4572 = vperm.xlu0 %4571, %v4339
      %v4573 = vpop.permute.xlu0 %4572
      %4576 = vset.pattern.permute.xlu0 0
      %4577 = vperm.xlu0 %4576, %v4340
      %v4578 = vpop.permute.xlu0 %4577
      %4581 = vset.pattern.permute.xlu0 0
      %4582 = vperm.xlu0 %4581, %v4341
      %v4583 = vpop.permute.xlu0 %4582
      %4586 = vset.pattern.permute.xlu0 0
      %4587 = vperm.xlu0 %4586, %v4342
      %v4588 = vpop.permute.xlu0 %4587
      %4591 = vset.pattern.permute.xlu0 0
      %4592 = vperm.xlu0 %4591, %v4343
      %v4593 = vpop.permute.xlu0 %4592
      %4596 = vset.pattern.permute.xlu0 0
      %4597 = vperm.xlu0 %4596, %v4344
      %v4598 = vpop.permute.xlu0 %4597
      %4601 = vset.pattern.permute.xlu0 0
      %4602 = vperm.xlu0 %4601, %v4345
      %v4603 = vpop.permute.xlu0 %4602
      %4606 = vset.pattern.permute.xlu0 0
      %4607 = vperm.xlu0 %4606, %v4346
      %v4608 = vpop.permute.xlu0 %4607
      %4611 = vset.pattern.permute.xlu0 0
      %4612 = vperm.xlu0 %4611, %v4347
      %v4613 = vpop.permute.xlu0 %4612
      %4616 = vset.pattern.permute.xlu0 0
      %4617 = vperm.xlu0 %4616, %v4348
      %v4618 = vpop.permute.xlu0 %4617
      %4621 = vset.pattern.permute.xlu0 0
      %4622 = vperm.xlu0 %4621, %v4349
      %v4623 = vpop.permute.xlu0 %4622
      %4626 = vset.pattern.permute.xlu0 0
      %4627 = vperm.xlu0 %4626, %v4350
      %v4628 = vpop.permute.xlu0 %4627
      %4631 = vset.pattern.permute.xlu0 0
      %4632 = vperm.xlu0 %4631, %v4351
      %v4633 = vpop.permute.xlu0 %4632
      %4636 = vset.pattern.permute.xlu0 0
      %4637 = vperm.xlu0 %4636, %v4352
      %v4638 = vpop.permute.xlu0 %4637
      %4641 = vset.pattern.permute.xlu0 0
      %4642 = vperm.xlu0 %4641, %v4353
      %v4643 = vpop.permute.xlu0 %4642
      %4646 = vset.pattern.permute.xlu0 0
      %4647 = vperm.xlu0 %4646, %v4354
      %v4648 = vpop.permute.xlu0 %4647
      %4651 = vset.pattern.permute.xlu0 0
      %4652 = vperm.xlu0 %4651, %v4355
      %v4653 = vpop.permute.xlu0 %4652
      %4656 = vset.pattern.permute.xlu0 0
      %4657 = vperm.xlu0 %4656, %v4356
      %v4658 = vpop.permute.xlu0 %4657
      %4661 = vset.pattern.permute.xlu0 0
      %4662 = vperm.xlu0 %4661, %v4357
      %v4663 = vpop.permute.xlu0 %4662
      %4666 = vset.pattern.permute.xlu0 0
      %4667 = vperm.xlu0 %4666, %v4358
      %v4668 = vpop.permute.xlu0 %4667
      %4671 = vset.pattern.permute.xlu0 0
      %4672 = vperm.xlu0 %4671, %v4359
      %v4673 = vpop.permute.xlu0 %4672
      %4676 = vset.pattern.permute.xlu0 0
      %4677 = vperm.xlu0 %4676, %v4360
      %v4678 = vpop.permute.xlu0 %4677
      %4681 = vset.pattern.permute.xlu0 0
      %4682 = vperm.xlu0 %4681, %v4361
      %v4683 = vpop.permute.xlu0 %4682
      %4686 = vset.pattern.permute.xlu0 0
      %4687 = vperm.xlu0 %4686, %v4362
      %v4688 = vpop.permute.xlu0 %4687
      %4691 = vset.pattern.permute.xlu0 0
      %4692 = vperm.xlu0 %4691, %v4363
      %v4693 = vpop.permute.xlu0 %4692
      %4696 = vset.pattern.permute.xlu0 0
      %4697 = vperm.xlu0 %4696, %v4364
      %v4698 = vpop.permute.xlu0 %4697
      %4701 = vset.pattern.permute.xlu0 0
      %4702 = vperm.xlu0 %4701, %v4365
      %v4703 = vpop.permute.xlu0 %4702
      %4706 = vset.pattern.permute.xlu0 0
      %4707 = vperm.xlu0 %4706, %v4366
      %v4708 = vpop.permute.xlu0 %4707
      %4711 = vset.pattern.permute.xlu0 0
      %4712 = vperm.xlu0 %4711, %v4367
      %v4713 = vpop.permute.xlu0 %4712
      %4716 = vset.pattern.permute.xlu0 0
      %4717 = vperm.xlu0 %4716, %v4368
      %v4718 = vpop.permute.xlu0 %4717
      %4721 = vset.pattern.permute.xlu0 0
      %4722 = vperm.xlu0 %4721, %v4369
      %v4723 = vpop.permute.xlu0 %4722
      %4726 = vset.pattern.permute.xlu0 0
      %4727 = vperm.xlu0 %4726, %v4370
      %v4728 = vpop.permute.xlu0 %4727
      %4731 = vset.pattern.permute.xlu0 0
      %4732 = vperm.xlu0 %4731, %v4371
      %v4733 = vpop.permute.xlu0 %4732
      %4736 = vset.pattern.permute.xlu0 0
      %4737 = vperm.xlu0 %4736, %v4372
      %v4738 = vpop.permute.xlu0 %4737
      %4741 = vset.pattern.permute.xlu0 0
      %4742 = vperm.xlu0 %4741, %v4373
      %v4743 = vpop.permute.xlu0 %4742
      %4746 = vset.pattern.permute.xlu0 0
      %4747 = vperm.xlu0 %4746, %v4374
      %v4748 = vpop.permute.xlu0 %4747
      %4751 = vset.pattern.permute.xlu0 0
      %4752 = vperm.xlu0 %4751, %v4375
      %v4753 = vpop.permute.xlu0 %4752
      %4756 = vset.pattern.permute.xlu0 0
      %4757 = vperm.xlu0 %4756, %v4376
      %v4758 = vpop.permute.xlu0 %4757
      %4761 = vset.pattern.permute.xlu0 0
      %4762 = vperm.xlu0 %4761, %v4377
      %v4763 = vpop.permute.xlu0 %4762
      %4766 = vset.pattern.permute.xlu0 0
      %4767 = vperm.xlu0 %4766, %v4378
      %v4768 = vpop.permute.xlu0 %4767
      %4771 = vset.pattern.permute.xlu0 0
      %4772 = vperm.xlu0 %4771, %v4379
      %v4773 = vpop.permute.xlu0 %4772
      %4776 = vset.pattern.permute.xlu0 0
      %4777 = vperm.xlu0 %4776, %v4380
      %v4778 = vpop.permute.xlu0 %4777
      %4781 = vset.pattern.permute.xlu0 0
      %4782 = vperm.xlu0 %4781, %v4381
      %v4783 = vpop.permute.xlu0 %4782
      %4786 = vset.pattern.permute.xlu0 0
      %4787 = vperm.xlu0 %4786, %v4382
      %v4788 = vpop.permute.xlu0 %4787
      %4791 = vset.pattern.permute.xlu0 0
      %4792 = vperm.xlu0 %4791, %v4383
      %v4793 = vpop.permute.xlu0 %4792
      %4796 = vset.pattern.permute.xlu0 0
      %4797 = vperm.xlu0 %4796, %v4384
      %v4798 = vpop.permute.xlu0 %4797
      %4801 = vset.pattern.permute.xlu0 0
      %4802 = vperm.xlu0 %4801, %v4385
      %v4803 = vpop.permute.xlu0 %4802
      %4806 = vset.pattern.permute.xlu0 0
      %4807 = vperm.xlu0 %4806, %v4386
      %v4808 = vpop.permute.xlu0 %4807
      %4811 = vset.pattern.permute.xlu0 0
      %4812 = vperm.xlu0 %4811, %v4387
      %v4813 = vpop.permute.xlu0 %4812
      %4816 = vset.pattern.permute.xlu0 0
      %4817 = vperm.xlu0 %4816, %v4388
      %v4818 = vpop.permute.xlu0 %4817
      %4821 = vset.pattern.permute.xlu0 0
      %4822 = vperm.xlu0 %4821, %v4389
      %v4823 = vpop.permute.xlu0 %4822
      %4826 = vset.pattern.permute.xlu0 0
      %4827 = vperm.xlu0 %4826, %v4390
      %v4828 = vpop.permute.xlu0 %4827
      %4831 = vset.pattern.permute.xlu0 0
      %4832 = vperm.xlu0 %4831, %v4391
      %v4833 = vpop.permute.xlu0 %4832
      %4836 = vset.pattern.permute.xlu0 0
      %4837 = vperm.xlu0 %4836, %v4392
      %v4838 = vpop.permute.xlu0 %4837
      %4841 = vset.pattern.permute.xlu0 0
      %4842 = vperm.xlu0 %4841, %v4393
      %v4843 = vpop.permute.xlu0 %4842
      %4846 = vset.pattern.permute.xlu0 0
      %4847 = vperm.xlu0 %4846, %v4394
      %v4848 = vpop.permute.xlu0 %4847
      %4851 = vset.pattern.permute.xlu0 0
      %4852 = vperm.xlu0 %4851, %v4395
      %v4853 = vpop.permute.xlu0 %4852
      %4856 = vset.pattern.permute.xlu0 0
      %4857 = vperm.xlu0 %4856, %v4396
      %v4858 = vpop.permute.xlu0 %4857
      %4861 = vset.pattern.permute.xlu0 0
      %4862 = vperm.xlu0 %4861, %v4397
      %v4863 = vpop.permute.xlu0 %4862
      %4866 = vset.pattern.permute.xlu0 0
      %4867 = vperm.xlu0 %4866, %v4398
      %v4868 = vpop.permute.xlu0 %4867
      %4871 = vset.pattern.permute.xlu0 0
      %4872 = vperm.xlu0 %4871, %v4399
      %v4873 = vpop.permute.xlu0 %4872
      %4876 = vset.pattern.permute.xlu0 0
      %4877 = vperm.xlu0 %4876, %v4400
      %v4878 = vpop.permute.xlu0 %4877
      %4881 = vset.pattern.permute.xlu0 0
      %4882 = vperm.xlu0 %4881, %v4401
      %v4883 = vpop.permute.xlu0 %4882
      %4886 = vset.pattern.permute.xlu0 0
      %4887 = vperm.xlu0 %4886, %v4402
      %v4888 = vpop.permute.xlu0 %4887
      %4891 = vset.pattern.permute.xlu0 0
      %4892 = vperm.xlu0 %4891, %v4403
      %v4893 = vpop.permute.xlu0 %4892
      %4896 = vset.pattern.permute.xlu0 0
      %4897 = vperm.xlu0 %4896, %v4404
      %v4898 = vpop.permute.xlu0 %4897
      %4901 = vset.pattern.permute.xlu0 0
      %4902 = vperm.xlu0 %4901, %v4405
      %v4903 = vpop.permute.xlu0 %4902
      %4906 = vset.pattern.permute.xlu0 0
      %4907 = vperm.xlu0 %4906, %v4406
      %v4908 = vpop.permute.xlu0 %4907
      %4911 = vset.pattern.permute.xlu0 0
      %4912 = vperm.xlu0 %4911, %v4407
      %v4913 = vpop.permute.xlu0 %4912
      %4916 = vset.pattern.permute.xlu0 0
      %4917 = vperm.xlu0 %4916, %v4408
      %v4918 = vpop.permute.xlu0 %4917
      %4921 = vset.pattern.permute.xlu0 0
      %4922 = vperm.xlu0 %4921, %v4409
      %v4923 = vpop.permute.xlu0 %4922
      %4926 = vset.pattern.permute.xlu0 0
      %4927 = vperm.xlu0 %4926, %v4410
      %v4928 = vpop.permute.xlu0 %4927
      %4931 = vset.pattern.permute.xlu0 0
      %4932 = vperm.xlu0 %4931, %v4411
      %v4933 = vpop.permute.xlu0 %4932
      %v4935 = vlaneseq
      %v4936 = vshrl.u32 %v4935, 7
      %v4937 = vsub.s32 0, %v4936
      %v4938 = vrot.slane %v4414, %v4937
      %v4939 = vmul.f32 %v4418, %v4938
      %v4940 = vmul.f32 %v4423, %v4938
      %v4941 = vmul.f32 %v4428, %v4938
      %v4942 = vmul.f32 %v4433, %v4938
      %v4943 = vmul.f32 %v4438, %v4938
      %v4944 = vmul.f32 %v4443, %v4938
      %v4945 = vmul.f32 %v4448, %v4938
      %v4946 = vmul.f32 %v4453, %v4938
      %v4947 = vmul.f32 %v4458, %v4938
      %v4948 = vmul.f32 %v4463, %v4938
      %v4949 = vmul.f32 %v4468, %v4938
      %v4950 = vmul.f32 %v4473, %v4938
      %v4951 = vmul.f32 %v4478, %v4938
      %v4952 = vmul.f32 %v4483, %v4938
      %v4953 = vmul.f32 %v4488, %v4938
      %v4954 = vmul.f32 %v4493, %v4938
      %v4955 = vmul.f32 %v4498, %v4938
      %v4956 = vmul.f32 %v4503, %v4938
      %v4957 = vmul.f32 %v4508, %v4938
      %v4958 = vmul.f32 %v4513, %v4938
      %v4959 = vmul.f32 %v4518, %v4938
      %v4960 = vmul.f32 %v4523, %v4938
      %v4961 = vmul.f32 %v4528, %v4938
      %v4962 = vmul.f32 %v4533, %v4938
      %v4963 = vmul.f32 %v4538, %v4938
      %v4964 = vmul.f32 %v4543, %v4938
      %v4965 = vmul.f32 %v4548, %v4938
      %v4966 = vmul.f32 %v4553, %v4938
      %v4967 = vmul.f32 %v4558, %v4938
      %v4968 = vmul.f32 %v4563, %v4938
      %v4969 = vmul.f32 %v4568, %v4938
      %v4970 = vmul.f32 %v4573, %v4938
      %v4971 = vmul.f32 %v4578, %v4938
      %v4972 = vmul.f32 %v4583, %v4938
      %v4973 = vmul.f32 %v4588, %v4938
      %v4974 = vmul.f32 %v4593, %v4938
      %v4975 = vmul.f32 %v4598, %v4938
      %v4976 = vmul.f32 %v4603, %v4938
      %v4977 = vmul.f32 %v4608, %v4938
      %v4978 = vmul.f32 %v4613, %v4938
      %v4979 = vmul.f32 %v4618, %v4938
      %v4980 = vmul.f32 %v4623, %v4938
      %v4981 = vmul.f32 %v4628, %v4938
      %v4982 = vmul.f32 %v4633, %v4938
      %v4983 = vmul.f32 %v4638, %v4938
      %v4984 = vmul.f32 %v4643, %v4938
      %v4985 = vmul.f32 %v4648, %v4938
      %v4986 = vmul.f32 %v4653, %v4938
      %v4987 = vmul.f32 %v4658, %v4938
      %v4988 = vmul.f32 %v4663, %v4938
      %v4989 = vmul.f32 %v4668, %v4938
      %v4990 = vmul.f32 %v4673, %v4938
      %v4991 = vmul.f32 %v4678, %v4938
      %v4992 = vmul.f32 %v4683, %v4938
      %v4993 = vmul.f32 %v4688, %v4938
      %v4994 = vmul.f32 %v4693, %v4938
      %v4995 = vmul.f32 %v4698, %v4938
      %v4996 = vmul.f32 %v4703, %v4938
      %v4997 = vmul.f32 %v4708, %v4938
      %v4998 = vmul.f32 %v4713, %v4938
      %v4999 = vmul.f32 %v4718, %v4938
      %v5000 = vmul.f32 %v4723, %v4938
      %v5001 = vmul.f32 %v4728, %v4938
      %v5002 = vmul.f32 %v4733, %v4938
      %v5003 = vmul.f32 %v4738, %v4938
      %v5004 = vmul.f32 %v4743, %v4938
      %v5005 = vmul.f32 %v4748, %v4938
      %v5006 = vmul.f32 %v4753, %v4938
      %v5007 = vmul.f32 %v4758, %v4938
      %v5008 = vmul.f32 %v4763, %v4938
      %v5009 = vmul.f32 %v4768, %v4938
      %v5010 = vmul.f32 %v4773, %v4938
      %v5011 = vmul.f32 %v4778, %v4938
      %v5012 = vmul.f32 %v4783, %v4938
      %v5013 = vmul.f32 %v4788, %v4938
      %v5014 = vmul.f32 %v4793, %v4938
      %v5015 = vmul.f32 %v4798, %v4938
      %v5016 = vmul.f32 %v4803, %v4938
      %v5017 = vmul.f32 %v4808, %v4938
      %v5018 = vmul.f32 %v4813, %v4938
      %v5019 = vmul.f32 %v4818, %v4938
      %v5020 = vmul.f32 %v4823, %v4938
      %v5021 = vmul.f32 %v4828, %v4938
      %v5022 = vmul.f32 %v4833, %v4938
      %v5023 = vmul.f32 %v4838, %v4938
      %v5024 = vmul.f32 %v4843, %v4938
      %v5025 = vmul.f32 %v4848, %v4938
      %v5026 = vmul.f32 %v4853, %v4938
      %v5027 = vmul.f32 %v4858, %v4938
      %v5028 = vmul.f32 %v4863, %v4938
      %v5029 = vmul.f32 %v4868, %v4938
      %v5030 = vmul.f32 %v4873, %v4938
      %v5031 = vmul.f32 %v4878, %v4938
      %v5032 = vmul.f32 %v4883, %v4938
      %v5033 = vmul.f32 %v4888, %v4938
      %v5034 = vmul.f32 %v4893, %v4938
      %v5035 = vmul.f32 %v4898, %v4938
      %v5036 = vmul.f32 %v4903, %v4938
      %v5037 = vmul.f32 %v4908, %v4938
      %v5038 = vmul.f32 %v4913, %v4938
      %v5039 = vmul.f32 %v4918, %v4938
      %v5040 = vmul.f32 %v4923, %v4938
      %v5041 = vmul.f32 %v4928, %v4938
      %v5042 = vmul.f32 %v4933, %v4938
      %v5043 = vadd.f32 %v4048, %v4939
      %v5044 = vadd.f32 %v4049, %v4940
      %v5045 = vadd.f32 %v4050, %v4941
      %v5046 = vadd.f32 %v4051, %v4942
      %v5047 = vadd.f32 %v4052, %v4943
      %v5048 = vadd.f32 %v4053, %v4944
      %v5049 = vadd.f32 %v4054, %v4945
      %v5050 = vadd.f32 %v4055, %v4946
      %v5051 = vadd.f32 %v4056, %v4947
      %v5052 = vadd.f32 %v4057, %v4948
      %v5053 = vadd.f32 %v4058, %v4949
      %v5054 = vadd.f32 %v4059, %v4950
      %v5055 = vadd.f32 %v4060, %v4951
      %v5056 = vadd.f32 %v4061, %v4952
      %v5057 = vadd.f32 %v4062, %v4953
      %v5058 = vadd.f32 %v4063, %v4954
      %v5059 = vadd.f32 %v4064, %v4955
      %v5060 = vadd.f32 %v4065, %v4956
      %v5061 = vadd.f32 %v4066, %v4957
      %v5062 = vadd.f32 %v4067, %v4958
      %v5063 = vadd.f32 %v4068, %v4959
      %v5064 = vadd.f32 %v4069, %v4960
      %v5065 = vadd.f32 %v4070, %v4961
      %v5066 = vadd.f32 %v4071, %v4962
      %v5067 = vadd.f32 %v4072, %v4963
      %v5068 = vadd.f32 %v4073, %v4964
      %v5069 = vadd.f32 %v4074, %v4965
      %v5070 = vadd.f32 %v4075, %v4966
      %v5071 = vadd.f32 %v4076, %v4967
      %v5072 = vadd.f32 %v4077, %v4968
      %v5073 = vadd.f32 %v4078, %v4969
      %v5074 = vadd.f32 %v4079, %v4970
      %v5075 = vadd.f32 %v4080, %v4971
      %v5076 = vadd.f32 %v4081, %v4972
      %v5077 = vadd.f32 %v4082, %v4973
      %v5078 = vadd.f32 %v4083, %v4974
      %v5079 = vadd.f32 %v4084, %v4975
      %v5080 = vadd.f32 %v4085, %v4976
      %v5081 = vadd.f32 %v4086, %v4977
      %v5082 = vadd.f32 %v4087, %v4978
      %v5083 = vadd.f32 %v4088, %v4979
      %v5084 = vadd.f32 %v4089, %v4980
      %v5085 = vadd.f32 %v4090, %v4981
      %v5086 = vadd.f32 %v4091, %v4982
      %v5087 = vadd.f32 %v4092, %v4983
      %v5088 = vadd.f32 %v4093, %v4984
      %v5089 = vadd.f32 %v4094, %v4985
      %v5090 = vadd.f32 %v4095, %v4986
      %v5091 = vadd.f32 %v4096, %v4987
      %v5092 = vadd.f32 %v4097, %v4988
      %v5093 = vadd.f32 %v4098, %v4989
      %v5094 = vadd.f32 %v4099, %v4990
      %v5095 = vadd.f32 %v4100, %v4991
      %v5096 = vadd.f32 %v4101, %v4992
      %v5097 = vadd.f32 %v4102, %v4993
      %v5098 = vadd.f32 %v4103, %v4994
      %v5099 = vadd.f32 %v4104, %v4995
      %v5100 = vadd.f32 %v4105, %v4996
      %v5101 = vadd.f32 %v4106, %v4997
      %v5102 = vadd.f32 %v4107, %v4998
      %v5103 = vadd.f32 %v4108, %v4999
      %v5104 = vadd.f32 %v4109, %v5000
      %v5105 = vadd.f32 %v4110, %v5001
      %v5106 = vadd.f32 %v4111, %v5002
      %v5107 = vadd.f32 %v4112, %v5003
      %v5108 = vadd.f32 %v4113, %v5004
      %v5109 = vadd.f32 %v4114, %v5005
      %v5110 = vadd.f32 %v4115, %v5006
      %v5111 = vadd.f32 %v4116, %v5007
      %v5112 = vadd.f32 %v4117, %v5008
      %v5113 = vadd.f32 %v4118, %v5009
      %v5114 = vadd.f32 %v4119, %v5010
      %v5115 = vadd.f32 %v4120, %v5011
      %v5116 = vadd.f32 %v4121, %v5012
      %v5117 = vadd.f32 %v4122, %v5013
      %v5118 = vadd.f32 %v4123, %v5014
      %v5119 = vadd.f32 %v4124, %v5015
      %v5120 = vadd.f32 %v4125, %v5016
      %v5121 = vadd.f32 %v4126, %v5017
      %v5122 = vadd.f32 %v4127, %v5018
      %v5123 = vadd.f32 %v4128, %v5019
      %v5124 = vadd.f32 %v4129, %v5020
      %v5125 = vadd.f32 %v4130, %v5021
      %v5126 = vadd.f32 %v4131, %v5022
      %v5127 = vadd.f32 %v4132, %v5023
      %v5128 = vadd.f32 %v4133, %v5024
      %v5129 = vadd.f32 %v4134, %v5025
      %v5130 = vadd.f32 %v4135, %v5026
      %v5131 = vadd.f32 %v4136, %v5027
      %v5132 = vadd.f32 %v4137, %v5028
      %v5133 = vadd.f32 %v4138, %v5029
      %v5134 = vadd.f32 %v4139, %v5030
      %v5135 = vadd.f32 %v4140, %v5031
      %v5136 = vadd.f32 %v4141, %v5032
      %v5137 = vadd.f32 %v4142, %v5033
      %v5138 = vadd.f32 %v4143, %v5034
      %v5139 = vadd.f32 %v4144, %v5035
      %v5140 = vadd.f32 %v4145, %v5036
      %v5141 = vadd.f32 %v4146, %v5037
      %v5142 = vadd.f32 %v4147, %v5038
      %v5143 = vadd.f32 %v4148, %v5039
      %v5144 = vadd.f32 %v4149, %v5040
      %v5145 = vadd.f32 %v4150, %v5041
      %v5146 = vadd.f32 %v4151, %v5042
      %v5147 = vld [vmem:[%s3156 + $0x2] sm:$0xff]
      %v5148 = vld [vmem:[%s3156 + $0xa] sm:$0xff]
      %v5149 = vld [vmem:[%s3156 + $0x12] sm:$0xff]
      %v5150 = vld [vmem:[%s3156 + $0x1a] sm:$0xff]
      %v5151 = vld [vmem:[%s3156 + $0x2a] sm:$0xff]
      %v5152 = vld [vmem:[%s3156 + $0x32] sm:$0xff]
      %v5153 = vld [vmem:[%s3156 + $0x3a] sm:$0xff]
      %v5154 = vld [vmem:[%s3156 + $0x42] sm:$0xff]
      %v5155 = vld [vmem:[%s3156 + $0x52] sm:$0xff]
      %v5156 = vld [vmem:[%s3156 + $0x5a] sm:$0xff]
      %v5157 = vld [vmem:[%s3156 + $0x62] sm:$0xff]
      %v5158 = vld [vmem:[%s3156 + $0x6a] sm:$0xff]
      %v5159 = vld [vmem:[%s3156 + $0x7a] sm:$0xff]
      %v5160 = vld [vmem:[%s3156 + $0x82] sm:$0xff]
      %v5161 = vld [vmem:[%s3156 + $0x8a] sm:$0xff]
      %v5162 = vld [vmem:[%s3156 + $0x92] sm:$0xff]
      %v5163 = vld [vmem:[%s3156 + $0xa2] sm:$0xff]
      %v5164 = vld [vmem:[%s3156 + $0xaa] sm:$0xff]
      %v5165 = vld [vmem:[%s3156 + $0xb2] sm:$0xff]
      %v5166 = vld [vmem:[%s3156 + $0xba] sm:$0xff]
      %v5167 = vld [vmem:[%s3156 + $0xca] sm:$0xff]
      %v5168 = vld [vmem:[%s3156 + $0xd2] sm:$0xff]
      %v5169 = vld [vmem:[%s3156 + $0xda] sm:$0xff]
      %v5170 = vld [vmem:[%s3156 + $0xe2] sm:$0xff]
      %v5171 = vld [vmem:[%s3156 + $0xf2] sm:$0xff]
      %v5172 = vld [vmem:[%s3156 + $0xfa] sm:$0xff]
      %v5173 = vld [vmem:[%s3156 + $0x102] sm:$0xff]
      %v5174 = vld [vmem:[%s3156 + $0x10a] sm:$0xff]
      %v5175 = vld [vmem:[%s3156 + $0x11a] sm:$0xff]
      %v5176 = vld [vmem:[%s3156 + $0x122] sm:$0xff]
      %v5177 = vld [vmem:[%s3156 + $0x12a] sm:$0xff]
      %v5178 = vld [vmem:[%s3156 + $0x132] sm:$0xff]
      %v5179 = vld [vmem:[%s3156 + $0x142] sm:$0xff]
      %v5180 = vld [vmem:[%s3156 + $0x14a] sm:$0xff]
      %v5181 = vld [vmem:[%s3156 + $0x152] sm:$0xff]
      %v5182 = vld [vmem:[%s3156 + $0x15a] sm:$0xff]
      %v5183 = vld [vmem:[%s3156 + $0x16a] sm:$0xff]
      %v5184 = vld [vmem:[%s3156 + $0x172] sm:$0xff]
      %v5185 = vld [vmem:[%s3156 + $0x17a] sm:$0xff]
      %v5186 = vld [vmem:[%s3156 + $0x182] sm:$0xff]
      %v5187 = vld [vmem:[%s3156 + $0x192] sm:$0xff]
      %v5188 = vld [vmem:[%s3156 + $0x19a] sm:$0xff]
      %v5189 = vld [vmem:[%s3156 + $0x1a2] sm:$0xff]
      %v5190 = vld [vmem:[%s3156 + $0x1aa] sm:$0xff]
      %v5191 = vld [vmem:[%s3156 + $0x1ba] sm:$0xff]
      %v5192 = vld [vmem:[%s3156 + $0x1c2] sm:$0xff]
      %v5193 = vld [vmem:[%s3156 + $0x1ca] sm:$0xff]
      %v5194 = vld [vmem:[%s3156 + $0x1d2] sm:$0xff]
      %v5195 = vld [vmem:[%s3156 + $0x1e2] sm:$0xff]
      %v5196 = vld [vmem:[%s3156 + $0x1ea] sm:$0xff]
      %v5197 = vld [vmem:[%s3156 + $0x1f2] sm:$0xff]
      %v5198 = vld [vmem:[%s3156 + $0x1fa] sm:$0xff]
      %v5199 = vld [vmem:[%s3156 + $0x20a] sm:$0xff]
      %v5200 = vld [vmem:[%s3156 + $0x212] sm:$0xff]
      %v5201 = vld [vmem:[%s3156 + $0x21a] sm:$0xff]
      %v5202 = vld [vmem:[%s3156 + $0x222] sm:$0xff]
      %v5203 = vld [vmem:[%s3156 + $0x232] sm:$0xff]
      %v5204 = vld [vmem:[%s3156 + $0x23a] sm:$0xff]
      %v5205 = vld [vmem:[%s3156 + $0x242] sm:$0xff]
      %v5206 = vld [vmem:[%s3156 + $0x24a] sm:$0xff]
      %v5207 = vld [vmem:[%s3156 + $0x25a] sm:$0xff]
      %v5208 = vld [vmem:[%s3156 + $0x262] sm:$0xff]
      %v5209 = vld [vmem:[%s3156 + $0x26a] sm:$0xff]
      %v5210 = vld [vmem:[%s3156 + $0x272] sm:$0xff]
      %v5211 = vld [vmem:[%s3156 + $0x282] sm:$0xff]
      %v5212 = vld [vmem:[%s3156 + $0x28a] sm:$0xff]
      %v5213 = vld [vmem:[%s3156 + $0x292] sm:$0xff]
      %v5214 = vld [vmem:[%s3156 + $0x29a] sm:$0xff]
      %v5215 = vld [vmem:[%s3156 + $0x2aa] sm:$0xff]
      %v5216 = vld [vmem:[%s3156 + $0x2b2] sm:$0xff]
      %v5217 = vld [vmem:[%s3156 + $0x2ba] sm:$0xff]
      %v5218 = vld [vmem:[%s3156 + $0x2c2] sm:$0xff]
      %v5219 = vld [vmem:[%s3156 + $0x2d2] sm:$0xff]
      %v5220 = vld [vmem:[%s3156 + $0x2da] sm:$0xff]
      %v5221 = vld [vmem:[%s3156 + $0x2e2] sm:$0xff]
      %v5222 = vld [vmem:[%s3156 + $0x2ea] sm:$0xff]
      %v5223 = vld [vmem:[%s3156 + $0x2fa] sm:$0xff]
      %v5224 = vld [vmem:[%s3156 + $0x302] sm:$0xff]
      %v5225 = vld [vmem:[%s3156 + $0x30a] sm:$0xff]
      %v5226 = vld [vmem:[%s3156 + $0x312] sm:$0xff]
      %v5227 = vld [vmem:[%s3156 + $0x322] sm:$0xff]
      %v5228 = vld [vmem:[%s3156 + $0x32a] sm:$0xff]
      %v5229 = vld [vmem:[%s3156 + $0x332] sm:$0xff]
      %v5230 = vld [vmem:[%s3156 + $0x33a] sm:$0xff]
      %v5231 = vld [vmem:[%s3156 + $0x34a] sm:$0xff]
      %v5232 = vld [vmem:[%s3156 + $0x352] sm:$0xff]
      %v5233 = vld [vmem:[%s3156 + $0x35a] sm:$0xff]
      %v5234 = vld [vmem:[%s3156 + $0x362] sm:$0xff]
      %v5235 = vld [vmem:[%s3156 + $0x372] sm:$0xff]
      %v5236 = vld [vmem:[%s3156 + $0x37a] sm:$0xff]
      %v5237 = vld [vmem:[%s3156 + $0x382] sm:$0xff]
      %v5238 = vld [vmem:[%s3156 + $0x38a] sm:$0xff]
      %v5239 = vld [vmem:[%s3156 + $0x39a] sm:$0xff]
      %v5240 = vld [vmem:[%s3156 + $0x3a2] sm:$0xff]
      %v5241 = vld [vmem:[%s3156 + $0x3aa] sm:$0xff]
      %v5242 = vld [vmem:[%s3156 + $0x3b2] sm:$0xff]
      %v5243 = vld [vmem:[%s3156 + $0x3c2] sm:$0xff]
      %v5244 = vld [vmem:[%s3156 + $0x3ca] sm:$0xff]
      %v5245 = vld [vmem:[%s3156 + $0x3d2] sm:$0xff]
      %v5246 = vld [vmem:[%s3156 + $0x3da] sm:$0xff]
      %v5247 = vld [vmem:[%s3156 + $0x3ea] sm:$0xff]
      %v5248 = vld [vmem:[%s3156 + $0x3f2] sm:$0xff]
      %v5249 = vld [vmem:[%s3156 + $0x3fa] sm:$0xff]
      %v5250 = vld [vmem:[%s3156 + $0x402] sm:$0xff]
      %v5251 = vpack.c.bf16 %v5148, %v5147
      %v5252 = vpack.c.bf16 %v5150, %v5149
      %v5253 = vpack.c.bf16 %v5152, %v5151
      %v5254 = vpack.c.bf16 %v5154, %v5153
      %v5255 = vpack.c.bf16 %v5156, %v5155
      %v5256 = vpack.c.bf16 %v5158, %v5157
      %v5257 = vpack.c.bf16 %v5160, %v5159
      %v5258 = vpack.c.bf16 %v5162, %v5161
      %v5259 = vpack.c.bf16 %v5164, %v5163
      %v5260 = vpack.c.bf16 %v5166, %v5165
      %v5261 = vpack.c.bf16 %v5168, %v5167
      %v5262 = vpack.c.bf16 %v5170, %v5169
      %v5263 = vpack.c.bf16 %v5172, %v5171
      %v5264 = vpack.c.bf16 %v5174, %v5173
      %v5265 = vpack.c.bf16 %v5176, %v5175
      %v5266 = vpack.c.bf16 %v5178, %v5177
      %v5267 = vpack.c.bf16 %v5180, %v5179
      %v5268 = vpack.c.bf16 %v5182, %v5181
      %v5269 = vpack.c.bf16 %v5184, %v5183
      %v5270 = vpack.c.bf16 %v5186, %v5185
      %v5271 = vpack.c.bf16 %v5188, %v5187
      %v5272 = vpack.c.bf16 %v5190, %v5189
      %v5273 = vpack.c.bf16 %v5192, %v5191
      %v5274 = vpack.c.bf16 %v5194, %v5193
      %v5275 = vpack.c.bf16 %v5196, %v5195
      %v5276 = vpack.c.bf16 %v5198, %v5197
      %v5277 = vpack.c.bf16 %v5200, %v5199
      %v5278 = vpack.c.bf16 %v5202, %v5201
      %v5279 = vpack.c.bf16 %v5204, %v5203
      %v5280 = vpack.c.bf16 %v5206, %v5205
      %v5281 = vpack.c.bf16 %v5208, %v5207
      %v5282 = vpack.c.bf16 %v5210, %v5209
      %v5283 = vpack.c.bf16 %v5212, %v5211
      %v5284 = vpack.c.bf16 %v5214, %v5213
      %v5285 = vpack.c.bf16 %v5216, %v5215
      %v5286 = vpack.c.bf16 %v5218, %v5217
      %v5287 = vpack.c.bf16 %v5220, %v5219
      %v5288 = vpack.c.bf16 %v5222, %v5221
      %v5289 = vpack.c.bf16 %v5224, %v5223
      %v5290 = vpack.c.bf16 %v5226, %v5225
      %v5291 = vpack.c.bf16 %v5228, %v5227
      %v5292 = vpack.c.bf16 %v5230, %v5229
      %v5293 = vpack.c.bf16 %v5232, %v5231
      %v5294 = vpack.c.bf16 %v5234, %v5233
      %v5295 = vpack.c.bf16 %v5236, %v5235
      %v5296 = vpack.c.bf16 %v5238, %v5237
      %v5297 = vpack.c.bf16 %v5240, %v5239
      %v5298 = vpack.c.bf16 %v5242, %v5241
      %v5299 = vpack.c.bf16 %v5244, %v5243
      %v5300 = vpack.c.bf16 %v5246, %v5245
      %v5301 = vpack.c.bf16 %v5248, %v5247
      %v5302 = vpack.c.bf16 %v5250, %v5249
      %v5303 = vunpack.c.l.bf16 %v5251
      %v5304 = vunpack.c.h.bf16 %v5251
      %v5305 = vunpack.c.l.bf16 %v5252
      %v5306 = vunpack.c.h.bf16 %v5252
      %v5307 = vunpack.c.l.bf16 %v5253
      %v5308 = vunpack.c.h.bf16 %v5253
      %v5309 = vunpack.c.l.bf16 %v5254
      %v5310 = vunpack.c.h.bf16 %v5254
      %v5311 = vunpack.c.l.bf16 %v5255
      %v5312 = vunpack.c.h.bf16 %v5255
      %v5313 = vunpack.c.l.bf16 %v5256
      %v5314 = vunpack.c.h.bf16 %v5256
      %v5315 = vunpack.c.l.bf16 %v5257
      %v5316 = vunpack.c.h.bf16 %v5257
      %v5317 = vunpack.c.l.bf16 %v5258
      %v5318 = vunpack.c.h.bf16 %v5258
      %v5319 = vunpack.c.l.bf16 %v5259
      %v5320 = vunpack.c.h.bf16 %v5259
      %v5321 = vunpack.c.l.bf16 %v5260
      %v5322 = vunpack.c.h.bf16 %v5260
      %v5323 = vunpack.c.l.bf16 %v5261
      %v5324 = vunpack.c.h.bf16 %v5261
      %v5325 = vunpack.c.l.bf16 %v5262
      %v5326 = vunpack.c.h.bf16 %v5262
      %v5327 = vunpack.c.l.bf16 %v5263
      %v5328 = vunpack.c.h.bf16 %v5263
      %v5329 = vunpack.c.l.bf16 %v5264
      %v5330 = vunpack.c.h.bf16 %v5264
      %v5331 = vunpack.c.l.bf16 %v5265
      %v5332 = vunpack.c.h.bf16 %v5265
      %v5333 = vunpack.c.l.bf16 %v5266
      %v5334 = vunpack.c.h.bf16 %v5266
      %v5335 = vunpack.c.l.bf16 %v5267
      %v5336 = vunpack.c.h.bf16 %v5267
      %v5337 = vunpack.c.l.bf16 %v5268
      %v5338 = vunpack.c.h.bf16 %v5268
      %v5339 = vunpack.c.l.bf16 %v5269
      %v5340 = vunpack.c.h.bf16 %v5269
      %v5341 = vunpack.c.l.bf16 %v5270
      %v5342 = vunpack.c.h.bf16 %v5270
      %v5343 = vunpack.c.l.bf16 %v5271
      %v5344 = vunpack.c.h.bf16 %v5271
      %v5345 = vunpack.c.l.bf16 %v5272
      %v5346 = vunpack.c.h.bf16 %v5272
      %v5347 = vunpack.c.l.bf16 %v5273
      %v5348 = vunpack.c.h.bf16 %v5273
      %v5349 = vunpack.c.l.bf16 %v5274
      %v5350 = vunpack.c.h.bf16 %v5274
      %v5351 = vunpack.c.l.bf16 %v5275
      %v5352 = vunpack.c.h.bf16 %v5275
      %v5353 = vunpack.c.l.bf16 %v5276
      %v5354 = vunpack.c.h.bf16 %v5276
      %v5355 = vunpack.c.l.bf16 %v5277
      %v5356 = vunpack.c.h.bf16 %v5277
      %v5357 = vunpack.c.l.bf16 %v5278
      %v5358 = vunpack.c.h.bf16 %v5278
      %v5359 = vunpack.c.l.bf16 %v5279
      %v5360 = vunpack.c.h.bf16 %v5279
      %v5361 = vunpack.c.l.bf16 %v5280
      %v5362 = vunpack.c.h.bf16 %v5280
      %v5363 = vunpack.c.l.bf16 %v5281
      %v5364 = vunpack.c.h.bf16 %v5281
      %v5365 = vunpack.c.l.bf16 %v5282
      %v5366 = vunpack.c.h.bf16 %v5282
      %v5367 = vunpack.c.l.bf16 %v5283
      %v5368 = vunpack.c.h.bf16 %v5283
      %v5369 = vunpack.c.l.bf16 %v5284
      %v5370 = vunpack.c.h.bf16 %v5284
      %v5371 = vunpack.c.l.bf16 %v5285
      %v5372 = vunpack.c.h.bf16 %v5285
      %v5373 = vunpack.c.l.bf16 %v5286
      %v5374 = vunpack.c.h.bf16 %v5286
      %v5375 = vunpack.c.l.bf16 %v5287
      %v5376 = vunpack.c.h.bf16 %v5287
      %v5377 = vunpack.c.l.bf16 %v5288
      %v5378 = vunpack.c.h.bf16 %v5288
      %v5379 = vunpack.c.l.bf16 %v5289
      %v5380 = vunpack.c.h.bf16 %v5289
      %v5381 = vunpack.c.l.bf16 %v5290
      %v5382 = vunpack.c.h.bf16 %v5290
      %v5383 = vunpack.c.l.bf16 %v5291
      %v5384 = vunpack.c.h.bf16 %v5291
      %v5385 = vunpack.c.l.bf16 %v5292
      %v5386 = vunpack.c.h.bf16 %v5292
      %v5387 = vunpack.c.l.bf16 %v5293
      %v5388 = vunpack.c.h.bf16 %v5293
      %v5389 = vunpack.c.l.bf16 %v5294
      %v5390 = vunpack.c.h.bf16 %v5294
      %v5391 = vunpack.c.l.bf16 %v5295
      %v5392 = vunpack.c.h.bf16 %v5295
      %v5393 = vunpack.c.l.bf16 %v5296
      %v5394 = vunpack.c.h.bf16 %v5296
      %v5395 = vunpack.c.l.bf16 %v5297
      %v5396 = vunpack.c.h.bf16 %v5297
      %v5397 = vunpack.c.l.bf16 %v5298
      %v5398 = vunpack.c.h.bf16 %v5298
      %v5399 = vunpack.c.l.bf16 %v5299
      %v5400 = vunpack.c.h.bf16 %v5299
      %v5401 = vunpack.c.l.bf16 %v5300
      %v5402 = vunpack.c.h.bf16 %v5300
      %v5403 = vunpack.c.l.bf16 %v5301
      %v5404 = vunpack.c.h.bf16 %v5301
      %v5405 = vunpack.c.l.bf16 %v5302
      %v5406 = vunpack.c.h.bf16 %v5302
      %v5407 = vld [vmem:[%s1 + $0x5] sm:$0x1]
      %v5408 = vpack.c.bf16 %v5407, %v5407
      %v5409 = vunpack.c.l.bf16 %v5408
      %5411 = vset.pattern.permute.xlu0 0
      %5412 = vperm.xlu0 %5411, %v5303
      %v5413 = vpop.permute.xlu0 %5412
      %5416 = vset.pattern.permute.xlu0 0
      %5417 = vperm.xlu0 %5416, %v5304
      %v5418 = vpop.permute.xlu0 %5417
      %5421 = vset.pattern.permute.xlu0 0
      %5422 = vperm.xlu0 %5421, %v5305
      %v5423 = vpop.permute.xlu0 %5422
      %5426 = vset.pattern.permute.xlu0 0
      %5427 = vperm.xlu0 %5426, %v5306
      %v5428 = vpop.permute.xlu0 %5427
      %5431 = vset.pattern.permute.xlu0 0
      %5432 = vperm.xlu0 %5431, %v5307
      %v5433 = vpop.permute.xlu0 %5432
      %5436 = vset.pattern.permute.xlu0 0
      %5437 = vperm.xlu0 %5436, %v5308
      %v5438 = vpop.permute.xlu0 %5437
      %5441 = vset.pattern.permute.xlu0 0
      %5442 = vperm.xlu0 %5441, %v5309
      %v5443 = vpop.permute.xlu0 %5442
      %5446 = vset.pattern.permute.xlu0 0
      %5447 = vperm.xlu0 %5446, %v5310
      %v5448 = vpop.permute.xlu0 %5447
      %5451 = vset.pattern.permute.xlu0 0
      %5452 = vperm.xlu0 %5451, %v5311
      %v5453 = vpop.permute.xlu0 %5452
      %5456 = vset.pattern.permute.xlu0 0
      %5457 = vperm.xlu0 %5456, %v5312
      %v5458 = vpop.permute.xlu0 %5457
      %5461 = vset.pattern.permute.xlu0 0
      %5462 = vperm.xlu0 %5461, %v5313
      %v5463 = vpop.permute.xlu0 %5462
      %5466 = vset.pattern.permute.xlu0 0
      %5467 = vperm.xlu0 %5466, %v5314
      %v5468 = vpop.permute.xlu0 %5467
      %5471 = vset.pattern.permute.xlu0 0
      %5472 = vperm.xlu0 %5471, %v5315
      %v5473 = vpop.permute.xlu0 %5472
      %5476 = vset.pattern.permute.xlu0 0
      %5477 = vperm.xlu0 %5476, %v5316
      %v5478 = vpop.permute.xlu0 %5477
      %5481 = vset.pattern.permute.xlu0 0
      %5482 = vperm.xlu0 %5481, %v5317
      %v5483 = vpop.permute.xlu0 %5482
      %5486 = vset.pattern.permute.xlu0 0
      %5487 = vperm.xlu0 %5486, %v5318
      %v5488 = vpop.permute.xlu0 %5487
      %5491 = vset.pattern.permute.xlu0 0
      %5492 = vperm.xlu0 %5491, %v5319
      %v5493 = vpop.permute.xlu0 %5492
      %5496 = vset.pattern.permute.xlu0 0
      %5497 = vperm.xlu0 %5496, %v5320
      %v5498 = vpop.permute.xlu0 %5497
      %5501 = vset.pattern.permute.xlu0 0
      %5502 = vperm.xlu0 %5501, %v5321
      %v5503 = vpop.permute.xlu0 %5502
      %5506 = vset.pattern.permute.xlu0 0
      %5507 = vperm.xlu0 %5506, %v5322
      %v5508 = vpop.permute.xlu0 %5507
      %5511 = vset.pattern.permute.xlu0 0
      %5512 = vperm.xlu0 %5511, %v5323
      %v5513 = vpop.permute.xlu0 %5512
      %5516 = vset.pattern.permute.xlu0 0
      %5517 = vperm.xlu0 %5516, %v5324
      %v5518 = vpop.permute.xlu0 %5517
      %5521 = vset.pattern.permute.xlu0 0
      %5522 = vperm.xlu0 %5521, %v5325
      %v5523 = vpop.permute.xlu0 %5522
      %5526 = vset.pattern.permute.xlu0 0
      %5527 = vperm.xlu0 %5526, %v5326
      %v5528 = vpop.permute.xlu0 %5527
      %5531 = vset.pattern.permute.xlu0 0
      %5532 = vperm.xlu0 %5531, %v5327
      %v5533 = vpop.permute.xlu0 %5532
      %5536 = vset.pattern.permute.xlu0 0
      %5537 = vperm.xlu0 %5536, %v5328
      %v5538 = vpop.permute.xlu0 %5537
      %5541 = vset.pattern.permute.xlu0 0
      %5542 = vperm.xlu0 %5541, %v5329
      %v5543 = vpop.permute.xlu0 %5542
      %5546 = vset.pattern.permute.xlu0 0
      %5547 = vperm.xlu0 %5546, %v5330
      %v5548 = vpop.permute.xlu0 %5547
      %5551 = vset.pattern.permute.xlu0 0
      %5552 = vperm.xlu0 %5551, %v5331
      %v5553 = vpop.permute.xlu0 %5552
      %5556 = vset.pattern.permute.xlu0 0
      %5557 = vperm.xlu0 %5556, %v5332
      %v5558 = vpop.permute.xlu0 %5557
      %5561 = vset.pattern.permute.xlu0 0
      %5562 = vperm.xlu0 %5561, %v5333
      %v5563 = vpop.permute.xlu0 %5562
      %5566 = vset.pattern.permute.xlu0 0
      %5567 = vperm.xlu0 %5566, %v5334
      %v5568 = vpop.permute.xlu0 %5567
      %5571 = vset.pattern.permute.xlu0 0
      %5572 = vperm.xlu0 %5571, %v5335
      %v5573 = vpop.permute.xlu0 %5572
      %5576 = vset.pattern.permute.xlu0 0
      %5577 = vperm.xlu0 %5576, %v5336
      %v5578 = vpop.permute.xlu0 %5577
      %5581 = vset.pattern.permute.xlu0 0
      %5582 = vperm.xlu0 %5581, %v5337
      %v5583 = vpop.permute.xlu0 %5582
      %5586 = vset.pattern.permute.xlu0 0
      %5587 = vperm.xlu0 %5586, %v5338
      %v5588 = vpop.permute.xlu0 %5587
      %5591 = vset.pattern.permute.xlu0 0
      %5592 = vperm.xlu0 %5591, %v5339
      %v5593 = vpop.permute.xlu0 %5592
      %5596 = vset.pattern.permute.xlu0 0
      %5597 = vperm.xlu0 %5596, %v5340
      %v5598 = vpop.permute.xlu0 %5597
      %5601 = vset.pattern.permute.xlu0 0
      %5602 = vperm.xlu0 %5601, %v5341
      %v5603 = vpop.permute.xlu0 %5602
      %5606 = vset.pattern.permute.xlu0 0
      %5607 = vperm.xlu0 %5606, %v5342
      %v5608 = vpop.permute.xlu0 %5607
      %5611 = vset.pattern.permute.xlu0 0
      %5612 = vperm.xlu0 %5611, %v5343
      %v5613 = vpop.permute.xlu0 %5612
      %5616 = vset.pattern.permute.xlu0 0
      %5617 = vperm.xlu0 %5616, %v5344
      %v5618 = vpop.permute.xlu0 %5617
      %5621 = vset.pattern.permute.xlu0 0
      %5622 = vperm.xlu0 %5621, %v5345
      %v5623 = vpop.permute.xlu0 %5622
      %5626 = vset.pattern.permute.xlu0 0
      %5627 = vperm.xlu0 %5626, %v5346
      %v5628 = vpop.permute.xlu0 %5627
      %5631 = vset.pattern.permute.xlu0 0
      %5632 = vperm.xlu0 %5631, %v5347
      %v5633 = vpop.permute.xlu0 %5632
      %5636 = vset.pattern.permute.xlu0 0
      %5637 = vperm.xlu0 %5636, %v5348
      %v5638 = vpop.permute.xlu0 %5637
      %5641 = vset.pattern.permute.xlu0 0
      %5642 = vperm.xlu0 %5641, %v5349
      %v5643 = vpop.permute.xlu0 %5642
      %5646 = vset.pattern.permute.xlu0 0
      %5647 = vperm.xlu0 %5646, %v5350
      %v5648 = vpop.permute.xlu0 %5647
      %5651 = vset.pattern.permute.xlu0 0
      %5652 = vperm.xlu0 %5651, %v5351
      %v5653 = vpop.permute.xlu0 %5652
      %5656 = vset.pattern.permute.xlu0 0
      %5657 = vperm.xlu0 %5656, %v5352
      %v5658 = vpop.permute.xlu0 %5657
      %5661 = vset.pattern.permute.xlu0 0
      %5662 = vperm.xlu0 %5661, %v5353
      %v5663 = vpop.permute.xlu0 %5662
      %5666 = vset.pattern.permute.xlu0 0
      %5667 = vperm.xlu0 %5666, %v5354
      %v5668 = vpop.permute.xlu0 %5667
      %5671 = vset.pattern.permute.xlu0 0
      %5672 = vperm.xlu0 %5671, %v5355
      %v5673 = vpop.permute.xlu0 %5672
      %5676 = vset.pattern.permute.xlu0 0
      %5677 = vperm.xlu0 %5676, %v5356
      %v5678 = vpop.permute.xlu0 %5677
      %5681 = vset.pattern.permute.xlu0 0
      %5682 = vperm.xlu0 %5681, %v5357
      %v5683 = vpop.permute.xlu0 %5682
      %5686 = vset.pattern.permute.xlu0 0
      %5687 = vperm.xlu0 %5686, %v5358
      %v5688 = vpop.permute.xlu0 %5687
      %5691 = vset.pattern.permute.xlu0 0
      %5692 = vperm.xlu0 %5691, %v5359
      %v5693 = vpop.permute.xlu0 %5692
      %5696 = vset.pattern.permute.xlu0 0
      %5697 = vperm.xlu0 %5696, %v5360
      %v5698 = vpop.permute.xlu0 %5697
      %5701 = vset.pattern.permute.xlu0 0
      %5702 = vperm.xlu0 %5701, %v5361
      %v5703 = vpop.permute.xlu0 %5702
      %5706 = vset.pattern.permute.xlu0 0
      %5707 = vperm.xlu0 %5706, %v5362
      %v5708 = vpop.permute.xlu0 %5707
      %5711 = vset.pattern.permute.xlu0 0
      %5712 = vperm.xlu0 %5711, %v5363
      %v5713 = vpop.permute.xlu0 %5712
      %5716 = vset.pattern.permute.xlu0 0
      %5717 = vperm.xlu0 %5716, %v5364
      %v5718 = vpop.permute.xlu0 %5717
      %5721 = vset.pattern.permute.xlu0 0
      %5722 = vperm.xlu0 %5721, %v5365
      %v5723 = vpop.permute.xlu0 %5722
      %5726 = vset.pattern.permute.xlu0 0
      %5727 = vperm.xlu0 %5726, %v5366
      %v5728 = vpop.permute.xlu0 %5727
      %5731 = vset.pattern.permute.xlu0 0
      %5732 = vperm.xlu0 %5731, %v5367
      %v5733 = vpop.permute.xlu0 %5732
      %5736 = vset.pattern.permute.xlu0 0
      %5737 = vperm.xlu0 %5736, %v5368
      %v5738 = vpop.permute.xlu0 %5737
      %5741 = vset.pattern.permute.xlu0 0
      %5742 = vperm.xlu0 %5741, %v5369
      %v5743 = vpop.permute.xlu0 %5742
      %5746 = vset.pattern.permute.xlu0 0
      %5747 = vperm.xlu0 %5746, %v5370
      %v5748 = vpop.permute.xlu0 %5747
      %5751 = vset.pattern.permute.xlu0 0
      %5752 = vperm.xlu0 %5751, %v5371
      %v5753 = vpop.permute.xlu0 %5752
      %5756 = vset.pattern.permute.xlu0 0
      %5757 = vperm.xlu0 %5756, %v5372
      %v5758 = vpop.permute.xlu0 %5757
      %5761 = vset.pattern.permute.xlu0 0
      %5762 = vperm.xlu0 %5761, %v5373
      %v5763 = vpop.permute.xlu0 %5762
      %5766 = vset.pattern.permute.xlu0 0
      %5767 = vperm.xlu0 %5766, %v5374
      %v5768 = vpop.permute.xlu0 %5767
      %5771 = vset.pattern.permute.xlu0 0
      %5772 = vperm.xlu0 %5771, %v5375
      %v5773 = vpop.permute.xlu0 %5772
      %5776 = vset.pattern.permute.xlu0 0
      %5777 = vperm.xlu0 %5776, %v5376
      %v5778 = vpop.permute.xlu0 %5777
      %5781 = vset.pattern.permute.xlu0 0
      %5782 = vperm.xlu0 %5781, %v5377
      %v5783 = vpop.permute.xlu0 %5782
      %5786 = vset.pattern.permute.xlu0 0
      %5787 = vperm.xlu0 %5786, %v5378
      %v5788 = vpop.permute.xlu0 %5787
      %5791 = vset.pattern.permute.xlu0 0
      %5792 = vperm.xlu0 %5791, %v5379
      %v5793 = vpop.permute.xlu0 %5792
      %5796 = vset.pattern.permute.xlu0 0
      %5797 = vperm.xlu0 %5796, %v5380
      %v5798 = vpop.permute.xlu0 %5797
      %5801 = vset.pattern.permute.xlu0 0
      %5802 = vperm.xlu0 %5801, %v5381
      %v5803 = vpop.permute.xlu0 %5802
      %5806 = vset.pattern.permute.xlu0 0
      %5807 = vperm.xlu0 %5806, %v5382
      %v5808 = vpop.permute.xlu0 %5807
      %5811 = vset.pattern.permute.xlu0 0
      %5812 = vperm.xlu0 %5811, %v5383
      %v5813 = vpop.permute.xlu0 %5812
      %5816 = vset.pattern.permute.xlu0 0
      %5817 = vperm.xlu0 %5816, %v5384
      %v5818 = vpop.permute.xlu0 %5817
      %5821 = vset.pattern.permute.xlu0 0
      %5822 = vperm.xlu0 %5821, %v5385
      %v5823 = vpop.permute.xlu0 %5822
      %5826 = vset.pattern.permute.xlu0 0
      %5827 = vperm.xlu0 %5826, %v5386
      %v5828 = vpop.permute.xlu0 %5827
      %5831 = vset.pattern.permute.xlu0 0
      %5832 = vperm.xlu0 %5831, %v5387
      %v5833 = vpop.permute.xlu0 %5832
      %5836 = vset.pattern.permute.xlu0 0
      %5837 = vperm.xlu0 %5836, %v5388
      %v5838 = vpop.permute.xlu0 %5837
      %5841 = vset.pattern.permute.xlu0 0
      %5842 = vperm.xlu0 %5841, %v5389
      %v5843 = vpop.permute.xlu0 %5842
      %5846 = vset.pattern.permute.xlu0 0
      %5847 = vperm.xlu0 %5846, %v5390
      %v5848 = vpop.permute.xlu0 %5847
      %5851 = vset.pattern.permute.xlu0 0
      %5852 = vperm.xlu0 %5851, %v5391
      %v5853 = vpop.permute.xlu0 %5852
      %5856 = vset.pattern.permute.xlu0 0
      %5857 = vperm.xlu0 %5856, %v5392
      %v5858 = vpop.permute.xlu0 %5857
      %5861 = vset.pattern.permute.xlu0 0
      %5862 = vperm.xlu0 %5861, %v5393
      %v5863 = vpop.permute.xlu0 %5862
      %5866 = vset.pattern.permute.xlu0 0
      %5867 = vperm.xlu0 %5866, %v5394
      %v5868 = vpop.permute.xlu0 %5867
      %5871 = vset.pattern.permute.xlu0 0
      %5872 = vperm.xlu0 %5871, %v5395
      %v5873 = vpop.permute.xlu0 %5872
      %5876 = vset.pattern.permute.xlu0 0
      %5877 = vperm.xlu0 %5876, %v5396
      %v5878 = vpop.permute.xlu0 %5877
      %5881 = vset.pattern.permute.xlu0 0
      %5882 = vperm.xlu0 %5881, %v5397
      %v5883 = vpop.permute.xlu0 %5882
      %5886 = vset.pattern.permute.xlu0 0
      %5887 = vperm.xlu0 %5886, %v5398
      %v5888 = vpop.permute.xlu0 %5887
      %5891 = vset.pattern.permute.xlu0 0
      %5892 = vperm.xlu0 %5891, %v5399
      %v5893 = vpop.permute.xlu0 %5892
      %5896 = vset.pattern.permute.xlu0 0
      %5897 = vperm.xlu0 %5896, %v5400
      %v5898 = vpop.permute.xlu0 %5897
      %5901 = vset.pattern.permute.xlu0 0
      %5902 = vperm.xlu0 %5901, %v5401
      %v5903 = vpop.permute.xlu0 %5902
      %5906 = vset.pattern.permute.xlu0 0
      %5907 = vperm.xlu0 %5906, %v5402
      %v5908 = vpop.permute.xlu0 %5907
      %5911 = vset.pattern.permute.xlu0 0
      %5912 = vperm.xlu0 %5911, %v5403
      %v5913 = vpop.permute.xlu0 %5912
      %5916 = vset.pattern.permute.xlu0 0
      %5917 = vperm.xlu0 %5916, %v5404
      %v5918 = vpop.permute.xlu0 %5917
      %5921 = vset.pattern.permute.xlu0 0
      %5922 = vperm.xlu0 %5921, %v5405
      %v5923 = vpop.permute.xlu0 %5922
      %5926 = vset.pattern.permute.xlu0 0
      %5927 = vperm.xlu0 %5926, %v5406
      %v5928 = vpop.permute.xlu0 %5927
      %v5930 = vlaneseq
      %v5931 = vshrl.u32 %v5930, 7
      %v5932 = vsub.s32 0, %v5931
      %v5933 = vrot.slane %v5409, %v5932
      %v5934 = vmul.f32 %v5413, %v5933
      %v5935 = vmul.f32 %v5418, %v5933
      %v5936 = vmul.f32 %v5423, %v5933
      %v5937 = vmul.f32 %v5428, %v5933
      %v5938 = vmul.f32 %v5433, %v5933
      %v5939 = vmul.f32 %v5438, %v5933
      %v5940 = vmul.f32 %v5443, %v5933
      %v5941 = vmul.f32 %v5448, %v5933
      %v5942 = vmul.f32 %v5453, %v5933
      %v5943 = vmul.f32 %v5458, %v5933
      %v5944 = vmul.f32 %v5463, %v5933
      %v5945 = vmul.f32 %v5468, %v5933
      %v5946 = vmul.f32 %v5473, %v5933
      %v5947 = vmul.f32 %v5478, %v5933
      %v5948 = vmul.f32 %v5483, %v5933
      %v5949 = vmul.f32 %v5488, %v5933
      %v5950 = vmul.f32 %v5493, %v5933
      %v5951 = vmul.f32 %v5498, %v5933
      %v5952 = vmul.f32 %v5503, %v5933
      %v5953 = vmul.f32 %v5508, %v5933
      %v5954 = vmul.f32 %v5513, %v5933
      %v5955 = vmul.f32 %v5518, %v5933
      %v5956 = vmul.f32 %v5523, %v5933
      %v5957 = vmul.f32 %v5528, %v5933
      %v5958 = vmul.f32 %v5533, %v5933
      %v5959 = vmul.f32 %v5538, %v5933
      %v5960 = vmul.f32 %v5543, %v5933
      %v5961 = vmul.f32 %v5548, %v5933
      %v5962 = vmul.f32 %v5553, %v5933
      %v5963 = vmul.f32 %v5558, %v5933
      %v5964 = vmul.f32 %v5563, %v5933
      %v5965 = vmul.f32 %v5568, %v5933
      %v5966 = vmul.f32 %v5573, %v5933
      %v5967 = vmul.f32 %v5578, %v5933
      %v5968 = vmul.f32 %v5583, %v5933
      %v5969 = vmul.f32 %v5588, %v5933
      %v5970 = vmul.f32 %v5593, %v5933
      %v5971 = vmul.f32 %v5598, %v5933
      %v5972 = vmul.f32 %v5603, %v5933
      %v5973 = vmul.f32 %v5608, %v5933
      %v5974 = vmul.f32 %v5613, %v5933
      %v5975 = vmul.f32 %v5618, %v5933
      %v5976 = vmul.f32 %v5623, %v5933
      %v5977 = vmul.f32 %v5628, %v5933
      %v5978 = vmul.f32 %v5633, %v5933
      %v5979 = vmul.f32 %v5638, %v5933
      %v5980 = vmul.f32 %v5643, %v5933
      %v5981 = vmul.f32 %v5648, %v5933
      %v5982 = vmul.f32 %v5653, %v5933
      %v5983 = vmul.f32 %v5658, %v5933
      %v5984 = vmul.f32 %v5663, %v5933
      %v5985 = vmul.f32 %v5668, %v5933
      %v5986 = vmul.f32 %v5673, %v5933
      %v5987 = vmul.f32 %v5678, %v5933
      %v5988 = vmul.f32 %v5683, %v5933
      %v5989 = vmul.f32 %v5688, %v5933
      %v5990 = vmul.f32 %v5693, %v5933
      %v5991 = vmul.f32 %v5698, %v5933
      %v5992 = vmul.f32 %v5703, %v5933
      %v5993 = vmul.f32 %v5708, %v5933
      %v5994 = vmul.f32 %v5713, %v5933
      %v5995 = vmul.f32 %v5718, %v5933
      %v5996 = vmul.f32 %v5723, %v5933
      %v5997 = vmul.f32 %v5728, %v5933
      %v5998 = vmul.f32 %v5733, %v5933
      %v5999 = vmul.f32 %v5738, %v5933
      %v6000 = vmul.f32 %v5743, %v5933
      %v6001 = vmul.f32 %v5748, %v5933
      %v6002 = vmul.f32 %v5753, %v5933
      %v6003 = vmul.f32 %v5758, %v5933
      %v6004 = vmul.f32 %v5763, %v5933
      %v6005 = vmul.f32 %v5768, %v5933
      %v6006 = vmul.f32 %v5773, %v5933
      %v6007 = vmul.f32 %v5778, %v5933
      %v6008 = vmul.f32 %v5783, %v5933
      %v6009 = vmul.f32 %v5788, %v5933
      %v6010 = vmul.f32 %v5793, %v5933
      %v6011 = vmul.f32 %v5798, %v5933
      %v6012 = vmul.f32 %v5803, %v5933
      %v6013 = vmul.f32 %v5808, %v5933
      %v6014 = vmul.f32 %v5813, %v5933
      %v6015 = vmul.f32 %v5818, %v5933
      %v6016 = vmul.f32 %v5823, %v5933
      %v6017 = vmul.f32 %v5828, %v5933
      %v6018 = vmul.f32 %v5833, %v5933
      %v6019 = vmul.f32 %v5838, %v5933
      %v6020 = vmul.f32 %v5843, %v5933
      %v6021 = vmul.f32 %v5848, %v5933
      %v6022 = vmul.f32 %v5853, %v5933
      %v6023 = vmul.f32 %v5858, %v5933
      %v6024 = vmul.f32 %v5863, %v5933
      %v6025 = vmul.f32 %v5868, %v5933
      %v6026 = vmul.f32 %v5873, %v5933
      %v6027 = vmul.f32 %v5878, %v5933
      %v6028 = vmul.f32 %v5883, %v5933
      %v6029 = vmul.f32 %v5888, %v5933
      %v6030 = vmul.f32 %v5893, %v5933
      %v6031 = vmul.f32 %v5898, %v5933
      %v6032 = vmul.f32 %v5903, %v5933
      %v6033 = vmul.f32 %v5908, %v5933
      %v6034 = vmul.f32 %v5913, %v5933
      %v6035 = vmul.f32 %v5918, %v5933
      %v6036 = vmul.f32 %v5923, %v5933
      %v6037 = vmul.f32 %v5928, %v5933
      %v6038 = vadd.f32 %v5043, %v5934
      %v6039 = vadd.f32 %v5044, %v5935
      %v6040 = vadd.f32 %v5045, %v5936
      %v6041 = vadd.f32 %v5046, %v5937
      %v6042 = vadd.f32 %v5047, %v5938
      %v6043 = vadd.f32 %v5048, %v5939
      %v6044 = vadd.f32 %v5049, %v5940
      %v6045 = vadd.f32 %v5050, %v5941
      %v6046 = vadd.f32 %v5051, %v5942
      %v6047 = vadd.f32 %v5052, %v5943
      %v6048 = vadd.f32 %v5053, %v5944
      %v6049 = vadd.f32 %v5054, %v5945
      %v6050 = vadd.f32 %v5055, %v5946
      %v6051 = vadd.f32 %v5056, %v5947
      %v6052 = vadd.f32 %v5057, %v5948
      %v6053 = vadd.f32 %v5058, %v5949
      %v6054 = vadd.f32 %v5059, %v5950
      %v6055 = vadd.f32 %v5060, %v5951
      %v6056 = vadd.f32 %v5061, %v5952
      %v6057 = vadd.f32 %v5062, %v5953
      %v6058 = vadd.f32 %v5063, %v5954
      %v6059 = vadd.f32 %v5064, %v5955
      %v6060 = vadd.f32 %v5065, %v5956
      %v6061 = vadd.f32 %v5066, %v5957
      %v6062 = vadd.f32 %v5067, %v5958
      %v6063 = vadd.f32 %v5068, %v5959
      %v6064 = vadd.f32 %v5069, %v5960
      %v6065 = vadd.f32 %v5070, %v5961
      %v6066 = vadd.f32 %v5071, %v5962
      %v6067 = vadd.f32 %v5072, %v5963
      %v6068 = vadd.f32 %v5073, %v5964
      %v6069 = vadd.f32 %v5074, %v5965
      %v6070 = vadd.f32 %v5075, %v5966
      %v6071 = vadd.f32 %v5076, %v5967
      %v6072 = vadd.f32 %v5077, %v5968
      %v6073 = vadd.f32 %v5078, %v5969
      %v6074 = vadd.f32 %v5079, %v5970
      %v6075 = vadd.f32 %v5080, %v5971
      %v6076 = vadd.f32 %v5081, %v5972
      %v6077 = vadd.f32 %v5082, %v5973
      %v6078 = vadd.f32 %v5083, %v5974
      %v6079 = vadd.f32 %v5084, %v5975
      %v6080 = vadd.f32 %v5085, %v5976
      %v6081 = vadd.f32 %v5086, %v5977
      %v6082 = vadd.f32 %v5087, %v5978
      %v6083 = vadd.f32 %v5088, %v5979
      %v6084 = vadd.f32 %v5089, %v5980
      %v6085 = vadd.f32 %v5090, %v5981
      %v6086 = vadd.f32 %v5091, %v5982
      %v6087 = vadd.f32 %v5092, %v5983
      %v6088 = vadd.f32 %v5093, %v5984
      %v6089 = vadd.f32 %v5094, %v5985
      %v6090 = vadd.f32 %v5095, %v5986
      %v6091 = vadd.f32 %v5096, %v5987
      %v6092 = vadd.f32 %v5097, %v5988
      %v6093 = vadd.f32 %v5098, %v5989
      %v6094 = vadd.f32 %v5099, %v5990
      %v6095 = vadd.f32 %v5100, %v5991
      %v6096 = vadd.f32 %v5101, %v5992
      %v6097 = vadd.f32 %v5102, %v5993
      %v6098 = vadd.f32 %v5103, %v5994
      %v6099 = vadd.f32 %v5104, %v5995
      %v6100 = vadd.f32 %v5105, %v5996
      %v6101 = vadd.f32 %v5106, %v5997
      %v6102 = vadd.f32 %v5107, %v5998
      %v6103 = vadd.f32 %v5108, %v5999
      %v6104 = vadd.f32 %v5109, %v6000
      %v6105 = vadd.f32 %v5110, %v6001
      %v6106 = vadd.f32 %v5111, %v6002
      %v6107 = vadd.f32 %v5112, %v6003
      %v6108 = vadd.f32 %v5113, %v6004
      %v6109 = vadd.f32 %v5114, %v6005
      %v6110 = vadd.f32 %v5115, %v6006
      %v6111 = vadd.f32 %v5116, %v6007
      %v6112 = vadd.f32 %v5117, %v6008
      %v6113 = vadd.f32 %v5118, %v6009
      %v6114 = vadd.f32 %v5119, %v6010
      %v6115 = vadd.f32 %v5120, %v6011
      %v6116 = vadd.f32 %v5121, %v6012
      %v6117 = vadd.f32 %v5122, %v6013
      %v6118 = vadd.f32 %v5123, %v6014
      %v6119 = vadd.f32 %v5124, %v6015
      %v6120 = vadd.f32 %v5125, %v6016
      %v6121 = vadd.f32 %v5126, %v6017
      %v6122 = vadd.f32 %v5127, %v6018
      %v6123 = vadd.f32 %v5128, %v6019
      %v6124 = vadd.f32 %v5129, %v6020
      %v6125 = vadd.f32 %v5130, %v6021
      %v6126 = vadd.f32 %v5131, %v6022
      %v6127 = vadd.f32 %v5132, %v6023
      %v6128 = vadd.f32 %v5133, %v6024
      %v6129 = vadd.f32 %v5134, %v6025
      %v6130 = vadd.f32 %v5135, %v6026
      %v6131 = vadd.f32 %v5136, %v6027
      %v6132 = vadd.f32 %v5137, %v6028
      %v6133 = vadd.f32 %v5138, %v6029
      %v6134 = vadd.f32 %v5139, %v6030
      %v6135 = vadd.f32 %v5140, %v6031
      %v6136 = vadd.f32 %v5141, %v6032
      %v6137 = vadd.f32 %v5142, %v6033
      %v6138 = vadd.f32 %v5143, %v6034
      %v6139 = vadd.f32 %v5144, %v6035
      %v6140 = vadd.f32 %v5145, %v6036
      %v6141 = vadd.f32 %v5146, %v6037
      %s6142 = scalar_lea.vmem %s165, 80
      %v6143 = vld [vmem:[%s6142] sm:$0xff]
      %v6144 = vld [vmem:[%s6142 + $0x8] sm:$0xff]
      %v6145 = vld [vmem:[%s6142 + $0x10] sm:$0xff]
      %v6146 = vld [vmem:[%s6142 + $0x18] sm:$0xff]
      %v6147 = vld [vmem:[%s6142 + $0x28] sm:$0xff]
      %v6148 = vld [vmem:[%s6142 + $0x30] sm:$0xff]
      %v6149 = vld [vmem:[%s6142 + $0x38] sm:$0xff]
      %v6150 = vld [vmem:[%s6142 + $0x40] sm:$0xff]
      %v6151 = vld [vmem:[%s6142 + $0x50] sm:$0xff]
      %v6152 = vld [vmem:[%s6142 + $0x58] sm:$0xff]
      %v6153 = vld [vmem:[%s6142 + $0x60] sm:$0xff]
      %v6154 = vld [vmem:[%s6142 + $0x68] sm:$0xff]
      %v6155 = vld [vmem:[%s6142 + $0x78] sm:$0xff]
      %v6156 = vld [vmem:[%s6142 + $0x80] sm:$0xff]
      %v6157 = vld [vmem:[%s6142 + $0x88] sm:$0xff]
      %v6158 = vld [vmem:[%s6142 + $0x90] sm:$0xff]
      %v6159 = vld [vmem:[%s6142 + $0xa0] sm:$0xff]
      %v6160 = vld [vmem:[%s6142 + $0xa8] sm:$0xff]
      %v6161 = vld [vmem:[%s6142 + $0xb0] sm:$0xff]
      %v6162 = vld [vmem:[%s6142 + $0xb8] sm:$0xff]
      %v6163 = vld [vmem:[%s6142 + $0xc8] sm:$0xff]
      %v6164 = vld [vmem:[%s6142 + $0xd0] sm:$0xff]
      %v6165 = vld [vmem:[%s6142 + $0xd8] sm:$0xff]
      %v6166 = vld [vmem:[%s6142 + $0xe0] sm:$0xff]
      %v6167 = vld [vmem:[%s6142 + $0xf0] sm:$0xff]
      %v6168 = vld [vmem:[%s6142 + $0xf8] sm:$0xff]
      %v6169 = vld [vmem:[%s6142 + $0x100] sm:$0xff]
      %v6170 = vld [vmem:[%s6142 + $0x108] sm:$0xff]
      %v6171 = vld [vmem:[%s6142 + $0x118] sm:$0xff]
      %v6172 = vld [vmem:[%s6142 + $0x120] sm:$0xff]
      %v6173 = vld [vmem:[%s6142 + $0x128] sm:$0xff]
      %v6174 = vld [vmem:[%s6142 + $0x130] sm:$0xff]
      %v6175 = vld [vmem:[%s6142 + $0x140] sm:$0xff]
      %v6176 = vld [vmem:[%s6142 + $0x148] sm:$0xff]
      %v6177 = vld [vmem:[%s6142 + $0x150] sm:$0xff]
      %v6178 = vld [vmem:[%s6142 + $0x158] sm:$0xff]
      %v6179 = vld [vmem:[%s6142 + $0x168] sm:$0xff]
      %v6180 = vld [vmem:[%s6142 + $0x170] sm:$0xff]
      %v6181 = vld [vmem:[%s6142 + $0x178] sm:$0xff]
      %v6182 = vld [vmem:[%s6142 + $0x180] sm:$0xff]
      %v6183 = vld [vmem:[%s6142 + $0x190] sm:$0xff]
      %v6184 = vld [vmem:[%s6142 + $0x198] sm:$0xff]
      %v6185 = vld [vmem:[%s6142 + $0x1a0] sm:$0xff]
      %v6186 = vld [vmem:[%s6142 + $0x1a8] sm:$0xff]
      %v6187 = vld [vmem:[%s6142 + $0x1b8] sm:$0xff]
      %v6188 = vld [vmem:[%s6142 + $0x1c0] sm:$0xff]
      %v6189 = vld [vmem:[%s6142 + $0x1c8] sm:$0xff]
      %v6190 = vld [vmem:[%s6142 + $0x1d0] sm:$0xff]
      %v6191 = vld [vmem:[%s6142 + $0x1e0] sm:$0xff]
      %v6192 = vld [vmem:[%s6142 + $0x1e8] sm:$0xff]
      %v6193 = vld [vmem:[%s6142 + $0x1f0] sm:$0xff]
      %v6194 = vld [vmem:[%s6142 + $0x1f8] sm:$0xff]
      %v6195 = vld [vmem:[%s6142 + $0x208] sm:$0xff]
      %v6196 = vld [vmem:[%s6142 + $0x210] sm:$0xff]
      %v6197 = vld [vmem:[%s6142 + $0x218] sm:$0xff]
      %v6198 = vld [vmem:[%s6142 + $0x220] sm:$0xff]
      %v6199 = vld [vmem:[%s6142 + $0x230] sm:$0xff]
      %v6200 = vld [vmem:[%s6142 + $0x238] sm:$0xff]
      %v6201 = vld [vmem:[%s6142 + $0x240] sm:$0xff]
      %v6202 = vld [vmem:[%s6142 + $0x248] sm:$0xff]
      %v6203 = vld [vmem:[%s6142 + $0x258] sm:$0xff]
      %v6204 = vld [vmem:[%s6142 + $0x260] sm:$0xff]
      %v6205 = vld [vmem:[%s6142 + $0x268] sm:$0xff]
      %v6206 = vld [vmem:[%s6142 + $0x270] sm:$0xff]
      %v6207 = vld [vmem:[%s6142 + $0x280] sm:$0xff]
      %v6208 = vld [vmem:[%s6142 + $0x288] sm:$0xff]
      %v6209 = vld [vmem:[%s6142 + $0x290] sm:$0xff]
      %v6210 = vld [vmem:[%s6142 + $0x298] sm:$0xff]
      %v6211 = vld [vmem:[%s6142 + $0x2a8] sm:$0xff]
      %v6212 = vld [vmem:[%s6142 + $0x2b0] sm:$0xff]
      %v6213 = vld [vmem:[%s6142 + $0x2b8] sm:$0xff]
      %v6214 = vld [vmem:[%s6142 + $0x2c0] sm:$0xff]
      %v6215 = vld [vmem:[%s6142 + $0x2d0] sm:$0xff]
      %v6216 = vld [vmem:[%s6142 + $0x2d8] sm:$0xff]
      %v6217 = vld [vmem:[%s6142 + $0x2e0] sm:$0xff]
      %v6218 = vld [vmem:[%s6142 + $0x2e8] sm:$0xff]
      %v6219 = vld [vmem:[%s6142 + $0x2f8] sm:$0xff]
      %v6220 = vld [vmem:[%s6142 + $0x300] sm:$0xff]
      %v6221 = vld [vmem:[%s6142 + $0x308] sm:$0xff]
      %v6222 = vld [vmem:[%s6142 + $0x310] sm:$0xff]
      %v6223 = vld [vmem:[%s6142 + $0x320] sm:$0xff]
      %v6224 = vld [vmem:[%s6142 + $0x328] sm:$0xff]
      %v6225 = vld [vmem:[%s6142 + $0x330] sm:$0xff]
      %v6226 = vld [vmem:[%s6142 + $0x338] sm:$0xff]
      %v6227 = vld [vmem:[%s6142 + $0x348] sm:$0xff]
      %v6228 = vld [vmem:[%s6142 + $0x350] sm:$0xff]
      %v6229 = vld [vmem:[%s6142 + $0x358] sm:$0xff]
      %v6230 = vld [vmem:[%s6142 + $0x360] sm:$0xff]
      %v6231 = vld [vmem:[%s6142 + $0x370] sm:$0xff]
      %v6232 = vld [vmem:[%s6142 + $0x378] sm:$0xff]
      %v6233 = vld [vmem:[%s6142 + $0x380] sm:$0xff]
      %v6234 = vld [vmem:[%s6142 + $0x388] sm:$0xff]
      %v6235 = vld [vmem:[%s6142 + $0x398] sm:$0xff]
      %v6236 = vld [vmem:[%s6142 + $0x3a0] sm:$0xff]
      %v6237 = vld [vmem:[%s6142 + $0x3a8] sm:$0xff]
      %v6238 = vld [vmem:[%s6142 + $0x3b0] sm:$0xff]
      %v6239 = vld [vmem:[%s6142 + $0x3c0] sm:$0xff]
      %v6240 = vld [vmem:[%s6142 + $0x3c8] sm:$0xff]
      %v6241 = vld [vmem:[%s6142 + $0x3d0] sm:$0xff]
      %v6242 = vld [vmem:[%s6142 + $0x3d8] sm:$0xff]
      %v6243 = vld [vmem:[%s6142 + $0x3e8] sm:$0xff]
      %v6244 = vld [vmem:[%s6142 + $0x3f0] sm:$0xff]
      %v6245 = vld [vmem:[%s6142 + $0x3f8] sm:$0xff]
      %v6246 = vld [vmem:[%s6142 + $0x400] sm:$0xff]
      %v6247 = vpack.c.bf16 %v6144, %v6143
      %v6248 = vpack.c.bf16 %v6146, %v6145
      %v6249 = vpack.c.bf16 %v6148, %v6147
      %v6250 = vpack.c.bf16 %v6150, %v6149
      %v6251 = vpack.c.bf16 %v6152, %v6151
      %v6252 = vpack.c.bf16 %v6154, %v6153
      %v6253 = vpack.c.bf16 %v6156, %v6155
      %v6254 = vpack.c.bf16 %v6158, %v6157
      %v6255 = vpack.c.bf16 %v6160, %v6159
      %v6256 = vpack.c.bf16 %v6162, %v6161
      %v6257 = vpack.c.bf16 %v6164, %v6163
      %v6258 = vpack.c.bf16 %v6166, %v6165
      %v6259 = vpack.c.bf16 %v6168, %v6167
      %v6260 = vpack.c.bf16 %v6170, %v6169
      %v6261 = vpack.c.bf16 %v6172, %v6171
      %v6262 = vpack.c.bf16 %v6174, %v6173
      %v6263 = vpack.c.bf16 %v6176, %v6175
      %v6264 = vpack.c.bf16 %v6178, %v6177
      %v6265 = vpack.c.bf16 %v6180, %v6179
      %v6266 = vpack.c.bf16 %v6182, %v6181
      %v6267 = vpack.c.bf16 %v6184, %v6183
      %v6268 = vpack.c.bf16 %v6186, %v6185
      %v6269 = vpack.c.bf16 %v6188, %v6187
      %v6270 = vpack.c.bf16 %v6190, %v6189
      %v6271 = vpack.c.bf16 %v6192, %v6191
      %v6272 = vpack.c.bf16 %v6194, %v6193
      %v6273 = vpack.c.bf16 %v6196, %v6195
      %v6274 = vpack.c.bf16 %v6198, %v6197
      %v6275 = vpack.c.bf16 %v6200, %v6199
      %v6276 = vpack.c.bf16 %v6202, %v6201
      %v6277 = vpack.c.bf16 %v6204, %v6203
      %v6278 = vpack.c.bf16 %v6206, %v6205
      %v6279 = vpack.c.bf16 %v6208, %v6207
      %v6280 = vpack.c.bf16 %v6210, %v6209
      %v6281 = vpack.c.bf16 %v6212, %v6211
      %v6282 = vpack.c.bf16 %v6214, %v6213
      %v6283 = vpack.c.bf16 %v6216, %v6215
      %v6284 = vpack.c.bf16 %v6218, %v6217
      %v6285 = vpack.c.bf16 %v6220, %v6219
      %v6286 = vpack.c.bf16 %v6222, %v6221
      %v6287 = vpack.c.bf16 %v6224, %v6223
      %v6288 = vpack.c.bf16 %v6226, %v6225
      %v6289 = vpack.c.bf16 %v6228, %v6227
      %v6290 = vpack.c.bf16 %v6230, %v6229
      %v6291 = vpack.c.bf16 %v6232, %v6231
      %v6292 = vpack.c.bf16 %v6234, %v6233
      %v6293 = vpack.c.bf16 %v6236, %v6235
      %v6294 = vpack.c.bf16 %v6238, %v6237
      %v6295 = vpack.c.bf16 %v6240, %v6239
      %v6296 = vpack.c.bf16 %v6242, %v6241
      %v6297 = vpack.c.bf16 %v6244, %v6243
      %v6298 = vpack.c.bf16 %v6246, %v6245
      %v6299 = vunpack.c.l.bf16 %v6247
      %v6300 = vunpack.c.h.bf16 %v6247
      %v6301 = vunpack.c.l.bf16 %v6248
      %v6302 = vunpack.c.h.bf16 %v6248
      %v6303 = vunpack.c.l.bf16 %v6249
      %v6304 = vunpack.c.h.bf16 %v6249
      %v6305 = vunpack.c.l.bf16 %v6250
      %v6306 = vunpack.c.h.bf16 %v6250
      %v6307 = vunpack.c.l.bf16 %v6251
      %v6308 = vunpack.c.h.bf16 %v6251
      %v6309 = vunpack.c.l.bf16 %v6252
      %v6310 = vunpack.c.h.bf16 %v6252
      %v6311 = vunpack.c.l.bf16 %v6253
      %v6312 = vunpack.c.h.bf16 %v6253
      %v6313 = vunpack.c.l.bf16 %v6254
      %v6314 = vunpack.c.h.bf16 %v6254
      %v6315 = vunpack.c.l.bf16 %v6255
      %v6316 = vunpack.c.h.bf16 %v6255
      %v6317 = vunpack.c.l.bf16 %v6256
      %v6318 = vunpack.c.h.bf16 %v6256
      %v6319 = vunpack.c.l.bf16 %v6257
      %v6320 = vunpack.c.h.bf16 %v6257
      %v6321 = vunpack.c.l.bf16 %v6258
      %v6322 = vunpack.c.h.bf16 %v6258
      %v6323 = vunpack.c.l.bf16 %v6259
      %v6324 = vunpack.c.h.bf16 %v6259
      %v6325 = vunpack.c.l.bf16 %v6260
      %v6326 = vunpack.c.h.bf16 %v6260
      %v6327 = vunpack.c.l.bf16 %v6261
      %v6328 = vunpack.c.h.bf16 %v6261
      %v6329 = vunpack.c.l.bf16 %v6262
      %v6330 = vunpack.c.h.bf16 %v6262
      %v6331 = vunpack.c.l.bf16 %v6263
      %v6332 = vunpack.c.h.bf16 %v6263
      %v6333 = vunpack.c.l.bf16 %v6264
      %v6334 = vunpack.c.h.bf16 %v6264
      %v6335 = vunpack.c.l.bf16 %v6265
      %v6336 = vunpack.c.h.bf16 %v6265
      %v6337 = vunpack.c.l.bf16 %v6266
      %v6338 = vunpack.c.h.bf16 %v6266
      %v6339 = vunpack.c.l.bf16 %v6267
      %v6340 = vunpack.c.h.bf16 %v6267
      %v6341 = vunpack.c.l.bf16 %v6268
      %v6342 = vunpack.c.h.bf16 %v6268
      %v6343 = vunpack.c.l.bf16 %v6269
      %v6344 = vunpack.c.h.bf16 %v6269
      %v6345 = vunpack.c.l.bf16 %v6270
      %v6346 = vunpack.c.h.bf16 %v6270
      %v6347 = vunpack.c.l.bf16 %v6271
      %v6348 = vunpack.c.h.bf16 %v6271
      %v6349 = vunpack.c.l.bf16 %v6272
      %v6350 = vunpack.c.h.bf16 %v6272
      %v6351 = vunpack.c.l.bf16 %v6273
      %v6352 = vunpack.c.h.bf16 %v6273
      %v6353 = vunpack.c.l.bf16 %v6274
      %v6354 = vunpack.c.h.bf16 %v6274
      %v6355 = vunpack.c.l.bf16 %v6275
      %v6356 = vunpack.c.h.bf16 %v6275
      %v6357 = vunpack.c.l.bf16 %v6276
      %v6358 = vunpack.c.h.bf16 %v6276
      %v6359 = vunpack.c.l.bf16 %v6277
      %v6360 = vunpack.c.h.bf16 %v6277
      %v6361 = vunpack.c.l.bf16 %v6278
      %v6362 = vunpack.c.h.bf16 %v6278
      %v6363 = vunpack.c.l.bf16 %v6279
      %v6364 = vunpack.c.h.bf16 %v6279
      %v6365 = vunpack.c.l.bf16 %v6280
      %v6366 = vunpack.c.h.bf16 %v6280
      %v6367 = vunpack.c.l.bf16 %v6281
      %v6368 = vunpack.c.h.bf16 %v6281
      %v6369 = vunpack.c.l.bf16 %v6282
      %v6370 = vunpack.c.h.bf16 %v6282
      %v6371 = vunpack.c.l.bf16 %v6283
      %v6372 = vunpack.c.h.bf16 %v6283
      %v6373 = vunpack.c.l.bf16 %v6284
      %v6374 = vunpack.c.h.bf16 %v6284
      %v6375 = vunpack.c.l.bf16 %v6285
      %v6376 = vunpack.c.h.bf16 %v6285
      %v6377 = vunpack.c.l.bf16 %v6286
      %v6378 = vunpack.c.h.bf16 %v6286
      %v6379 = vunpack.c.l.bf16 %v6287
      %v6380 = vunpack.c.h.bf16 %v6287
      %v6381 = vunpack.c.l.bf16 %v6288
      %v6382 = vunpack.c.h.bf16 %v6288
      %v6383 = vunpack.c.l.bf16 %v6289
      %v6384 = vunpack.c.h.bf16 %v6289
      %v6385 = vunpack.c.l.bf16 %v6290
      %v6386 = vunpack.c.h.bf16 %v6290
      %v6387 = vunpack.c.l.bf16 %v6291
      %v6388 = vunpack.c.h.bf16 %v6291
      %v6389 = vunpack.c.l.bf16 %v6292
      %v6390 = vunpack.c.h.bf16 %v6292
      %v6391 = vunpack.c.l.bf16 %v6293
      %v6392 = vunpack.c.h.bf16 %v6293
      %v6393 = vunpack.c.l.bf16 %v6294
      %v6394 = vunpack.c.h.bf16 %v6294
      %v6395 = vunpack.c.l.bf16 %v6295
      %v6396 = vunpack.c.h.bf16 %v6295
      %v6397 = vunpack.c.l.bf16 %v6296
      %v6398 = vunpack.c.h.bf16 %v6296
      %v6399 = vunpack.c.l.bf16 %v6297
      %v6400 = vunpack.c.h.bf16 %v6297
      %v6401 = vunpack.c.l.bf16 %v6298
      %v6402 = vunpack.c.h.bf16 %v6298
      %v6403 = vld [vmem:[%s1 + $0x6] sm:$0x1]
      %v6404 = vpack.c.bf16 %v6403, %v6403
      %v6405 = vunpack.c.l.bf16 %v6404
      %6407 = vset.pattern.permute.xlu0 0
      %6408 = vperm.xlu0 %6407, %v6299
      %v6409 = vpop.permute.xlu0 %6408
      %6412 = vset.pattern.permute.xlu0 0
      %6413 = vperm.xlu0 %6412, %v6300
      %v6414 = vpop.permute.xlu0 %6413
      %6417 = vset.pattern.permute.xlu0 0
      %6418 = vperm.xlu0 %6417, %v6301
      %v6419 = vpop.permute.xlu0 %6418
      %6422 = vset.pattern.permute.xlu0 0
      %6423 = vperm.xlu0 %6422, %v6302
      %v6424 = vpop.permute.xlu0 %6423
      %6427 = vset.pattern.permute.xlu0 0
      %6428 = vperm.xlu0 %6427, %v6303
      %v6429 = vpop.permute.xlu0 %6428
      %6432 = vset.pattern.permute.xlu0 0
      %6433 = vperm.xlu0 %6432, %v6304
      %v6434 = vpop.permute.xlu0 %6433
      %6437 = vset.pattern.permute.xlu0 0
      %6438 = vperm.xlu0 %6437, %v6305
      %v6439 = vpop.permute.xlu0 %6438
      %6442 = vset.pattern.permute.xlu0 0
      %6443 = vperm.xlu0 %6442, %v6306
      %v6444 = vpop.permute.xlu0 %6443
      %6447 = vset.pattern.permute.xlu0 0
      %6448 = vperm.xlu0 %6447, %v6307
      %v6449 = vpop.permute.xlu0 %6448
      %6452 = vset.pattern.permute.xlu0 0
      %6453 = vperm.xlu0 %6452, %v6308
      %v6454 = vpop.permute.xlu0 %6453
      %6457 = vset.pattern.permute.xlu0 0
      %6458 = vperm.xlu0 %6457, %v6309
      %v6459 = vpop.permute.xlu0 %6458
      %6462 = vset.pattern.permute.xlu0 0
      %6463 = vperm.xlu0 %6462, %v6310
      %v6464 = vpop.permute.xlu0 %6463
      %6467 = vset.pattern.permute.xlu0 0
      %6468 = vperm.xlu0 %6467, %v6311
      %v6469 = vpop.permute.xlu0 %6468
      %6472 = vset.pattern.permute.xlu0 0
      %6473 = vperm.xlu0 %6472, %v6312
      %v6474 = vpop.permute.xlu0 %6473
      %6477 = vset.pattern.permute.xlu0 0
      %6478 = vperm.xlu0 %6477, %v6313
      %v6479 = vpop.permute.xlu0 %6478
      %6482 = vset.pattern.permute.xlu0 0
      %6483 = vperm.xlu0 %6482, %v6314
      %v6484 = vpop.permute.xlu0 %6483
      %6487 = vset.pattern.permute.xlu0 0
      %6488 = vperm.xlu0 %6487, %v6315
      %v6489 = vpop.permute.xlu0 %6488
      %6492 = vset.pattern.permute.xlu0 0
      %6493 = vperm.xlu0 %6492, %v6316
      %v6494 = vpop.permute.xlu0 %6493
      %6497 = vset.pattern.permute.xlu0 0
      %6498 = vperm.xlu0 %6497, %v6317
      %v6499 = vpop.permute.xlu0 %6498
      %6502 = vset.pattern.permute.xlu0 0
      %6503 = vperm.xlu0 %6502, %v6318
      %v6504 = vpop.permute.xlu0 %6503
      %6507 = vset.pattern.permute.xlu0 0
      %6508 = vperm.xlu0 %6507, %v6319
      %v6509 = vpop.permute.xlu0 %6508
      %6512 = vset.pattern.permute.xlu0 0
      %6513 = vperm.xlu0 %6512, %v6320
      %v6514 = vpop.permute.xlu0 %6513
      %6517 = vset.pattern.permute.xlu0 0
      %6518 = vperm.xlu0 %6517, %v6321
      %v6519 = vpop.permute.xlu0 %6518
      %6522 = vset.pattern.permute.xlu0 0
      %6523 = vperm.xlu0 %6522, %v6322
      %v6524 = vpop.permute.xlu0 %6523
      %6527 = vset.pattern.permute.xlu0 0
      %6528 = vperm.xlu0 %6527, %v6323
      %v6529 = vpop.permute.xlu0 %6528
      %6532 = vset.pattern.permute.xlu0 0
      %6533 = vperm.xlu0 %6532, %v6324
      %v6534 = vpop.permute.xlu0 %6533
      %6537 = vset.pattern.permute.xlu0 0
      %6538 = vperm.xlu0 %6537, %v6325
      %v6539 = vpop.permute.xlu0 %6538
      %6542 = vset.pattern.permute.xlu0 0
      %6543 = vperm.xlu0 %6542, %v6326
      %v6544 = vpop.permute.xlu0 %6543
      %6547 = vset.pattern.permute.xlu0 0
      %6548 = vperm.xlu0 %6547, %v6327
      %v6549 = vpop.permute.xlu0 %6548
      %6552 = vset.pattern.permute.xlu0 0
      %6553 = vperm.xlu0 %6552, %v6328
      %v6554 = vpop.permute.xlu0 %6553
      %6557 = vset.pattern.permute.xlu0 0
      %6558 = vperm.xlu0 %6557, %v6329
      %v6559 = vpop.permute.xlu0 %6558
      %6562 = vset.pattern.permute.xlu0 0
      %6563 = vperm.xlu0 %6562, %v6330
      %v6564 = vpop.permute.xlu0 %6563
      %6567 = vset.pattern.permute.xlu0 0
      %6568 = vperm.xlu0 %6567, %v6331
      %v6569 = vpop.permute.xlu0 %6568
      %6572 = vset.pattern.permute.xlu0 0
      %6573 = vperm.xlu0 %6572, %v6332
      %v6574 = vpop.permute.xlu0 %6573
      %6577 = vset.pattern.permute.xlu0 0
      %6578 = vperm.xlu0 %6577, %v6333
      %v6579 = vpop.permute.xlu0 %6578
      %6582 = vset.pattern.permute.xlu0 0
      %6583 = vperm.xlu0 %6582, %v6334
      %v6584 = vpop.permute.xlu0 %6583
      %6587 = vset.pattern.permute.xlu0 0
      %6588 = vperm.xlu0 %6587, %v6335
      %v6589 = vpop.permute.xlu0 %6588
      %6592 = vset.pattern.permute.xlu0 0
      %6593 = vperm.xlu0 %6592, %v6336
      %v6594 = vpop.permute.xlu0 %6593
      %6597 = vset.pattern.permute.xlu0 0
      %6598 = vperm.xlu0 %6597, %v6337
      %v6599 = vpop.permute.xlu0 %6598
      %6602 = vset.pattern.permute.xlu0 0
      %6603 = vperm.xlu0 %6602, %v6338
      %v6604 = vpop.permute.xlu0 %6603
      %6607 = vset.pattern.permute.xlu0 0
      %6608 = vperm.xlu0 %6607, %v6339
      %v6609 = vpop.permute.xlu0 %6608
      %6612 = vset.pattern.permute.xlu0 0
      %6613 = vperm.xlu0 %6612, %v6340
      %v6614 = vpop.permute.xlu0 %6613
      %6617 = vset.pattern.permute.xlu0 0
      %6618 = vperm.xlu0 %6617, %v6341
      %v6619 = vpop.permute.xlu0 %6618
      %6622 = vset.pattern.permute.xlu0 0
      %6623 = vperm.xlu0 %6622, %v6342
      %v6624 = vpop.permute.xlu0 %6623
      %6627 = vset.pattern.permute.xlu0 0
      %6628 = vperm.xlu0 %6627, %v6343
      %v6629 = vpop.permute.xlu0 %6628
      %6632 = vset.pattern.permute.xlu0 0
      %6633 = vperm.xlu0 %6632, %v6344
      %v6634 = vpop.permute.xlu0 %6633
      %6637 = vset.pattern.permute.xlu0 0
      %6638 = vperm.xlu0 %6637, %v6345
      %v6639 = vpop.permute.xlu0 %6638
      %6642 = vset.pattern.permute.xlu0 0
      %6643 = vperm.xlu0 %6642, %v6346
      %v6644 = vpop.permute.xlu0 %6643
      %6647 = vset.pattern.permute.xlu0 0
      %6648 = vperm.xlu0 %6647, %v6347
      %v6649 = vpop.permute.xlu0 %6648
      %6652 = vset.pattern.permute.xlu0 0
      %6653 = vperm.xlu0 %6652, %v6348
      %v6654 = vpop.permute.xlu0 %6653
      %6657 = vset.pattern.permute.xlu0 0
      %6658 = vperm.xlu0 %6657, %v6349
      %v6659 = vpop.permute.xlu0 %6658
      %6662 = vset.pattern.permute.xlu0 0
      %6663 = vperm.xlu0 %6662, %v6350
      %v6664 = vpop.permute.xlu0 %6663
      %6667 = vset.pattern.permute.xlu0 0
      %6668 = vperm.xlu0 %6667, %v6351
      %v6669 = vpop.permute.xlu0 %6668
      %6672 = vset.pattern.permute.xlu0 0
      %6673 = vperm.xlu0 %6672, %v6352
      %v6674 = vpop.permute.xlu0 %6673
      %6677 = vset.pattern.permute.xlu0 0
      %6678 = vperm.xlu0 %6677, %v6353
      %v6679 = vpop.permute.xlu0 %6678
      %6682 = vset.pattern.permute.xlu0 0
      %6683 = vperm.xlu0 %6682, %v6354
      %v6684 = vpop.permute.xlu0 %6683
      %6687 = vset.pattern.permute.xlu0 0
      %6688 = vperm.xlu0 %6687, %v6355
      %v6689 = vpop.permute.xlu0 %6688
      %6692 = vset.pattern.permute.xlu0 0
      %6693 = vperm.xlu0 %6692, %v6356
      %v6694 = vpop.permute.xlu0 %6693
      %6697 = vset.pattern.permute.xlu0 0
      %6698 = vperm.xlu0 %6697, %v6357
      %v6699 = vpop.permute.xlu0 %6698
      %6702 = vset.pattern.permute.xlu0 0
      %6703 = vperm.xlu0 %6702, %v6358
      %v6704 = vpop.permute.xlu0 %6703
      %6707 = vset.pattern.permute.xlu0 0
      %6708 = vperm.xlu0 %6707, %v6359
      %v6709 = vpop.permute.xlu0 %6708
      %6712 = vset.pattern.permute.xlu0 0
      %6713 = vperm.xlu0 %6712, %v6360
      %v6714 = vpop.permute.xlu0 %6713
      %6717 = vset.pattern.permute.xlu0 0
      %6718 = vperm.xlu0 %6717, %v6361
      %v6719 = vpop.permute.xlu0 %6718
      %6722 = vset.pattern.permute.xlu0 0
      %6723 = vperm.xlu0 %6722, %v6362
      %v6724 = vpop.permute.xlu0 %6723
      %6727 = vset.pattern.permute.xlu0 0
      %6728 = vperm.xlu0 %6727, %v6363
      %v6729 = vpop.permute.xlu0 %6728
      %6732 = vset.pattern.permute.xlu0 0
      %6733 = vperm.xlu0 %6732, %v6364
      %v6734 = vpop.permute.xlu0 %6733
      %6737 = vset.pattern.permute.xlu0 0
      %6738 = vperm.xlu0 %6737, %v6365
      %v6739 = vpop.permute.xlu0 %6738
      %6742 = vset.pattern.permute.xlu0 0
      %6743 = vperm.xlu0 %6742, %v6366
      %v6744 = vpop.permute.xlu0 %6743
      %6747 = vset.pattern.permute.xlu0 0
      %6748 = vperm.xlu0 %6747, %v6367
      %v6749 = vpop.permute.xlu0 %6748
      %6752 = vset.pattern.permute.xlu0 0
      %6753 = vperm.xlu0 %6752, %v6368
      %v6754 = vpop.permute.xlu0 %6753
      %6757 = vset.pattern.permute.xlu0 0
      %6758 = vperm.xlu0 %6757, %v6369
      %v6759 = vpop.permute.xlu0 %6758
      %6762 = vset.pattern.permute.xlu0 0
      %6763 = vperm.xlu0 %6762, %v6370
      %v6764 = vpop.permute.xlu0 %6763
      %6767 = vset.pattern.permute.xlu0 0
      %6768 = vperm.xlu0 %6767, %v6371
      %v6769 = vpop.permute.xlu0 %6768
      %6772 = vset.pattern.permute.xlu0 0
      %6773 = vperm.xlu0 %6772, %v6372
      %v6774 = vpop.permute.xlu0 %6773
      %6777 = vset.pattern.permute.xlu0 0
      %6778 = vperm.xlu0 %6777, %v6373
      %v6779 = vpop.permute.xlu0 %6778
      %6782 = vset.pattern.permute.xlu0 0
      %6783 = vperm.xlu0 %6782, %v6374
      %v6784 = vpop.permute.xlu0 %6783
      %6787 = vset.pattern.permute.xlu0 0
      %6788 = vperm.xlu0 %6787, %v6375
      %v6789 = vpop.permute.xlu0 %6788
      %6792 = vset.pattern.permute.xlu0 0
      %6793 = vperm.xlu0 %6792, %v6376
      %v6794 = vpop.permute.xlu0 %6793
      %6797 = vset.pattern.permute.xlu0 0
      %6798 = vperm.xlu0 %6797, %v6377
      %v6799 = vpop.permute.xlu0 %6798
      %6802 = vset.pattern.permute.xlu0 0
      %6803 = vperm.xlu0 %6802, %v6378
      %v6804 = vpop.permute.xlu0 %6803
      %6807 = vset.pattern.permute.xlu0 0
      %6808 = vperm.xlu0 %6807, %v6379
      %v6809 = vpop.permute.xlu0 %6808
      %6812 = vset.pattern.permute.xlu0 0
      %6813 = vperm.xlu0 %6812, %v6380
      %v6814 = vpop.permute.xlu0 %6813
      %6817 = vset.pattern.permute.xlu0 0
      %6818 = vperm.xlu0 %6817, %v6381
      %v6819 = vpop.permute.xlu0 %6818
      %6822 = vset.pattern.permute.xlu0 0
      %6823 = vperm.xlu0 %6822, %v6382
      %v6824 = vpop.permute.xlu0 %6823
      %6827 = vset.pattern.permute.xlu0 0
      %6828 = vperm.xlu0 %6827, %v6383
      %v6829 = vpop.permute.xlu0 %6828
      %6832 = vset.pattern.permute.xlu0 0
      %6833 = vperm.xlu0 %6832, %v6384
      %v6834 = vpop.permute.xlu0 %6833
      %6837 = vset.pattern.permute.xlu0 0
      %6838 = vperm.xlu0 %6837, %v6385
      %v6839 = vpop.permute.xlu0 %6838
      %6842 = vset.pattern.permute.xlu0 0
      %6843 = vperm.xlu0 %6842, %v6386
      %v6844 = vpop.permute.xlu0 %6843
      %6847 = vset.pattern.permute.xlu0 0
      %6848 = vperm.xlu0 %6847, %v6387
      %v6849 = vpop.permute.xlu0 %6848
      %6852 = vset.pattern.permute.xlu0 0
      %6853 = vperm.xlu0 %6852, %v6388
      %v6854 = vpop.permute.xlu0 %6853
      %6857 = vset.pattern.permute.xlu0 0
      %6858 = vperm.xlu0 %6857, %v6389
      %v6859 = vpop.permute.xlu0 %6858
      %6862 = vset.pattern.permute.xlu0 0
      %6863 = vperm.xlu0 %6862, %v6390
      %v6864 = vpop.permute.xlu0 %6863
      %6867 = vset.pattern.permute.xlu0 0
      %6868 = vperm.xlu0 %6867, %v6391
      %v6869 = vpop.permute.xlu0 %6868
      %6872 = vset.pattern.permute.xlu0 0
      %6873 = vperm.xlu0 %6872, %v6392
      %v6874 = vpop.permute.xlu0 %6873
      %6877 = vset.pattern.permute.xlu0 0
      %6878 = vperm.xlu0 %6877, %v6393
      %v6879 = vpop.permute.xlu0 %6878
      %6882 = vset.pattern.permute.xlu0 0
      %6883 = vperm.xlu0 %6882, %v6394
      %v6884 = vpop.permute.xlu0 %6883
      %6887 = vset.pattern.permute.xlu0 0
      %6888 = vperm.xlu0 %6887, %v6395
      %v6889 = vpop.permute.xlu0 %6888
      %6892 = vset.pattern.permute.xlu0 0
      %6893 = vperm.xlu0 %6892, %v6396
      %v6894 = vpop.permute.xlu0 %6893
      %6897 = vset.pattern.permute.xlu0 0
      %6898 = vperm.xlu0 %6897, %v6397
      %v6899 = vpop.permute.xlu0 %6898
      %6902 = vset.pattern.permute.xlu0 0
      %6903 = vperm.xlu0 %6902, %v6398
      %v6904 = vpop.permute.xlu0 %6903
      %6907 = vset.pattern.permute.xlu0 0
      %6908 = vperm.xlu0 %6907, %v6399
      %v6909 = vpop.permute.xlu0 %6908
      %6912 = vset.pattern.permute.xlu0 0
      %6913 = vperm.xlu0 %6912, %v6400
      %v6914 = vpop.permute.xlu0 %6913
      %6917 = vset.pattern.permute.xlu0 0
      %6918 = vperm.xlu0 %6917, %v6401
      %v6919 = vpop.permute.xlu0 %6918
      %6922 = vset.pattern.permute.xlu0 0
      %6923 = vperm.xlu0 %6922, %v6402
      %v6924 = vpop.permute.xlu0 %6923
      %v6926 = vlaneseq
      %v6927 = vshrl.u32 %v6926, 7
      %v6928 = vsub.s32 0, %v6927
      %v6929 = vrot.slane %v6405, %v6928
      %v6930 = vmul.f32 %v6409, %v6929
      %v6931 = vmul.f32 %v6414, %v6929
      %v6932 = vmul.f32 %v6419, %v6929
      %v6933 = vmul.f32 %v6424, %v6929
      %v6934 = vmul.f32 %v6429, %v6929
      %v6935 = vmul.f32 %v6434, %v6929
      %v6936 = vmul.f32 %v6439, %v6929
      %v6937 = vmul.f32 %v6444, %v6929
      %v6938 = vmul.f32 %v6449, %v6929
      %v6939 = vmul.f32 %v6454, %v6929
      %v6940 = vmul.f32 %v6459, %v6929
      %v6941 = vmul.f32 %v6464, %v6929
      %v6942 = vmul.f32 %v6469, %v6929
      %v6943 = vmul.f32 %v6474, %v6929
      %v6944 = vmul.f32 %v6479, %v6929
      %v6945 = vmul.f32 %v6484, %v6929
      %v6946 = vmul.f32 %v6489, %v6929
      %v6947 = vmul.f32 %v6494, %v6929
      %v6948 = vmul.f32 %v6499, %v6929
      %v6949 = vmul.f32 %v6504, %v6929
      %v6950 = vmul.f32 %v6509, %v6929
      %v6951 = vmul.f32 %v6514, %v6929
      %v6952 = vmul.f32 %v6519, %v6929
      %v6953 = vmul.f32 %v6524, %v6929
      %v6954 = vmul.f32 %v6529, %v6929
      %v6955 = vmul.f32 %v6534, %v6929
      %v6956 = vmul.f32 %v6539, %v6929
      %v6957 = vmul.f32 %v6544, %v6929
      %v6958 = vmul.f32 %v6549, %v6929
      %v6959 = vmul.f32 %v6554, %v6929
      %v6960 = vmul.f32 %v6559, %v6929
      %v6961 = vmul.f32 %v6564, %v6929
      %v6962 = vmul.f32 %v6569, %v6929
      %v6963 = vmul.f32 %v6574, %v6929
      %v6964 = vmul.f32 %v6579, %v6929
      %v6965 = vmul.f32 %v6584, %v6929
      %v6966 = vmul.f32 %v6589, %v6929
      %v6967 = vmul.f32 %v6594, %v6929
      %v6968 = vmul.f32 %v6599, %v6929
      %v6969 = vmul.f32 %v6604, %v6929
      %v6970 = vmul.f32 %v6609, %v6929
      %v6971 = vmul.f32 %v6614, %v6929
      %v6972 = vmul.f32 %v6619, %v6929
      %v6973 = vmul.f32 %v6624, %v6929
      %v6974 = vmul.f32 %v6629, %v6929
      %v6975 = vmul.f32 %v6634, %v6929
      %v6976 = vmul.f32 %v6639, %v6929
      %v6977 = vmul.f32 %v6644, %v6929
      %v6978 = vmul.f32 %v6649, %v6929
      %v6979 = vmul.f32 %v6654, %v6929
      %v6980 = vmul.f32 %v6659, %v6929
      %v6981 = vmul.f32 %v6664, %v6929
      %v6982 = vmul.f32 %v6669, %v6929
      %v6983 = vmul.f32 %v6674, %v6929
      %v6984 = vmul.f32 %v6679, %v6929
      %v6985 = vmul.f32 %v6684, %v6929
      %v6986 = vmul.f32 %v6689, %v6929
      %v6987 = vmul.f32 %v6694, %v6929
      %v6988 = vmul.f32 %v6699, %v6929
      %v6989 = vmul.f32 %v6704, %v6929
      %v6990 = vmul.f32 %v6709, %v6929
      %v6991 = vmul.f32 %v6714, %v6929
      %v6992 = vmul.f32 %v6719, %v6929
      %v6993 = vmul.f32 %v6724, %v6929
      %v6994 = vmul.f32 %v6729, %v6929
      %v6995 = vmul.f32 %v6734, %v6929
      %v6996 = vmul.f32 %v6739, %v6929
      %v6997 = vmul.f32 %v6744, %v6929
      %v6998 = vmul.f32 %v6749, %v6929
      %v6999 = vmul.f32 %v6754, %v6929
      %v7000 = vmul.f32 %v6759, %v6929
      %v7001 = vmul.f32 %v6764, %v6929
      %v7002 = vmul.f32 %v6769, %v6929
      %v7003 = vmul.f32 %v6774, %v6929
      %v7004 = vmul.f32 %v6779, %v6929
      %v7005 = vmul.f32 %v6784, %v6929
      %v7006 = vmul.f32 %v6789, %v6929
      %v7007 = vmul.f32 %v6794, %v6929
      %v7008 = vmul.f32 %v6799, %v6929
      %v7009 = vmul.f32 %v6804, %v6929
      %v7010 = vmul.f32 %v6809, %v6929
      %v7011 = vmul.f32 %v6814, %v6929
      %v7012 = vmul.f32 %v6819, %v6929
      %v7013 = vmul.f32 %v6824, %v6929
      %v7014 = vmul.f32 %v6829, %v6929
      %v7015 = vmul.f32 %v6834, %v6929
      %v7016 = vmul.f32 %v6839, %v6929
      %v7017 = vmul.f32 %v6844, %v6929
      %v7018 = vmul.f32 %v6849, %v6929
      %v7019 = vmul.f32 %v6854, %v6929
      %v7020 = vmul.f32 %v6859, %v6929
      %v7021 = vmul.f32 %v6864, %v6929
      %v7022 = vmul.f32 %v6869, %v6929
      %v7023 = vmul.f32 %v6874, %v6929
      %v7024 = vmul.f32 %v6879, %v6929
      %v7025 = vmul.f32 %v6884, %v6929
      %v7026 = vmul.f32 %v6889, %v6929
      %v7027 = vmul.f32 %v6894, %v6929
      %v7028 = vmul.f32 %v6899, %v6929
      %v7029 = vmul.f32 %v6904, %v6929
      %v7030 = vmul.f32 %v6909, %v6929
      %v7031 = vmul.f32 %v6914, %v6929
      %v7032 = vmul.f32 %v6919, %v6929
      %v7033 = vmul.f32 %v6924, %v6929
      %v7034 = vadd.f32 %v6038, %v6930
      %v7035 = vadd.f32 %v6039, %v6931
      %v7036 = vadd.f32 %v6040, %v6932
      %v7037 = vadd.f32 %v6041, %v6933
      %v7038 = vadd.f32 %v6042, %v6934
      %v7039 = vadd.f32 %v6043, %v6935
      %v7040 = vadd.f32 %v6044, %v6936
      %v7041 = vadd.f32 %v6045, %v6937
      %v7042 = vadd.f32 %v6046, %v6938
      %v7043 = vadd.f32 %v6047, %v6939
      %v7044 = vadd.f32 %v6048, %v6940
      %v7045 = vadd.f32 %v6049, %v6941
      %v7046 = vadd.f32 %v6050, %v6942
      %v7047 = vadd.f32 %v6051, %v6943
      %v7048 = vadd.f32 %v6052, %v6944
      %v7049 = vadd.f32 %v6053, %v6945
      %v7050 = vadd.f32 %v6054, %v6946
      %v7051 = vadd.f32 %v6055, %v6947
      %v7052 = vadd.f32 %v6056, %v6948
      %v7053 = vadd.f32 %v6057, %v6949
      %v7054 = vadd.f32 %v6058, %v6950
      %v7055 = vadd.f32 %v6059, %v6951
      %v7056 = vadd.f32 %v6060, %v6952
      %v7057 = vadd.f32 %v6061, %v6953
      %v7058 = vadd.f32 %v6062, %v6954
      %v7059 = vadd.f32 %v6063, %v6955
      %v7060 = vadd.f32 %v6064, %v6956
      %v7061 = vadd.f32 %v6065, %v6957
      %v7062 = vadd.f32 %v6066, %v6958
      %v7063 = vadd.f32 %v6067, %v6959
      %v7064 = vadd.f32 %v6068, %v6960
      %v7065 = vadd.f32 %v6069, %v6961
      %v7066 = vadd.f32 %v6070, %v6962
      %v7067 = vadd.f32 %v6071, %v6963
      %v7068 = vadd.f32 %v6072, %v6964
      %v7069 = vadd.f32 %v6073, %v6965
      %v7070 = vadd.f32 %v6074, %v6966
      %v7071 = vadd.f32 %v6075, %v6967
      %v7072 = vadd.f32 %v6076, %v6968
      %v7073 = vadd.f32 %v6077, %v6969
      %v7074 = vadd.f32 %v6078, %v6970
      %v7075 = vadd.f32 %v6079, %v6971
      %v7076 = vadd.f32 %v6080, %v6972
      %v7077 = vadd.f32 %v6081, %v6973
      %v7078 = vadd.f32 %v6082, %v6974
      %v7079 = vadd.f32 %v6083, %v6975
      %v7080 = vadd.f32 %v6084, %v6976
      %v7081 = vadd.f32 %v6085, %v6977
      %v7082 = vadd.f32 %v6086, %v6978
      %v7083 = vadd.f32 %v6087, %v6979
      %v7084 = vadd.f32 %v6088, %v6980
      %v7085 = vadd.f32 %v6089, %v6981
      %v7086 = vadd.f32 %v6090, %v6982
      %v7087 = vadd.f32 %v6091, %v6983
      %v7088 = vadd.f32 %v6092, %v6984
      %v7089 = vadd.f32 %v6093, %v6985
      %v7090 = vadd.f32 %v6094, %v6986
      %v7091 = vadd.f32 %v6095, %v6987
      %v7092 = vadd.f32 %v6096, %v6988
      %v7093 = vadd.f32 %v6097, %v6989
      %v7094 = vadd.f32 %v6098, %v6990
      %v7095 = vadd.f32 %v6099, %v6991
      %v7096 = vadd.f32 %v6100, %v6992
      %v7097 = vadd.f32 %v6101, %v6993
      %v7098 = vadd.f32 %v6102, %v6994
      %v7099 = vadd.f32 %v6103, %v6995
      %v7100 = vadd.f32 %v6104, %v6996
      %v7101 = vadd.f32 %v6105, %v6997
      %v7102 = vadd.f32 %v6106, %v6998
      %v7103 = vadd.f32 %v6107, %v6999
      %v7104 = vadd.f32 %v6108, %v7000
      %v7105 = vadd.f32 %v6109, %v7001
      %v7106 = vadd.f32 %v6110, %v7002
      %v7107 = vadd.f32 %v6111, %v7003
      %v7108 = vadd.f32 %v6112, %v7004
      %v7109 = vadd.f32 %v6113, %v7005
      %v7110 = vadd.f32 %v6114, %v7006
      %v7111 = vadd.f32 %v6115, %v7007
      %v7112 = vadd.f32 %v6116, %v7008
      %v7113 = vadd.f32 %v6117, %v7009
      %v7114 = vadd.f32 %v6118, %v7010
      %v7115 = vadd.f32 %v6119, %v7011
      %v7116 = vadd.f32 %v6120, %v7012
      %v7117 = vadd.f32 %v6121, %v7013
      %v7118 = vadd.f32 %v6122, %v7014
      %v7119 = vadd.f32 %v6123, %v7015
      %v7120 = vadd.f32 %v6124, %v7016
      %v7121 = vadd.f32 %v6125, %v7017
      %v7122 = vadd.f32 %v6126, %v7018
      %v7123 = vadd.f32 %v6127, %v7019
      %v7124 = vadd.f32 %v6128, %v7020
      %v7125 = vadd.f32 %v6129, %v7021
      %v7126 = vadd.f32 %v6130, %v7022
      %v7127 = vadd.f32 %v6131, %v7023
      %v7128 = vadd.f32 %v6132, %v7024
      %v7129 = vadd.f32 %v6133, %v7025
      %v7130 = vadd.f32 %v6134, %v7026
      %v7131 = vadd.f32 %v6135, %v7027
      %v7132 = vadd.f32 %v6136, %v7028
      %v7133 = vadd.f32 %v6137, %v7029
      %v7134 = vadd.f32 %v6138, %v7030
      %v7135 = vadd.f32 %v6139, %v7031
      %v7136 = vadd.f32 %v6140, %v7032
      %v7137 = vadd.f32 %v6141, %v7033
      %v7138 = vld [vmem:[%s6142 + $0x1] sm:$0xff]
      %v7139 = vld [vmem:[%s6142 + $0x9] sm:$0xff]
      %v7140 = vld [vmem:[%s6142 + $0x11] sm:$0xff]
      %v7141 = vld [vmem:[%s6142 + $0x19] sm:$0xff]
      %v7142 = vld [vmem:[%s6142 + $0x29] sm:$0xff]
      %v7143 = vld [vmem:[%s6142 + $0x31] sm:$0xff]
      %v7144 = vld [vmem:[%s6142 + $0x39] sm:$0xff]
      %v7145 = vld [vmem:[%s6142 + $0x41] sm:$0xff]
      %v7146 = vld [vmem:[%s6142 + $0x51] sm:$0xff]
      %v7147 = vld [vmem:[%s6142 + $0x59] sm:$0xff]
      %v7148 = vld [vmem:[%s6142 + $0x61] sm:$0xff]
      %v7149 = vld [vmem:[%s6142 + $0x69] sm:$0xff]
      %v7150 = vld [vmem:[%s6142 + $0x79] sm:$0xff]
      %v7151 = vld [vmem:[%s6142 + $0x81] sm:$0xff]
      %v7152 = vld [vmem:[%s6142 + $0x89] sm:$0xff]
      %v7153 = vld [vmem:[%s6142 + $0x91] sm:$0xff]
      %v7154 = vld [vmem:[%s6142 + $0xa1] sm:$0xff]
      %v7155 = vld [vmem:[%s6142 + $0xa9] sm:$0xff]
      %v7156 = vld [vmem:[%s6142 + $0xb1] sm:$0xff]
      %v7157 = vld [vmem:[%s6142 + $0xb9] sm:$0xff]
      %v7158 = vld [vmem:[%s6142 + $0xc9] sm:$0xff]
      %v7159 = vld [vmem:[%s6142 + $0xd1] sm:$0xff]
      %v7160 = vld [vmem:[%s6142 + $0xd9] sm:$0xff]
      %v7161 = vld [vmem:[%s6142 + $0xe1] sm:$0xff]
      %v7162 = vld [vmem:[%s6142 + $0xf1] sm:$0xff]
      %v7163 = vld [vmem:[%s6142 + $0xf9] sm:$0xff]
      %v7164 = vld [vmem:[%s6142 + $0x101] sm:$0xff]
      %v7165 = vld [vmem:[%s6142 + $0x109] sm:$0xff]
      %v7166 = vld [vmem:[%s6142 + $0x119] sm:$0xff]
      %v7167 = vld [vmem:[%s6142 + $0x121] sm:$0xff]
      %v7168 = vld [vmem:[%s6142 + $0x129] sm:$0xff]
      %v7169 = vld [vmem:[%s6142 + $0x131] sm:$0xff]
      %v7170 = vld [vmem:[%s6142 + $0x141] sm:$0xff]
      %v7171 = vld [vmem:[%s6142 + $0x149] sm:$0xff]
      %v7172 = vld [vmem:[%s6142 + $0x151] sm:$0xff]
      %v7173 = vld [vmem:[%s6142 + $0x159] sm:$0xff]
      %v7174 = vld [vmem:[%s6142 + $0x169] sm:$0xff]
      %v7175 = vld [vmem:[%s6142 + $0x171] sm:$0xff]
      %v7176 = vld [vmem:[%s6142 + $0x179] sm:$0xff]
      %v7177 = vld [vmem:[%s6142 + $0x181] sm:$0xff]
      %v7178 = vld [vmem:[%s6142 + $0x191] sm:$0xff]
      %v7179 = vld [vmem:[%s6142 + $0x199] sm:$0xff]
      %v7180 = vld [vmem:[%s6142 + $0x1a1] sm:$0xff]
      %v7181 = vld [vmem:[%s6142 + $0x1a9] sm:$0xff]
      %v7182 = vld [vmem:[%s6142 + $0x1b9] sm:$0xff]
      %v7183 = vld [vmem:[%s6142 + $0x1c1] sm:$0xff]
      %v7184 = vld [vmem:[%s6142 + $0x1c9] sm:$0xff]
      %v7185 = vld [vmem:[%s6142 + $0x1d1] sm:$0xff]
      %v7186 = vld [vmem:[%s6142 + $0x1e1] sm:$0xff]
      %v7187 = vld [vmem:[%s6142 + $0x1e9] sm:$0xff]
      %v7188 = vld [vmem:[%s6142 + $0x1f1] sm:$0xff]
      %v7189 = vld [vmem:[%s6142 + $0x1f9] sm:$0xff]
      %v7190 = vld [vmem:[%s6142 + $0x209] sm:$0xff]
      %v7191 = vld [vmem:[%s6142 + $0x211] sm:$0xff]
      %v7192 = vld [vmem:[%s6142 + $0x219] sm:$0xff]
      %v7193 = vld [vmem:[%s6142 + $0x221] sm:$0xff]
      %v7194 = vld [vmem:[%s6142 + $0x231] sm:$0xff]
      %v7195 = vld [vmem:[%s6142 + $0x239] sm:$0xff]
      %v7196 = vld [vmem:[%s6142 + $0x241] sm:$0xff]
      %v7197 = vld [vmem:[%s6142 + $0x249] sm:$0xff]
      %v7198 = vld [vmem:[%s6142 + $0x259] sm:$0xff]
      %v7199 = vld [vmem:[%s6142 + $0x261] sm:$0xff]
      %v7200 = vld [vmem:[%s6142 + $0x269] sm:$0xff]
      %v7201 = vld [vmem:[%s6142 + $0x271] sm:$0xff]
      %v7202 = vld [vmem:[%s6142 + $0x281] sm:$0xff]
      %v7203 = vld [vmem:[%s6142 + $0x289] sm:$0xff]
      %v7204 = vld [vmem:[%s6142 + $0x291] sm:$0xff]
      %v7205 = vld [vmem:[%s6142 + $0x299] sm:$0xff]
      %v7206 = vld [vmem:[%s6142 + $0x2a9] sm:$0xff]
      %v7207 = vld [vmem:[%s6142 + $0x2b1] sm:$0xff]
      %v7208 = vld [vmem:[%s6142 + $0x2b9] sm:$0xff]
      %v7209 = vld [vmem:[%s6142 + $0x2c1] sm:$0xff]
      %v7210 = vld [vmem:[%s6142 + $0x2d1] sm:$0xff]
      %v7211 = vld [vmem:[%s6142 + $0x2d9] sm:$0xff]
      %v7212 = vld [vmem:[%s6142 + $0x2e1] sm:$0xff]
      %v7213 = vld [vmem:[%s6142 + $0x2e9] sm:$0xff]
      %v7214 = vld [vmem:[%s6142 + $0x2f9] sm:$0xff]
      %v7215 = vld [vmem:[%s6142 + $0x301] sm:$0xff]
      %v7216 = vld [vmem:[%s6142 + $0x309] sm:$0xff]
      %v7217 = vld [vmem:[%s6142 + $0x311] sm:$0xff]
      %v7218 = vld [vmem:[%s6142 + $0x321] sm:$0xff]
      %v7219 = vld [vmem:[%s6142 + $0x329] sm:$0xff]
      %v7220 = vld [vmem:[%s6142 + $0x331] sm:$0xff]
      %v7221 = vld [vmem:[%s6142 + $0x339] sm:$0xff]
      %v7222 = vld [vmem:[%s6142 + $0x349] sm:$0xff]
      %v7223 = vld [vmem:[%s6142 + $0x351] sm:$0xff]
      %v7224 = vld [vmem:[%s6142 + $0x359] sm:$0xff]
      %v7225 = vld [vmem:[%s6142 + $0x361] sm:$0xff]
      %v7226 = vld [vmem:[%s6142 + $0x371] sm:$0xff]
      %v7227 = vld [vmem:[%s6142 + $0x379] sm:$0xff]
      %v7228 = vld [vmem:[%s6142 + $0x381] sm:$0xff]
      %v7229 = vld [vmem:[%s6142 + $0x389] sm:$0xff]
      %v7230 = vld [vmem:[%s6142 + $0x399] sm:$0xff]
      %v7231 = vld [vmem:[%s6142 + $0x3a1] sm:$0xff]
      %v7232 = vld [vmem:[%s6142 + $0x3a9] sm:$0xff]
      %v7233 = vld [vmem:[%s6142 + $0x3b1] sm:$0xff]
      %v7234 = vld [vmem:[%s6142 + $0x3c1] sm:$0xff]
      %v7235 = vld [vmem:[%s6142 + $0x3c9] sm:$0xff]
      %v7236 = vld [vmem:[%s6142 + $0x3d1] sm:$0xff]
      %v7237 = vld [vmem:[%s6142 + $0x3d9] sm:$0xff]
      %v7238 = vld [vmem:[%s6142 + $0x3e9] sm:$0xff]
      %v7239 = vld [vmem:[%s6142 + $0x3f1] sm:$0xff]
      %v7240 = vld [vmem:[%s6142 + $0x3f9] sm:$0xff]
      %v7241 = vld [vmem:[%s6142 + $0x401] sm:$0xff]
      %v7242 = vpack.c.bf16 %v7139, %v7138
      %v7243 = vpack.c.bf16 %v7141, %v7140
      %v7244 = vpack.c.bf16 %v7143, %v7142
      %v7245 = vpack.c.bf16 %v7145, %v7144
      %v7246 = vpack.c.bf16 %v7147, %v7146
      %v7247 = vpack.c.bf16 %v7149, %v7148
      %v7248 = vpack.c.bf16 %v7151, %v7150
      %v7249 = vpack.c.bf16 %v7153, %v7152
      %v7250 = vpack.c.bf16 %v7155, %v7154
      %v7251 = vpack.c.bf16 %v7157, %v7156
      %v7252 = vpack.c.bf16 %v7159, %v7158
      %v7253 = vpack.c.bf16 %v7161, %v7160
      %v7254 = vpack.c.bf16 %v7163, %v7162
      %v7255 = vpack.c.bf16 %v7165, %v7164
      %v7256 = vpack.c.bf16 %v7167, %v7166
      %v7257 = vpack.c.bf16 %v7169, %v7168
      %v7258 = vpack.c.bf16 %v7171, %v7170
      %v7259 = vpack.c.bf16 %v7173, %v7172
      %v7260 = vpack.c.bf16 %v7175, %v7174
      %v7261 = vpack.c.bf16 %v7177, %v7176
      %v7262 = vpack.c.bf16 %v7179, %v7178
      %v7263 = vpack.c.bf16 %v7181, %v7180
      %v7264 = vpack.c.bf16 %v7183, %v7182
      %v7265 = vpack.c.bf16 %v7185, %v7184
      %v7266 = vpack.c.bf16 %v7187, %v7186
      %v7267 = vpack.c.bf16 %v7189, %v7188
      %v7268 = vpack.c.bf16 %v7191, %v7190
      %v7269 = vpack.c.bf16 %v7193, %v7192
      %v7270 = vpack.c.bf16 %v7195, %v7194
      %v7271 = vpack.c.bf16 %v7197, %v7196
      %v7272 = vpack.c.bf16 %v7199, %v7198
      %v7273 = vpack.c.bf16 %v7201, %v7200
      %v7274 = vpack.c.bf16 %v7203, %v7202
      %v7275 = vpack.c.bf16 %v7205, %v7204
      %v7276 = vpack.c.bf16 %v7207, %v7206
      %v7277 = vpack.c.bf16 %v7209, %v7208
      %v7278 = vpack.c.bf16 %v7211, %v7210
      %v7279 = vpack.c.bf16 %v7213, %v7212
      %v7280 = vpack.c.bf16 %v7215, %v7214
      %v7281 = vpack.c.bf16 %v7217, %v7216
      %v7282 = vpack.c.bf16 %v7219, %v7218
      %v7283 = vpack.c.bf16 %v7221, %v7220
      %v7284 = vpack.c.bf16 %v7223, %v7222
      %v7285 = vpack.c.bf16 %v7225, %v7224
      %v7286 = vpack.c.bf16 %v7227, %v7226
      %v7287 = vpack.c.bf16 %v7229, %v7228
      %v7288 = vpack.c.bf16 %v7231, %v7230
      %v7289 = vpack.c.bf16 %v7233, %v7232
      %v7290 = vpack.c.bf16 %v7235, %v7234
      %v7291 = vpack.c.bf16 %v7237, %v7236
      %v7292 = vpack.c.bf16 %v7239, %v7238
      %v7293 = vpack.c.bf16 %v7241, %v7240
      %v7294 = vunpack.c.l.bf16 %v7242
      %v7295 = vunpack.c.h.bf16 %v7242
      %v7296 = vunpack.c.l.bf16 %v7243
      %v7297 = vunpack.c.h.bf16 %v7243
      %v7298 = vunpack.c.l.bf16 %v7244
      %v7299 = vunpack.c.h.bf16 %v7244
      %v7300 = vunpack.c.l.bf16 %v7245
      %v7301 = vunpack.c.h.bf16 %v7245
      %v7302 = vunpack.c.l.bf16 %v7246
      %v7303 = vunpack.c.h.bf16 %v7246
      %v7304 = vunpack.c.l.bf16 %v7247
      %v7305 = vunpack.c.h.bf16 %v7247
      %v7306 = vunpack.c.l.bf16 %v7248
      %v7307 = vunpack.c.h.bf16 %v7248
      %v7308 = vunpack.c.l.bf16 %v7249
      %v7309 = vunpack.c.h.bf16 %v7249
      %v7310 = vunpack.c.l.bf16 %v7250
      %v7311 = vunpack.c.h.bf16 %v7250
      %v7312 = vunpack.c.l.bf16 %v7251
      %v7313 = vunpack.c.h.bf16 %v7251
      %v7314 = vunpack.c.l.bf16 %v7252
      %v7315 = vunpack.c.h.bf16 %v7252
      %v7316 = vunpack.c.l.bf16 %v7253
      %v7317 = vunpack.c.h.bf16 %v7253
      %v7318 = vunpack.c.l.bf16 %v7254
      %v7319 = vunpack.c.h.bf16 %v7254
      %v7320 = vunpack.c.l.bf16 %v7255
      %v7321 = vunpack.c.h.bf16 %v7255
      %v7322 = vunpack.c.l.bf16 %v7256
      %v7323 = vunpack.c.h.bf16 %v7256
      %v7324 = vunpack.c.l.bf16 %v7257
      %v7325 = vunpack.c.h.bf16 %v7257
      %v7326 = vunpack.c.l.bf16 %v7258
      %v7327 = vunpack.c.h.bf16 %v7258
      %v7328 = vunpack.c.l.bf16 %v7259
      %v7329 = vunpack.c.h.bf16 %v7259
      %v7330 = vunpack.c.l.bf16 %v7260
      %v7331 = vunpack.c.h.bf16 %v7260
      %v7332 = vunpack.c.l.bf16 %v7261
      %v7333 = vunpack.c.h.bf16 %v7261
      %v7334 = vunpack.c.l.bf16 %v7262
      %v7335 = vunpack.c.h.bf16 %v7262
      %v7336 = vunpack.c.l.bf16 %v7263
      %v7337 = vunpack.c.h.bf16 %v7263
      %v7338 = vunpack.c.l.bf16 %v7264
      %v7339 = vunpack.c.h.bf16 %v7264
      %v7340 = vunpack.c.l.bf16 %v7265
      %v7341 = vunpack.c.h.bf16 %v7265
      %v7342 = vunpack.c.l.bf16 %v7266
      %v7343 = vunpack.c.h.bf16 %v7266
      %v7344 = vunpack.c.l.bf16 %v7267
      %v7345 = vunpack.c.h.bf16 %v7267
      %v7346 = vunpack.c.l.bf16 %v7268
      %v7347 = vunpack.c.h.bf16 %v7268
      %v7348 = vunpack.c.l.bf16 %v7269
      %v7349 = vunpack.c.h.bf16 %v7269
      %v7350 = vunpack.c.l.bf16 %v7270
      %v7351 = vunpack.c.h.bf16 %v7270
      %v7352 = vunpack.c.l.bf16 %v7271
      %v7353 = vunpack.c.h.bf16 %v7271
      %v7354 = vunpack.c.l.bf16 %v7272
      %v7355 = vunpack.c.h.bf16 %v7272
      %v7356 = vunpack.c.l.bf16 %v7273
      %v7357 = vunpack.c.h.bf16 %v7273
      %v7358 = vunpack.c.l.bf16 %v7274
      %v7359 = vunpack.c.h.bf16 %v7274
      %v7360 = vunpack.c.l.bf16 %v7275
      %v7361 = vunpack.c.h.bf16 %v7275
      %v7362 = vunpack.c.l.bf16 %v7276
      %v7363 = vunpack.c.h.bf16 %v7276
      %v7364 = vunpack.c.l.bf16 %v7277
      %v7365 = vunpack.c.h.bf16 %v7277
      %v7366 = vunpack.c.l.bf16 %v7278
      %v7367 = vunpack.c.h.bf16 %v7278
      %v7368 = vunpack.c.l.bf16 %v7279
      %v7369 = vunpack.c.h.bf16 %v7279
      %v7370 = vunpack.c.l.bf16 %v7280
      %v7371 = vunpack.c.h.bf16 %v7280
      %v7372 = vunpack.c.l.bf16 %v7281
      %v7373 = vunpack.c.h.bf16 %v7281
      %v7374 = vunpack.c.l.bf16 %v7282
      %v7375 = vunpack.c.h.bf16 %v7282
      %v7376 = vunpack.c.l.bf16 %v7283
      %v7377 = vunpack.c.h.bf16 %v7283
      %v7378 = vunpack.c.l.bf16 %v7284
      %v7379 = vunpack.c.h.bf16 %v7284
      %v7380 = vunpack.c.l.bf16 %v7285
      %v7381 = vunpack.c.h.bf16 %v7285
      %v7382 = vunpack.c.l.bf16 %v7286
      %v7383 = vunpack.c.h.bf16 %v7286
      %v7384 = vunpack.c.l.bf16 %v7287
      %v7385 = vunpack.c.h.bf16 %v7287
      %v7386 = vunpack.c.l.bf16 %v7288
      %v7387 = vunpack.c.h.bf16 %v7288
      %v7388 = vunpack.c.l.bf16 %v7289
      %v7389 = vunpack.c.h.bf16 %v7289
      %v7390 = vunpack.c.l.bf16 %v7290
      %v7391 = vunpack.c.h.bf16 %v7290
      %v7392 = vunpack.c.l.bf16 %v7291
      %v7393 = vunpack.c.h.bf16 %v7291
      %v7394 = vunpack.c.l.bf16 %v7292
      %v7395 = vunpack.c.h.bf16 %v7292
      %v7396 = vunpack.c.l.bf16 %v7293
      %v7397 = vunpack.c.h.bf16 %v7293
      %v7398 = vld [vmem:[%s1 + $0x7] sm:$0x1]
      %v7399 = vpack.c.bf16 %v7398, %v7398
      %v7400 = vunpack.c.l.bf16 %v7399
      %7402 = vset.pattern.permute.xlu0 0
      %7403 = vperm.xlu0 %7402, %v7294
      %v7404 = vpop.permute.xlu0 %7403
      %7407 = vset.pattern.permute.xlu0 0
      %7408 = vperm.xlu0 %7407, %v7295
      %v7409 = vpop.permute.xlu0 %7408
      %7412 = vset.pattern.permute.xlu0 0
      %7413 = vperm.xlu0 %7412, %v7296
      %v7414 = vpop.permute.xlu0 %7413
      %7417 = vset.pattern.permute.xlu0 0
      %7418 = vperm.xlu0 %7417, %v7297
      %v7419 = vpop.permute.xlu0 %7418
      %7422 = vset.pattern.permute.xlu0 0
      %7423 = vperm.xlu0 %7422, %v7298
      %v7424 = vpop.permute.xlu0 %7423
      %7427 = vset.pattern.permute.xlu0 0
      %7428 = vperm.xlu0 %7427, %v7299
      %v7429 = vpop.permute.xlu0 %7428
      %7432 = vset.pattern.permute.xlu0 0
      %7433 = vperm.xlu0 %7432, %v7300
      %v7434 = vpop.permute.xlu0 %7433
      %7437 = vset.pattern.permute.xlu0 0
      %7438 = vperm.xlu0 %7437, %v7301
      %v7439 = vpop.permute.xlu0 %7438
      %7442 = vset.pattern.permute.xlu0 0
      %7443 = vperm.xlu0 %7442, %v7302
      %v7444 = vpop.permute.xlu0 %7443
      %7447 = vset.pattern.permute.xlu0 0
      %7448 = vperm.xlu0 %7447, %v7303
      %v7449 = vpop.permute.xlu0 %7448
      %7452 = vset.pattern.permute.xlu0 0
      %7453 = vperm.xlu0 %7452, %v7304
      %v7454 = vpop.permute.xlu0 %7453
      %7457 = vset.pattern.permute.xlu0 0
      %7458 = vperm.xlu0 %7457, %v7305
      %v7459 = vpop.permute.xlu0 %7458
      %7462 = vset.pattern.permute.xlu0 0
      %7463 = vperm.xlu0 %7462, %v7306
      %v7464 = vpop.permute.xlu0 %7463
      %7467 = vset.pattern.permute.xlu0 0
      %7468 = vperm.xlu0 %7467, %v7307
      %v7469 = vpop.permute.xlu0 %7468
      %7472 = vset.pattern.permute.xlu0 0
      %7473 = vperm.xlu0 %7472, %v7308
      %v7474 = vpop.permute.xlu0 %7473
      %7477 = vset.pattern.permute.xlu0 0
      %7478 = vperm.xlu0 %7477, %v7309
      %v7479 = vpop.permute.xlu0 %7478
      %7482 = vset.pattern.permute.xlu0 0
      %7483 = vperm.xlu0 %7482, %v7310
      %v7484 = vpop.permute.xlu0 %7483
      %7487 = vset.pattern.permute.xlu0 0
      %7488 = vperm.xlu0 %7487, %v7311
      %v7489 = vpop.permute.xlu0 %7488
      %7492 = vset.pattern.permute.xlu0 0
      %7493 = vperm.xlu0 %7492, %v7312
      %v7494 = vpop.permute.xlu0 %7493
      %7497 = vset.pattern.permute.xlu0 0
      %7498 = vperm.xlu0 %7497, %v7313
      %v7499 = vpop.permute.xlu0 %7498
      %7502 = vset.pattern.permute.xlu0 0
      %7503 = vperm.xlu0 %7502, %v7314
      %v7504 = vpop.permute.xlu0 %7503
      %7507 = vset.pattern.permute.xlu0 0
      %7508 = vperm.xlu0 %7507, %v7315
      %v7509 = vpop.permute.xlu0 %7508
      %7512 = vset.pattern.permute.xlu0 0
      %7513 = vperm.xlu0 %7512, %v7316
      %v7514 = vpop.permute.xlu0 %7513
      %7517 = vset.pattern.permute.xlu0 0
      %7518 = vperm.xlu0 %7517, %v7317
      %v7519 = vpop.permute.xlu0 %7518
      %7522 = vset.pattern.permute.xlu0 0
      %7523 = vperm.xlu0 %7522, %v7318
      %v7524 = vpop.permute.xlu0 %7523
      %7527 = vset.pattern.permute.xlu0 0
      %7528 = vperm.xlu0 %7527, %v7319
      %v7529 = vpop.permute.xlu0 %7528
      %7532 = vset.pattern.permute.xlu0 0
      %7533 = vperm.xlu0 %7532, %v7320
      %v7534 = vpop.permute.xlu0 %7533
      %7537 = vset.pattern.permute.xlu0 0
      %7538 = vperm.xlu0 %7537, %v7321
      %v7539 = vpop.permute.xlu0 %7538
      %7542 = vset.pattern.permute.xlu0 0
      %7543 = vperm.xlu0 %7542, %v7322
      %v7544 = vpop.permute.xlu0 %7543
      %7547 = vset.pattern.permute.xlu0 0
      %7548 = vperm.xlu0 %7547, %v7323
      %v7549 = vpop.permute.xlu0 %7548
      %7552 = vset.pattern.permute.xlu0 0
      %7553 = vperm.xlu0 %7552, %v7324
      %v7554 = vpop.permute.xlu0 %7553
      %7557 = vset.pattern.permute.xlu0 0
      %7558 = vperm.xlu0 %7557, %v7325
      %v7559 = vpop.permute.xlu0 %7558
      %7562 = vset.pattern.permute.xlu0 0
      %7563 = vperm.xlu0 %7562, %v7326
      %v7564 = vpop.permute.xlu0 %7563
      %7567 = vset.pattern.permute.xlu0 0
      %7568 = vperm.xlu0 %7567, %v7327
      %v7569 = vpop.permute.xlu0 %7568
      %7572 = vset.pattern.permute.xlu0 0
      %7573 = vperm.xlu0 %7572, %v7328
      %v7574 = vpop.permute.xlu0 %7573
      %7577 = vset.pattern.permute.xlu0 0
      %7578 = vperm.xlu0 %7577, %v7329
      %v7579 = vpop.permute.xlu0 %7578
      %7582 = vset.pattern.permute.xlu0 0
      %7583 = vperm.xlu0 %7582, %v7330
      %v7584 = vpop.permute.xlu0 %7583
      %7587 = vset.pattern.permute.xlu0 0
      %7588 = vperm.xlu0 %7587, %v7331
      %v7589 = vpop.permute.xlu0 %7588
      %7592 = vset.pattern.permute.xlu0 0
      %7593 = vperm.xlu0 %7592, %v7332
      %v7594 = vpop.permute.xlu0 %7593
      %7597 = vset.pattern.permute.xlu0 0
      %7598 = vperm.xlu0 %7597, %v7333
      %v7599 = vpop.permute.xlu0 %7598
      %7602 = vset.pattern.permute.xlu0 0
      %7603 = vperm.xlu0 %7602, %v7334
      %v7604 = vpop.permute.xlu0 %7603
      %7607 = vset.pattern.permute.xlu0 0
      %7608 = vperm.xlu0 %7607, %v7335
      %v7609 = vpop.permute.xlu0 %7608
      %7612 = vset.pattern.permute.xlu0 0
      %7613 = vperm.xlu0 %7612, %v7336
      %v7614 = vpop.permute.xlu0 %7613
      %7617 = vset.pattern.permute.xlu0 0
      %7618 = vperm.xlu0 %7617, %v7337
      %v7619 = vpop.permute.xlu0 %7618
      %7622 = vset.pattern.permute.xlu0 0
      %7623 = vperm.xlu0 %7622, %v7338
      %v7624 = vpop.permute.xlu0 %7623
      %7627 = vset.pattern.permute.xlu0 0
      %7628 = vperm.xlu0 %7627, %v7339
      %v7629 = vpop.permute.xlu0 %7628
      %7632 = vset.pattern.permute.xlu0 0
      %7633 = vperm.xlu0 %7632, %v7340
      %v7634 = vpop.permute.xlu0 %7633
      %7637 = vset.pattern.permute.xlu0 0
      %7638 = vperm.xlu0 %7637, %v7341
      %v7639 = vpop.permute.xlu0 %7638
      %7642 = vset.pattern.permute.xlu0 0
      %7643 = vperm.xlu0 %7642, %v7342
      %v7644 = vpop.permute.xlu0 %7643
      %7647 = vset.pattern.permute.xlu0 0
      %7648 = vperm.xlu0 %7647, %v7343
      %v7649 = vpop.permute.xlu0 %7648
      %7652 = vset.pattern.permute.xlu0 0
      %7653 = vperm.xlu0 %7652, %v7344
      %v7654 = vpop.permute.xlu0 %7653
      %7657 = vset.pattern.permute.xlu0 0
      %7658 = vperm.xlu0 %7657, %v7345
      %v7659 = vpop.permute.xlu0 %7658
      %7662 = vset.pattern.permute.xlu0 0
      %7663 = vperm.xlu0 %7662, %v7346
      %v7664 = vpop.permute.xlu0 %7663
      %7667 = vset.pattern.permute.xlu0 0
      %7668 = vperm.xlu0 %7667, %v7347
      %v7669 = vpop.permute.xlu0 %7668
      %7672 = vset.pattern.permute.xlu0 0
      %7673 = vperm.xlu0 %7672, %v7348
      %v7674 = vpop.permute.xlu0 %7673
      %7677 = vset.pattern.permute.xlu0 0
      %7678 = vperm.xlu0 %7677, %v7349
      %v7679 = vpop.permute.xlu0 %7678
      %7682 = vset.pattern.permute.xlu0 0
      %7683 = vperm.xlu0 %7682, %v7350
      %v7684 = vpop.permute.xlu0 %7683
      %7687 = vset.pattern.permute.xlu0 0
      %7688 = vperm.xlu0 %7687, %v7351
      %v7689 = vpop.permute.xlu0 %7688
      %7692 = vset.pattern.permute.xlu0 0
      %7693 = vperm.xlu0 %7692, %v7352
      %v7694 = vpop.permute.xlu0 %7693
      %7697 = vset.pattern.permute.xlu0 0
      %7698 = vperm.xlu0 %7697, %v7353
      %v7699 = vpop.permute.xlu0 %7698
      %7702 = vset.pattern.permute.xlu0 0
      %7703 = vperm.xlu0 %7702, %v7354
      %v7704 = vpop.permute.xlu0 %7703
      %7707 = vset.pattern.permute.xlu0 0
      %7708 = vperm.xlu0 %7707, %v7355
      %v7709 = vpop.permute.xlu0 %7708
      %7712 = vset.pattern.permute.xlu0 0
      %7713 = vperm.xlu0 %7712, %v7356
      %v7714 = vpop.permute.xlu0 %7713
      %7717 = vset.pattern.permute.xlu0 0
      %7718 = vperm.xlu0 %7717, %v7357
      %v7719 = vpop.permute.xlu0 %7718
      %7722 = vset.pattern.permute.xlu0 0
      %7723 = vperm.xlu0 %7722, %v7358
      %v7724 = vpop.permute.xlu0 %7723
      %7727 = vset.pattern.permute.xlu0 0
      %7728 = vperm.xlu0 %7727, %v7359
      %v7729 = vpop.permute.xlu0 %7728
      %7732 = vset.pattern.permute.xlu0 0
      %7733 = vperm.xlu0 %7732, %v7360
      %v7734 = vpop.permute.xlu0 %7733
      %7737 = vset.pattern.permute.xlu0 0
      %7738 = vperm.xlu0 %7737, %v7361
      %v7739 = vpop.permute.xlu0 %7738
      %7742 = vset.pattern.permute.xlu0 0
      %7743 = vperm.xlu0 %7742, %v7362
      %v7744 = vpop.permute.xlu0 %7743
      %7747 = vset.pattern.permute.xlu0 0
      %7748 = vperm.xlu0 %7747, %v7363
      %v7749 = vpop.permute.xlu0 %7748
      %7752 = vset.pattern.permute.xlu0 0
      %7753 = vperm.xlu0 %7752, %v7364
      %v7754 = vpop.permute.xlu0 %7753
      %7757 = vset.pattern.permute.xlu0 0
      %7758 = vperm.xlu0 %7757, %v7365
      %v7759 = vpop.permute.xlu0 %7758
      %7762 = vset.pattern.permute.xlu0 0
      %7763 = vperm.xlu0 %7762, %v7366
      %v7764 = vpop.permute.xlu0 %7763
      %7767 = vset.pattern.permute.xlu0 0
      %7768 = vperm.xlu0 %7767, %v7367
      %v7769 = vpop.permute.xlu0 %7768
      %7772 = vset.pattern.permute.xlu0 0
      %7773 = vperm.xlu0 %7772, %v7368
      %v7774 = vpop.permute.xlu0 %7773
      %7777 = vset.pattern.permute.xlu0 0
      %7778 = vperm.xlu0 %7777, %v7369
      %v7779 = vpop.permute.xlu0 %7778
      %7782 = vset.pattern.permute.xlu0 0
      %7783 = vperm.xlu0 %7782, %v7370
      %v7784 = vpop.permute.xlu0 %7783
      %7787 = vset.pattern.permute.xlu0 0
      %7788 = vperm.xlu0 %7787, %v7371
      %v7789 = vpop.permute.xlu0 %7788
      %7792 = vset.pattern.permute.xlu0 0
      %7793 = vperm.xlu0 %7792, %v7372
      %v7794 = vpop.permute.xlu0 %7793
      %7797 = vset.pattern.permute.xlu0 0
      %7798 = vperm.xlu0 %7797, %v7373
      %v7799 = vpop.permute.xlu0 %7798
      %7802 = vset.pattern.permute.xlu0 0
      %7803 = vperm.xlu0 %7802, %v7374
      %v7804 = vpop.permute.xlu0 %7803
      %7807 = vset.pattern.permute.xlu0 0
      %7808 = vperm.xlu0 %7807, %v7375
      %v7809 = vpop.permute.xlu0 %7808
      %7812 = vset.pattern.permute.xlu0 0
      %7813 = vperm.xlu0 %7812, %v7376
      %v7814 = vpop.permute.xlu0 %7813
      %7817 = vset.pattern.permute.xlu0 0
      %7818 = vperm.xlu0 %7817, %v7377
      %v7819 = vpop.permute.xlu0 %7818
      %7822 = vset.pattern.permute.xlu0 0
      %7823 = vperm.xlu0 %7822, %v7378
      %v7824 = vpop.permute.xlu0 %7823
      %7827 = vset.pattern.permute.xlu0 0
      %7828 = vperm.xlu0 %7827, %v7379
      %v7829 = vpop.permute.xlu0 %7828
      %7832 = vset.pattern.permute.xlu0 0
      %7833 = vperm.xlu0 %7832, %v7380
      %v7834 = vpop.permute.xlu0 %7833
      %7837 = vset.pattern.permute.xlu0 0
      %7838 = vperm.xlu0 %7837, %v7381
      %v7839 = vpop.permute.xlu0 %7838
      %7842 = vset.pattern.permute.xlu0 0
      %7843 = vperm.xlu0 %7842, %v7382
      %v7844 = vpop.permute.xlu0 %7843
      %7847 = vset.pattern.permute.xlu0 0
      %7848 = vperm.xlu0 %7847, %v7383
      %v7849 = vpop.permute.xlu0 %7848
      %7852 = vset.pattern.permute.xlu0 0
      %7853 = vperm.xlu0 %7852, %v7384
      %v7854 = vpop.permute.xlu0 %7853
      %7857 = vset.pattern.permute.xlu0 0
      %7858 = vperm.xlu0 %7857, %v7385
      %v7859 = vpop.permute.xlu0 %7858
      %7862 = vset.pattern.permute.xlu0 0
      %7863 = vperm.xlu0 %7862, %v7386
      %v7864 = vpop.permute.xlu0 %7863
      %7867 = vset.pattern.permute.xlu0 0
      %7868 = vperm.xlu0 %7867, %v7387
      %v7869 = vpop.permute.xlu0 %7868
      %7872 = vset.pattern.permute.xlu0 0
      %7873 = vperm.xlu0 %7872, %v7388
      %v7874 = vpop.permute.xlu0 %7873
      %7877 = vset.pattern.permute.xlu0 0
      %7878 = vperm.xlu0 %7877, %v7389
      %v7879 = vpop.permute.xlu0 %7878
      %7882 = vset.pattern.permute.xlu0 0
      %7883 = vperm.xlu0 %7882, %v7390
      %v7884 = vpop.permute.xlu0 %7883
      %7887 = vset.pattern.permute.xlu0 0
      %7888 = vperm.xlu0 %7887, %v7391
      %v7889 = vpop.permute.xlu0 %7888
      %7892 = vset.pattern.permute.xlu0 0
      %7893 = vperm.xlu0 %7892, %v7392
      %v7894 = vpop.permute.xlu0 %7893
      %7897 = vset.pattern.permute.xlu0 0
      %7898 = vperm.xlu0 %7897, %v7393
      %v7899 = vpop.permute.xlu0 %7898
      %7902 = vset.pattern.permute.xlu0 0
      %7903 = vperm.xlu0 %7902, %v7394
      %v7904 = vpop.permute.xlu0 %7903
      %7907 = vset.pattern.permute.xlu0 0
      %7908 = vperm.xlu0 %7907, %v7395
      %v7909 = vpop.permute.xlu0 %7908
      %7912 = vset.pattern.permute.xlu0 0
      %7913 = vperm.xlu0 %7912, %v7396
      %v7914 = vpop.permute.xlu0 %7913
      %7917 = vset.pattern.permute.xlu0 0
      %7918 = vperm.xlu0 %7917, %v7397
      %v7919 = vpop.permute.xlu0 %7918
      %v7921 = vlaneseq
      %v7922 = vshrl.u32 %v7921, 7
      %v7923 = vsub.s32 0, %v7922
      %v7924 = vrot.slane %v7400, %v7923
      %v7925 = vmul.f32 %v7404, %v7924
      %v7926 = vmul.f32 %v7409, %v7924
      %v7927 = vmul.f32 %v7414, %v7924
      %v7928 = vmul.f32 %v7419, %v7924
      %v7929 = vmul.f32 %v7424, %v7924
      %v7930 = vmul.f32 %v7429, %v7924
      %v7931 = vmul.f32 %v7434, %v7924
      %v7932 = vmul.f32 %v7439, %v7924
      %v7933 = vmul.f32 %v7444, %v7924
      %v7934 = vmul.f32 %v7449, %v7924
      %v7935 = vmul.f32 %v7454, %v7924
      %v7936 = vmul.f32 %v7459, %v7924
      %v7937 = vmul.f32 %v7464, %v7924
      %v7938 = vmul.f32 %v7469, %v7924
      %v7939 = vmul.f32 %v7474, %v7924
      %v7940 = vmul.f32 %v7479, %v7924
      %v7941 = vmul.f32 %v7484, %v7924
      %v7942 = vmul.f32 %v7489, %v7924
      %v7943 = vmul.f32 %v7494, %v7924
      %v7944 = vmul.f32 %v7499, %v7924
      %v7945 = vmul.f32 %v7504, %v7924
      %v7946 = vmul.f32 %v7509, %v7924
      %v7947 = vmul.f32 %v7514, %v7924
      %v7948 = vmul.f32 %v7519, %v7924
      %v7949 = vmul.f32 %v7524, %v7924
      %v7950 = vmul.f32 %v7529, %v7924
      %v7951 = vmul.f32 %v7534, %v7924
      %v7952 = vmul.f32 %v7539, %v7924
      %v7953 = vmul.f32 %v7544, %v7924
      %v7954 = vmul.f32 %v7549, %v7924
      %v7955 = vmul.f32 %v7554, %v7924
      %v7956 = vmul.f32 %v7559, %v7924
      %v7957 = vmul.f32 %v7564, %v7924
      %v7958 = vmul.f32 %v7569, %v7924
      %v7959 = vmul.f32 %v7574, %v7924
      %v7960 = vmul.f32 %v7579, %v7924
      %v7961 = vmul.f32 %v7584, %v7924
      %v7962 = vmul.f32 %v7589, %v7924
      %v7963 = vmul.f32 %v7594, %v7924
      %v7964 = vmul.f32 %v7599, %v7924
      %v7965 = vmul.f32 %v7604, %v7924
      %v7966 = vmul.f32 %v7609, %v7924
      %v7967 = vmul.f32 %v7614, %v7924
      %v7968 = vmul.f32 %v7619, %v7924
      %v7969 = vmul.f32 %v7624, %v7924
      %v7970 = vmul.f32 %v7629, %v7924
      %v7971 = vmul.f32 %v7634, %v7924
      %v7972 = vmul.f32 %v7639, %v7924
      %v7973 = vmul.f32 %v7644, %v7924
      %v7974 = vmul.f32 %v7649, %v7924
      %v7975 = vmul.f32 %v7654, %v7924
      %v7976 = vmul.f32 %v7659, %v7924
      %v7977 = vmul.f32 %v7664, %v7924
      %v7978 = vmul.f32 %v7669, %v7924
      %v7979 = vmul.f32 %v7674, %v7924
      %v7980 = vmul.f32 %v7679, %v7924
      %v7981 = vmul.f32 %v7684, %v7924
      %v7982 = vmul.f32 %v7689, %v7924
      %v7983 = vmul.f32 %v7694, %v7924
      %v7984 = vmul.f32 %v7699, %v7924
      %v7985 = vmul.f32 %v7704, %v7924
      %v7986 = vmul.f32 %v7709, %v7924
      %v7987 = vmul.f32 %v7714, %v7924
      %v7988 = vmul.f32 %v7719, %v7924
      %v7989 = vmul.f32 %v7724, %v7924
      %v7990 = vmul.f32 %v7729, %v7924
      %v7991 = vmul.f32 %v7734, %v7924
      %v7992 = vmul.f32 %v7739, %v7924
      %v7993 = vmul.f32 %v7744, %v7924
      %v7994 = vmul.f32 %v7749, %v7924
      %v7995 = vmul.f32 %v7754, %v7924
      %v7996 = vmul.f32 %v7759, %v7924
      %v7997 = vmul.f32 %v7764, %v7924
      %v7998 = vmul.f32 %v7769, %v7924
      %v7999 = vmul.f32 %v7774, %v7924
      %v8000 = vmul.f32 %v7779, %v7924
      %v8001 = vmul.f32 %v7784, %v7924
      %v8002 = vmul.f32 %v7789, %v7924
      %v8003 = vmul.f32 %v7794, %v7924
      %v8004 = vmul.f32 %v7799, %v7924
      %v8005 = vmul.f32 %v7804, %v7924
      %v8006 = vmul.f32 %v7809, %v7924
      %v8007 = vmul.f32 %v7814, %v7924
      %v8008 = vmul.f32 %v7819, %v7924
      %v8009 = vmul.f32 %v7824, %v7924
      %v8010 = vmul.f32 %v7829, %v7924
      %v8011 = vmul.f32 %v7834, %v7924
      %v8012 = vmul.f32 %v7839, %v7924
      %v8013 = vmul.f32 %v7844, %v7924
      %v8014 = vmul.f32 %v7849, %v7924
      %v8015 = vmul.f32 %v7854, %v7924
      %v8016 = vmul.f32 %v7859, %v7924
      %v8017 = vmul.f32 %v7864, %v7924
      %v8018 = vmul.f32 %v7869, %v7924
      %v8019 = vmul.f32 %v7874, %v7924
      %v8020 = vmul.f32 %v7879, %v7924
      %v8021 = vmul.f32 %v7884, %v7924
      %v8022 = vmul.f32 %v7889, %v7924
      %v8023 = vmul.f32 %v7894, %v7924
      %v8024 = vmul.f32 %v7899, %v7924
      %v8025 = vmul.f32 %v7904, %v7924
      %v8026 = vmul.f32 %v7909, %v7924
      %v8027 = vmul.f32 %v7914, %v7924
      %v8028 = vmul.f32 %v7919, %v7924
      %v8029 = vadd.f32 %v7034, %v7925
      %v8030 = vadd.f32 %v7035, %v7926
      %v8031 = vadd.f32 %v7036, %v7927
      %v8032 = vadd.f32 %v7037, %v7928
      %v8033 = vadd.f32 %v7038, %v7929
      %v8034 = vadd.f32 %v7039, %v7930
      %v8035 = vadd.f32 %v7040, %v7931
      %v8036 = vadd.f32 %v7041, %v7932
      %v8037 = vadd.f32 %v7042, %v7933
      %v8038 = vadd.f32 %v7043, %v7934
      %v8039 = vadd.f32 %v7044, %v7935
      %v8040 = vadd.f32 %v7045, %v7936
      %v8041 = vadd.f32 %v7046, %v7937
      %v8042 = vadd.f32 %v7047, %v7938
      %v8043 = vadd.f32 %v7048, %v7939
      %v8044 = vadd.f32 %v7049, %v7940
      %v8045 = vadd.f32 %v7050, %v7941
      %v8046 = vadd.f32 %v7051, %v7942
      %v8047 = vadd.f32 %v7052, %v7943
      %v8048 = vadd.f32 %v7053, %v7944
      %v8049 = vadd.f32 %v7054, %v7945
      %v8050 = vadd.f32 %v7055, %v7946
      %v8051 = vadd.f32 %v7056, %v7947
      %v8052 = vadd.f32 %v7057, %v7948
      %v8053 = vadd.f32 %v7058, %v7949
      %v8054 = vadd.f32 %v7059, %v7950
      %v8055 = vadd.f32 %v7060, %v7951
      %v8056 = vadd.f32 %v7061, %v7952
      %v8057 = vadd.f32 %v7062, %v7953
      %v8058 = vadd.f32 %v7063, %v7954
      %v8059 = vadd.f32 %v7064, %v7955
      %v8060 = vadd.f32 %v7065, %v7956
      %v8061 = vadd.f32 %v7066, %v7957
      %v8062 = vadd.f32 %v7067, %v7958
      %v8063 = vadd.f32 %v7068, %v7959
      %v8064 = vadd.f32 %v7069, %v7960
      %v8065 = vadd.f32 %v7070, %v7961
      %v8066 = vadd.f32 %v7071, %v7962
      %v8067 = vadd.f32 %v7072, %v7963
      %v8068 = vadd.f32 %v7073, %v7964
      %v8069 = vadd.f32 %v7074, %v7965
      %v8070 = vadd.f32 %v7075, %v7966
      %v8071 = vadd.f32 %v7076, %v7967
      %v8072 = vadd.f32 %v7077, %v7968
      %v8073 = vadd.f32 %v7078, %v7969
      %v8074 = vadd.f32 %v7079, %v7970
      %v8075 = vadd.f32 %v7080, %v7971
      %v8076 = vadd.f32 %v7081, %v7972
      %v8077 = vadd.f32 %v7082, %v7973
      %v8078 = vadd.f32 %v7083, %v7974
      %v8079 = vadd.f32 %v7084, %v7975
      %v8080 = vadd.f32 %v7085, %v7976
      %v8081 = vadd.f32 %v7086, %v7977
      %v8082 = vadd.f32 %v7087, %v7978
      %v8083 = vadd.f32 %v7088, %v7979
      %v8084 = vadd.f32 %v7089, %v7980
      %v8085 = vadd.f32 %v7090, %v7981
      %v8086 = vadd.f32 %v7091, %v7982
      %v8087 = vadd.f32 %v7092, %v7983
      %v8088 = vadd.f32 %v7093, %v7984
      %v8089 = vadd.f32 %v7094, %v7985
      %v8090 = vadd.f32 %v7095, %v7986
      %v8091 = vadd.f32 %v7096, %v7987
      %v8092 = vadd.f32 %v7097, %v7988
      %v8093 = vadd.f32 %v7098, %v7989
      %v8094 = vadd.f32 %v7099, %v7990
      %v8095 = vadd.f32 %v7100, %v7991
      %v8096 = vadd.f32 %v7101, %v7992
      %v8097 = vadd.f32 %v7102, %v7993
      %v8098 = vadd.f32 %v7103, %v7994
      %v8099 = vadd.f32 %v7104, %v7995
      %v8100 = vadd.f32 %v7105, %v7996
      %v8101 = vadd.f32 %v7106, %v7997
      %v8102 = vadd.f32 %v7107, %v7998
      %v8103 = vadd.f32 %v7108, %v7999
      %v8104 = vadd.f32 %v7109, %v8000
      %v8105 = vadd.f32 %v7110, %v8001
      %v8106 = vadd.f32 %v7111, %v8002
      %v8107 = vadd.f32 %v7112, %v8003
      %v8108 = vadd.f32 %v7113, %v8004
      %v8109 = vadd.f32 %v7114, %v8005
      %v8110 = vadd.f32 %v7115, %v8006
      %v8111 = vadd.f32 %v7116, %v8007
      %v8112 = vadd.f32 %v7117, %v8008
      %v8113 = vadd.f32 %v7118, %v8009
      %v8114 = vadd.f32 %v7119, %v8010
      %v8115 = vadd.f32 %v7120, %v8011
      %v8116 = vadd.f32 %v7121, %v8012
      %v8117 = vadd.f32 %v7122, %v8013
      %v8118 = vadd.f32 %v7123, %v8014
      %v8119 = vadd.f32 %v7124, %v8015
      %v8120 = vadd.f32 %v7125, %v8016
      %v8121 = vadd.f32 %v7126, %v8017
      %v8122 = vadd.f32 %v7127, %v8018
      %v8123 = vadd.f32 %v7128, %v8019
      %v8124 = vadd.f32 %v7129, %v8020
      %v8125 = vadd.f32 %v7130, %v8021
      %v8126 = vadd.f32 %v7131, %v8022
      %v8127 = vadd.f32 %v7132, %v8023
      %v8128 = vadd.f32 %v7133, %v8024
      %v8129 = vadd.f32 %v7134, %v8025
      %v8130 = vadd.f32 %v7135, %v8026
      %v8131 = vadd.f32 %v7136, %v8027
      %v8132 = vadd.f32 %v7137, %v8028
      %v8133 = vld [vmem:[%s6142 + $0x2] sm:$0xff]
      %v8134 = vld [vmem:[%s6142 + $0xa] sm:$0xff]
      %v8135 = vld [vmem:[%s6142 + $0x12] sm:$0xff]
      %v8136 = vld [vmem:[%s6142 + $0x1a] sm:$0xff]
      %v8137 = vld [vmem:[%s6142 + $0x2a] sm:$0xff]
      %v8138 = vld [vmem:[%s6142 + $0x32] sm:$0xff]
      %v8139 = vld [vmem:[%s6142 + $0x3a] sm:$0xff]
      %v8140 = vld [vmem:[%s6142 + $0x42] sm:$0xff]
      %v8141 = vld [vmem:[%s6142 + $0x52] sm:$0xff]
      %v8142 = vld [vmem:[%s6142 + $0x5a] sm:$0xff]
      %v8143 = vld [vmem:[%s6142 + $0x62] sm:$0xff]
      %v8144 = vld [vmem:[%s6142 + $0x6a] sm:$0xff]
      %v8145 = vld [vmem:[%s6142 + $0x7a] sm:$0xff]
      %v8146 = vld [vmem:[%s6142 + $0x82] sm:$0xff]
      %v8147 = vld [vmem:[%s6142 + $0x8a] sm:$0xff]
      %v8148 = vld [vmem:[%s6142 + $0x92] sm:$0xff]
      %v8149 = vld [vmem:[%s6142 + $0xa2] sm:$0xff]
      %v8150 = vld [vmem:[%s6142 + $0xaa] sm:$0xff]
      %v8151 = vld [vmem:[%s6142 + $0xb2] sm:$0xff]
      %v8152 = vld [vmem:[%s6142 + $0xba] sm:$0xff]
      %v8153 = vld [vmem:[%s6142 + $0xca] sm:$0xff]
      %v8154 = vld [vmem:[%s6142 + $0xd2] sm:$0xff]
      %v8155 = vld [vmem:[%s6142 + $0xda] sm:$0xff]
      %v8156 = vld [vmem:[%s6142 + $0xe2] sm:$0xff]
      %v8157 = vld [vmem:[%s6142 + $0xf2] sm:$0xff]
      %v8158 = vld [vmem:[%s6142 + $0xfa] sm:$0xff]
      %v8159 = vld [vmem:[%s6142 + $0x102] sm:$0xff]
      %v8160 = vld [vmem:[%s6142 + $0x10a] sm:$0xff]
      %v8161 = vld [vmem:[%s6142 + $0x11a] sm:$0xff]
      %v8162 = vld [vmem:[%s6142 + $0x122] sm:$0xff]
      %v8163 = vld [vmem:[%s6142 + $0x12a] sm:$0xff]
      %v8164 = vld [vmem:[%s6142 + $0x132] sm:$0xff]
      %v8165 = vld [vmem:[%s6142 + $0x142] sm:$0xff]
      %v8166 = vld [vmem:[%s6142 + $0x14a] sm:$0xff]
      %v8167 = vld [vmem:[%s6142 + $0x152] sm:$0xff]
      %v8168 = vld [vmem:[%s6142 + $0x15a] sm:$0xff]
      %v8169 = vld [vmem:[%s6142 + $0x16a] sm:$0xff]
      %v8170 = vld [vmem:[%s6142 + $0x172] sm:$0xff]
      %v8171 = vld [vmem:[%s6142 + $0x17a] sm:$0xff]
      %v8172 = vld [vmem:[%s6142 + $0x182] sm:$0xff]
      %v8173 = vld [vmem:[%s6142 + $0x192] sm:$0xff]
      %v8174 = vld [vmem:[%s6142 + $0x19a] sm:$0xff]
      %v8175 = vld [vmem:[%s6142 + $0x1a2] sm:$0xff]
      %v8176 = vld [vmem:[%s6142 + $0x1aa] sm:$0xff]
      %v8177 = vld [vmem:[%s6142 + $0x1ba] sm:$0xff]
      %v8178 = vld [vmem:[%s6142 + $0x1c2] sm:$0xff]
      %v8179 = vld [vmem:[%s6142 + $0x1ca] sm:$0xff]
      %v8180 = vld [vmem:[%s6142 + $0x1d2] sm:$0xff]
      %v8181 = vld [vmem:[%s6142 + $0x1e2] sm:$0xff]
      %v8182 = vld [vmem:[%s6142 + $0x1ea] sm:$0xff]
      %v8183 = vld [vmem:[%s6142 + $0x1f2] sm:$0xff]
      %v8184 = vld [vmem:[%s6142 + $0x1fa] sm:$0xff]
      %v8185 = vld [vmem:[%s6142 + $0x20a] sm:$0xff]
      %v8186 = vld [vmem:[%s6142 + $0x212] sm:$0xff]
      %v8187 = vld [vmem:[%s6142 + $0x21a] sm:$0xff]
      %v8188 = vld [vmem:[%s6142 + $0x222] sm:$0xff]
      %v8189 = vld [vmem:[%s6142 + $0x232] sm:$0xff]
      %v8190 = vld [vmem:[%s6142 + $0x23a] sm:$0xff]
      %v8191 = vld [vmem:[%s6142 + $0x242] sm:$0xff]
      %v8192 = vld [vmem:[%s6142 + $0x24a] sm:$0xff]
      %v8193 = vld [vmem:[%s6142 + $0x25a] sm:$0xff]
      %v8194 = vld [vmem:[%s6142 + $0x262] sm:$0xff]
      %v8195 = vld [vmem:[%s6142 + $0x26a] sm:$0xff]
      %v8196 = vld [vmem:[%s6142 + $0x272] sm:$0xff]
      %v8197 = vld [vmem:[%s6142 + $0x282] sm:$0xff]
      %v8198 = vld [vmem:[%s6142 + $0x28a] sm:$0xff]
      %v8199 = vld [vmem:[%s6142 + $0x292] sm:$0xff]
      %v8200 = vld [vmem:[%s6142 + $0x29a] sm:$0xff]
      %v8201 = vld [vmem:[%s6142 + $0x2aa] sm:$0xff]
      %v8202 = vld [vmem:[%s6142 + $0x2b2] sm:$0xff]
      %v8203 = vld [vmem:[%s6142 + $0x2ba] sm:$0xff]
      %v8204 = vld [vmem:[%s6142 + $0x2c2] sm:$0xff]
      %v8205 = vld [vmem:[%s6142 + $0x2d2] sm:$0xff]
      %v8206 = vld [vmem:[%s6142 + $0x2da] sm:$0xff]
      %v8207 = vld [vmem:[%s6142 + $0x2e2] sm:$0xff]
      %v8208 = vld [vmem:[%s6142 + $0x2ea] sm:$0xff]
      %v8209 = vld [vmem:[%s6142 + $0x2fa] sm:$0xff]
      %v8210 = vld [vmem:[%s6142 + $0x302] sm:$0xff]
      %v8211 = vld [vmem:[%s6142 + $0x30a] sm:$0xff]
      %v8212 = vld [vmem:[%s6142 + $0x312] sm:$0xff]
      %v8213 = vld [vmem:[%s6142 + $0x322] sm:$0xff]
      %v8214 = vld [vmem:[%s6142 + $0x32a] sm:$0xff]
      %v8215 = vld [vmem:[%s6142 + $0x332] sm:$0xff]
      %v8216 = vld [vmem:[%s6142 + $0x33a] sm:$0xff]
      %v8217 = vld [vmem:[%s6142 + $0x34a] sm:$0xff]
      %v8218 = vld [vmem:[%s6142 + $0x352] sm:$0xff]
      %v8219 = vld [vmem:[%s6142 + $0x35a] sm:$0xff]
      %v8220 = vld [vmem:[%s6142 + $0x362] sm:$0xff]
      %v8221 = vld [vmem:[%s6142 + $0x372] sm:$0xff]
      %v8222 = vld [vmem:[%s6142 + $0x37a] sm:$0xff]
      %v8223 = vld [vmem:[%s6142 + $0x382] sm:$0xff]
      %v8224 = vld [vmem:[%s6142 + $0x38a] sm:$0xff]
      %v8225 = vld [vmem:[%s6142 + $0x39a] sm:$0xff]
      %v8226 = vld [vmem:[%s6142 + $0x3a2] sm:$0xff]
      %v8227 = vld [vmem:[%s6142 + $0x3aa] sm:$0xff]
      %v8228 = vld [vmem:[%s6142 + $0x3b2] sm:$0xff]
      %v8229 = vld [vmem:[%s6142 + $0x3c2] sm:$0xff]
      %v8230 = vld [vmem:[%s6142 + $0x3ca] sm:$0xff]
      %v8231 = vld [vmem:[%s6142 + $0x3d2] sm:$0xff]
      %v8232 = vld [vmem:[%s6142 + $0x3da] sm:$0xff]
      %v8233 = vld [vmem:[%s6142 + $0x3ea] sm:$0xff]
      %v8234 = vld [vmem:[%s6142 + $0x3f2] sm:$0xff]
      %v8235 = vld [vmem:[%s6142 + $0x3fa] sm:$0xff]
      %v8236 = vld [vmem:[%s6142 + $0x402] sm:$0xff]
      %v8237 = vpack.c.bf16 %v8134, %v8133
      %v8238 = vpack.c.bf16 %v8136, %v8135
      %v8239 = vpack.c.bf16 %v8138, %v8137
      %v8240 = vpack.c.bf16 %v8140, %v8139
      %v8241 = vpack.c.bf16 %v8142, %v8141
      %v8242 = vpack.c.bf16 %v8144, %v8143
      %v8243 = vpack.c.bf16 %v8146, %v8145
      %v8244 = vpack.c.bf16 %v8148, %v8147
      %v8245 = vpack.c.bf16 %v8150, %v8149
      %v8246 = vpack.c.bf16 %v8152, %v8151
      %v8247 = vpack.c.bf16 %v8154, %v8153
      %v8248 = vpack.c.bf16 %v8156, %v8155
      %v8249 = vpack.c.bf16 %v8158, %v8157
      %v8250 = vpack.c.bf16 %v8160, %v8159
      %v8251 = vpack.c.bf16 %v8162, %v8161
      %v8252 = vpack.c.bf16 %v8164, %v8163
      %v8253 = vpack.c.bf16 %v8166, %v8165
      %v8254 = vpack.c.bf16 %v8168, %v8167
      %v8255 = vpack.c.bf16 %v8170, %v8169
      %v8256 = vpack.c.bf16 %v8172, %v8171
      %v8257 = vpack.c.bf16 %v8174, %v8173
      %v8258 = vpack.c.bf16 %v8176, %v8175
      %v8259 = vpack.c.bf16 %v8178, %v8177
      %v8260 = vpack.c.bf16 %v8180, %v8179
      %v8261 = vpack.c.bf16 %v8182, %v8181
      %v8262 = vpack.c.bf16 %v8184, %v8183
      %v8263 = vpack.c.bf16 %v8186, %v8185
      %v8264 = vpack.c.bf16 %v8188, %v8187
      %v8265 = vpack.c.bf16 %v8190, %v8189
      %v8266 = vpack.c.bf16 %v8192, %v8191
      %v8267 = vpack.c.bf16 %v8194, %v8193
      %v8268 = vpack.c.bf16 %v8196, %v8195
      %v8269 = vpack.c.bf16 %v8198, %v8197
      %v8270 = vpack.c.bf16 %v8200, %v8199
      %v8271 = vpack.c.bf16 %v8202, %v8201
      %v8272 = vpack.c.bf16 %v8204, %v8203
      %v8273 = vpack.c.bf16 %v8206, %v8205
      %v8274 = vpack.c.bf16 %v8208, %v8207
      %v8275 = vpack.c.bf16 %v8210, %v8209
      %v8276 = vpack.c.bf16 %v8212, %v8211
      %v8277 = vpack.c.bf16 %v8214, %v8213
      %v8278 = vpack.c.bf16 %v8216, %v8215
      %v8279 = vpack.c.bf16 %v8218, %v8217
      %v8280 = vpack.c.bf16 %v8220, %v8219
      %v8281 = vpack.c.bf16 %v8222, %v8221
      %v8282 = vpack.c.bf16 %v8224, %v8223
      %v8283 = vpack.c.bf16 %v8226, %v8225
      %v8284 = vpack.c.bf16 %v8228, %v8227
      %v8285 = vpack.c.bf16 %v8230, %v8229
      %v8286 = vpack.c.bf16 %v8232, %v8231
      %v8287 = vpack.c.bf16 %v8234, %v8233
      %v8288 = vpack.c.bf16 %v8236, %v8235
      %v8289 = vunpack.c.l.bf16 %v8237
      %v8290 = vunpack.c.h.bf16 %v8237
      %v8291 = vunpack.c.l.bf16 %v8238
      %v8292 = vunpack.c.h.bf16 %v8238
      %v8293 = vunpack.c.l.bf16 %v8239
      %v8294 = vunpack.c.h.bf16 %v8239
      %v8295 = vunpack.c.l.bf16 %v8240
      %v8296 = vunpack.c.h.bf16 %v8240
      %v8297 = vunpack.c.l.bf16 %v8241
      %v8298 = vunpack.c.h.bf16 %v8241
      %v8299 = vunpack.c.l.bf16 %v8242
      %v8300 = vunpack.c.h.bf16 %v8242
      %v8301 = vunpack.c.l.bf16 %v8243
      %v8302 = vunpack.c.h.bf16 %v8243
      %v8303 = vunpack.c.l.bf16 %v8244
      %v8304 = vunpack.c.h.bf16 %v8244
      %v8305 = vunpack.c.l.bf16 %v8245
      %v8306 = vunpack.c.h.bf16 %v8245
      %v8307 = vunpack.c.l.bf16 %v8246
      %v8308 = vunpack.c.h.bf16 %v8246
      %v8309 = vunpack.c.l.bf16 %v8247
      %v8310 = vunpack.c.h.bf16 %v8247
      %v8311 = vunpack.c.l.bf16 %v8248
      %v8312 = vunpack.c.h.bf16 %v8248
      %v8313 = vunpack.c.l.bf16 %v8249
      %v8314 = vunpack.c.h.bf16 %v8249
      %v8315 = vunpack.c.l.bf16 %v8250
      %v8316 = vunpack.c.h.bf16 %v8250
      %v8317 = vunpack.c.l.bf16 %v8251
      %v8318 = vunpack.c.h.bf16 %v8251
      %v8319 = vunpack.c.l.bf16 %v8252
      %v8320 = vunpack.c.h.bf16 %v8252
      %v8321 = vunpack.c.l.bf16 %v8253
      %v8322 = vunpack.c.h.bf16 %v8253
      %v8323 = vunpack.c.l.bf16 %v8254
      %v8324 = vunpack.c.h.bf16 %v8254
      %v8325 = vunpack.c.l.bf16 %v8255
      %v8326 = vunpack.c.h.bf16 %v8255
      %v8327 = vunpack.c.l.bf16 %v8256
      %v8328 = vunpack.c.h.bf16 %v8256
      %v8329 = vunpack.c.l.bf16 %v8257
      %v8330 = vunpack.c.h.bf16 %v8257
      %v8331 = vunpack.c.l.bf16 %v8258
      %v8332 = vunpack.c.h.bf16 %v8258
      %v8333 = vunpack.c.l.bf16 %v8259
      %v8334 = vunpack.c.h.bf16 %v8259
      %v8335 = vunpack.c.l.bf16 %v8260
      %v8336 = vunpack.c.h.bf16 %v8260
      %v8337 = vunpack.c.l.bf16 %v8261
      %v8338 = vunpack.c.h.bf16 %v8261
      %v8339 = vunpack.c.l.bf16 %v8262
      %v8340 = vunpack.c.h.bf16 %v8262
      %v8341 = vunpack.c.l.bf16 %v8263
      %v8342 = vunpack.c.h.bf16 %v8263
      %v8343 = vunpack.c.l.bf16 %v8264
      %v8344 = vunpack.c.h.bf16 %v8264
      %v8345 = vunpack.c.l.bf16 %v8265
      %v8346 = vunpack.c.h.bf16 %v8265
      %v8347 = vunpack.c.l.bf16 %v8266
      %v8348 = vunpack.c.h.bf16 %v8266
      %v8349 = vunpack.c.l.bf16 %v8267
      %v8350 = vunpack.c.h.bf16 %v8267
      %v8351 = vunpack.c.l.bf16 %v8268
      %v8352 = vunpack.c.h.bf16 %v8268
      %v8353 = vunpack.c.l.bf16 %v8269
      %v8354 = vunpack.c.h.bf16 %v8269
      %v8355 = vunpack.c.l.bf16 %v8270
      %v8356 = vunpack.c.h.bf16 %v8270
      %v8357 = vunpack.c.l.bf16 %v8271
      %v8358 = vunpack.c.h.bf16 %v8271
      %v8359 = vunpack.c.l.bf16 %v8272
      %v8360 = vunpack.c.h.bf16 %v8272
      %v8361 = vunpack.c.l.bf16 %v8273
      %v8362 = vunpack.c.h.bf16 %v8273
      %v8363 = vunpack.c.l.bf16 %v8274
      %v8364 = vunpack.c.h.bf16 %v8274
      %v8365 = vunpack.c.l.bf16 %v8275
      %v8366 = vunpack.c.h.bf16 %v8275
      %v8367 = vunpack.c.l.bf16 %v8276
      %v8368 = vunpack.c.h.bf16 %v8276
      %v8369 = vunpack.c.l.bf16 %v8277
      %v8370 = vunpack.c.h.bf16 %v8277
      %v8371 = vunpack.c.l.bf16 %v8278
      %v8372 = vunpack.c.h.bf16 %v8278
      %v8373 = vunpack.c.l.bf16 %v8279
      %v8374 = vunpack.c.h.bf16 %v8279
      %v8375 = vunpack.c.l.bf16 %v8280
      %v8376 = vunpack.c.h.bf16 %v8280
      %v8377 = vunpack.c.l.bf16 %v8281
      %v8378 = vunpack.c.h.bf16 %v8281
      %v8379 = vunpack.c.l.bf16 %v8282
      %v8380 = vunpack.c.h.bf16 %v8282
      %v8381 = vunpack.c.l.bf16 %v8283
      %v8382 = vunpack.c.h.bf16 %v8283
      %v8383 = vunpack.c.l.bf16 %v8284
      %v8384 = vunpack.c.h.bf16 %v8284
      %v8385 = vunpack.c.l.bf16 %v8285
      %v8386 = vunpack.c.h.bf16 %v8285
      %v8387 = vunpack.c.l.bf16 %v8286
      %v8388 = vunpack.c.h.bf16 %v8286
      %v8389 = vunpack.c.l.bf16 %v8287
      %v8390 = vunpack.c.h.bf16 %v8287
      %v8391 = vunpack.c.l.bf16 %v8288
      %v8392 = vunpack.c.h.bf16 %v8288
      %v8393 = vld [vmem:[%s1 + $0x8] sm:$0x1]
      %v8394 = vpack.c.bf16 %v8393, %v8393
      %v8395 = vunpack.c.l.bf16 %v8394
      %8397 = vset.pattern.permute.xlu0 0
      %8398 = vperm.xlu0 %8397, %v8289
      %v8399 = vpop.permute.xlu0 %8398
      %8402 = vset.pattern.permute.xlu0 0
      %8403 = vperm.xlu0 %8402, %v8290
      %v8404 = vpop.permute.xlu0 %8403
      %8407 = vset.pattern.permute.xlu0 0
      %8408 = vperm.xlu0 %8407, %v8291
      %v8409 = vpop.permute.xlu0 %8408
      %8412 = vset.pattern.permute.xlu0 0
      %8413 = vperm.xlu0 %8412, %v8292
      %v8414 = vpop.permute.xlu0 %8413
      %8417 = vset.pattern.permute.xlu0 0
      %8418 = vperm.xlu0 %8417, %v8293
      %v8419 = vpop.permute.xlu0 %8418
      %8422 = vset.pattern.permute.xlu0 0
      %8423 = vperm.xlu0 %8422, %v8294
      %v8424 = vpop.permute.xlu0 %8423
      %8427 = vset.pattern.permute.xlu0 0
      %8428 = vperm.xlu0 %8427, %v8295
      %v8429 = vpop.permute.xlu0 %8428
      %8432 = vset.pattern.permute.xlu0 0
      %8433 = vperm.xlu0 %8432, %v8296
      %v8434 = vpop.permute.xlu0 %8433
      %8437 = vset.pattern.permute.xlu0 0
      %8438 = vperm.xlu0 %8437, %v8297
      %v8439 = vpop.permute.xlu0 %8438
      %8442 = vset.pattern.permute.xlu0 0
      %8443 = vperm.xlu0 %8442, %v8298
      %v8444 = vpop.permute.xlu0 %8443
      %8447 = vset.pattern.permute.xlu0 0
      %8448 = vperm.xlu0 %8447, %v8299
      %v8449 = vpop.permute.xlu0 %8448
      %8452 = vset.pattern.permute.xlu0 0
      %8453 = vperm.xlu0 %8452, %v8300
      %v8454 = vpop.permute.xlu0 %8453
      %8457 = vset.pattern.permute.xlu0 0
      %8458 = vperm.xlu0 %8457, %v8301
      %v8459 = vpop.permute.xlu0 %8458
      %8462 = vset.pattern.permute.xlu0 0
      %8463 = vperm.xlu0 %8462, %v8302
      %v8464 = vpop.permute.xlu0 %8463
      %8467 = vset.pattern.permute.xlu0 0
      %8468 = vperm.xlu0 %8467, %v8303
      %v8469 = vpop.permute.xlu0 %8468
      %8472 = vset.pattern.permute.xlu0 0
      %8473 = vperm.xlu0 %8472, %v8304
      %v8474 = vpop.permute.xlu0 %8473
      %8477 = vset.pattern.permute.xlu0 0
      %8478 = vperm.xlu0 %8477, %v8305
      %v8479 = vpop.permute.xlu0 %8478
      %8482 = vset.pattern.permute.xlu0 0
      %8483 = vperm.xlu0 %8482, %v8306
      %v8484 = vpop.permute.xlu0 %8483
      %8487 = vset.pattern.permute.xlu0 0
      %8488 = vperm.xlu0 %8487, %v8307
      %v8489 = vpop.permute.xlu0 %8488
      %8492 = vset.pattern.permute.xlu0 0
      %8493 = vperm.xlu0 %8492, %v8308
      %v8494 = vpop.permute.xlu0 %8493
      %8497 = vset.pattern.permute.xlu0 0
      %8498 = vperm.xlu0 %8497, %v8309
      %v8499 = vpop.permute.xlu0 %8498
      %8502 = vset.pattern.permute.xlu0 0
      %8503 = vperm.xlu0 %8502, %v8310
      %v8504 = vpop.permute.xlu0 %8503
      %8507 = vset.pattern.permute.xlu0 0
      %8508 = vperm.xlu0 %8507, %v8311
      %v8509 = vpop.permute.xlu0 %8508
      %8512 = vset.pattern.permute.xlu0 0
      %8513 = vperm.xlu0 %8512, %v8312
      %v8514 = vpop.permute.xlu0 %8513
      %8517 = vset.pattern.permute.xlu0 0
      %8518 = vperm.xlu0 %8517, %v8313
      %v8519 = vpop.permute.xlu0 %8518
      %8522 = vset.pattern.permute.xlu0 0
      %8523 = vperm.xlu0 %8522, %v8314
      %v8524 = vpop.permute.xlu0 %8523
      %8527 = vset.pattern.permute.xlu0 0
      %8528 = vperm.xlu0 %8527, %v8315
      %v8529 = vpop.permute.xlu0 %8528
      %8532 = vset.pattern.permute.xlu0 0
      %8533 = vperm.xlu0 %8532, %v8316
      %v8534 = vpop.permute.xlu0 %8533
      %8537 = vset.pattern.permute.xlu0 0
      %8538 = vperm.xlu0 %8537, %v8317
      %v8539 = vpop.permute.xlu0 %8538
      %8542 = vset.pattern.permute.xlu0 0
      %8543 = vperm.xlu0 %8542, %v8318
      %v8544 = vpop.permute.xlu0 %8543
      %8547 = vset.pattern.permute.xlu0 0
      %8548 = vperm.xlu0 %8547, %v8319
      %v8549 = vpop.permute.xlu0 %8548
      %8552 = vset.pattern.permute.xlu0 0
      %8553 = vperm.xlu0 %8552, %v8320
      %v8554 = vpop.permute.xlu0 %8553
      %8557 = vset.pattern.permute.xlu0 0
      %8558 = vperm.xlu0 %8557, %v8321
      %v8559 = vpop.permute.xlu0 %8558
      %8562 = vset.pattern.permute.xlu0 0
      %8563 = vperm.xlu0 %8562, %v8322
      %v8564 = vpop.permute.xlu0 %8563
      %8567 = vset.pattern.permute.xlu0 0
      %8568 = vperm.xlu0 %8567, %v8323
      %v8569 = vpop.permute.xlu0 %8568
      %8572 = vset.pattern.permute.xlu0 0
      %8573 = vperm.xlu0 %8572, %v8324
      %v8574 = vpop.permute.xlu0 %8573
      %8577 = vset.pattern.permute.xlu0 0
      %8578 = vperm.xlu0 %8577, %v8325
      %v8579 = vpop.permute.xlu0 %8578
      %8582 = vset.pattern.permute.xlu0 0
      %8583 = vperm.xlu0 %8582, %v8326
      %v8584 = vpop.permute.xlu0 %8583
      %8587 = vset.pattern.permute.xlu0 0
      %8588 = vperm.xlu0 %8587, %v8327
      %v8589 = vpop.permute.xlu0 %8588
      %8592 = vset.pattern.permute.xlu0 0
      %8593 = vperm.xlu0 %8592, %v8328
      %v8594 = vpop.permute.xlu0 %8593
      %8597 = vset.pattern.permute.xlu0 0
      %8598 = vperm.xlu0 %8597, %v8329
      %v8599 = vpop.permute.xlu0 %8598
      %8602 = vset.pattern.permute.xlu0 0
      %8603 = vperm.xlu0 %8602, %v8330
      %v8604 = vpop.permute.xlu0 %8603
      %8607 = vset.pattern.permute.xlu0 0
      %8608 = vperm.xlu0 %8607, %v8331
      %v8609 = vpop.permute.xlu0 %8608
      %8612 = vset.pattern.permute.xlu0 0
      %8613 = vperm.xlu0 %8612, %v8332
      %v8614 = vpop.permute.xlu0 %8613
      %8617 = vset.pattern.permute.xlu0 0
      %8618 = vperm.xlu0 %8617, %v8333
      %v8619 = vpop.permute.xlu0 %8618
      %8622 = vset.pattern.permute.xlu0 0
      %8623 = vperm.xlu0 %8622, %v8334
      %v8624 = vpop.permute.xlu0 %8623
      %8627 = vset.pattern.permute.xlu0 0
      %8628 = vperm.xlu0 %8627, %v8335
      %v8629 = vpop.permute.xlu0 %8628
      %8632 = vset.pattern.permute.xlu0 0
      %8633 = vperm.xlu0 %8632, %v8336
      %v8634 = vpop.permute.xlu0 %8633
      %8637 = vset.pattern.permute.xlu0 0
      %8638 = vperm.xlu0 %8637, %v8337
      %v8639 = vpop.permute.xlu0 %8638
      %8642 = vset.pattern.permute.xlu0 0
      %8643 = vperm.xlu0 %8642, %v8338
      %v8644 = vpop.permute.xlu0 %8643
      %8647 = vset.pattern.permute.xlu0 0
      %8648 = vperm.xlu0 %8647, %v8339
      %v8649 = vpop.permute.xlu0 %8648
      %8652 = vset.pattern.permute.xlu0 0
      %8653 = vperm.xlu0 %8652, %v8340
      %v8654 = vpop.permute.xlu0 %8653
      %8657 = vset.pattern.permute.xlu0 0
      %8658 = vperm.xlu0 %8657, %v8341
      %v8659 = vpop.permute.xlu0 %8658
      %8662 = vset.pattern.permute.xlu0 0
      %8663 = vperm.xlu0 %8662, %v8342
      %v8664 = vpop.permute.xlu0 %8663
      %8667 = vset.pattern.permute.xlu0 0
      %8668 = vperm.xlu0 %8667, %v8343
      %v8669 = vpop.permute.xlu0 %8668
      %8672 = vset.pattern.permute.xlu0 0
      %8673 = vperm.xlu0 %8672, %v8344
      %v8674 = vpop.permute.xlu0 %8673
      %8677 = vset.pattern.permute.xlu0 0
      %8678 = vperm.xlu0 %8677, %v8345
      %v8679 = vpop.permute.xlu0 %8678
      %8682 = vset.pattern.permute.xlu0 0
      %8683 = vperm.xlu0 %8682, %v8346
      %v8684 = vpop.permute.xlu0 %8683
      %8687 = vset.pattern.permute.xlu0 0
      %8688 = vperm.xlu0 %8687, %v8347
      %v8689 = vpop.permute.xlu0 %8688
      %8692 = vset.pattern.permute.xlu0 0
      %8693 = vperm.xlu0 %8692, %v8348
      %v8694 = vpop.permute.xlu0 %8693
      %8697 = vset.pattern.permute.xlu0 0
      %8698 = vperm.xlu0 %8697, %v8349
      %v8699 = vpop.permute.xlu0 %8698
      %8702 = vset.pattern.permute.xlu0 0
      %8703 = vperm.xlu0 %8702, %v8350
      %v8704 = vpop.permute.xlu0 %8703
      %8707 = vset.pattern.permute.xlu0 0
      %8708 = vperm.xlu0 %8707, %v8351
      %v8709 = vpop.permute.xlu0 %8708
      %8712 = vset.pattern.permute.xlu0 0
      %8713 = vperm.xlu0 %8712, %v8352
      %v8714 = vpop.permute.xlu0 %8713
      %8717 = vset.pattern.permute.xlu0 0
      %8718 = vperm.xlu0 %8717, %v8353
      %v8719 = vpop.permute.xlu0 %8718
      %8722 = vset.pattern.permute.xlu0 0
      %8723 = vperm.xlu0 %8722, %v8354
      %v8724 = vpop.permute.xlu0 %8723
      %8727 = vset.pattern.permute.xlu0 0
      %8728 = vperm.xlu0 %8727, %v8355
      %v8729 = vpop.permute.xlu0 %8728
      %8732 = vset.pattern.permute.xlu0 0
      %8733 = vperm.xlu0 %8732, %v8356
      %v8734 = vpop.permute.xlu0 %8733
      %8737 = vset.pattern.permute.xlu0 0
      %8738 = vperm.xlu0 %8737, %v8357
      %v8739 = vpop.permute.xlu0 %8738
      %8742 = vset.pattern.permute.xlu0 0
      %8743 = vperm.xlu0 %8742, %v8358
      %v8744 = vpop.permute.xlu0 %8743
      %8747 = vset.pattern.permute.xlu0 0
      %8748 = vperm.xlu0 %8747, %v8359
      %v8749 = vpop.permute.xlu0 %8748
      %8752 = vset.pattern.permute.xlu0 0
      %8753 = vperm.xlu0 %8752, %v8360
      %v8754 = vpop.permute.xlu0 %8753
      %8757 = vset.pattern.permute.xlu0 0
      %8758 = vperm.xlu0 %8757, %v8361
      %v8759 = vpop.permute.xlu0 %8758
      %8762 = vset.pattern.permute.xlu0 0
      %8763 = vperm.xlu0 %8762, %v8362
      %v8764 = vpop.permute.xlu0 %8763
      %8767 = vset.pattern.permute.xlu0 0
      %8768 = vperm.xlu0 %8767, %v8363
      %v8769 = vpop.permute.xlu0 %8768
      %8772 = vset.pattern.permute.xlu0 0
      %8773 = vperm.xlu0 %8772, %v8364
      %v8774 = vpop.permute.xlu0 %8773
      %8777 = vset.pattern.permute.xlu0 0
      %8778 = vperm.xlu0 %8777, %v8365
      %v8779 = vpop.permute.xlu0 %8778
      %8782 = vset.pattern.permute.xlu0 0
      %8783 = vperm.xlu0 %8782, %v8366
      %v8784 = vpop.permute.xlu0 %8783
      %8787 = vset.pattern.permute.xlu0 0
      %8788 = vperm.xlu0 %8787, %v8367
      %v8789 = vpop.permute.xlu0 %8788
      %8792 = vset.pattern.permute.xlu0 0
      %8793 = vperm.xlu0 %8792, %v8368
      %v8794 = vpop.permute.xlu0 %8793
      %8797 = vset.pattern.permute.xlu0 0
      %8798 = vperm.xlu0 %8797, %v8369
      %v8799 = vpop.permute.xlu0 %8798
      %8802 = vset.pattern.permute.xlu0 0
      %8803 = vperm.xlu0 %8802, %v8370
      %v8804 = vpop.permute.xlu0 %8803
      %8807 = vset.pattern.permute.xlu0 0
      %8808 = vperm.xlu0 %8807, %v8371
      %v8809 = vpop.permute.xlu0 %8808
      %8812 = vset.pattern.permute.xlu0 0
      %8813 = vperm.xlu0 %8812, %v8372
      %v8814 = vpop.permute.xlu0 %8813
      %8817 = vset.pattern.permute.xlu0 0
      %8818 = vperm.xlu0 %8817, %v8373
      %v8819 = vpop.permute.xlu0 %8818
      %8822 = vset.pattern.permute.xlu0 0
      %8823 = vperm.xlu0 %8822, %v8374
      %v8824 = vpop.permute.xlu0 %8823
      %8827 = vset.pattern.permute.xlu0 0
      %8828 = vperm.xlu0 %8827, %v8375
      %v8829 = vpop.permute.xlu0 %8828
      %8832 = vset.pattern.permute.xlu0 0
      %8833 = vperm.xlu0 %8832, %v8376
      %v8834 = vpop.permute.xlu0 %8833
      %8837 = vset.pattern.permute.xlu0 0
      %8838 = vperm.xlu0 %8837, %v8377
      %v8839 = vpop.permute.xlu0 %8838
      %8842 = vset.pattern.permute.xlu0 0
      %8843 = vperm.xlu0 %8842, %v8378
      %v8844 = vpop.permute.xlu0 %8843
      %8847 = vset.pattern.permute.xlu0 0
      %8848 = vperm.xlu0 %8847, %v8379
      %v8849 = vpop.permute.xlu0 %8848
      %8852 = vset.pattern.permute.xlu0 0
      %8853 = vperm.xlu0 %8852, %v8380
      %v8854 = vpop.permute.xlu0 %8853
      %8857 = vset.pattern.permute.xlu0 0
      %8858 = vperm.xlu0 %8857, %v8381
      %v8859 = vpop.permute.xlu0 %8858
      %8862 = vset.pattern.permute.xlu0 0
      %8863 = vperm.xlu0 %8862, %v8382
      %v8864 = vpop.permute.xlu0 %8863
      %8867 = vset.pattern.permute.xlu0 0
      %8868 = vperm.xlu0 %8867, %v8383
      %v8869 = vpop.permute.xlu0 %8868
      %8872 = vset.pattern.permute.xlu0 0
      %8873 = vperm.xlu0 %8872, %v8384
      %v8874 = vpop.permute.xlu0 %8873
      %8877 = vset.pattern.permute.xlu0 0
      %8878 = vperm.xlu0 %8877, %v8385
      %v8879 = vpop.permute.xlu0 %8878
      %8882 = vset.pattern.permute.xlu0 0
      %8883 = vperm.xlu0 %8882, %v8386
      %v8884 = vpop.permute.xlu0 %8883
      %8887 = vset.pattern.permute.xlu0 0
      %8888 = vperm.xlu0 %8887, %v8387
      %v8889 = vpop.permute.xlu0 %8888
      %8892 = vset.pattern.permute.xlu0 0
      %8893 = vperm.xlu0 %8892, %v8388
      %v8894 = vpop.permute.xlu0 %8893
      %8897 = vset.pattern.permute.xlu0 0
      %8898 = vperm.xlu0 %8897, %v8389
      %v8899 = vpop.permute.xlu0 %8898
      %8902 = vset.pattern.permute.xlu0 0
      %8903 = vperm.xlu0 %8902, %v8390
      %v8904 = vpop.permute.xlu0 %8903
      %8907 = vset.pattern.permute.xlu0 0
      %8908 = vperm.xlu0 %8907, %v8391
      %v8909 = vpop.permute.xlu0 %8908
      %8912 = vset.pattern.permute.xlu0 0
      %8913 = vperm.xlu0 %8912, %v8392
      %v8914 = vpop.permute.xlu0 %8913
      %v8916 = vlaneseq
      %v8917 = vshrl.u32 %v8916, 7
      %v8918 = vsub.s32 0, %v8917
      %v8919 = vrot.slane %v8395, %v8918
      %v8920 = vmul.f32 %v8399, %v8919
      %v8921 = vmul.f32 %v8404, %v8919
      %v8922 = vmul.f32 %v8409, %v8919
      %v8923 = vmul.f32 %v8414, %v8919
      %v8924 = vmul.f32 %v8419, %v8919
      %v8925 = vmul.f32 %v8424, %v8919
      %v8926 = vmul.f32 %v8429, %v8919
      %v8927 = vmul.f32 %v8434, %v8919
      %v8928 = vmul.f32 %v8439, %v8919
      %v8929 = vmul.f32 %v8444, %v8919
      %v8930 = vmul.f32 %v8449, %v8919
      %v8931 = vmul.f32 %v8454, %v8919
      %v8932 = vmul.f32 %v8459, %v8919
      %v8933 = vmul.f32 %v8464, %v8919
      %v8934 = vmul.f32 %v8469, %v8919
      %v8935 = vmul.f32 %v8474, %v8919
      %v8936 = vmul.f32 %v8479, %v8919
      %v8937 = vmul.f32 %v8484, %v8919
      %v8938 = vmul.f32 %v8489, %v8919
      %v8939 = vmul.f32 %v8494, %v8919
      %v8940 = vmul.f32 %v8499, %v8919
      %v8941 = vmul.f32 %v8504, %v8919
      %v8942 = vmul.f32 %v8509, %v8919
      %v8943 = vmul.f32 %v8514, %v8919
      %v8944 = vmul.f32 %v8519, %v8919
      %v8945 = vmul.f32 %v8524, %v8919
      %v8946 = vmul.f32 %v8529, %v8919
      %v8947 = vmul.f32 %v8534, %v8919
      %v8948 = vmul.f32 %v8539, %v8919
      %v8949 = vmul.f32 %v8544, %v8919
      %v8950 = vmul.f32 %v8549, %v8919
      %v8951 = vmul.f32 %v8554, %v8919
      %v8952 = vmul.f32 %v8559, %v8919
      %v8953 = vmul.f32 %v8564, %v8919
      %v8954 = vmul.f32 %v8569, %v8919
      %v8955 = vmul.f32 %v8574, %v8919
      %v8956 = vmul.f32 %v8579, %v8919
      %v8957 = vmul.f32 %v8584, %v8919
      %v8958 = vmul.f32 %v8589, %v8919
      %v8959 = vmul.f32 %v8594, %v8919
      %v8960 = vmul.f32 %v8599, %v8919
      %v8961 = vmul.f32 %v8604, %v8919
      %v8962 = vmul.f32 %v8609, %v8919
      %v8963 = vmul.f32 %v8614, %v8919
      %v8964 = vmul.f32 %v8619, %v8919
      %v8965 = vmul.f32 %v8624, %v8919
      %v8966 = vmul.f32 %v8629, %v8919
      %v8967 = vmul.f32 %v8634, %v8919
      %v8968 = vmul.f32 %v8639, %v8919
      %v8969 = vmul.f32 %v8644, %v8919
      %v8970 = vmul.f32 %v8649, %v8919
      %v8971 = vmul.f32 %v8654, %v8919
      %v8972 = vmul.f32 %v8659, %v8919
      %v8973 = vmul.f32 %v8664, %v8919
      %v8974 = vmul.f32 %v8669, %v8919
      %v8975 = vmul.f32 %v8674, %v8919
      %v8976 = vmul.f32 %v8679, %v8919
      %v8977 = vmul.f32 %v8684, %v8919
      %v8978 = vmul.f32 %v8689, %v8919
      %v8979 = vmul.f32 %v8694, %v8919
      %v8980 = vmul.f32 %v8699, %v8919
      %v8981 = vmul.f32 %v8704, %v8919
      %v8982 = vmul.f32 %v8709, %v8919
      %v8983 = vmul.f32 %v8714, %v8919
      %v8984 = vmul.f32 %v8719, %v8919
      %v8985 = vmul.f32 %v8724, %v8919
      %v8986 = vmul.f32 %v8729, %v8919
      %v8987 = vmul.f32 %v8734, %v8919
      %v8988 = vmul.f32 %v8739, %v8919
      %v8989 = vmul.f32 %v8744, %v8919
      %v8990 = vmul.f32 %v8749, %v8919
      %v8991 = vmul.f32 %v8754, %v8919
      %v8992 = vmul.f32 %v8759, %v8919
      %v8993 = vmul.f32 %v8764, %v8919
      %v8994 = vmul.f32 %v8769, %v8919
      %v8995 = vmul.f32 %v8774, %v8919
      %v8996 = vmul.f32 %v8779, %v8919
      %v8997 = vmul.f32 %v8784, %v8919
      %v8998 = vmul.f32 %v8789, %v8919
      %v8999 = vmul.f32 %v8794, %v8919
      %v9000 = vmul.f32 %v8799, %v8919
      %v9001 = vmul.f32 %v8804, %v8919
      %v9002 = vmul.f32 %v8809, %v8919
      %v9003 = vmul.f32 %v8814, %v8919
      %v9004 = vmul.f32 %v8819, %v8919
      %v9005 = vmul.f32 %v8824, %v8919
      %v9006 = vmul.f32 %v8829, %v8919
      %v9007 = vmul.f32 %v8834, %v8919
      %v9008 = vmul.f32 %v8839, %v8919
      %v9009 = vmul.f32 %v8844, %v8919
      %v9010 = vmul.f32 %v8849, %v8919
      %v9011 = vmul.f32 %v8854, %v8919
      %v9012 = vmul.f32 %v8859, %v8919
      %v9013 = vmul.f32 %v8864, %v8919
      %v9014 = vmul.f32 %v8869, %v8919
      %v9015 = vmul.f32 %v8874, %v8919
      %v9016 = vmul.f32 %v8879, %v8919
      %v9017 = vmul.f32 %v8884, %v8919
      %v9018 = vmul.f32 %v8889, %v8919
      %v9019 = vmul.f32 %v8894, %v8919
      %v9020 = vmul.f32 %v8899, %v8919
      %v9021 = vmul.f32 %v8904, %v8919
      %v9022 = vmul.f32 %v8909, %v8919
      %v9023 = vmul.f32 %v8914, %v8919
      %v9024 = vadd.f32 %v8029, %v8920
      %v9025 = vadd.f32 %v8030, %v8921
      %v9026 = vadd.f32 %v8031, %v8922
      %v9027 = vadd.f32 %v8032, %v8923
      %v9028 = vadd.f32 %v8033, %v8924
      %v9029 = vadd.f32 %v8034, %v8925
      %v9030 = vadd.f32 %v8035, %v8926
      %v9031 = vadd.f32 %v8036, %v8927
      %v9032 = vadd.f32 %v8037, %v8928
      %v9033 = vadd.f32 %v8038, %v8929
      %v9034 = vadd.f32 %v8039, %v8930
      %v9035 = vadd.f32 %v8040, %v8931
      %v9036 = vadd.f32 %v8041, %v8932
      %v9037 = vadd.f32 %v8042, %v8933
      %v9038 = vadd.f32 %v8043, %v8934
      %v9039 = vadd.f32 %v8044, %v8935
      %v9040 = vadd.f32 %v8045, %v8936
      %v9041 = vadd.f32 %v8046, %v8937
      %v9042 = vadd.f32 %v8047, %v8938
      %v9043 = vadd.f32 %v8048, %v8939
      %v9044 = vadd.f32 %v8049, %v8940
      %v9045 = vadd.f32 %v8050, %v8941
      %v9046 = vadd.f32 %v8051, %v8942
      %v9047 = vadd.f32 %v8052, %v8943
      %v9048 = vadd.f32 %v8053, %v8944
      %v9049 = vadd.f32 %v8054, %v8945
      %v9050 = vadd.f32 %v8055, %v8946
      %v9051 = vadd.f32 %v8056, %v8947
      %v9052 = vadd.f32 %v8057, %v8948
      %v9053 = vadd.f32 %v8058, %v8949
      %v9054 = vadd.f32 %v8059, %v8950
      %v9055 = vadd.f32 %v8060, %v8951
      %v9056 = vadd.f32 %v8061, %v8952
      %v9057 = vadd.f32 %v8062, %v8953
      %v9058 = vadd.f32 %v8063, %v8954
      %v9059 = vadd.f32 %v8064, %v8955
      %v9060 = vadd.f32 %v8065, %v8956
      %v9061 = vadd.f32 %v8066, %v8957
      %v9062 = vadd.f32 %v8067, %v8958
      %v9063 = vadd.f32 %v8068, %v8959
      %v9064 = vadd.f32 %v8069, %v8960
      %v9065 = vadd.f32 %v8070, %v8961
      %v9066 = vadd.f32 %v8071, %v8962
      %v9067 = vadd.f32 %v8072, %v8963
      %v9068 = vadd.f32 %v8073, %v8964
      %v9069 = vadd.f32 %v8074, %v8965
      %v9070 = vadd.f32 %v8075, %v8966
      %v9071 = vadd.f32 %v8076, %v8967
      %v9072 = vadd.f32 %v8077, %v8968
      %v9073 = vadd.f32 %v8078, %v8969
      %v9074 = vadd.f32 %v8079, %v8970
      %v9075 = vadd.f32 %v8080, %v8971
      %v9076 = vadd.f32 %v8081, %v8972
      %v9077 = vadd.f32 %v8082, %v8973
      %v9078 = vadd.f32 %v8083, %v8974
      %v9079 = vadd.f32 %v8084, %v8975
      %v9080 = vadd.f32 %v8085, %v8976
      %v9081 = vadd.f32 %v8086, %v8977
      %v9082 = vadd.f32 %v8087, %v8978
      %v9083 = vadd.f32 %v8088, %v8979
      %v9084 = vadd.f32 %v8089, %v8980
      %v9085 = vadd.f32 %v8090, %v8981
      %v9086 = vadd.f32 %v8091, %v8982
      %v9087 = vadd.f32 %v8092, %v8983
      %v9088 = vadd.f32 %v8093, %v8984
      %v9089 = vadd.f32 %v8094, %v8985
      %v9090 = vadd.f32 %v8095, %v8986
      %v9091 = vadd.f32 %v8096, %v8987
      %v9092 = vadd.f32 %v8097, %v8988
      %v9093 = vadd.f32 %v8098, %v8989
      %v9094 = vadd.f32 %v8099, %v8990
      %v9095 = vadd.f32 %v8100, %v8991
      %v9096 = vadd.f32 %v8101, %v8992
      %v9097 = vadd.f32 %v8102, %v8993
      %v9098 = vadd.f32 %v8103, %v8994
      %v9099 = vadd.f32 %v8104, %v8995
      %v9100 = vadd.f32 %v8105, %v8996
      %v9101 = vadd.f32 %v8106, %v8997
      %v9102 = vadd.f32 %v8107, %v8998
      %v9103 = vadd.f32 %v8108, %v8999
      %v9104 = vadd.f32 %v8109, %v9000
      %v9105 = vadd.f32 %v8110, %v9001
      %v9106 = vadd.f32 %v8111, %v9002
      %v9107 = vadd.f32 %v8112, %v9003
      %v9108 = vadd.f32 %v8113, %v9004
      %v9109 = vadd.f32 %v8114, %v9005
      %v9110 = vadd.f32 %v8115, %v9006
      %v9111 = vadd.f32 %v8116, %v9007
      %v9112 = vadd.f32 %v8117, %v9008
      %v9113 = vadd.f32 %v8118, %v9009
      %v9114 = vadd.f32 %v8119, %v9010
      %v9115 = vadd.f32 %v8120, %v9011
      %v9116 = vadd.f32 %v8121, %v9012
      %v9117 = vadd.f32 %v8122, %v9013
      %v9118 = vadd.f32 %v8123, %v9014
      %v9119 = vadd.f32 %v8124, %v9015
      %v9120 = vadd.f32 %v8125, %v9016
      %v9121 = vadd.f32 %v8126, %v9017
      %v9122 = vadd.f32 %v8127, %v9018
      %v9123 = vadd.f32 %v8128, %v9019
      %v9124 = vadd.f32 %v8129, %v9020
      %v9125 = vadd.f32 %v8130, %v9021
      %v9126 = vadd.f32 %v8131, %v9022
      %v9127 = vadd.f32 %v8132, %v9023
      %v9128 = vld [vmem:[%s2] sm:$0x1]
      %v9130 = vlaneseq
      %v9131 = vshrl.u32 %v9130, 7
      %v9132 = vsub.s32 0, %v9131
      %v9133 = vrot.slane %v9128, %v9132
      %v9135 = vadd.f32 %v9024, %v9133
      %v9136 = vadd.f32 %v9025, %v9133
      %v9137 = vadd.f32 %v9026, %v9133
      %v9138 = vadd.f32 %v9027, %v9133
      %v9139 = vadd.f32 %v9028, %v9133
      %v9140 = vadd.f32 %v9029, %v9133
      %v9141 = vadd.f32 %v9030, %v9133
      %v9142 = vadd.f32 %v9031, %v9133
      %v9143 = vadd.f32 %v9032, %v9133
      %v9144 = vadd.f32 %v9033, %v9133
      %v9145 = vadd.f32 %v9034, %v9133
      %v9146 = vadd.f32 %v9035, %v9133
      %v9147 = vadd.f32 %v9036, %v9133
      %v9148 = vadd.f32 %v9037, %v9133
      %v9149 = vadd.f32 %v9038, %v9133
      %v9150 = vadd.f32 %v9039, %v9133
      %v9151 = vadd.f32 %v9040, %v9133
      %v9152 = vadd.f32 %v9041, %v9133
      %v9153 = vadd.f32 %v9042, %v9133
      %v9154 = vadd.f32 %v9043, %v9133
      %v9155 = vadd.f32 %v9044, %v9133
      %v9156 = vadd.f32 %v9045, %v9133
      %v9157 = vadd.f32 %v9046, %v9133
      %v9158 = vadd.f32 %v9047, %v9133
      %v9159 = vadd.f32 %v9048, %v9133
      %v9160 = vadd.f32 %v9049, %v9133
      %v9161 = vadd.f32 %v9050, %v9133
      %v9162 = vadd.f32 %v9051, %v9133
      %v9163 = vadd.f32 %v9052, %v9133
      %v9164 = vadd.f32 %v9053, %v9133
      %v9165 = vadd.f32 %v9054, %v9133
      %v9166 = vadd.f32 %v9055, %v9133
      %v9167 = vadd.f32 %v9056, %v9133
      %v9168 = vadd.f32 %v9057, %v9133
      %v9169 = vadd.f32 %v9058, %v9133
      %v9170 = vadd.f32 %v9059, %v9133
      %v9171 = vadd.f32 %v9060, %v9133
      %v9172 = vadd.f32 %v9061, %v9133
      %v9173 = vadd.f32 %v9062, %v9133
      %v9174 = vadd.f32 %v9063, %v9133
      %v9175 = vadd.f32 %v9064, %v9133
      %v9176 = vadd.f32 %v9065, %v9133
      %v9177 = vadd.f32 %v9066, %v9133
      %v9178 = vadd.f32 %v9067, %v9133
      %v9179 = vadd.f32 %v9068, %v9133
      %v9180 = vadd.f32 %v9069, %v9133
      %v9181 = vadd.f32 %v9070, %v9133
      %v9182 = vadd.f32 %v9071, %v9133
      %v9183 = vadd.f32 %v9072, %v9133
      %v9184 = vadd.f32 %v9073, %v9133
      %v9185 = vadd.f32 %v9074, %v9133
      %v9186 = vadd.f32 %v9075, %v9133
      %v9187 = vadd.f32 %v9076, %v9133
      %v9188 = vadd.f32 %v9077, %v9133
      %v9189 = vadd.f32 %v9078, %v9133
      %v9190 = vadd.f32 %v9079, %v9133
      %v9191 = vadd.f32 %v9080, %v9133
      %v9192 = vadd.f32 %v9081, %v9133
      %v9193 = vadd.f32 %v9082, %v9133
      %v9194 = vadd.f32 %v9083, %v9133
      %v9195 = vadd.f32 %v9084, %v9133
      %v9196 = vadd.f32 %v9085, %v9133
      %v9197 = vadd.f32 %v9086, %v9133
      %v9198 = vadd.f32 %v9087, %v9133
      %v9199 = vadd.f32 %v9088, %v9133
      %v9200 = vadd.f32 %v9089, %v9133
      %v9201 = vadd.f32 %v9090, %v9133
      %v9202 = vadd.f32 %v9091, %v9133
      %v9203 = vadd.f32 %v9092, %v9133
      %v9204 = vadd.f32 %v9093, %v9133
      %v9205 = vadd.f32 %v9094, %v9133
      %v9206 = vadd.f32 %v9095, %v9133
      %v9207 = vadd.f32 %v9096, %v9133
      %v9208 = vadd.f32 %v9097, %v9133
      %v9209 = vadd.f32 %v9098, %v9133
      %v9210 = vadd.f32 %v9099, %v9133
      %v9211 = vadd.f32 %v9100, %v9133
      %v9212 = vadd.f32 %v9101, %v9133
      %v9213 = vadd.f32 %v9102, %v9133
      %v9214 = vadd.f32 %v9103, %v9133
      %v9215 = vadd.f32 %v9104, %v9133
      %v9216 = vadd.f32 %v9105, %v9133
      %v9217 = vadd.f32 %v9106, %v9133
      %v9218 = vadd.f32 %v9107, %v9133
      %v9219 = vadd.f32 %v9108, %v9133
      %v9220 = vadd.f32 %v9109, %v9133
      %v9221 = vadd.f32 %v9110, %v9133
      %v9222 = vadd.f32 %v9111, %v9133
      %v9223 = vadd.f32 %v9112, %v9133
      %v9224 = vadd.f32 %v9113, %v9133
      %v9225 = vadd.f32 %v9114, %v9133
      %v9226 = vadd.f32 %v9115, %v9133
      %v9227 = vadd.f32 %v9116, %v9133
      %v9228 = vadd.f32 %v9117, %v9133
      %v9229 = vadd.f32 %v9118, %v9133
      %v9230 = vadd.f32 %v9119, %v9133
      %v9231 = vadd.f32 %v9120, %v9133
      %v9232 = vadd.f32 %v9121, %v9133
      %v9233 = vadd.f32 %v9122, %v9133
      %v9234 = vadd.f32 %v9123, %v9133
      %v9235 = vadd.f32 %v9124, %v9133
      %v9236 = vadd.f32 %v9125, %v9133
      %v9237 = vadd.f32 %v9126, %v9133
      %v9238 = vadd.f32 %v9127, %v9133
      %v9239 = vmax.f32 %v9135, 0.0
      %v9240 = vmax.f32 %v9136, 0.0
      %v9241 = vmax.f32 %v9137, 0.0
      %v9242 = vmax.f32 %v9138, 0.0
      %v9243 = vmax.f32 %v9139, 0.0
      %v9244 = vmax.f32 %v9140, 0.0
      %v9245 = vmax.f32 %v9141, 0.0
      %v9246 = vmax.f32 %v9142, 0.0
      %v9247 = vmax.f32 %v9143, 0.0
      %v9248 = vmax.f32 %v9144, 0.0
      %v9249 = vmax.f32 %v9145, 0.0
      %v9250 = vmax.f32 %v9146, 0.0
      %v9251 = vmax.f32 %v9147, 0.0
      %v9252 = vmax.f32 %v9148, 0.0
      %v9253 = vmax.f32 %v9149, 0.0
      %v9254 = vmax.f32 %v9150, 0.0
      %v9255 = vmax.f32 %v9151, 0.0
      %v9256 = vmax.f32 %v9152, 0.0
      %v9257 = vmax.f32 %v9153, 0.0
      %v9258 = vmax.f32 %v9154, 0.0
      %v9259 = vmax.f32 %v9155, 0.0
      %v9260 = vmax.f32 %v9156, 0.0
      %v9261 = vmax.f32 %v9157, 0.0
      %v9262 = vmax.f32 %v9158, 0.0
      %v9263 = vmax.f32 %v9159, 0.0
      %v9264 = vmax.f32 %v9160, 0.0
      %v9265 = vmax.f32 %v9161, 0.0
      %v9266 = vmax.f32 %v9162, 0.0
      %v9267 = vmax.f32 %v9163, 0.0
      %v9268 = vmax.f32 %v9164, 0.0
      %v9269 = vmax.f32 %v9165, 0.0
      %v9270 = vmax.f32 %v9166, 0.0
      %v9271 = vmax.f32 %v9167, 0.0
      %v9272 = vmax.f32 %v9168, 0.0
      %v9273 = vmax.f32 %v9169, 0.0
      %v9274 = vmax.f32 %v9170, 0.0
      %v9275 = vmax.f32 %v9171, 0.0
      %v9276 = vmax.f32 %v9172, 0.0
      %v9277 = vmax.f32 %v9173, 0.0
      %v9278 = vmax.f32 %v9174, 0.0
      %v9279 = vmax.f32 %v9175, 0.0
      %v9280 = vmax.f32 %v9176, 0.0
      %v9281 = vmax.f32 %v9177, 0.0
      %v9282 = vmax.f32 %v9178, 0.0
      %v9283 = vmax.f32 %v9179, 0.0
      %v9284 = vmax.f32 %v9180, 0.0
      %v9285 = vmax.f32 %v9181, 0.0
      %v9286 = vmax.f32 %v9182, 0.0
      %v9287 = vmax.f32 %v9183, 0.0
      %v9288 = vmax.f32 %v9184, 0.0
      %v9289 = vmax.f32 %v9185, 0.0
      %v9290 = vmax.f32 %v9186, 0.0
      %v9291 = vmax.f32 %v9187, 0.0
      %v9292 = vmax.f32 %v9188, 0.0
      %v9293 = vmax.f32 %v9189, 0.0
      %v9294 = vmax.f32 %v9190, 0.0
      %v9295 = vmax.f32 %v9191, 0.0
      %v9296 = vmax.f32 %v9192, 0.0
      %v9297 = vmax.f32 %v9193, 0.0
      %v9298 = vmax.f32 %v9194, 0.0
      %v9299 = vmax.f32 %v9195, 0.0
      %v9300 = vmax.f32 %v9196, 0.0
      %v9301 = vmax.f32 %v9197, 0.0
      %v9302 = vmax.f32 %v9198, 0.0
      %v9303 = vmax.f32 %v9199, 0.0
      %v9304 = vmax.f32 %v9200, 0.0
      %v9305 = vmax.f32 %v9201, 0.0
      %v9306 = vmax.f32 %v9202, 0.0
      %v9307 = vmax.f32 %v9203, 0.0
      %v9308 = vmax.f32 %v9204, 0.0
      %v9309 = vmax.f32 %v9205, 0.0
      %v9310 = vmax.f32 %v9206, 0.0
      %v9311 = vmax.f32 %v9207, 0.0
      %v9312 = vmax.f32 %v9208, 0.0
      %v9313 = vmax.f32 %v9209, 0.0
      %v9314 = vmax.f32 %v9210, 0.0
      %v9315 = vmax.f32 %v9211, 0.0
      %v9316 = vmax.f32 %v9212, 0.0
      %v9317 = vmax.f32 %v9213, 0.0
      %v9318 = vmax.f32 %v9214, 0.0
      %v9319 = vmax.f32 %v9215, 0.0
      %v9320 = vmax.f32 %v9216, 0.0
      %v9321 = vmax.f32 %v9217, 0.0
      %v9322 = vmax.f32 %v9218, 0.0
      %v9323 = vmax.f32 %v9219, 0.0
      %v9324 = vmax.f32 %v9220, 0.0
      %v9325 = vmax.f32 %v9221, 0.0
      %v9326 = vmax.f32 %v9222, 0.0
      %v9327 = vmax.f32 %v9223, 0.0
      %v9328 = vmax.f32 %v9224, 0.0
      %v9329 = vmax.f32 %v9225, 0.0
      %v9330 = vmax.f32 %v9226, 0.0
      %v9331 = vmax.f32 %v9227, 0.0
      %v9332 = vmax.f32 %v9228, 0.0
      %v9333 = vmax.f32 %v9229, 0.0
      %v9334 = vmax.f32 %v9230, 0.0
      %v9335 = vmax.f32 %v9231, 0.0
      %v9336 = vmax.f32 %v9232, 0.0
      %v9337 = vmax.f32 %v9233, 0.0
      %v9338 = vmax.f32 %v9234, 0.0
      %v9339 = vmax.f32 %v9235, 0.0
      %v9340 = vmax.f32 %v9236, 0.0
      %v9341 = vmax.f32 %v9237, 0.0
      %v9342 = vmax.f32 %v9238, 0.0
      %v9343 = vmax.f32 %v9239, %v9243
      %v9344 = vmax.f32 %v9240, %v9244
      %v9345 = vmax.f32 %v9241, %v9245
      %v9346 = vmax.f32 %v9242, %v9246
      %v9347 = vmax.f32 %v9247, %v9251
      %v9348 = vmax.f32 %v9248, %v9252
      %v9349 = vmax.f32 %v9249, %v9253
      %v9350 = vmax.f32 %v9250, %v9254
      %v9351 = vmax.f32 %v9255, %v9259
      %v9352 = vmax.f32 %v9256, %v9260
      %v9353 = vmax.f32 %v9257, %v9261
      %v9354 = vmax.f32 %v9258, %v9262
      %v9355 = vmax.f32 %v9263, %v9267
      %v9356 = vmax.f32 %v9264, %v9268
      %v9357 = vmax.f32 %v9265, %v9269
      %v9358 = vmax.f32 %v9266, %v9270
      %v9359 = vmax.f32 %v9271, %v9275
      %v9360 = vmax.f32 %v9272, %v9276
      %v9361 = vmax.f32 %v9273, %v9277
      %v9362 = vmax.f32 %v9274, %v9278
      %v9363 = vmax.f32 %v9279, %v9283
      %v9364 = vmax.f32 %v9280, %v9284
      %v9365 = vmax.f32 %v9281, %v9285
      %v9366 = vmax.f32 %v9282, %v9286
      %v9367 = vmax.f32 %v9287, %v9291
      %v9368 = vmax.f32 %v9288, %v9292
      %v9369 = vmax.f32 %v9289, %v9293
      %v9370 = vmax.f32 %v9290, %v9294
      %v9371 = vmax.f32 %v9295, %v9299
      %v9372 = vmax.f32 %v9296, %v9300
      %v9373 = vmax.f32 %v9297, %v9301
      %v9374 = vmax.f32 %v9298, %v9302
      %v9375 = vmax.f32 %v9303, %v9307
      %v9376 = vmax.f32 %v9304, %v9308
      %v9377 = vmax.f32 %v9305, %v9309
      %v9378 = vmax.f32 %v9306, %v9310
      %v9379 = vmax.f32 %v9311, %v9315
      %v9380 = vmax.f32 %v9312, %v9316
      %v9381 = vmax.f32 %v9313, %v9317
      %v9382 = vmax.f32 %v9314, %v9318
      %v9383 = vmax.f32 %v9319, %v9323
      %v9384 = vmax.f32 %v9320, %v9324
      %v9385 = vmax.f32 %v9321, %v9325
      %v9386 = vmax.f32 %v9322, %v9326
      %v9387 = vmax.f32 %v9327, %v9331
      %v9388 = vmax.f32 %v9328, %v9332
      %v9389 = vmax.f32 %v9329, %v9333
      %v9390 = vmax.f32 %v9330, %v9334
      %v9391 = vmax.f32 %v9335, %v9339
      %v9392 = vmax.f32 %v9336, %v9340
      %v9393 = vmax.f32 %v9337, %v9341
      %v9394 = vmax.f32 %v9338, %v9342
      %v9408 = vrot.slane %v9343, 1
      %v9409 = vrot.slane %v9347, 1
      %v9410 = vrot.slane %v9351, 1
      %v9411 = vrot.slane %v9355, 1
      %v9412 = vrot.slane %v9359, 1
      %v9413 = vrot.slane %v9363, 1
      %v9414 = vrot.slane %v9367, 1
      %v9415 = vrot.slane %v9371, 1
      %v9416 = vrot.slane %v9375, 1
      %v9417 = vrot.slane %v9379, 1
      %v9418 = vrot.slane %v9383, 1
      %v9419 = vrot.slane %v9387, 1
      %v9420 = vrot.slane %v9391, 1
      %v9434 = vmax.f32 %v9343, %v9408
      %v9435 = vmax.f32 %v9347, %v9409
      %v9436 = vmax.f32 %v9351, %v9410
      %v9437 = vmax.f32 %v9355, %v9411
      %v9438 = vmax.f32 %v9359, %v9412
      %v9439 = vmax.f32 %v9363, %v9413
      %v9440 = vmax.f32 %v9367, %v9414
      %v9441 = vmax.f32 %v9371, %v9415
      %v9442 = vmax.f32 %v9375, %v9416
      %v9443 = vmax.f32 %v9379, %v9417
      %v9444 = vmax.f32 %v9383, %v9418
      %v9445 = vmax.f32 %v9387, %v9419
      %v9446 = vmax.f32 %v9391, %v9420
      %v9460 = vrot.slane %v9344, 1
      %v9461 = vrot.slane %v9348, 1
      %v9462 = vrot.slane %v9352, 1
      %v9463 = vrot.slane %v9356, 1
      %v9464 = vrot.slane %v9360, 1
      %v9465 = vrot.slane %v9364, 1
      %v9466 = vrot.slane %v9368, 1
      %v9467 = vrot.slane %v9372, 1
      %v9468 = vrot.slane %v9376, 1
      %v9469 = vrot.slane %v9380, 1
      %v9470 = vrot.slane %v9384, 1
      %v9471 = vrot.slane %v9388, 1
      %v9472 = vrot.slane %v9392, 1
      %v9486 = vmax.f32 %v9344, %v9460
      %v9487 = vmax.f32 %v9348, %v9461
      %v9488 = vmax.f32 %v9352, %v9462
      %v9489 = vmax.f32 %v9356, %v9463
      %v9490 = vmax.f32 %v9360, %v9464
      %v9491 = vmax.f32 %v9364, %v9465
      %v9492 = vmax.f32 %v9368, %v9466
      %v9493 = vmax.f32 %v9372, %v9467
      %v9494 = vmax.f32 %v9376, %v9468
      %v9495 = vmax.f32 %v9380, %v9469
      %v9496 = vmax.f32 %v9384, %v9470
      %v9497 = vmax.f32 %v9388, %v9471
      %v9498 = vmax.f32 %v9392, %v9472
      %v9512 = vrot.slane %v9345, 1
      %v9513 = vrot.slane %v9349, 1
      %v9514 = vrot.slane %v9353, 1
      %v9515 = vrot.slane %v9357, 1
      %v9516 = vrot.slane %v9361, 1
      %v9517 = vrot.slane %v9365, 1
      %v9518 = vrot.slane %v9369, 1
      %v9519 = vrot.slane %v9373, 1
      %v9520 = vrot.slane %v9377, 1
      %v9521 = vrot.slane %v9381, 1
      %v9522 = vrot.slane %v9385, 1
      %v9523 = vrot.slane %v9389, 1
      %v9524 = vrot.slane %v9393, 1
      %v9538 = vmax.f32 %v9345, %v9512
      %v9539 = vmax.f32 %v9349, %v9513
      %v9540 = vmax.f32 %v9353, %v9514
      %v9541 = vmax.f32 %v9357, %v9515
      %v9542 = vmax.f32 %v9361, %v9516
      %v9543 = vmax.f32 %v9365, %v9517
      %v9544 = vmax.f32 %v9369, %v9518
      %v9545 = vmax.f32 %v9373, %v9519
      %v9546 = vmax.f32 %v9377, %v9520
      %v9547 = vmax.f32 %v9381, %v9521
      %v9548 = vmax.f32 %v9385, %v9522
      %v9549 = vmax.f32 %v9389, %v9523
      %v9550 = vmax.f32 %v9393, %v9524
      %v9564 = vrot.slane %v9346, 1
      %v9565 = vrot.slane %v9350, 1
      %v9566 = vrot.slane %v9354, 1
      %v9567 = vrot.slane %v9358, 1
      %v9568 = vrot.slane %v9362, 1
      %v9569 = vrot.slane %v9366, 1
      %v9570 = vrot.slane %v9370, 1
      %v9571 = vrot.slane %v9374, 1
      %v9572 = vrot.slane %v9378, 1
      %v9573 = vrot.slane %v9382, 1
      %v9574 = vrot.slane %v9386, 1
      %v9575 = vrot.slane %v9390, 1
      %v9576 = vrot.slane %v9394, 1
      %v9590 = vmax.f32 %v9346, %v9564
      %v9591 = vmax.f32 %v9350, %v9565
      %v9592 = vmax.f32 %v9354, %v9566
      %v9593 = vmax.f32 %v9358, %v9567
      %v9594 = vmax.f32 %v9362, %v9568
      %v9595 = vmax.f32 %v9366, %v9569
      %v9596 = vmax.f32 %v9370, %v9570
      %v9597 = vmax.f32 %v9374, %v9571
      %v9598 = vmax.f32 %v9378, %v9572
      %v9599 = vmax.f32 %v9382, %v9573
      %v9600 = vmax.f32 %v9386, %v9574
      %v9601 = vmax.f32 %v9390, %v9575
      %v9602 = vmax.f32 %v9394, %v9576
      %v9616 = vrot.slane %v9434, 1
      %v9617 = vrot.slane %v9435, 1
      %v9618 = vrot.slane %v9436, 1
      %v9619 = vrot.slane %v9437, 1
      %v9620 = vrot.slane %v9438, 1
      %v9621 = vrot.slane %v9439, 1
      %v9622 = vrot.slane %v9440, 1
      %v9623 = vrot.slane %v9441, 1
      %v9624 = vrot.slane %v9442, 1
      %v9625 = vrot.slane %v9443, 1
      %v9626 = vrot.slane %v9444, 1
      %v9627 = vrot.slane %v9445, 1
      %v9628 = vrot.slane %v9446, 1
      %v9642 = vrot.slane %v9434, 2
      %v9643 = vrot.slane %v9435, 2
      %v9644 = vrot.slane %v9436, 2
      %v9645 = vrot.slane %v9437, 2
      %v9646 = vrot.slane %v9438, 2
      %v9647 = vrot.slane %v9439, 2
      %v9648 = vrot.slane %v9440, 2
      %v9649 = vrot.slane %v9441, 2
      %v9650 = vrot.slane %v9442, 2
      %v9651 = vrot.slane %v9443, 2
      %v9652 = vrot.slane %v9444, 2
      %v9653 = vrot.slane %v9445, 2
      %v9654 = vrot.slane %v9446, 2
      %v9668 = vrot.slane %v9434, 3
      %v9669 = vrot.slane %v9435, 3
      %v9670 = vrot.slane %v9436, 3
      %v9671 = vrot.slane %v9437, 3
      %v9672 = vrot.slane %v9438, 3
      %v9673 = vrot.slane %v9439, 3
      %v9674 = vrot.slane %v9440, 3
      %v9675 = vrot.slane %v9441, 3
      %v9676 = vrot.slane %v9442, 3
      %v9677 = vrot.slane %v9443, 3
      %v9678 = vrot.slane %v9444, 3
      %v9679 = vrot.slane %v9445, 3
      %v9680 = vrot.slane %v9446, 3
      %v9707 = vrot.slane %v9486, 4
      %v9708 = vrot.slane %v9487, 4
      %v9709 = vrot.slane %v9488, 4
      %v9710 = vrot.slane %v9489, 4
      %v9711 = vrot.slane %v9490, 4
      %v9712 = vrot.slane %v9491, 4
      %v9713 = vrot.slane %v9492, 4
      %v9714 = vrot.slane %v9493, 4
      %v9715 = vrot.slane %v9494, 4
      %v9716 = vrot.slane %v9495, 4
      %v9717 = vrot.slane %v9496, 4
      %v9718 = vrot.slane %v9497, 4
      %v9719 = vrot.slane %v9498, 4
      %v9733 = vrot.slane %v9486, 5
      %v9734 = vrot.slane %v9487, 5
      %v9735 = vrot.slane %v9488, 5
      %v9736 = vrot.slane %v9489, 5
      %v9737 = vrot.slane %v9490, 5
      %v9738 = vrot.slane %v9491, 5
      %v9739 = vrot.slane %v9492, 5
      %v9740 = vrot.slane %v9493, 5
      %v9741 = vrot.slane %v9494, 5
      %v9742 = vrot.slane %v9495, 5
      %v9743 = vrot.slane %v9496, 5
      %v9744 = vrot.slane %v9497, 5
      %v9745 = vrot.slane %v9498, 5
      %v9759 = vrot.slane %v9486, 6
      %v9760 = vrot.slane %v9487, 6
      %v9761 = vrot.slane %v9488, 6
      %v9762 = vrot.slane %v9489, 6
      %v9763 = vrot.slane %v9490, 6
      %v9764 = vrot.slane %v9491, 6
      %v9765 = vrot.slane %v9492, 6
      %v9766 = vrot.slane %v9493, 6
      %v9767 = vrot.slane %v9494, 6
      %v9768 = vrot.slane %v9495, 6
      %v9769 = vrot.slane %v9496, 6
      %v9770 = vrot.slane %v9497, 6
      %v9771 = vrot.slane %v9498, 6
      %v9785 = vrot.slane %v9486, 7
      %v9786 = vrot.slane %v9487, 7
      %v9787 = vrot.slane %v9488, 7
      %v9788 = vrot.slane %v9489, 7
      %v9789 = vrot.slane %v9490, 7
      %v9790 = vrot.slane %v9491, 7
      %v9791 = vrot.slane %v9492, 7
      %v9792 = vrot.slane %v9493, 7
      %v9793 = vrot.slane %v9494, 7
      %v9794 = vrot.slane %v9495, 7
      %v9795 = vrot.slane %v9496, 7
      %v9796 = vrot.slane %v9497, 7
      %v9797 = vrot.slane %v9498, 7
      %v9824 = vrot.slane %v9538, 1
      %v9825 = vrot.slane %v9539, 1
      %v9826 = vrot.slane %v9540, 1
      %v9827 = vrot.slane %v9541, 1
      %v9828 = vrot.slane %v9542, 1
      %v9829 = vrot.slane %v9543, 1
      %v9830 = vrot.slane %v9544, 1
      %v9831 = vrot.slane %v9545, 1
      %v9832 = vrot.slane %v9546, 1
      %v9833 = vrot.slane %v9547, 1
      %v9834 = vrot.slane %v9548, 1
      %v9835 = vrot.slane %v9549, 1
      %v9836 = vrot.slane %v9550, 1
      %v9850 = vrot.slane %v9538, 2
      %v9851 = vrot.slane %v9539, 2
      %v9852 = vrot.slane %v9540, 2
      %v9853 = vrot.slane %v9541, 2
      %v9854 = vrot.slane %v9542, 2
      %v9855 = vrot.slane %v9543, 2
      %v9856 = vrot.slane %v9544, 2
      %v9857 = vrot.slane %v9545, 2
      %v9858 = vrot.slane %v9546, 2
      %v9859 = vrot.slane %v9547, 2
      %v9860 = vrot.slane %v9548, 2
      %v9861 = vrot.slane %v9549, 2
      %v9862 = vrot.slane %v9550, 2
      %v9876 = vrot.slane %v9538, 3
      %v9877 = vrot.slane %v9539, 3
      %v9878 = vrot.slane %v9540, 3
      %v9879 = vrot.slane %v9541, 3
      %v9880 = vrot.slane %v9542, 3
      %v9881 = vrot.slane %v9543, 3
      %v9882 = vrot.slane %v9544, 3
      %v9883 = vrot.slane %v9545, 3
      %v9884 = vrot.slane %v9546, 3
      %v9885 = vrot.slane %v9547, 3
      %v9886 = vrot.slane %v9548, 3
      %v9887 = vrot.slane %v9549, 3
      %v9888 = vrot.slane %v9550, 3
      %v9915 = vrot.slane %v9590, 4
      %v9916 = vrot.slane %v9591, 4
      %v9917 = vrot.slane %v9592, 4
      %v9918 = vrot.slane %v9593, 4
      %v9919 = vrot.slane %v9594, 4
      %v9920 = vrot.slane %v9595, 4
      %v9921 = vrot.slane %v9596, 4
      %v9922 = vrot.slane %v9597, 4
      %v9923 = vrot.slane %v9598, 4
      %v9924 = vrot.slane %v9599, 4
      %v9925 = vrot.slane %v9600, 4
      %v9926 = vrot.slane %v9601, 4
      %v9927 = vrot.slane %v9602, 4
      %vm9941 = vcmask 1040384
      %v9942 = vsel %vm9941, %v9434, %v9616
      %v9943 = vsel %vm9941, %v9435, %v9617
      %v9944 = vsel %vm9941, %v9436, %v9618
      %v9945 = vsel %vm9941, %v9437, %v9619
      %v9946 = vsel %vm9941, %v9438, %v9620
      %v9947 = vsel %vm9941, %v9439, %v9621
      %v9948 = vsel %vm9941, %v9440, %v9622
      %v9949 = vsel %vm9941, %v9441, %v9623
      %v9950 = vsel %vm9941, %v9442, %v9624
      %v9951 = vsel %vm9941, %v9443, %v9625
      %v9952 = vsel %vm9941, %v9444, %v9626
      %v9953 = vsel %vm9941, %v9445, %v9627
      %v9954 = vsel %vm9941, %v9446, %v9628
      %vm9955 = vcmask 1041408
      %v9956 = vsel %vm9955, %v9942, %v9642
      %v9957 = vsel %vm9955, %v9943, %v9643
      %v9958 = vsel %vm9955, %v9944, %v9644
      %v9959 = vsel %vm9955, %v9945, %v9645
      %v9960 = vsel %vm9955, %v9946, %v9646
      %v9961 = vsel %vm9955, %v9947, %v9647
      %v9962 = vsel %vm9955, %v9948, %v9648
      %v9963 = vsel %vm9955, %v9949, %v9649
      %v9964 = vsel %vm9955, %v9950, %v9650
      %v9965 = vsel %vm9955, %v9951, %v9651
      %v9966 = vsel %vm9955, %v9952, %v9652
      %v9967 = vsel %vm9955, %v9953, %v9653
      %v9968 = vsel %vm9955, %v9954, %v9654
      %vm9969 = vcmask 1042432
      %v9970 = vsel %vm9969, %v9956, %v9668
      %v9971 = vsel %vm9969, %v9957, %v9669
      %v9972 = vsel %vm9969, %v9958, %v9670
      %v9973 = vsel %vm9969, %v9959, %v9671
      %v9974 = vsel %vm9969, %v9960, %v9672
      %v9975 = vsel %vm9969, %v9961, %v9673
      %v9976 = vsel %vm9969, %v9962, %v9674
      %v9977 = vsel %vm9969, %v9963, %v9675
      %v9978 = vsel %vm9969, %v9964, %v9676
      %v9979 = vsel %vm9969, %v9965, %v9677
      %v9980 = vsel %vm9969, %v9966, %v9678
      %v9981 = vsel %vm9969, %v9967, %v9679
      %v9982 = vsel %vm9969, %v9968, %v9680
      %vm9983 = vcmask 1043456
      %v9984 = vsel %vm9983, %v9970, %v9707
      %v9985 = vsel %vm9983, %v9971, %v9708
      %v9986 = vsel %vm9983, %v9972, %v9709
      %v9987 = vsel %vm9983, %v9973, %v9710
      %v9988 = vsel %vm9983, %v9974, %v9711
      %v9989 = vsel %vm9983, %v9975, %v9712
      %v9990 = vsel %vm9983, %v9976, %v9713
      %v9991 = vsel %vm9983, %v9977, %v9714
      %v9992 = vsel %vm9983, %v9978, %v9715
      %v9993 = vsel %vm9983, %v9979, %v9716
      %v9994 = vsel %vm9983, %v9980, %v9717
      %v9995 = vsel %vm9983, %v9981, %v9718
      %v9996 = vsel %vm9983, %v9982, %v9719
      %vm9997 = vcmask 1044480
      %v9998 = vsel %vm9997, %v9984, %v9733
      %v9999 = vsel %vm9997, %v9985, %v9734
      %v10000 = vsel %vm9997, %v9986, %v9735
      %v10001 = vsel %vm9997, %v9987, %v9736
      %v10002 = vsel %vm9997, %v9988, %v9737
      %v10003 = vsel %vm9997, %v9989, %v9738
      %v10004 = vsel %vm9997, %v9990, %v9739
      %v10005 = vsel %vm9997, %v9991, %v9740
      %v10006 = vsel %vm9997, %v9992, %v9741
      %v10007 = vsel %vm9997, %v9993, %v9742
      %v10008 = vsel %vm9997, %v9994, %v9743
      %v10009 = vsel %vm9997, %v9995, %v9744
      %v10010 = vsel %vm9997, %v9996, %v9745
      %vm10011 = vcmask 1045504
      %v10012 = vsel %vm10011, %v9998, %v9759
      %v10013 = vsel %vm10011, %v9999, %v9760
      %v10014 = vsel %vm10011, %v10000, %v9761
      %v10015 = vsel %vm10011, %v10001, %v9762
      %v10016 = vsel %vm10011, %v10002, %v9763
      %v10017 = vsel %vm10011, %v10003, %v9764
      %v10018 = vsel %vm10011, %v10004, %v9765
      %v10019 = vsel %vm10011, %v10005, %v9766
      %v10020 = vsel %vm10011, %v10006, %v9767
      %v10021 = vsel %vm10011, %v10007, %v9768
      %v10022 = vsel %vm10011, %v10008, %v9769
      %v10023 = vsel %vm10011, %v10009, %v9770
      %v10024 = vsel %vm10011, %v10010, %v9771
      %vm10025 = vcmask 1046528
      %v10026 = vsel %vm10025, %v10012, %v9785
      %v10027 = vsel %vm10025, %v10013, %v9786
      %v10028 = vsel %vm10025, %v10014, %v9787
      %v10029 = vsel %vm10025, %v10015, %v9788
      %v10030 = vsel %vm10025, %v10016, %v9789
      %v10031 = vsel %vm10025, %v10017, %v9790
      %v10032 = vsel %vm10025, %v10018, %v9791
      %v10033 = vsel %vm10025, %v10019, %v9792
      %v10034 = vsel %vm10025, %v10020, %v9793
      %v10035 = vsel %vm10025, %v10021, %v9794
      %v10036 = vsel %vm10025, %v10022, %v9795
      %v10037 = vsel %vm10025, %v10023, %v9796
      %v10038 = vsel %vm10025, %v10024, %v9797
      %v10039 = vsel %vm9941, %v9538, %v9824
      %v10040 = vsel %vm9941, %v9539, %v9825
      %v10041 = vsel %vm9941, %v9540, %v9826
      %v10042 = vsel %vm9941, %v9541, %v9827
      %v10043 = vsel %vm9941, %v9542, %v9828
      %v10044 = vsel %vm9941, %v9543, %v9829
      %v10045 = vsel %vm9941, %v9544, %v9830
      %v10046 = vsel %vm9941, %v9545, %v9831
      %v10047 = vsel %vm9941, %v9546, %v9832
      %v10048 = vsel %vm9941, %v9547, %v9833
      %v10049 = vsel %vm9941, %v9548, %v9834
      %v10050 = vsel %vm9941, %v9549, %v9835
      %v10051 = vsel %vm9941, %v9550, %v9836
      %v10052 = vsel %vm9955, %v10039, %v9850
      %v10053 = vsel %vm9955, %v10040, %v9851
      %v10054 = vsel %vm9955, %v10041, %v9852
      %v10055 = vsel %vm9955, %v10042, %v9853
      %v10056 = vsel %vm9955, %v10043, %v9854
      %v10057 = vsel %vm9955, %v10044, %v9855
      %v10058 = vsel %vm9955, %v10045, %v9856
      %v10059 = vsel %vm9955, %v10046, %v9857
      %v10060 = vsel %vm9955, %v10047, %v9858
      %v10061 = vsel %vm9955, %v10048, %v9859
      %v10062 = vsel %vm9955, %v10049, %v9860
      %v10063 = vsel %vm9955, %v10050, %v9861
      %v10064 = vsel %vm9955, %v10051, %v9862
      %v10065 = vsel %vm9969, %v10052, %v9876
      %v10066 = vsel %vm9969, %v10053, %v9877
      %v10067 = vsel %vm9969, %v10054, %v9878
      %v10068 = vsel %vm9969, %v10055, %v9879
      %v10069 = vsel %vm9969, %v10056, %v9880
      %v10070 = vsel %vm9969, %v10057, %v9881
      %v10071 = vsel %vm9969, %v10058, %v9882
      %v10072 = vsel %vm9969, %v10059, %v9883
      %v10073 = vsel %vm9969, %v10060, %v9884
      %v10074 = vsel %vm9969, %v10061, %v9885
      %v10075 = vsel %vm9969, %v10062, %v9886
      %v10076 = vsel %vm9969, %v10063, %v9887
      %v10077 = vsel %vm9969, %v10064, %v9888
      %v10078 = vsel %vm9983, %v10065, %v9915
      %v10079 = vsel %vm9983, %v10066, %v9916
      %v10080 = vsel %vm9983, %v10067, %v9917
      %v10081 = vsel %vm9983, %v10068, %v9918
      %v10082 = vsel %vm9983, %v10069, %v9919
      %v10083 = vsel %vm9983, %v10070, %v9920
      %v10084 = vsel %vm9983, %v10071, %v9921
      %v10085 = vsel %vm9983, %v10072, %v9922
      %v10086 = vsel %vm9983, %v10073, %v9923
      %v10087 = vsel %vm9983, %v10074, %v9924
      %v10088 = vsel %vm9983, %v10075, %v9925
      %v10089 = vsel %vm9983, %v10076, %v9926
      %v10090 = vsel %vm9983, %v10077, %v9927
      %v10091 = vsel %vm9997, %v10078, 0.0
      %v10092 = vsel %vm9997, %v10079, 0.0
      %v10093 = vsel %vm9997, %v10080, 0.0
      %v10094 = vsel %vm9997, %v10081, 0.0
      %v10095 = vsel %vm9997, %v10082, 0.0
      %v10096 = vsel %vm9997, %v10083, 0.0
      %v10097 = vsel %vm9997, %v10084, 0.0
      %v10098 = vsel %vm9997, %v10085, 0.0
      %v10099 = vsel %vm9997, %v10086, 0.0
      %v10100 = vsel %vm9997, %v10087, 0.0
      %v10101 = vsel %vm9997, %v10088, 0.0
      %v10102 = vsel %vm9997, %v10089, 0.0
      %v10103 = vsel %vm9997, %v10090, 0.0
      %vm10104 = vcmask 261120
      %10105 = vst.msk [vmem:[%s170] sm:$0xff] %vm10104, %v10026
      %10106 = vst.msk [vmem:[%s170 + $0x8] sm:$0xff] %vm10104, %v10091
      %vm10107 = vcmask 254976
      %10108 = vst.msk [vmem:[%s170 + $0x10] sm:$0x3] %vm10107, 0.0
      %10109 = vst.msk [vmem:[%s170 + $0x18] sm:$0xff] %vm10104, %v10027
      %10110 = vst.msk [vmem:[%s170 + $0x20] sm:$0xff] %vm10104, %v10092
      %10111 = vst.msk [vmem:[%s170 + $0x28] sm:$0x3] %vm10107, 0.0
      %10112 = vst.msk [vmem:[%s170 + $0x30] sm:$0xff] %vm10104, %v10028
      %10113 = vst.msk [vmem:[%s170 + $0x38] sm:$0xff] %vm10104, %v10093
      %10114 = vst.msk [vmem:[%s170 + $0x40] sm:$0x3] %vm10107, 0.0
      %10115 = vst.msk [vmem:[%s170 + $0x48] sm:$0xff] %vm10104, %v10029
      %10116 = vst.msk [vmem:[%s170 + $0x50] sm:$0xff] %vm10104, %v10094
      %10117 = vst.msk [vmem:[%s170 + $0x58] sm:$0x3] %vm10107, 0.0
      %10118 = vst.msk [vmem:[%s170 + $0x60] sm:$0xff] %vm10104, %v10030
      %10119 = vst.msk [vmem:[%s170 + $0x68] sm:$0xff] %vm10104, %v10095
      %10120 = vst.msk [vmem:[%s170 + $0x70] sm:$0x3] %vm10107, 0.0
      %10121 = vst.msk [vmem:[%s170 + $0x78] sm:$0xff] %vm10104, %v10031
      %10122 = vst.msk [vmem:[%s170 + $0x80] sm:$0xff] %vm10104, %v10096
      %10123 = vst.msk [vmem:[%s170 + $0x88] sm:$0x3] %vm10107, 0.0
      %10124 = vst.msk [vmem:[%s170 + $0x90] sm:$0xff] %vm10104, %v10032
      %10125 = vst.msk [vmem:[%s170 + $0x98] sm:$0xff] %vm10104, %v10097
      %10126 = vst.msk [vmem:[%s170 + $0xa0] sm:$0x3] %vm10107, 0.0
      %10127 = vst.msk [vmem:[%s170 + $0xa8] sm:$0xff] %vm10104, %v10033
      %10128 = vst.msk [vmem:[%s170 + $0xb0] sm:$0xff] %vm10104, %v10098
      %10129 = vst.msk [vmem:[%s170 + $0xb8] sm:$0x3] %vm10107, 0.0
      %10130 = vst.msk [vmem:[%s170 + $0xc0] sm:$0xff] %vm10104, %v10034
      %10131 = vst.msk [vmem:[%s170 + $0xc8] sm:$0xff] %vm10104, %v10099
      %10132 = vst.msk [vmem:[%s170 + $0xd0] sm:$0x3] %vm10107, 0.0
      %10133 = vst.msk [vmem:[%s170 + $0xd8] sm:$0xff] %vm10104, %v10035
      %10134 = vst.msk [vmem:[%s170 + $0xe0] sm:$0xff] %vm10104, %v10100
      %10135 = vst.msk [vmem:[%s170 + $0xe8] sm:$0x3] %vm10107, 0.0
      %10136 = vst.msk [vmem:[%s170 + $0xf0] sm:$0xff] %vm10104, %v10036
      %10137 = vst.msk [vmem:[%s170 + $0xf8] sm:$0xff] %vm10104, %v10101
      %10138 = vst.msk [vmem:[%s170 + $0x100] sm:$0x3] %vm10107, 0.0
      %10139 = vst.msk [vmem:[%s170 + $0x108] sm:$0xff] %vm10104, %v10037
      %10140 = vst.msk [vmem:[%s170 + $0x110] sm:$0xff] %vm10104, %v10102
      %10141 = vst.msk [vmem:[%s170 + $0x118] sm:$0x3] %vm10107, 0.0
      %10142 = vst.msk [vmem:[%s170 + $0x120] sm:$0xff] %vm10104, %v10038
      %10143 = vst.msk [vmem:[%s170 + $0x128] sm:$0xff] %vm10104, %v10103
      %10144 = vst.msk [vmem:[%s170 + $0x130] sm:$0x3] %vm10107, 0.0
      %p10145 = scmp.lt.s32.totalorder %s14, 1
      %s10146 = scalar_select %p10145, %s14, 1
      %s10147 = smul.addr %s10146, 39
      %s10148 = smul.addr %s10147, 8
      %s10149 = scalar_lea.vmem %s3, %s10148
      // Predicated region
      $region33: #{cnn_forward.3} parent=31 // pred_check
        %p10150 = pneg %p100
      $region34: #{cnn_forward.3} parent=31 // pred_check_branch
        %10152 = sbr.rel (%p10150) target = $region36
      $region35: #{cnn_forward.3} parent=31 // pred_region
        _
      $region36: #{cnn_forward.3} parent=31 // pred_fallthru
        _
    $region32: #{cnn_forward.3} parent=5 // pred_fallthru
      _
    %p10153 = scmp.le.s32.totalorder 2, %s9
    // Predicated region
    $region37: #{cnn_forward.3} parent=5 // pred_check
      %p10154 = pneg %p10153
    $region38: #{cnn_forward.3} parent=5 // pred_check_branch
      %10156 = sbr.rel (%p10154) target = $region40
    $region39: #{cnn_forward.3} parent=5 // pred_region
      %s10157 = ssub.s32 %s9, 2
      // Predicated region
      $region41: #{cnn_forward.3} parent=39 // pred_check
        %p10158 = pneg %p106
      $region42: #{cnn_forward.3} parent=39 // pred_check_branch
        %10160 = sbr.rel (%p10158) target = $region44
      $region43: #{cnn_forward.3} parent=39 // pred_region
        %p10161 = scmp.lt.s32.totalorder %s15, 1
        %s10162 = scalar_select %p10161, %s15, 1
        %s10163 = smul.addr %s10162, 39
        %s10164 = smul.addr %s10163, 8
        %s10165 = scalar_lea.vmem %s3, %s10164
      $region44: #{cnn_forward.3} parent=39 // pred_fallthru
        _
    $region40: #{cnn_forward.3} parent=5 // pred_fallthru
      _
  $region6: #{cnn_forward.3} parent=0 // loop_footer
    %s13 = sadd.s32 1, %s9
  $region7: #{cnn_forward.3} parent=0 // loop_footer_branch
    %8 = sbr.rel target = $region3
  $region8: #{cnn_forward.3} parent=0 // loop_exit
    _

</llo_original>
